<compile_context>
chip_gen: v7x
topology: tpu7x:2x2x1
jax: 0.10.0
libtpu: 0.0.40
codegen_flags: <defaults>
</compile_context>

<pallas_src>
import functools
import math

import jax
import jax.numpy as jnp
from jax import lax
from jax.experimental import pallas as pl
from jax.experimental.pallas import tpu as pltpu

EPS = 1e-5        # PyTorch nn.LayerNorm default
NEG_INF = -1e9    # PyTorch reference uses masked_fill(..., -1e9)

# Batched-matmul dimension numbers: single leading batch dim, one contraction.
_BMM = (((2,), (1,)), ((0,), (0,)))        # (g,m,k) x (g,k,n) -> (g,m,n)
_BMM_RHS_T = (((2,), (2,)), ((0,), (0,)))  # (g,m,k) x (g,n,k) -> (g,m,n)

_WEIGHT_KEYS = ("sa_wq", "sa_wk", "sa_wv", "sa_wo",
                "ca_wq", "ca_wk", "ca_wv", "ca_wo",
                "ff_w1", "ff_b1", "ff_w2", "ff_b2",
                "n1_g", "n1_b", "n2_g", "n2_b", "n3_g", "n3_b",
                "fin_g", "fin_b")


# ----------------------------- in-kernel helpers -----------------------------

def _layer_norm(x, g, b):
    # x: (..., D) f32, g/b: (1, D) f32 — broadcast over leading dims.
    mu = jnp.mean(x, axis=-1, keepdims=True)
    var = jnp.mean((x - mu) ** 2, axis=-1, keepdims=True)
    return (x - mu) * lax.rsqrt(var + EPS) * g + b


def _split_heads(y, bb, s, heads, dk):
    # (bb*s, H*dk) f32 -> (bb*H, s, dk) bf16 for the batched score/PV matmuls.
    y = y.reshape(bb, s, heads, dk).transpose(0, 2, 1, 3)
    return y.reshape(bb * heads, s, dk).astype(jnp.bfloat16)


def _mha(xq2, sq, kv2, sk, row_sel, wq, wk, wv, wo, bb, heads):
    """Multi-head attention with 2-D projections on flattened activations.

    xq2: (bb*sq, D) bf16, kv2: (bb*sk, D) bf16, row_sel: (bb*H, sq, 1) bool
    (True => that QUERY row is masked, PyTorch masked_fill semantics).
    wq (scale pre-folded) / wk / wv / wo: (D, D) bf16.  Returns (bb, sq, D) f32.
    """
    d = wq.shape[0]
    dk = d // heads
    f32 = jnp.float32
    bf16 = jnp.bfloat16

    # Full-width 2-D projections: M = bb*S, K = D (fills the MXU).
    q = jnp.dot(xq2, wq, preferred_element_type=f32)          # (bb*sq, D)
    k = jnp.dot(kv2, wk, preferred_element_type=f32)          # (bb*sk, D)
    v = jnp.dot(kv2, wv, preferred_element_type=f32)          # (bb*sk, D)

    q = _split_heads(q, bb, sq, heads, dk)                    # (G, sq, dk) bf16
    k = _split_heads(k, bb, sk, heads, dk)                    # (G, sk, dk) bf16
    v = _split_heads(v, bb, sk, heads, dk)                    # (G, sk, dk) bf16

    s = lax.dot_general(q, k, _BMM_RHS_T,
                        preferred_element_type=f32)           # (G, sq, sk)
    # masked_fill: replace (not add) the scores of masked query rows.
    s = jnp.where(row_sel, NEG_INF, s)
    s = s - jnp.max(s, axis=-1, keepdims=True)
    p = jnp.exp(s)
    # approx reciprocal -> EUP slot (few-ULP deviation from exact division).
    p = p * pl.reciprocal(jnp.sum(p, axis=-1, keepdims=True), approx=True)

    o = lax.dot_general(p.astype(bf16), v, _BMM,
                        preferred_element_type=f32)           # (G, sq, dk)
    # Merge heads back, then ONE (bb*sq, H*dk) @ (H*dk, D) output projection.
    o = o.reshape(bb, heads, sq, dk).transpose(0, 2, 1, 3)
    o = o.reshape(bb * sq, d).astype(bf16)
    return jnp.dot(o, wo, preferred_element_type=f32).reshape(bb, sq, d)


# ------------------------------- Pallas kernel -------------------------------

def decoder_kernel(x_ref, enc_ref, tmask_ref, mmask_ref,
                   sa_wq, sa_wk, sa_wv, sa_wo,
                   ca_wq, ca_wk, ca_wv, ca_wo,
                   ff_w1, ff_b1, ff_w2, ff_b2,
                   n1_g, n1_b, n2_g, n2_b, n3_g, n3_b,
                   fin_g, fin_b,
                   out_ref, *, num_heads):
    num_layers = sa_wq.shape[0]
    bb, s_t, d_model = x_ref.shape
    _, s_s, _ = enc_ref.shape
    heads = num_heads
    f32 = jnp.float32
    bf16 = jnp.bfloat16

    x = x_ref[...]                                            # (bb, St, D) f32
    # Encoder activations: flatten + cast once, reused by every layer's
    # cross-attention K/V projections (layer-invariant, hoisted).
    enc2 = enc_ref[...].reshape(bb * s_s, d_model).astype(bf16)

    # Mask -> per-(batch,head) query-row selector, hoisted out of the layer
    # loop.  PyTorch expands (B, St) -> (B, 1, St, 1) and masked_fills whole
    # query rows of the score matrix.
    def row_sel(mref):
        m = jnp.broadcast_to(mref[...][:, None, :, :], (bb, heads, s_t, 1))
        return m.reshape(bb * heads, s_t, 1) != 0.0

    t_sel = row_sel(tmask_ref)
    m_sel = row_sel(mmask_ref)

    for l in range(num_layers):
        # 1) masked self-attention + residual + norm1
        x2 = x.reshape(bb * s_t, d_model).astype(bf16)
        sa = _mha(x2, s_t, x2, s_t, t_sel,
                  sa_wq[l], sa_wk[l], sa_wv[l], sa_wo[l], bb, heads)
        x = _layer_norm(x + sa, n1_g[l], n1_b[l])

        # 2) encoder-decoder attention + residual + norm2
        x2 = x.reshape(bb * s_t, d_model).astype(bf16)
        ca = _mha(x2, s_t, enc2, s_s, m_sel,
                  ca_wq[l], ca_wk[l], ca_wv[l], ca_wo[l], bb, heads)
        x = _layer_norm(x + ca, n2_g[l], n2_b[l])

        # 3) feed-forward (bias included, as in nn.Linear) + residual + norm3
        x2 = x.reshape(bb * s_t, d_model).astype(bf16)
        h = jnp.maximum(
            jnp.dot(x2, ff_w1[l], preferred_element_type=f32) + ff_b1[l], 0.0)
        ff = jnp.dot(h.astype(bf16), ff_w2[l],
                     preferred_element_type=f32) + ff_b2[l]
        x = _layer_norm(x + ff.reshape(bb, s_t, d_model), n3_g[l], n3_b[l])

    # TODO(synk): dropout layers are identity here (eval-mode semantics).
    # Final decoder LayerNorm fused into the same kernel (no extra HBM pass).
    out_ref[...] = _layer_norm(x, fin_g[...], fin_b[...]).astype(out_ref.dtype)


# -------------------------------- host wrapper --------------------------------

def _const_spec(shape):
    n = len(shape)
    return pl.BlockSpec(shape, lambda i, _n=n: (0,) * _n)


def decoder_forward(x, enc_output, tgt_mask, memory_mask, params, num_heads,
                    batch_tile=1):
    """x: (B, St, D), enc_output: (B, Ss, D),
    tgt_mask / memory_mask: (B, St, 1) float32 (nonzero == masked query row)."""
    B, s_t, d_model = x.shape
    _, s_s, _ = enc_output.shape

    bb = batch_tile
    assert B % bb == 0, "batch_tile must divide the batch size"
    grid = (B // bb,)

    data_specs = [
        pl.BlockSpec((bb, s_t, d_model), lambda i: (i, 0, 0)),   # x
        pl.BlockSpec((bb, s_s, d_model), lambda i: (i, 0, 0)),   # enc_output
        pl.BlockSpec((bb, s_t, 1), lambda i: (i, 0, 0)),         # tgt_mask
        pl.BlockSpec((bb, s_t, 1), lambda i: (i, 0, 0)),         # memory_mask
    ]
    # Constant index_maps: weights stay VMEM-resident across batch grid steps.
    weight_specs = [_const_spec(params[k].shape) for k in _WEIGHT_KEYS]
    out_spec = pl.BlockSpec((bb, s_t, d_model), lambda i: (i, 0, 0))

    kernel = functools.partial(decoder_kernel, num_heads=num_heads)

    return pl.pallas_call(
        kernel,
        out_shape=jax.ShapeDtypeStruct((B, s_t, d_model), jnp.float32),
        grid_spec=pltpu.PrefetchScalarGridSpec(
            num_scalar_prefetch=0,
            grid=grid,
            in_specs=data_specs + weight_specs,
            out_specs=out_spec,
        ),
        compiler_params=pltpu.CompilerParams(
            # Batch tiles are independent -> shard across TensorCores on v7x.
            dimension_semantics=("parallel",),
            # Above the 16/32 MiB scoped defaults, still within v7x's 64 MiB.
            vmem_limit_bytes=48 * 1024 * 1024,
        ),
    )(x, enc_output, tgt_mask, memory_mask,
      *[params[k] for k in _WEIGHT_KEYS])


# -------------------------------- parameter init --------------------------------

def init_params(key, num_layers, embed_dim, num_heads, ff_dim):
    D, F, H = embed_dim, ff_dim, num_heads
    dk = D // H
    q_scale = 1.0 / math.sqrt(dk)   # folded into W_q (saves a VALU pass/layer)

    def dense(k, fan_in, shape):
        lim = 1.0 / math.sqrt(fan_in)
        return jax.random.uniform(k, shape, jnp.float32, -lim, lim)

    layers = []
    for _ in range(num_layers):
        key, *ks = jax.random.split(key, 13)
        layers.append({
            # Attention projections: bias=False in the reference.  Stored bf16
            # (MXU-native); LayerNorm params and FFN biases stay f32.
            "sa_wq": (dense(ks[0], D, (D, D)) * q_scale).astype(jnp.bfloat16),
            "sa_wk": dense(ks[1], D, (D, D)).astype(jnp.bfloat16),
            "sa_wv": dense(ks[2], D, (D, D)).astype(jnp.bfloat16),
            "sa_wo": dense(ks[3], D, (D, D)).astype(jnp.bfloat16),
            "ca_wq": (dense(ks[4], D, (D, D)) * q_scale).astype(jnp.bfloat16),
            "ca_wk": dense(ks[5], D, (D, D)).astype(jnp.bfloat16),
            "ca_wv": dense(ks[6], D, (D, D)).astype(jnp.bfloat16),
            "ca_wo": dense(ks[7], D, (D, D)).astype(jnp.bfloat16),
            "ff_w1": dense(ks[8], D, (D, F)).astype(jnp.bfloat16),
            "ff_b1": dense(ks[9], D, (1, F)),
            "ff_w2": dense(ks[10], F, (F, D)).astype(jnp.bfloat16),
            "ff_b2": dense(ks[11], F, (1, D)),
            "n1_g": jnp.ones((1, D), jnp.float32), "n1_b": jnp.zeros((1, D), jnp.float32),
            "n2_g": jnp.ones((1, D), jnp.float32), "n2_b": jnp.zeros((1, D), jnp.float32),
            "n3_g": jnp.ones((1, D), jnp.float32), "n3_b": jnp.zeros((1, D), jnp.float32),
        })

    # Stack per-layer weights along a leading L axis so the whole decoder is
    # one pallas_call with an in-kernel layer loop.
    stacked = {k: jnp.stack([lp[k] for lp in layers], axis=0) for k in layers[0]}
    stacked["fin_g"] = jnp.ones((1, D), jnp.float32)
    stacked["fin_b"] = jnp.zeros((1, D), jnp.float32)
    return stacked


# ------------------------------------ main ------------------------------------

if __name__ == "__main__":
    B, St, Ss = 2, 8, 8
    embed_dim, num_heads, ff_dim, num_layers = 32, 4, 64, 2

    key = jax.random.PRNGKey(0)
    kx, kenc, kp = jax.random.split(key, 3)

    x = jax.random.normal(kx, (B, St, embed_dim), jnp.float32)
    enc_output = jax.random.normal(kenc, (B, Ss, embed_dim), jnp.float32)

    # PyTorch mask semantics: mask shape (B, seq), True -> that QUERY row of
    # the score matrix is masked_fill'ed with -1e9 (broadcast over keys/heads),
    # i.e. masked rows attend uniformly over V.
    tgt_mask = (jnp.arange(St) >= St - 2).astype(jnp.float32)
    tgt_mask = jnp.broadcast_to(tgt_mask, (B, St)).reshape(B, St, 1)
    memory_mask = jnp.zeros((B, St, 1), jnp.float32)  # no masking

    params = init_params(kp, num_layers, embed_dim, num_heads, ff_dim)

    out = decoder_forward(x, enc_output, tgt_mask, memory_mask, params,
                          num_heads=num_heads, batch_tile=1)
    out = jax.block_until_ready(out)
    assert out.shape == (B, St, embed_dim)
    assert bool(jnp.all(jnp.isfinite(out)))
    print("KERNEL_OK")
</pallas_src>

<mosaic_0001>
module attributes {stable_mosaic.version = 11 : i64} {
  func.func @decoder_kernel(%arg0: i32, %arg1: memref<1x8x32xf32, #tpu.memory_space<vmem>>, %arg2: memref<1x8x32xf32, #tpu.memory_space<vmem>>, %arg3: memref<1x8x1xf32, #tpu.memory_space<vmem>>, %arg4: memref<1x8x1xf32, #tpu.memory_space<vmem>>, %arg5: memref<2x32x32xbf16, #tpu.memory_space<vmem>>, %arg6: memref<2x32x32xbf16, #tpu.memory_space<vmem>>, %arg7: memref<2x32x32xbf16, #tpu.memory_space<vmem>>, %arg8: memref<2x32x32xbf16, #tpu.memory_space<vmem>>, %arg9: memref<2x32x32xbf16, #tpu.memory_space<vmem>>, %arg10: memref<2x32x32xbf16, #tpu.memory_space<vmem>>, %arg11: memref<2x32x32xbf16, #tpu.memory_space<vmem>>, %arg12: memref<2x32x32xbf16, #tpu.memory_space<vmem>>, %arg13: memref<2x32x64xbf16, #tpu.memory_space<vmem>>, %arg14: memref<2x1x64xf32, #tpu.memory_space<vmem>>, %arg15: memref<2x64x32xbf16, #tpu.memory_space<vmem>>, %arg16: memref<2x1x32xf32, #tpu.memory_space<vmem>>, %arg17: memref<2x1x32xf32, #tpu.memory_space<vmem>>, %arg18: memref<2x1x32xf32, #tpu.memory_space<vmem>>, %arg19: memref<2x1x32xf32, #tpu.memory_space<vmem>>, %arg20: memref<2x1x32xf32, #tpu.memory_space<vmem>>, %arg21: memref<2x1x32xf32, #tpu.memory_space<vmem>>, %arg22: memref<2x1x32xf32, #tpu.memory_space<vmem>>, %arg23: memref<1x32xf32, #tpu.memory_space<vmem>>, %arg24: memref<1x32xf32, #tpu.memory_space<vmem>>, %arg25: memref<1x8x32xf32, #tpu.memory_space<vmem>>) attributes {dimension_semantics = [#tpu.dimension_semantics<parallel>], iteration_bounds = array<i64: 2>, scalar_prefetch = 0 : i64, scratch_operands = 0 : i64, tpu.core_type = #tpu.core_type<tc>, window_params = [{transform_indices = @transform_0, window_bounds = array<i64: 1, 8, 32>}, {transform_indices = @transform_1, window_bounds = array<i64: 1, 8, 32>}, {transform_indices = @transform_2, window_bounds = array<i64: 1, 8, 1>}, {transform_indices = @transform_3, window_bounds = array<i64: 1, 8, 1>}, {pipeline_mode = #tpu.pipeline_mode<synchronous>, transform_indices = @transform_4, window_bounds = array<i64: 2, 32, 32>}, {pipeline_mode = #tpu.pipeline_mode<synchronous>, transform_indices = @transform_5, window_bounds = array<i64: 2, 32, 32>}, {pipeline_mode = #tpu.pipeline_mode<synchronous>, transform_indices = @transform_6, window_bounds = array<i64: 2, 32, 32>}, {pipeline_mode = #tpu.pipeline_mode<synchronous>, transform_indices = @transform_7, window_bounds = array<i64: 2, 32, 32>}, {pipeline_mode = #tpu.pipeline_mode<synchronous>, transform_indices = @transform_8, window_bounds = array<i64: 2, 32, 32>}, {pipeline_mode = #tpu.pipeline_mode<synchronous>, transform_indices = @transform_9, window_bounds = array<i64: 2, 32, 32>}, {pipeline_mode = #tpu.pipeline_mode<synchronous>, transform_indices = @transform_10, window_bounds = array<i64: 2, 32, 32>}, {pipeline_mode = #tpu.pipeline_mode<synchronous>, transform_indices = @transform_11, window_bounds = array<i64: 2, 32, 32>}, {pipeline_mode = #tpu.pipeline_mode<synchronous>, transform_indices = @transform_12, window_bounds = array<i64: 2, 32, 64>}, {pipeline_mode = #tpu.pipeline_mode<synchronous>, transform_indices = @transform_13, window_bounds = array<i64: 2, 1, 64>}, {pipeline_mode = #tpu.pipeline_mode<synchronous>, transform_indices = @transform_14, window_bounds = array<i64: 2, 64, 32>}, {pipeline_mode = #tpu.pipeline_mode<synchronous>, transform_indices = @transform_15, window_bounds = array<i64: 2, 1, 32>}, {pipeline_mode = #tpu.pipeline_mode<synchronous>, transform_indices = @transform_16, window_bounds = array<i64: 2, 1, 32>}, {pipeline_mode = #tpu.pipeline_mode<synchronous>, transform_indices = @transform_17, window_bounds = array<i64: 2, 1, 32>}, {pipeline_mode = #tpu.pipeline_mode<synchronous>, transform_indices = @transform_18, window_bounds = array<i64: 2, 1, 32>}, {pipeline_mode = #tpu.pipeline_mode<synchronous>, transform_indices = @transform_19, window_bounds = array<i64: 2, 1, 32>}, {pipeline_mode = #tpu.pipeline_mode<synchronous>, transform_indices = @transform_20, window_bounds = array<i64: 2, 1, 32>}, {pipeline_mode = #tpu.pipeline_mode<synchronous>, transform_indices = @transform_21, window_bounds = array<i64: 2, 1, 32>}, {pipeline_mode = #tpu.pipeline_mode<synchronous>, transform_indices = @transform_22, window_bounds = array<i64: 1, 32>}, {pipeline_mode = #tpu.pipeline_mode<synchronous>, transform_indices = @transform_23, window_bounds = array<i64: 1, 32>}, {transform_indices = @transform_24, window_bounds = array<i64: 1, 8, 32>}]} {
    %c0 = arith.constant 0 : index
    %c0_0 = arith.constant 0 : index
    %c0_1 = arith.constant 0 : index
    %0 = vector.load %arg1[%c0, %c0_0, %c0_1] : memref<1x8x32xf32, #tpu.memory_space<vmem>>, vector<1x8x32xf32>
    %c0_2 = arith.constant 0 : index
    %c0_3 = arith.constant 0 : index
    %c0_4 = arith.constant 0 : index
    %1 = vector.load %arg2[%c0_2, %c0_3, %c0_4] : memref<1x8x32xf32, #tpu.memory_space<vmem>>, vector<1x8x32xf32>
    %2 = vector.shape_cast %1 : vector<1x8x32xf32> to vector<8x32xf32>
    %3 = arith.truncf %2 : vector<8x32xf32> to vector<8x32xbf16>
    %c0_5 = arith.constant 0 : index
    %c0_6 = arith.constant 0 : index
    %c0_7 = arith.constant 0 : index
    %4 = vector.load %arg3[%c0_5, %c0_6, %c0_7] : memref<1x8x1xf32, #tpu.memory_space<vmem>>, vector<1x8x1xf32>
    %5 = vector.shape_cast %4 : vector<1x8x1xf32> to vector<1x1x8x1xf32>
    %6 = vector.shape_cast %5 : vector<1x1x8x1xf32> to vector<1x1x8x1xf32>
    %7 = vector.broadcast %6 : vector<1x1x8x1xf32> to vector<1x4x8x1xf32>
    %8 = vector.shape_cast %7 : vector<1x4x8x1xf32> to vector<4x8x1xf32>
    %cst = arith.constant 0.000000e+00 : f32
    %9 = vector.broadcast %cst : f32 to vector<4x8x1xf32>
    %10 = arith.cmpf one, %8, %9 : vector<4x8x1xf32>
    %c0_8 = arith.constant 0 : index
    %c0_9 = arith.constant 0 : index
    %c0_10 = arith.constant 0 : index
    %11 = vector.load %arg4[%c0_8, %c0_9, %c0_10] : memref<1x8x1xf32, #tpu.memory_space<vmem>>, vector<1x8x1xf32>
    %12 = vector.shape_cast %11 : vector<1x8x1xf32> to vector<1x1x8x1xf32>
    %13 = vector.shape_cast %12 : vector<1x1x8x1xf32> to vector<1x1x8x1xf32>
    %14 = vector.broadcast %13 : vector<1x1x8x1xf32> to vector<1x4x8x1xf32>
    %15 = vector.shape_cast %14 : vector<1x4x8x1xf32> to vector<4x8x1xf32>
    %cst_11 = arith.constant 0.000000e+00 : f32
    %16 = vector.broadcast %cst_11 : f32 to vector<4x8x1xf32>
    %17 = arith.cmpf one, %15, %16 : vector<4x8x1xf32>
    %18 = vector.shape_cast %0 : vector<1x8x32xf32> to vector<8x32xf32>
    %19 = arith.truncf %18 : vector<8x32xf32> to vector<8x32xbf16>
    %c0_12 = arith.constant 0 : index
    %c0_13 = arith.constant 0 : index
    %c0_14 = arith.constant 0 : index
    %20 = vector.load %arg5[%c0_12, %c0_13, %c0_14] : memref<2x32x32xbf16, #tpu.memory_space<vmem>>, vector<1x32x32xbf16>
    %21 = vector.shape_cast %20 : vector<1x32x32xbf16> to vector<32x32xbf16>
    %c0_15 = arith.constant 0 : index
    %c0_16 = arith.constant 0 : index
    %c0_17 = arith.constant 0 : index
    %22 = vector.load %arg6[%c0_15, %c0_16, %c0_17] : memref<2x32x32xbf16, #tpu.memory_space<vmem>>, vector<1x32x32xbf16>
    %23 = vector.shape_cast %22 : vector<1x32x32xbf16> to vector<32x32xbf16>
    %c0_18 = arith.constant 0 : index
    %c0_19 = arith.constant 0 : index
    %c0_20 = arith.constant 0 : index
    %24 = vector.load %arg7[%c0_18, %c0_19, %c0_20] : memref<2x32x32xbf16, #tpu.memory_space<vmem>>, vector<1x32x32xbf16>
    %25 = vector.shape_cast %24 : vector<1x32x32xbf16> to vector<32x32xbf16>
    %c0_21 = arith.constant 0 : index
    %c0_22 = arith.constant 0 : index
    %c0_23 = arith.constant 0 : index
    %26 = vector.load %arg8[%c0_21, %c0_22, %c0_23] : memref<2x32x32xbf16, #tpu.memory_space<vmem>>, vector<1x32x32xbf16>
    %27 = vector.shape_cast %26 : vector<1x32x32xbf16> to vector<32x32xbf16>
    %cst_24 = arith.constant dense<0.000000e+00> : vector<8x32xf32>
    %28 = tpu.matmul %19, %21, %cst_24 {dimension_numbers = #tpu.dot_dimension_numbers<[1], [0], [0], [1], [0, 0, 1, 1], [], []>} : vector<8x32xbf16>, vector<32x32xbf16>, vector<8x32xf32> -> vector<8x32xf32>
    %cst_25 = arith.constant dense<0.000000e+00> : vector<8x32xf32>
    %29 = tpu.matmul %19, %23, %cst_25 {dimension_numbers = #tpu.dot_dimension_numbers<[1], [0], [0], [1], [0, 0, 1, 1], [], []>} : vector<8x32xbf16>, vector<32x32xbf16>, vector<8x32xf32> -> vector<8x32xf32>
    %cst_26 = arith.constant dense<0.000000e+00> : vector<8x32xf32>
    %30 = tpu.matmul %19, %25, %cst_26 {dimension_numbers = #tpu.dot_dimension_numbers<[1], [0], [0], [1], [0, 0, 1, 1], [], []>} : vector<8x32xbf16>, vector<32x32xbf16>, vector<8x32xf32> -> vector<8x32xf32>
    %31 = vector.shape_cast %28 : vector<8x32xf32> to vector<1x8x4x8xf32>
    %32 = tpu.transpose %31, [0, 2, 1, 3] : vector<1x8x4x8xf32> -> vector<1x4x8x8xf32>
    %33 = vector.shape_cast %32 : vector<1x4x8x8xf32> to vector<4x8x8xf32>
    %34 = arith.truncf %33 : vector<4x8x8xf32> to vector<4x8x8xbf16>
    %35 = vector.shape_cast %29 : vector<8x32xf32> to vector<1x8x4x8xf32>
    %36 = tpu.transpose %35, [0, 2, 1, 3] : vector<1x8x4x8xf32> -> vector<1x4x8x8xf32>
    %37 = vector.shape_cast %36 : vector<1x4x8x8xf32> to vector<4x8x8xf32>
    %38 = arith.truncf %37 : vector<4x8x8xf32> to vector<4x8x8xbf16>
    %39 = vector.shape_cast %30 : vector<8x32xf32> to vector<1x8x4x8xf32>
    %40 = tpu.transpose %39, [0, 2, 1, 3] : vector<1x8x4x8xf32> -> vector<1x4x8x8xf32>
    %41 = vector.shape_cast %40 : vector<1x4x8x8xf32> to vector<4x8x8xf32>
    %42 = arith.truncf %41 : vector<4x8x8xf32> to vector<4x8x8xbf16>
    %cst_27 = arith.constant dense<0.000000e+00> : vector<4x8x8xf32>
    %43 = tpu.matmul %34, %38, %cst_27 {dimension_numbers = #tpu.dot_dimension_numbers<[2], [2], [1], [1], [0, 0, 0, 1, 1, 1], [0], [0]>} : vector<4x8x8xbf16>, vector<4x8x8xbf16>, vector<4x8x8xf32> -> vector<4x8x8xf32>
    %cst_28 = arith.constant -1.000000e+09 : f32
    %44 = vector.shape_cast %10 : vector<4x8x1xi1> to vector<4x8x1xi1>
    %45 = vector.broadcast %44 : vector<4x8x1xi1> to vector<4x8x8xi1>
    %46 = vector.broadcast %cst_28 : f32 to vector<4x8x8xf32>
    %47 = arith.select %45, %46, %43 : vector<4x8x8xi1>, vector<4x8x8xf32>
    %cst_29 = arith.constant dense<0xFF800000> : vector<4x8xf32>
    %48 = vector.multi_reduction <maximumf>, %47, %cst_29 [2] : vector<4x8x8xf32> to vector<4x8xf32>
    %49 = vector.shape_cast %48 : vector<4x8xf32> to vector<4x8x1xf32>
    %50 = vector.broadcast %49 : vector<4x8x1xf32> to vector<4x8x8xf32>
    %51 = arith.subf %47, %50 : vector<4x8x8xf32>
    %52 = math.exp %51 : vector<4x8x8xf32>
    %cst_30 = arith.constant dense<0.000000e+00> : vector<4x8xf32>
    %53 = vector.multi_reduction <add>, %52, %cst_30 [2] : vector<4x8x8xf32> to vector<4x8xf32>
    %54 = vector.shape_cast %53 : vector<4x8xf32> to vector<4x8x1xf32>
    %55 = tpu.reciprocal %54 {approx = true} : vector<4x8x1xf32> -> vector<4x8x1xf32>
    %56 = vector.broadcast %55 : vector<4x8x1xf32> to vector<4x8x8xf32>
    %57 = arith.mulf %52, %56 : vector<4x8x8xf32>
    %58 = arith.truncf %57 : vector<4x8x8xf32> to vector<4x8x8xbf16>
    %cst_31 = arith.constant dense<0.000000e+00> : vector<4x8x8xf32>
    %59 = tpu.matmul %58, %42, %cst_31 {dimension_numbers = #tpu.dot_dimension_numbers<[2], [1], [1], [2], [0, 0, 0, 1, 1, 2], [0], [0]>} : vector<4x8x8xbf16>, vector<4x8x8xbf16>, vector<4x8x8xf32> -> vector<4x8x8xf32>
    %60 = vector.shape_cast %59 : vector<4x8x8xf32> to vector<1x4x8x8xf32>
    %61 = tpu.transpose %60, [0, 2, 1, 3] : vector<1x4x8x8xf32> -> vector<1x8x4x8xf32>
    %62 = vector.shape_cast %61 : vector<1x8x4x8xf32> to vector<8x32xf32>
    %63 = arith.truncf %62 : vector<8x32xf32> to vector<8x32xbf16>
    %cst_32 = arith.constant dense<0.000000e+00> : vector<8x32xf32>
    %64 = tpu.matmul %63, %27, %cst_32 {dimension_numbers = #tpu.dot_dimension_numbers<[1], [0], [0], [1], [0, 0, 1, 1], [], []>} : vector<8x32xbf16>, vector<32x32xbf16>, vector<8x32xf32> -> vector<8x32xf32>
    %65 = vector.shape_cast %64 : vector<8x32xf32> to vector<1x8x32xf32>
    %66 = arith.addf %0, %65 : vector<1x8x32xf32>
    %c0_33 = arith.constant 0 : index
    %c0_34 = arith.constant 0 : index
    %c0_35 = arith.constant 0 : index
    %67 = vector.load %arg17[%c0_33, %c0_34, %c0_35] : memref<2x1x32xf32, #tpu.memory_space<vmem>>, vector<1x1x32xf32>
    %68 = vector.shape_cast %67 : vector<1x1x32xf32> to vector<1x32xf32>
    %c0_36 = arith.constant 0 : index
    %c0_37 = arith.constant 0 : index
    %c0_38 = arith.constant 0 : index
    %69 = vector.load %arg18[%c0_36, %c0_37, %c0_38] : memref<2x1x32xf32, #tpu.memory_space<vmem>>, vector<1x1x32xf32>
    %70 = vector.shape_cast %69 : vector<1x1x32xf32> to vector<1x32xf32>
    %cst_39 = arith.constant dense<0.000000e+00> : vector<1x8xf32>
    %71 = vector.multi_reduction <add>, %66, %cst_39 [2] : vector<1x8x32xf32> to vector<1x8xf32>
    %72 = vector.shape_cast %71 : vector<1x8xf32> to vector<1x8x1xf32>
    %cst_40 = arith.constant 3.200000e+01 : f32
    %73 = vector.broadcast %cst_40 : f32 to vector<1x8x1xf32>
    %74 = arith.divf %72, %73 : vector<1x8x1xf32>
    %75 = vector.broadcast %74 : vector<1x8x1xf32> to vector<1x8x32xf32>
    %76 = arith.subf %66, %75 : vector<1x8x32xf32>
    %77 = arith.mulf %76, %76 : vector<1x8x32xf32>
    %cst_41 = arith.constant dense<0.000000e+00> : vector<1x8xf32>
    %78 = vector.multi_reduction <add>, %77, %cst_41 [2] : vector<1x8x32xf32> to vector<1x8xf32>
    %79 = vector.shape_cast %78 : vector<1x8xf32> to vector<1x8x1xf32>
    %cst_42 = arith.constant 3.200000e+01 : f32
    %80 = vector.broadcast %cst_42 : f32 to vector<1x8x1xf32>
    %81 = arith.divf %79, %80 : vector<1x8x1xf32>
    %82 = vector.broadcast %74 : vector<1x8x1xf32> to vector<1x8x32xf32>
    %83 = arith.subf %66, %82 : vector<1x8x32xf32>
    %cst_43 = arith.constant 9.99999974E-6 : f32
    %84 = vector.broadcast %cst_43 : f32 to vector<1x8x1xf32>
    %85 = arith.addf %81, %84 : vector<1x8x1xf32>
    %86 = math.rsqrt %85 : vector<1x8x1xf32>
    %87 = vector.broadcast %86 : vector<1x8x1xf32> to vector<1x8x32xf32>
    %88 = arith.mulf %83, %87 : vector<1x8x32xf32>
    %89 = vector.shape_cast %68 : vector<1x32xf32> to vector<1x1x32xf32>
    %90 = vector.broadcast %89 : vector<1x1x32xf32> to vector<1x8x32xf32>
    %91 = arith.mulf %88, %90 : vector<1x8x32xf32>
    %92 = vector.shape_cast %70 : vector<1x32xf32> to vector<1x1x32xf32>
    %93 = vector.broadcast %92 : vector<1x1x32xf32> to vector<1x8x32xf32>
    %94 = arith.addf %91, %93 : vector<1x8x32xf32>
    %95 = vector.shape_cast %94 : vector<1x8x32xf32> to vector<8x32xf32>
    %96 = arith.truncf %95 : vector<8x32xf32> to vector<8x32xbf16>
    %c0_44 = arith.constant 0 : index
    %c0_45 = arith.constant 0 : index
    %c0_46 = arith.constant 0 : index
    %97 = vector.load %arg9[%c0_44, %c0_45, %c0_46] : memref<2x32x32xbf16, #tpu.memory_space<vmem>>, vector<1x32x32xbf16>
    %98 = vector.shape_cast %97 : vector<1x32x32xbf16> to vector<32x32xbf16>
    %c0_47 = arith.constant 0 : index
    %c0_48 = arith.constant 0 : index
    %c0_49 = arith.constant 0 : index
    %99 = vector.load %arg10[%c0_47, %c0_48, %c0_49] : memref<2x32x32xbf16, #tpu.memory_space<vmem>>, vector<1x32x32xbf16>
    %100 = vector.shape_cast %99 : vector<1x32x32xbf16> to vector<32x32xbf16>
    %c0_50 = arith.constant 0 : index
    %c0_51 = arith.constant 0 : index
    %c0_52 = arith.constant 0 : index
    %101 = vector.load %arg11[%c0_50, %c0_51, %c0_52] : memref<2x32x32xbf16, #tpu.memory_space<vmem>>, vector<1x32x32xbf16>
    %102 = vector.shape_cast %101 : vector<1x32x32xbf16> to vector<32x32xbf16>
    %c0_53 = arith.constant 0 : index
    %c0_54 = arith.constant 0 : index
    %c0_55 = arith.constant 0 : index
    %103 = vector.load %arg12[%c0_53, %c0_54, %c0_55] : memref<2x32x32xbf16, #tpu.memory_space<vmem>>, vector<1x32x32xbf16>
    %104 = vector.shape_cast %103 : vector<1x32x32xbf16> to vector<32x32xbf16>
    %cst_56 = arith.constant dense<0.000000e+00> : vector<8x32xf32>
    %105 = tpu.matmul %96, %98, %cst_56 {dimension_numbers = #tpu.dot_dimension_numbers<[1], [0], [0], [1], [0, 0, 1, 1], [], []>} : vector<8x32xbf16>, vector<32x32xbf16>, vector<8x32xf32> -> vector<8x32xf32>
    %cst_57 = arith.constant dense<0.000000e+00> : vector<8x32xf32>
    %106 = tpu.matmul %3, %100, %cst_57 {dimension_numbers = #tpu.dot_dimension_numbers<[1], [0], [0], [1], [0, 0, 1, 1], [], []>} : vector<8x32xbf16>, vector<32x32xbf16>, vector<8x32xf32> -> vector<8x32xf32>
    %cst_58 = arith.constant dense<0.000000e+00> : vector<8x32xf32>
    %107 = tpu.matmul %3, %102, %cst_58 {dimension_numbers = #tpu.dot_dimension_numbers<[1], [0], [0], [1], [0, 0, 1, 1], [], []>} : vector<8x32xbf16>, vector<32x32xbf16>, vector<8x32xf32> -> vector<8x32xf32>
    %108 = vector.shape_cast %105 : vector<8x32xf32> to vector<1x8x4x8xf32>
    %109 = tpu.transpose %108, [0, 2, 1, 3] : vector<1x8x4x8xf32> -> vector<1x4x8x8xf32>
    %110 = vector.shape_cast %109 : vector<1x4x8x8xf32> to vector<4x8x8xf32>
    %111 = arith.truncf %110 : vector<4x8x8xf32> to vector<4x8x8xbf16>
    %112 = vector.shape_cast %106 : vector<8x32xf32> to vector<1x8x4x8xf32>
    %113 = tpu.transpose %112, [0, 2, 1, 3] : vector<1x8x4x8xf32> -> vector<1x4x8x8xf32>
    %114 = vector.shape_cast %113 : vector<1x4x8x8xf32> to vector<4x8x8xf32>
    %115 = arith.truncf %114 : vector<4x8x8xf32> to vector<4x8x8xbf16>
    %116 = vector.shape_cast %107 : vector<8x32xf32> to vector<1x8x4x8xf32>
    %117 = tpu.transpose %116, [0, 2, 1, 3] : vector<1x8x4x8xf32> -> vector<1x4x8x8xf32>
    %118 = vector.shape_cast %117 : vector<1x4x8x8xf32> to vector<4x8x8xf32>
    %119 = arith.truncf %118 : vector<4x8x8xf32> to vector<4x8x8xbf16>
    %cst_59 = arith.constant dense<0.000000e+00> : vector<4x8x8xf32>
    %120 = tpu.matmul %111, %115, %cst_59 {dimension_numbers = #tpu.dot_dimension_numbers<[2], [2], [1], [1], [0, 0, 0, 1, 1, 1], [0], [0]>} : vector<4x8x8xbf16>, vector<4x8x8xbf16>, vector<4x8x8xf32> -> vector<4x8x8xf32>
    %cst_60 = arith.constant -1.000000e+09 : f32
    %121 = vector.shape_cast %17 : vector<4x8x1xi1> to vector<4x8x1xi1>
    %122 = vector.broadcast %121 : vector<4x8x1xi1> to vector<4x8x8xi1>
    %123 = vector.broadcast %cst_60 : f32 to vector<4x8x8xf32>
    %124 = arith.select %122, %123, %120 : vector<4x8x8xi1>, vector<4x8x8xf32>
    %cst_61 = arith.constant dense<0xFF800000> : vector<4x8xf32>
    %125 = vector.multi_reduction <maximumf>, %124, %cst_61 [2] : vector<4x8x8xf32> to vector<4x8xf32>
    %126 = vector.shape_cast %125 : vector<4x8xf32> to vector<4x8x1xf32>
    %127 = vector.broadcast %126 : vector<4x8x1xf32> to vector<4x8x8xf32>
    %128 = arith.subf %124, %127 : vector<4x8x8xf32>
    %129 = math.exp %128 : vector<4x8x8xf32>
    %cst_62 = arith.constant dense<0.000000e+00> : vector<4x8xf32>
    %130 = vector.multi_reduction <add>, %129, %cst_62 [2] : vector<4x8x8xf32> to vector<4x8xf32>
    %131 = vector.shape_cast %130 : vector<4x8xf32> to vector<4x8x1xf32>
    %132 = tpu.reciprocal %131 {approx = true} : vector<4x8x1xf32> -> vector<4x8x1xf32>
    %133 = vector.broadcast %132 : vector<4x8x1xf32> to vector<4x8x8xf32>
    %134 = arith.mulf %129, %133 : vector<4x8x8xf32>
    %135 = arith.truncf %134 : vector<4x8x8xf32> to vector<4x8x8xbf16>
    %cst_63 = arith.constant dense<0.000000e+00> : vector<4x8x8xf32>
    %136 = tpu.matmul %135, %119, %cst_63 {dimension_numbers = #tpu.dot_dimension_numbers<[2], [1], [1], [2], [0, 0, 0, 1, 1, 2], [0], [0]>} : vector<4x8x8xbf16>, vector<4x8x8xbf16>, vector<4x8x8xf32> -> vector<4x8x8xf32>
    %137 = vector.shape_cast %136 : vector<4x8x8xf32> to vector<1x4x8x8xf32>
    %138 = tpu.transpose %137, [0, 2, 1, 3] : vector<1x4x8x8xf32> -> vector<1x8x4x8xf32>
    %139 = vector.shape_cast %138 : vector<1x8x4x8xf32> to vector<8x32xf32>
    %140 = arith.truncf %139 : vector<8x32xf32> to vector<8x32xbf16>
    %cst_64 = arith.constant dense<0.000000e+00> : vector<8x32xf32>
    %141 = tpu.matmul %140, %104, %cst_64 {dimension_numbers = #tpu.dot_dimension_numbers<[1], [0], [0], [1], [0, 0, 1, 1], [], []>} : vector<8x32xbf16>, vector<32x32xbf16>, vector<8x32xf32> -> vector<8x32xf32>
    %142 = vector.shape_cast %141 : vector<8x32xf32> to vector<1x8x32xf32>
    %143 = arith.addf %94, %142 : vector<1x8x32xf32>
    %c0_65 = arith.constant 0 : index
    %c0_66 = arith.constant 0 : index
    %c0_67 = arith.constant 0 : index
    %144 = vector.load %arg19[%c0_65, %c0_66, %c0_67] : memref<2x1x32xf32, #tpu.memory_space<vmem>>, vector<1x1x32xf32>
    %145 = vector.shape_cast %144 : vector<1x1x32xf32> to vector<1x32xf32>
    %c0_68 = arith.constant 0 : index
    %c0_69 = arith.constant 0 : index
    %c0_70 = arith.constant 0 : index
    %146 = vector.load %arg20[%c0_68, %c0_69, %c0_70] : memref<2x1x32xf32, #tpu.memory_space<vmem>>, vector<1x1x32xf32>
    %147 = vector.shape_cast %146 : vector<1x1x32xf32> to vector<1x32xf32>
    %cst_71 = arith.constant dense<0.000000e+00> : vector<1x8xf32>
    %148 = vector.multi_reduction <add>, %143, %cst_71 [2] : vector<1x8x32xf32> to vector<1x8xf32>
    %149 = vector.shape_cast %148 : vector<1x8xf32> to vector<1x8x1xf32>
    %cst_72 = arith.constant 3.200000e+01 : f32
    %150 = vector.broadcast %cst_72 : f32 to vector<1x8x1xf32>
    %151 = arith.divf %149, %150 : vector<1x8x1xf32>
    %152 = vector.broadcast %151 : vector<1x8x1xf32> to vector<1x8x32xf32>
    %153 = arith.subf %143, %152 : vector<1x8x32xf32>
    %154 = arith.mulf %153, %153 : vector<1x8x32xf32>
    %cst_73 = arith.constant dense<0.000000e+00> : vector<1x8xf32>
    %155 = vector.multi_reduction <add>, %154, %cst_73 [2] : vector<1x8x32xf32> to vector<1x8xf32>
    %156 = vector.shape_cast %155 : vector<1x8xf32> to vector<1x8x1xf32>
    %cst_74 = arith.constant 3.200000e+01 : f32
    %157 = vector.broadcast %cst_74 : f32 to vector<1x8x1xf32>
    %158 = arith.divf %156, %157 : vector<1x8x1xf32>
    %159 = vector.broadcast %151 : vector<1x8x1xf32> to vector<1x8x32xf32>
    %160 = arith.subf %143, %159 : vector<1x8x32xf32>
    %cst_75 = arith.constant 9.99999974E-6 : f32
    %161 = vector.broadcast %cst_75 : f32 to vector<1x8x1xf32>
    %162 = arith.addf %158, %161 : vector<1x8x1xf32>
    %163 = math.rsqrt %162 : vector<1x8x1xf32>
    %164 = vector.broadcast %163 : vector<1x8x1xf32> to vector<1x8x32xf32>
    %165 = arith.mulf %160, %164 : vector<1x8x32xf32>
    %166 = vector.shape_cast %145 : vector<1x32xf32> to vector<1x1x32xf32>
    %167 = vector.broadcast %166 : vector<1x1x32xf32> to vector<1x8x32xf32>
    %168 = arith.mulf %165, %167 : vector<1x8x32xf32>
    %169 = vector.shape_cast %147 : vector<1x32xf32> to vector<1x1x32xf32>
    %170 = vector.broadcast %169 : vector<1x1x32xf32> to vector<1x8x32xf32>
    %171 = arith.addf %168, %170 : vector<1x8x32xf32>
    %172 = vector.shape_cast %171 : vector<1x8x32xf32> to vector<8x32xf32>
    %173 = arith.truncf %172 : vector<8x32xf32> to vector<8x32xbf16>
    %c0_76 = arith.constant 0 : index
    %c0_77 = arith.constant 0 : index
    %c0_78 = arith.constant 0 : index
    %174 = vector.load %arg13[%c0_76, %c0_77, %c0_78] : memref<2x32x64xbf16, #tpu.memory_space<vmem>>, vector<1x32x64xbf16>
    %175 = vector.shape_cast %174 : vector<1x32x64xbf16> to vector<32x64xbf16>
    %cst_79 = arith.constant dense<0.000000e+00> : vector<8x64xf32>
    %176 = tpu.matmul %173, %175, %cst_79 {dimension_numbers = #tpu.dot_dimension_numbers<[1], [0], [0], [1], [0, 0, 1, 1], [], []>} : vector<8x32xbf16>, vector<32x64xbf16>, vector<8x64xf32> -> vector<8x64xf32>
    %c0_80 = arith.constant 0 : index
    %c0_81 = arith.constant 0 : index
    %c0_82 = arith.constant 0 : index
    %177 = vector.load %arg14[%c0_80, %c0_81, %c0_82] : memref<2x1x64xf32, #tpu.memory_space<vmem>>, vector<1x1x64xf32>
    %178 = vector.shape_cast %177 : vector<1x1x64xf32> to vector<1x64xf32>
    %179 = vector.broadcast %178 : vector<1x64xf32> to vector<8x64xf32>
    %180 = arith.addf %176, %179 : vector<8x64xf32>
    %cst_83 = arith.constant 0.000000e+00 : f32
    %181 = vector.broadcast %cst_83 : f32 to vector<8x64xf32>
    %182 = arith.maximumf %180, %181 : vector<8x64xf32>
    %183 = arith.truncf %182 : vector<8x64xf32> to vector<8x64xbf16>
    %c0_84 = arith.constant 0 : index
    %c0_85 = arith.constant 0 : index
    %c0_86 = arith.constant 0 : index
    %184 = vector.load %arg15[%c0_84, %c0_85, %c0_86] : memref<2x64x32xbf16, #tpu.memory_space<vmem>>, vector<1x64x32xbf16>
    %185 = vector.shape_cast %184 : vector<1x64x32xbf16> to vector<64x32xbf16>
    %cst_87 = arith.constant dense<0.000000e+00> : vector<8x32xf32>
    %186 = tpu.matmul %183, %185, %cst_87 {dimension_numbers = #tpu.dot_dimension_numbers<[1], [0], [0], [1], [0, 0, 1, 1], [], []>} : vector<8x64xbf16>, vector<64x32xbf16>, vector<8x32xf32> -> vector<8x32xf32>
    %c0_88 = arith.constant 0 : index
    %c0_89 = arith.constant 0 : index
    %c0_90 = arith.constant 0 : index
    %187 = vector.load %arg16[%c0_88, %c0_89, %c0_90] : memref<2x1x32xf32, #tpu.memory_space<vmem>>, vector<1x1x32xf32>
    %188 = vector.shape_cast %187 : vector<1x1x32xf32> to vector<1x32xf32>
    %189 = vector.broadcast %188 : vector<1x32xf32> to vector<8x32xf32>
    %190 = arith.addf %186, %189 : vector<8x32xf32>
    %191 = vector.shape_cast %190 : vector<8x32xf32> to vector<1x8x32xf32>
    %192 = arith.addf %171, %191 : vector<1x8x32xf32>
    %c0_91 = arith.constant 0 : index
    %c0_92 = arith.constant 0 : index
    %c0_93 = arith.constant 0 : index
    %193 = vector.load %arg21[%c0_91, %c0_92, %c0_93] : memref<2x1x32xf32, #tpu.memory_space<vmem>>, vector<1x1x32xf32>
    %194 = vector.shape_cast %193 : vector<1x1x32xf32> to vector<1x32xf32>
    %c0_94 = arith.constant 0 : index
    %c0_95 = arith.constant 0 : index
    %c0_96 = arith.constant 0 : index
    %195 = vector.load %arg22[%c0_94, %c0_95, %c0_96] : memref<2x1x32xf32, #tpu.memory_space<vmem>>, vector<1x1x32xf32>
    %196 = vector.shape_cast %195 : vector<1x1x32xf32> to vector<1x32xf32>
    %cst_97 = arith.constant dense<0.000000e+00> : vector<1x8xf32>
    %197 = vector.multi_reduction <add>, %192, %cst_97 [2] : vector<1x8x32xf32> to vector<1x8xf32>
    %198 = vector.shape_cast %197 : vector<1x8xf32> to vector<1x8x1xf32>
    %cst_98 = arith.constant 3.200000e+01 : f32
    %199 = vector.broadcast %cst_98 : f32 to vector<1x8x1xf32>
    %200 = arith.divf %198, %199 : vector<1x8x1xf32>
    %201 = vector.broadcast %200 : vector<1x8x1xf32> to vector<1x8x32xf32>
    %202 = arith.subf %192, %201 : vector<1x8x32xf32>
    %203 = arith.mulf %202, %202 : vector<1x8x32xf32>
    %cst_99 = arith.constant dense<0.000000e+00> : vector<1x8xf32>
    %204 = vector.multi_reduction <add>, %203, %cst_99 [2] : vector<1x8x32xf32> to vector<1x8xf32>
    %205 = vector.shape_cast %204 : vector<1x8xf32> to vector<1x8x1xf32>
    %cst_100 = arith.constant 3.200000e+01 : f32
    %206 = vector.broadcast %cst_100 : f32 to vector<1x8x1xf32>
    %207 = arith.divf %205, %206 : vector<1x8x1xf32>
    %208 = vector.broadcast %200 : vector<1x8x1xf32> to vector<1x8x32xf32>
    %209 = arith.subf %192, %208 : vector<1x8x32xf32>
    %cst_101 = arith.constant 9.99999974E-6 : f32
    %210 = vector.broadcast %cst_101 : f32 to vector<1x8x1xf32>
    %211 = arith.addf %207, %210 : vector<1x8x1xf32>
    %212 = math.rsqrt %211 : vector<1x8x1xf32>
    %213 = vector.broadcast %212 : vector<1x8x1xf32> to vector<1x8x32xf32>
    %214 = arith.mulf %209, %213 : vector<1x8x32xf32>
    %215 = vector.shape_cast %194 : vector<1x32xf32> to vector<1x1x32xf32>
    %216 = vector.broadcast %215 : vector<1x1x32xf32> to vector<1x8x32xf32>
    %217 = arith.mulf %214, %216 : vector<1x8x32xf32>
    %218 = vector.shape_cast %196 : vector<1x32xf32> to vector<1x1x32xf32>
    %219 = vector.broadcast %218 : vector<1x1x32xf32> to vector<1x8x32xf32>
    %220 = arith.addf %217, %219 : vector<1x8x32xf32>
    %221 = vector.shape_cast %220 : vector<1x8x32xf32> to vector<8x32xf32>
    %222 = arith.truncf %221 : vector<8x32xf32> to vector<8x32xbf16>
    %c1 = arith.constant 1 : index
    %c0_102 = arith.constant 0 : index
    %c0_103 = arith.constant 0 : index
    %223 = vector.load %arg5[%c1, %c0_102, %c0_103] : memref<2x32x32xbf16, #tpu.memory_space<vmem>>, vector<1x32x32xbf16>
    %224 = vector.shape_cast %223 : vector<1x32x32xbf16> to vector<32x32xbf16>
    %c1_104 = arith.constant 1 : index
    %c0_105 = arith.constant 0 : index
    %c0_106 = arith.constant 0 : index
    %225 = vector.load %arg6[%c1_104, %c0_105, %c0_106] : memref<2x32x32xbf16, #tpu.memory_space<vmem>>, vector<1x32x32xbf16>
    %226 = vector.shape_cast %225 : vector<1x32x32xbf16> to vector<32x32xbf16>
    %c1_107 = arith.constant 1 : index
    %c0_108 = arith.constant 0 : index
    %c0_109 = arith.constant 0 : index
    %227 = vector.load %arg7[%c1_107, %c0_108, %c0_109] : memref<2x32x32xbf16, #tpu.memory_space<vmem>>, vector<1x32x32xbf16>
    %228 = vector.shape_cast %227 : vector<1x32x32xbf16> to vector<32x32xbf16>
    %c1_110 = arith.constant 1 : index
    %c0_111 = arith.constant 0 : index
    %c0_112 = arith.constant 0 : index
    %229 = vector.load %arg8[%c1_110, %c0_111, %c0_112] : memref<2x32x32xbf16, #tpu.memory_space<vmem>>, vector<1x32x32xbf16>
    %230 = vector.shape_cast %229 : vector<1x32x32xbf16> to vector<32x32xbf16>
    %cst_113 = arith.constant dense<0.000000e+00> : vector<8x32xf32>
    %231 = tpu.matmul %222, %224, %cst_113 {dimension_numbers = #tpu.dot_dimension_numbers<[1], [0], [0], [1], [0, 0, 1, 1], [], []>} : vector<8x32xbf16>, vector<32x32xbf16>, vector<8x32xf32> -> vector<8x32xf32>
    %cst_114 = arith.constant dense<0.000000e+00> : vector<8x32xf32>
    %232 = tpu.matmul %222, %226, %cst_114 {dimension_numbers = #tpu.dot_dimension_numbers<[1], [0], [0], [1], [0, 0, 1, 1], [], []>} : vector<8x32xbf16>, vector<32x32xbf16>, vector<8x32xf32> -> vector<8x32xf32>
    %cst_115 = arith.constant dense<0.000000e+00> : vector<8x32xf32>
    %233 = tpu.matmul %222, %228, %cst_115 {dimension_numbers = #tpu.dot_dimension_numbers<[1], [0], [0], [1], [0, 0, 1, 1], [], []>} : vector<8x32xbf16>, vector<32x32xbf16>, vector<8x32xf32> -> vector<8x32xf32>
    %234 = vector.shape_cast %231 : vector<8x32xf32> to vector<1x8x4x8xf32>
    %235 = tpu.transpose %234, [0, 2, 1, 3] : vector<1x8x4x8xf32> -> vector<1x4x8x8xf32>
    %236 = vector.shape_cast %235 : vector<1x4x8x8xf32> to vector<4x8x8xf32>
    %237 = arith.truncf %236 : vector<4x8x8xf32> to vector<4x8x8xbf16>
    %238 = vector.shape_cast %232 : vector<8x32xf32> to vector<1x8x4x8xf32>
    %239 = tpu.transpose %238, [0, 2, 1, 3] : vector<1x8x4x8xf32> -> vector<1x4x8x8xf32>
    %240 = vector.shape_cast %239 : vector<1x4x8x8xf32> to vector<4x8x8xf32>
    %241 = arith.truncf %240 : vector<4x8x8xf32> to vector<4x8x8xbf16>
    %242 = vector.shape_cast %233 : vector<8x32xf32> to vector<1x8x4x8xf32>
    %243 = tpu.transpose %242, [0, 2, 1, 3] : vector<1x8x4x8xf32> -> vector<1x4x8x8xf32>
    %244 = vector.shape_cast %243 : vector<1x4x8x8xf32> to vector<4x8x8xf32>
    %245 = arith.truncf %244 : vector<4x8x8xf32> to vector<4x8x8xbf16>
    %cst_116 = arith.constant dense<0.000000e+00> : vector<4x8x8xf32>
    %246 = tpu.matmul %237, %241, %cst_116 {dimension_numbers = #tpu.dot_dimension_numbers<[2], [2], [1], [1], [0, 0, 0, 1, 1, 1], [0], [0]>} : vector<4x8x8xbf16>, vector<4x8x8xbf16>, vector<4x8x8xf32> -> vector<4x8x8xf32>
    %cst_117 = arith.constant -1.000000e+09 : f32
    %247 = vector.shape_cast %10 : vector<4x8x1xi1> to vector<4x8x1xi1>
    %248 = vector.broadcast %247 : vector<4x8x1xi1> to vector<4x8x8xi1>
    %249 = vector.broadcast %cst_117 : f32 to vector<4x8x8xf32>
    %250 = arith.select %248, %249, %246 : vector<4x8x8xi1>, vector<4x8x8xf32>
    %cst_118 = arith.constant dense<0xFF800000> : vector<4x8xf32>
    %251 = vector.multi_reduction <maximumf>, %250, %cst_118 [2] : vector<4x8x8xf32> to vector<4x8xf32>
    %252 = vector.shape_cast %251 : vector<4x8xf32> to vector<4x8x1xf32>
    %253 = vector.broadcast %252 : vector<4x8x1xf32> to vector<4x8x8xf32>
    %254 = arith.subf %250, %253 : vector<4x8x8xf32>
    %255 = math.exp %254 : vector<4x8x8xf32>
    %cst_119 = arith.constant dense<0.000000e+00> : vector<4x8xf32>
    %256 = vector.multi_reduction <add>, %255, %cst_119 [2] : vector<4x8x8xf32> to vector<4x8xf32>
    %257 = vector.shape_cast %256 : vector<4x8xf32> to vector<4x8x1xf32>
    %258 = tpu.reciprocal %257 {approx = true} : vector<4x8x1xf32> -> vector<4x8x1xf32>
    %259 = vector.broadcast %258 : vector<4x8x1xf32> to vector<4x8x8xf32>
    %260 = arith.mulf %255, %259 : vector<4x8x8xf32>
    %261 = arith.truncf %260 : vector<4x8x8xf32> to vector<4x8x8xbf16>
    %cst_120 = arith.constant dense<0.000000e+00> : vector<4x8x8xf32>
    %262 = tpu.matmul %261, %245, %cst_120 {dimension_numbers = #tpu.dot_dimension_numbers<[2], [1], [1], [2], [0, 0, 0, 1, 1, 2], [0], [0]>} : vector<4x8x8xbf16>, vector<4x8x8xbf16>, vector<4x8x8xf32> -> vector<4x8x8xf32>
    %263 = vector.shape_cast %262 : vector<4x8x8xf32> to vector<1x4x8x8xf32>
    %264 = tpu.transpose %263, [0, 2, 1, 3] : vector<1x4x8x8xf32> -> vector<1x8x4x8xf32>
    %265 = vector.shape_cast %264 : vector<1x8x4x8xf32> to vector<8x32xf32>
    %266 = arith.truncf %265 : vector<8x32xf32> to vector<8x32xbf16>
    %cst_121 = arith.constant dense<0.000000e+00> : vector<8x32xf32>
    %267 = tpu.matmul %266, %230, %cst_121 {dimension_numbers = #tpu.dot_dimension_numbers<[1], [0], [0], [1], [0, 0, 1, 1], [], []>} : vector<8x32xbf16>, vector<32x32xbf16>, vector<8x32xf32> -> vector<8x32xf32>
    %268 = vector.shape_cast %267 : vector<8x32xf32> to vector<1x8x32xf32>
    %269 = arith.addf %220, %268 : vector<1x8x32xf32>
    %c1_122 = arith.constant 1 : index
    %c0_123 = arith.constant 0 : index
    %c0_124 = arith.constant 0 : index
    %270 = vector.load %arg17[%c1_122, %c0_123, %c0_124] : memref<2x1x32xf32, #tpu.memory_space<vmem>>, vector<1x1x32xf32>
    %271 = vector.shape_cast %270 : vector<1x1x32xf32> to vector<1x32xf32>
    %c1_125 = arith.constant 1 : index
    %c0_126 = arith.constant 0 : index
    %c0_127 = arith.constant 0 : index
    %272 = vector.load %arg18[%c1_125, %c0_126, %c0_127] : memref<2x1x32xf32, #tpu.memory_space<vmem>>, vector<1x1x32xf32>
    %273 = vector.shape_cast %272 : vector<1x1x32xf32> to vector<1x32xf32>
    %cst_128 = arith.constant dense<0.000000e+00> : vector<1x8xf32>
    %274 = vector.multi_reduction <add>, %269, %cst_128 [2] : vector<1x8x32xf32> to vector<1x8xf32>
    %275 = vector.shape_cast %274 : vector<1x8xf32> to vector<1x8x1xf32>
    %cst_129 = arith.constant 3.200000e+01 : f32
    %276 = vector.broadcast %cst_129 : f32 to vector<1x8x1xf32>
    %277 = arith.divf %275, %276 : vector<1x8x1xf32>
    %278 = vector.broadcast %277 : vector<1x8x1xf32> to vector<1x8x32xf32>
    %279 = arith.subf %269, %278 : vector<1x8x32xf32>
    %280 = arith.mulf %279, %279 : vector<1x8x32xf32>
    %cst_130 = arith.constant dense<0.000000e+00> : vector<1x8xf32>
    %281 = vector.multi_reduction <add>, %280, %cst_130 [2] : vector<1x8x32xf32> to vector<1x8xf32>
    %282 = vector.shape_cast %281 : vector<1x8xf32> to vector<1x8x1xf32>
    %cst_131 = arith.constant 3.200000e+01 : f32
    %283 = vector.broadcast %cst_131 : f32 to vector<1x8x1xf32>
    %284 = arith.divf %282, %283 : vector<1x8x1xf32>
    %285 = vector.broadcast %277 : vector<1x8x1xf32> to vector<1x8x32xf32>
    %286 = arith.subf %269, %285 : vector<1x8x32xf32>
    %cst_132 = arith.constant 9.99999974E-6 : f32
    %287 = vector.broadcast %cst_132 : f32 to vector<1x8x1xf32>
    %288 = arith.addf %284, %287 : vector<1x8x1xf32>
    %289 = math.rsqrt %288 : vector<1x8x1xf32>
    %290 = vector.broadcast %289 : vector<1x8x1xf32> to vector<1x8x32xf32>
    %291 = arith.mulf %286, %290 : vector<1x8x32xf32>
    %292 = vector.shape_cast %271 : vector<1x32xf32> to vector<1x1x32xf32>
    %293 = vector.broadcast %292 : vector<1x1x32xf32> to vector<1x8x32xf32>
    %294 = arith.mulf %291, %293 : vector<1x8x32xf32>
    %295 = vector.shape_cast %273 : vector<1x32xf32> to vector<1x1x32xf32>
    %296 = vector.broadcast %295 : vector<1x1x32xf32> to vector<1x8x32xf32>
    %297 = arith.addf %294, %296 : vector<1x8x32xf32>
    %298 = vector.shape_cast %297 : vector<1x8x32xf32> to vector<8x32xf32>
    %299 = arith.truncf %298 : vector<8x32xf32> to vector<8x32xbf16>
    %c1_133 = arith.constant 1 : index
    %c0_134 = arith.constant 0 : index
    %c0_135 = arith.constant 0 : index
    %300 = vector.load %arg9[%c1_133, %c0_134, %c0_135] : memref<2x32x32xbf16, #tpu.memory_space<vmem>>, vector<1x32x32xbf16>
    %301 = vector.shape_cast %300 : vector<1x32x32xbf16> to vector<32x32xbf16>
    %c1_136 = arith.constant 1 : index
    %c0_137 = arith.constant 0 : index
    %c0_138 = arith.constant 0 : index
    %302 = vector.load %arg10[%c1_136, %c0_137, %c0_138] : memref<2x32x32xbf16, #tpu.memory_space<vmem>>, vector<1x32x32xbf16>
    %303 = vector.shape_cast %302 : vector<1x32x32xbf16> to vector<32x32xbf16>
    %c1_139 = arith.constant 1 : index
    %c0_140 = arith.constant 0 : index
    %c0_141 = arith.constant 0 : index
    %304 = vector.load %arg11[%c1_139, %c0_140, %c0_141] : memref<2x32x32xbf16, #tpu.memory_space<vmem>>, vector<1x32x32xbf16>
    %305 = vector.shape_cast %304 : vector<1x32x32xbf16> to vector<32x32xbf16>
    %c1_142 = arith.constant 1 : index
    %c0_143 = arith.constant 0 : index
    %c0_144 = arith.constant 0 : index
    %306 = vector.load %arg12[%c1_142, %c0_143, %c0_144] : memref<2x32x32xbf16, #tpu.memory_space<vmem>>, vector<1x32x32xbf16>
    %307 = vector.shape_cast %306 : vector<1x32x32xbf16> to vector<32x32xbf16>
    %cst_145 = arith.constant dense<0.000000e+00> : vector<8x32xf32>
    %308 = tpu.matmul %299, %301, %cst_145 {dimension_numbers = #tpu.dot_dimension_numbers<[1], [0], [0], [1], [0, 0, 1, 1], [], []>} : vector<8x32xbf16>, vector<32x32xbf16>, vector<8x32xf32> -> vector<8x32xf32>
    %cst_146 = arith.constant dense<0.000000e+00> : vector<8x32xf32>
    %309 = tpu.matmul %3, %303, %cst_146 {dimension_numbers = #tpu.dot_dimension_numbers<[1], [0], [0], [1], [0, 0, 1, 1], [], []>} : vector<8x32xbf16>, vector<32x32xbf16>, vector<8x32xf32> -> vector<8x32xf32>
    %cst_147 = arith.constant dense<0.000000e+00> : vector<8x32xf32>
    %310 = tpu.matmul %3, %305, %cst_147 {dimension_numbers = #tpu.dot_dimension_numbers<[1], [0], [0], [1], [0, 0, 1, 1], [], []>} : vector<8x32xbf16>, vector<32x32xbf16>, vector<8x32xf32> -> vector<8x32xf32>
    %311 = vector.shape_cast %308 : vector<8x32xf32> to vector<1x8x4x8xf32>
    %312 = tpu.transpose %311, [0, 2, 1, 3] : vector<1x8x4x8xf32> -> vector<1x4x8x8xf32>
    %313 = vector.shape_cast %312 : vector<1x4x8x8xf32> to vector<4x8x8xf32>
    %314 = arith.truncf %313 : vector<4x8x8xf32> to vector<4x8x8xbf16>
    %315 = vector.shape_cast %309 : vector<8x32xf32> to vector<1x8x4x8xf32>
    %316 = tpu.transpose %315, [0, 2, 1, 3] : vector<1x8x4x8xf32> -> vector<1x4x8x8xf32>
    %317 = vector.shape_cast %316 : vector<1x4x8x8xf32> to vector<4x8x8xf32>
    %318 = arith.truncf %317 : vector<4x8x8xf32> to vector<4x8x8xbf16>
    %319 = vector.shape_cast %310 : vector<8x32xf32> to vector<1x8x4x8xf32>
    %320 = tpu.transpose %319, [0, 2, 1, 3] : vector<1x8x4x8xf32> -> vector<1x4x8x8xf32>
    %321 = vector.shape_cast %320 : vector<1x4x8x8xf32> to vector<4x8x8xf32>
    %322 = arith.truncf %321 : vector<4x8x8xf32> to vector<4x8x8xbf16>
    %cst_148 = arith.constant dense<0.000000e+00> : vector<4x8x8xf32>
    %323 = tpu.matmul %314, %318, %cst_148 {dimension_numbers = #tpu.dot_dimension_numbers<[2], [2], [1], [1], [0, 0, 0, 1, 1, 1], [0], [0]>} : vector<4x8x8xbf16>, vector<4x8x8xbf16>, vector<4x8x8xf32> -> vector<4x8x8xf32>
    %cst_149 = arith.constant -1.000000e+09 : f32
    %324 = vector.shape_cast %17 : vector<4x8x1xi1> to vector<4x8x1xi1>
    %325 = vector.broadcast %324 : vector<4x8x1xi1> to vector<4x8x8xi1>
    %326 = vector.broadcast %cst_149 : f32 to vector<4x8x8xf32>
    %327 = arith.select %325, %326, %323 : vector<4x8x8xi1>, vector<4x8x8xf32>
    %cst_150 = arith.constant dense<0xFF800000> : vector<4x8xf32>
    %328 = vector.multi_reduction <maximumf>, %327, %cst_150 [2] : vector<4x8x8xf32> to vector<4x8xf32>
    %329 = vector.shape_cast %328 : vector<4x8xf32> to vector<4x8x1xf32>
    %330 = vector.broadcast %329 : vector<4x8x1xf32> to vector<4x8x8xf32>
    %331 = arith.subf %327, %330 : vector<4x8x8xf32>
    %332 = math.exp %331 : vector<4x8x8xf32>
    %cst_151 = arith.constant dense<0.000000e+00> : vector<4x8xf32>
    %333 = vector.multi_reduction <add>, %332, %cst_151 [2] : vector<4x8x8xf32> to vector<4x8xf32>
    %334 = vector.shape_cast %333 : vector<4x8xf32> to vector<4x8x1xf32>
    %335 = tpu.reciprocal %334 {approx = true} : vector<4x8x1xf32> -> vector<4x8x1xf32>
    %336 = vector.broadcast %335 : vector<4x8x1xf32> to vector<4x8x8xf32>
    %337 = arith.mulf %332, %336 : vector<4x8x8xf32>
    %338 = arith.truncf %337 : vector<4x8x8xf32> to vector<4x8x8xbf16>
    %cst_152 = arith.constant dense<0.000000e+00> : vector<4x8x8xf32>
    %339 = tpu.matmul %338, %322, %cst_152 {dimension_numbers = #tpu.dot_dimension_numbers<[2], [1], [1], [2], [0, 0, 0, 1, 1, 2], [0], [0]>} : vector<4x8x8xbf16>, vector<4x8x8xbf16>, vector<4x8x8xf32> -> vector<4x8x8xf32>
    %340 = vector.shape_cast %339 : vector<4x8x8xf32> to vector<1x4x8x8xf32>
    %341 = tpu.transpose %340, [0, 2, 1, 3] : vector<1x4x8x8xf32> -> vector<1x8x4x8xf32>
    %342 = vector.shape_cast %341 : vector<1x8x4x8xf32> to vector<8x32xf32>
    %343 = arith.truncf %342 : vector<8x32xf32> to vector<8x32xbf16>
    %cst_153 = arith.constant dense<0.000000e+00> : vector<8x32xf32>
    %344 = tpu.matmul %343, %307, %cst_153 {dimension_numbers = #tpu.dot_dimension_numbers<[1], [0], [0], [1], [0, 0, 1, 1], [], []>} : vector<8x32xbf16>, vector<32x32xbf16>, vector<8x32xf32> -> vector<8x32xf32>
    %345 = vector.shape_cast %344 : vector<8x32xf32> to vector<1x8x32xf32>
    %346 = arith.addf %297, %345 : vector<1x8x32xf32>
    %c1_154 = arith.constant 1 : index
    %c0_155 = arith.constant 0 : index
    %c0_156 = arith.constant 0 : index
    %347 = vector.load %arg19[%c1_154, %c0_155, %c0_156] : memref<2x1x32xf32, #tpu.memory_space<vmem>>, vector<1x1x32xf32>
    %348 = vector.shape_cast %347 : vector<1x1x32xf32> to vector<1x32xf32>
    %c1_157 = arith.constant 1 : index
    %c0_158 = arith.constant 0 : index
    %c0_159 = arith.constant 0 : index
    %349 = vector.load %arg20[%c1_157, %c0_158, %c0_159] : memref<2x1x32xf32, #tpu.memory_space<vmem>>, vector<1x1x32xf32>
    %350 = vector.shape_cast %349 : vector<1x1x32xf32> to vector<1x32xf32>
    %cst_160 = arith.constant dense<0.000000e+00> : vector<1x8xf32>
    %351 = vector.multi_reduction <add>, %346, %cst_160 [2] : vector<1x8x32xf32> to vector<1x8xf32>
    %352 = vector.shape_cast %351 : vector<1x8xf32> to vector<1x8x1xf32>
    %cst_161 = arith.constant 3.200000e+01 : f32
    %353 = vector.broadcast %cst_161 : f32 to vector<1x8x1xf32>
    %354 = arith.divf %352, %353 : vector<1x8x1xf32>
    %355 = vector.broadcast %354 : vector<1x8x1xf32> to vector<1x8x32xf32>
    %356 = arith.subf %346, %355 : vector<1x8x32xf32>
    %357 = arith.mulf %356, %356 : vector<1x8x32xf32>
    %cst_162 = arith.constant dense<0.000000e+00> : vector<1x8xf32>
    %358 = vector.multi_reduction <add>, %357, %cst_162 [2] : vector<1x8x32xf32> to vector<1x8xf32>
    %359 = vector.shape_cast %358 : vector<1x8xf32> to vector<1x8x1xf32>
    %cst_163 = arith.constant 3.200000e+01 : f32
    %360 = vector.broadcast %cst_163 : f32 to vector<1x8x1xf32>
    %361 = arith.divf %359, %360 : vector<1x8x1xf32>
    %362 = vector.broadcast %354 : vector<1x8x1xf32> to vector<1x8x32xf32>
    %363 = arith.subf %346, %362 : vector<1x8x32xf32>
    %cst_164 = arith.constant 9.99999974E-6 : f32
    %364 = vector.broadcast %cst_164 : f32 to vector<1x8x1xf32>
    %365 = arith.addf %361, %364 : vector<1x8x1xf32>
    %366 = math.rsqrt %365 : vector<1x8x1xf32>
    %367 = vector.broadcast %366 : vector<1x8x1xf32> to vector<1x8x32xf32>
    %368 = arith.mulf %363, %367 : vector<1x8x32xf32>
    %369 = vector.shape_cast %348 : vector<1x32xf32> to vector<1x1x32xf32>
    %370 = vector.broadcast %369 : vector<1x1x32xf32> to vector<1x8x32xf32>
    %371 = arith.mulf %368, %370 : vector<1x8x32xf32>
    %372 = vector.shape_cast %350 : vector<1x32xf32> to vector<1x1x32xf32>
    %373 = vector.broadcast %372 : vector<1x1x32xf32> to vector<1x8x32xf32>
    %374 = arith.addf %371, %373 : vector<1x8x32xf32>
    %375 = vector.shape_cast %374 : vector<1x8x32xf32> to vector<8x32xf32>
    %376 = arith.truncf %375 : vector<8x32xf32> to vector<8x32xbf16>
    %c1_165 = arith.constant 1 : index
    %c0_166 = arith.constant 0 : index
    %c0_167 = arith.constant 0 : index
    %377 = vector.load %arg13[%c1_165, %c0_166, %c0_167] : memref<2x32x64xbf16, #tpu.memory_space<vmem>>, vector<1x32x64xbf16>
    %378 = vector.shape_cast %377 : vector<1x32x64xbf16> to vector<32x64xbf16>
    %cst_168 = arith.constant dense<0.000000e+00> : vector<8x64xf32>
    %379 = tpu.matmul %376, %378, %cst_168 {dimension_numbers = #tpu.dot_dimension_numbers<[1], [0], [0], [1], [0, 0, 1, 1], [], []>} : vector<8x32xbf16>, vector<32x64xbf16>, vector<8x64xf32> -> vector<8x64xf32>
    %c1_169 = arith.constant 1 : index
    %c0_170 = arith.constant 0 : index
    %c0_171 = arith.constant 0 : index
    %380 = vector.load %arg14[%c1_169, %c0_170, %c0_171] : memref<2x1x64xf32, #tpu.memory_space<vmem>>, vector<1x1x64xf32>
    %381 = vector.shape_cast %380 : vector<1x1x64xf32> to vector<1x64xf32>
    %382 = vector.broadcast %381 : vector<1x64xf32> to vector<8x64xf32>
    %383 = arith.addf %379, %382 : vector<8x64xf32>
    %cst_172 = arith.constant 0.000000e+00 : f32
    %384 = vector.broadcast %cst_172 : f32 to vector<8x64xf32>
    %385 = arith.maximumf %383, %384 : vector<8x64xf32>
    %386 = arith.truncf %385 : vector<8x64xf32> to vector<8x64xbf16>
    %c1_173 = arith.constant 1 : index
    %c0_174 = arith.constant 0 : index
    %c0_175 = arith.constant 0 : index
    %387 = vector.load %arg15[%c1_173, %c0_174, %c0_175] : memref<2x64x32xbf16, #tpu.memory_space<vmem>>, vector<1x64x32xbf16>
    %388 = vector.shape_cast %387 : vector<1x64x32xbf16> to vector<64x32xbf16>
    %cst_176 = arith.constant dense<0.000000e+00> : vector<8x32xf32>
    %389 = tpu.matmul %386, %388, %cst_176 {dimension_numbers = #tpu.dot_dimension_numbers<[1], [0], [0], [1], [0, 0, 1, 1], [], []>} : vector<8x64xbf16>, vector<64x32xbf16>, vector<8x32xf32> -> vector<8x32xf32>
    %c1_177 = arith.constant 1 : index
    %c0_178 = arith.constant 0 : index
    %c0_179 = arith.constant 0 : index
    %390 = vector.load %arg16[%c1_177, %c0_178, %c0_179] : memref<2x1x32xf32, #tpu.memory_space<vmem>>, vector<1x1x32xf32>
    %391 = vector.shape_cast %390 : vector<1x1x32xf32> to vector<1x32xf32>
    %392 = vector.broadcast %391 : vector<1x32xf32> to vector<8x32xf32>
    %393 = arith.addf %389, %392 : vector<8x32xf32>
    %394 = vector.shape_cast %393 : vector<8x32xf32> to vector<1x8x32xf32>
    %395 = arith.addf %374, %394 : vector<1x8x32xf32>
    %c1_180 = arith.constant 1 : index
    %c0_181 = arith.constant 0 : index
    %c0_182 = arith.constant 0 : index
    %396 = vector.load %arg21[%c1_180, %c0_181, %c0_182] : memref<2x1x32xf32, #tpu.memory_space<vmem>>, vector<1x1x32xf32>
    %397 = vector.shape_cast %396 : vector<1x1x32xf32> to vector<1x32xf32>
    %c1_183 = arith.constant 1 : index
    %c0_184 = arith.constant 0 : index
    %c0_185 = arith.constant 0 : index
    %398 = vector.load %arg22[%c1_183, %c0_184, %c0_185] : memref<2x1x32xf32, #tpu.memory_space<vmem>>, vector<1x1x32xf32>
    %399 = vector.shape_cast %398 : vector<1x1x32xf32> to vector<1x32xf32>
    %cst_186 = arith.constant dense<0.000000e+00> : vector<1x8xf32>
    %400 = vector.multi_reduction <add>, %395, %cst_186 [2] : vector<1x8x32xf32> to vector<1x8xf32>
    %401 = vector.shape_cast %400 : vector<1x8xf32> to vector<1x8x1xf32>
    %cst_187 = arith.constant 3.200000e+01 : f32
    %402 = vector.broadcast %cst_187 : f32 to vector<1x8x1xf32>
    %403 = arith.divf %401, %402 : vector<1x8x1xf32>
    %404 = vector.broadcast %403 : vector<1x8x1xf32> to vector<1x8x32xf32>
    %405 = arith.subf %395, %404 : vector<1x8x32xf32>
    %406 = arith.mulf %405, %405 : vector<1x8x32xf32>
    %cst_188 = arith.constant dense<0.000000e+00> : vector<1x8xf32>
    %407 = vector.multi_reduction <add>, %406, %cst_188 [2] : vector<1x8x32xf32> to vector<1x8xf32>
    %408 = vector.shape_cast %407 : vector<1x8xf32> to vector<1x8x1xf32>
    %cst_189 = arith.constant 3.200000e+01 : f32
    %409 = vector.broadcast %cst_189 : f32 to vector<1x8x1xf32>
    %410 = arith.divf %408, %409 : vector<1x8x1xf32>
    %411 = vector.broadcast %403 : vector<1x8x1xf32> to vector<1x8x32xf32>
    %412 = arith.subf %395, %411 : vector<1x8x32xf32>
    %cst_190 = arith.constant 9.99999974E-6 : f32
    %413 = vector.broadcast %cst_190 : f32 to vector<1x8x1xf32>
    %414 = arith.addf %410, %413 : vector<1x8x1xf32>
    %415 = math.rsqrt %414 : vector<1x8x1xf32>
    %416 = vector.broadcast %415 : vector<1x8x1xf32> to vector<1x8x32xf32>
    %417 = arith.mulf %412, %416 : vector<1x8x32xf32>
    %418 = vector.shape_cast %397 : vector<1x32xf32> to vector<1x1x32xf32>
    %419 = vector.broadcast %418 : vector<1x1x32xf32> to vector<1x8x32xf32>
    %420 = arith.mulf %417, %419 : vector<1x8x32xf32>
    %421 = vector.shape_cast %399 : vector<1x32xf32> to vector<1x1x32xf32>
    %422 = vector.broadcast %421 : vector<1x1x32xf32> to vector<1x8x32xf32>
    %423 = arith.addf %420, %422 : vector<1x8x32xf32>
    %c0_191 = arith.constant 0 : index
    %c0_192 = arith.constant 0 : index
    %424 = vector.load %arg23[%c0_191, %c0_192] : memref<1x32xf32, #tpu.memory_space<vmem>>, vector<1x32xf32>
    %c0_193 = arith.constant 0 : index
    %c0_194 = arith.constant 0 : index
    %425 = vector.load %arg24[%c0_193, %c0_194] : memref<1x32xf32, #tpu.memory_space<vmem>>, vector<1x32xf32>
    %cst_195 = arith.constant dense<0.000000e+00> : vector<1x8xf32>
    %426 = vector.multi_reduction <add>, %423, %cst_195 [2] : vector<1x8x32xf32> to vector<1x8xf32>
    %427 = vector.shape_cast %426 : vector<1x8xf32> to vector<1x8x1xf32>
    %cst_196 = arith.constant 3.200000e+01 : f32
    %428 = vector.broadcast %cst_196 : f32 to vector<1x8x1xf32>
    %429 = arith.divf %427, %428 : vector<1x8x1xf32>
    %430 = vector.broadcast %429 : vector<1x8x1xf32> to vector<1x8x32xf32>
    %431 = arith.subf %423, %430 : vector<1x8x32xf32>
    %432 = arith.mulf %431, %431 : vector<1x8x32xf32>
    %cst_197 = arith.constant dense<0.000000e+00> : vector<1x8xf32>
    %433 = vector.multi_reduction <add>, %432, %cst_197 [2] : vector<1x8x32xf32> to vector<1x8xf32>
    %434 = vector.shape_cast %433 : vector<1x8xf32> to vector<1x8x1xf32>
    %cst_198 = arith.constant 3.200000e+01 : f32
    %435 = vector.broadcast %cst_198 : f32 to vector<1x8x1xf32>
    %436 = arith.divf %434, %435 : vector<1x8x1xf32>
    %437 = vector.broadcast %429 : vector<1x8x1xf32> to vector<1x8x32xf32>
    %438 = arith.subf %423, %437 : vector<1x8x32xf32>
    %cst_199 = arith.constant 9.99999974E-6 : f32
    %439 = vector.broadcast %cst_199 : f32 to vector<1x8x1xf32>
    %440 = arith.addf %436, %439 : vector<1x8x1xf32>
    %441 = math.rsqrt %440 : vector<1x8x1xf32>
    %442 = vector.broadcast %441 : vector<1x8x1xf32> to vector<1x8x32xf32>
    %443 = arith.mulf %438, %442 : vector<1x8x32xf32>
    %444 = vector.shape_cast %424 : vector<1x32xf32> to vector<1x1x32xf32>
    %445 = vector.broadcast %444 : vector<1x1x32xf32> to vector<1x8x32xf32>
    %446 = arith.mulf %443, %445 : vector<1x8x32xf32>
    %447 = vector.shape_cast %425 : vector<1x32xf32> to vector<1x1x32xf32>
    %448 = vector.broadcast %447 : vector<1x1x32xf32> to vector<1x8x32xf32>
    %449 = arith.addf %446, %448 : vector<1x8x32xf32>
    %c0_200 = arith.constant 0 : index
    %c0_201 = arith.constant 0 : index
    %c0_202 = arith.constant 0 : index
    %450 = vector.load %arg25[%c0_200, %c0_201, %c0_202] : memref<1x8x32xf32, #tpu.memory_space<vmem>>, vector<1x8x32xf32>
    tpu.vector_store %arg25[%c0_200, %c0_201, %c0_202], %449 {strides = array<i32>} : memref<1x8x32xf32, #tpu.memory_space<vmem>>, vector<1x8x32xf32>,
    return
  }
  func.func @transform_0(%arg0: i32) -> (i32, i32, i32) {
    %c0_i32 = arith.constant 0 : i32
    %c0_i32_0 = arith.constant 0 : i32
    %c0_i32_1 = arith.constant 0 : i32
    return %arg0, %c0_i32, %c0_i32_0 : i32, i32, i32
  }
  func.func @transform_1(%arg0: i32) -> (i32, i32, i32) {
    %c0_i32 = arith.constant 0 : i32
    %c0_i32_0 = arith.constant 0 : i32
    %c0_i32_1 = arith.constant 0 : i32
    return %arg0, %c0_i32, %c0_i32_0 : i32, i32, i32
  }
  func.func @transform_2(%arg0: i32) -> (i32, i32, i32) {
    %c0_i32 = arith.constant 0 : i32
    %c0_i32_0 = arith.constant 0 : i32
    %c0_i32_1 = arith.constant 0 : i32
    return %arg0, %c0_i32, %c0_i32_0 : i32, i32, i32
  }
  func.func @transform_3(%arg0: i32) -> (i32, i32, i32) {
    %c0_i32 = arith.constant 0 : i32
    %c0_i32_0 = arith.constant 0 : i32
    %c0_i32_1 = arith.constant 0 : i32
    return %arg0, %c0_i32, %c0_i32_0 : i32, i32, i32
  }
  func.func @transform_4(%arg0: i32) -> (i32, i32, i32) {
    %c0_i32 = arith.constant 0 : i32
    %c0_i32_0 = arith.constant 0 : i32
    %c0_i32_1 = arith.constant 0 : i32
    %c0_i32_2 = arith.constant 0 : i32
    return %c0_i32, %c0_i32_0, %c0_i32_1 : i32, i32, i32
  }
  func.func @transform_5(%arg0: i32) -> (i32, i32, i32) {
    %c0_i32 = arith.constant 0 : i32
    %c0_i32_0 = arith.constant 0 : i32
    %c0_i32_1 = arith.constant 0 : i32
    %c0_i32_2 = arith.constant 0 : i32
    return %c0_i32, %c0_i32_0, %c0_i32_1 : i32, i32, i32
  }
  func.func @transform_6(%arg0: i32) -> (i32, i32, i32) {
    %c0_i32 = arith.constant 0 : i32
    %c0_i32_0 = arith.constant 0 : i32
    %c0_i32_1 = arith.constant 0 : i32
    %c0_i32_2 = arith.constant 0 : i32
    return %c0_i32, %c0_i32_0, %c0_i32_1 : i32, i32, i32
  }
  func.func @transform_7(%arg0: i32) -> (i32, i32, i32) {
    %c0_i32 = arith.constant 0 : i32
    %c0_i32_0 = arith.constant 0 : i32
    %c0_i32_1 = arith.constant 0 : i32
    %c0_i32_2 = arith.constant 0 : i32
    return %c0_i32, %c0_i32_0, %c0_i32_1 : i32, i32, i32
  }
  func.func @transform_8(%arg0: i32) -> (i32, i32, i32) {
    %c0_i32 = arith.constant 0 : i32
    %c0_i32_0 = arith.constant 0 : i32
    %c0_i32_1 = arith.constant 0 : i32
    %c0_i32_2 = arith.constant 0 : i32
    return %c0_i32, %c0_i32_0, %c0_i32_1 : i32, i32, i32
  }
  func.func @transform_9(%arg0: i32) -> (i32, i32, i32) {
    %c0_i32 = arith.constant 0 : i32
    %c0_i32_0 = arith.constant 0 : i32
    %c0_i32_1 = arith.constant 0 : i32
    %c0_i32_2 = arith.constant 0 : i32
    return %c0_i32, %c0_i32_0, %c0_i32_1 : i32, i32, i32
  }
  func.func @transform_10(%arg0: i32) -> (i32, i32, i32) {
    %c0_i32 = arith.constant 0 : i32
    %c0_i32_0 = arith.constant 0 : i32
    %c0_i32_1 = arith.constant 0 : i32
    %c0_i32_2 = arith.constant 0 : i32
    return %c0_i32, %c0_i32_0, %c0_i32_1 : i32, i32, i32
  }
  func.func @transform_11(%arg0: i32) -> (i32, i32, i32) {
    %c0_i32 = arith.constant 0 : i32
    %c0_i32_0 = arith.constant 0 : i32
    %c0_i32_1 = arith.constant 0 : i32
    %c0_i32_2 = arith.constant 0 : i32
    return %c0_i32, %c0_i32_0, %c0_i32_1 : i32, i32, i32
  }
  func.func @transform_12(%arg0: i32) -> (i32, i32, i32) {
    %c0_i32 = arith.constant 0 : i32
    %c0_i32_0 = arith.constant 0 : i32
    %c0_i32_1 = arith.constant 0 : i32
    %c0_i32_2 = arith.constant 0 : i32
    return %c0_i32, %c0_i32_0, %c0_i32_1 : i32, i32, i32
  }
  func.func @transform_13(%arg0: i32) -> (i32, i32, i32) {
    %c0_i32 = arith.constant 0 : i32
    %c0_i32_0 = arith.constant 0 : i32
    %c0_i32_1 = arith.constant 0 : i32
    %c0_i32_2 = arith.constant 0 : i32
    return %c0_i32, %c0_i32_0, %c0_i32_1 : i32, i32, i32
  }
  func.func @transform_14(%arg0: i32) -> (i32, i32, i32) {
    %c0_i32 = arith.constant 0 : i32
    %c0_i32_0 = arith.constant 0 : i32
    %c0_i32_1 = arith.constant 0 : i32
    %c0_i32_2 = arith.constant 0 : i32
    return %c0_i32, %c0_i32_0, %c0_i32_1 : i32, i32, i32
  }
  func.func @transform_15(%arg0: i32) -> (i32, i32, i32) {
    %c0_i32 = arith.constant 0 : i32
    %c0_i32_0 = arith.constant 0 : i32
    %c0_i32_1 = arith.constant 0 : i32
    %c0_i32_2 = arith.constant 0 : i32
    return %c0_i32, %c0_i32_0, %c0_i32_1 : i32, i32, i32
  }
  func.func @transform_16(%arg0: i32) -> (i32, i32, i32) {
    %c0_i32 = arith.constant 0 : i32
    %c0_i32_0 = arith.constant 0 : i32
    %c0_i32_1 = arith.constant 0 : i32
    %c0_i32_2 = arith.constant 0 : i32
    return %c0_i32, %c0_i32_0, %c0_i32_1 : i32, i32, i32
  }
  func.func @transform_17(%arg0: i32) -> (i32, i32, i32) {
    %c0_i32 = arith.constant 0 : i32
    %c0_i32_0 = arith.constant 0 : i32
    %c0_i32_1 = arith.constant 0 : i32
    %c0_i32_2 = arith.constant 0 : i32
    return %c0_i32, %c0_i32_0, %c0_i32_1 : i32, i32, i32
  }
  func.func @transform_18(%arg0: i32) -> (i32, i32, i32) {
    %c0_i32 = arith.constant 0 : i32
    %c0_i32_0 = arith.constant 0 : i32
    %c0_i32_1 = arith.constant 0 : i32
    %c0_i32_2 = arith.constant 0 : i32
    return %c0_i32, %c0_i32_0, %c0_i32_1 : i32, i32, i32
  }
  func.func @transform_19(%arg0: i32) -> (i32, i32, i32) {
    %c0_i32 = arith.constant 0 : i32
    %c0_i32_0 = arith.constant 0 : i32
    %c0_i32_1 = arith.constant 0 : i32
    %c0_i32_2 = arith.constant 0 : i32
    return %c0_i32, %c0_i32_0, %c0_i32_1 : i32, i32, i32
  }
  func.func @transform_20(%arg0: i32) -> (i32, i32, i32) {
    %c0_i32 = arith.constant 0 : i32
    %c0_i32_0 = arith.constant 0 : i32
    %c0_i32_1 = arith.constant 0 : i32
    %c0_i32_2 = arith.constant 0 : i32
    return %c0_i32, %c0_i32_0, %c0_i32_1 : i32, i32, i32
  }
  func.func @transform_21(%arg0: i32) -> (i32, i32, i32) {
    %c0_i32 = arith.constant 0 : i32
    %c0_i32_0 = arith.constant 0 : i32
    %c0_i32_1 = arith.constant 0 : i32
    %c0_i32_2 = arith.constant 0 : i32
    return %c0_i32, %c0_i32_0, %c0_i32_1 : i32, i32, i32
  }
  func.func @transform_22(%arg0: i32) -> (i32, i32) {
    %c0_i32 = arith.constant 0 : i32
    %c0_i32_0 = arith.constant 0 : i32
    %c0_i32_1 = arith.constant 0 : i32
    return %c0_i32, %c0_i32_0 : i32, i32
  }
  func.func @transform_23(%arg0: i32) -> (i32, i32) {
    %c0_i32 = arith.constant 0 : i32
    %c0_i32_0 = arith.constant 0 : i32
    %c0_i32_1 = arith.constant 0 : i32
    return %c0_i32, %c0_i32_0 : i32, i32
  }
  func.func @transform_24(%arg0: i32) -> (i32, i32, i32) {
    %c0_i32 = arith.constant 0 : i32
    %c0_i32_0 = arith.constant 0 : i32
    %c0_i32_1 = arith.constant 0 : i32
    return %arg0, %c0_i32, %c0_i32_0 : i32, i32, i32
  }
}

</mosaic_0001>

<llo_original>
// kernel: tpu_custom_call.1
$region0: #{tpu_custom_call.1}
  #allocation0 [shape = 'u32[]', space=smem, size = 0x4, offset = 0x4, fixed_abs, tag = 'smem constant byte address 0x4 - core index']
  #allocation1 [shape = 'u32[144,128]{1,0:T(1,128)}', space=vmem, size = 0x12000, scoped, tag = 'internal scratch']
  %s0 = inlined_call_operand.hbm [shape: f32[2,8,32], index: 0, kind: input, shape index: {}]
  %s1 = inlined_call_operand.hbm [shape: f32[2,8,32], index: 1, kind: input, shape index: {}]
  %s2 = inlined_call_operand.vmem [shape: f32[2,8,1], index: 2, kind: input, shape index: {}]
  %s3 = inlined_call_operand.vmem [shape: f32[2,8,1], index: 3, kind: input, shape index: {}]
  %s4 = inlined_call_operand.vmem [shape: bf16[2,32,32], index: 4, kind: input, shape index: {}]
  %s5 = inlined_call_operand.vmem [shape: bf16[2,32,32], index: 5, kind: input, shape index: {}]
  %s6 = inlined_call_operand.vmem [shape: bf16[2,32,32], index: 6, kind: input, shape index: {}]
  %s7 = inlined_call_operand.vmem [shape: bf16[2,32,32], index: 7, kind: input, shape index: {}]
  %s8 = inlined_call_operand.vmem [shape: bf16[2,32,32], index: 8, kind: input, shape index: {}]
  %s9 = inlined_call_operand.hbm [shape: bf16[2,32,32], index: 9, kind: input, shape index: {}]
  %s10 = inlined_call_operand.hbm [shape: bf16[2,32,32], index: 10, kind: input, shape index: {}]
  %s11 = inlined_call_operand.hbm [shape: bf16[2,32,32], index: 11, kind: input, shape index: {}]
  %s12 = inlined_call_operand.hbm [shape: bf16[2,32,64], index: 12, kind: input, shape index: {}]
  %s13 = inlined_call_operand.vmem [shape: f32[2,1,64], index: 13, kind: input, shape index: {}]
  %s14 = inlined_call_operand.vmem [shape: bf16[2,64,32], index: 14, kind: input, shape index: {}]
  %s15 = inlined_call_operand.vmem [shape: f32[2,1,32], index: 15, kind: input, shape index: {}]
  %s16 = inlined_call_operand.vmem [shape: f32[2,1,32], index: 16, kind: input, shape index: {}]
  %s17 = inlined_call_operand.vmem [shape: f32[2,1,32], index: 17, kind: input, shape index: {}]
  %s18 = inlined_call_operand.vmem [shape: f32[2,1,32], index: 18, kind: input, shape index: {}]
  %s19 = inlined_call_operand.vmem [shape: f32[2,1,32], index: 19, kind: input, shape index: {}]
  %s20 = inlined_call_operand.vmem [shape: f32[2,1,32], index: 20, kind: input, shape index: {}]
  %s21 = inlined_call_operand.vmem [shape: f32[2,1,32], index: 21, kind: input, shape index: {}]
  %s22 = inlined_call_operand.vmem [shape: f32[1,32], index: 22, kind: input, shape index: {}]
  %s23 = inlined_call_operand.vmem [shape: f32[1,32], index: 23, kind: input, shape index: {}]
  %s24 = inlined_call_operand.hbm [shape: f32[2,8,32], index: 24, kind: output, shape index: {}]
  %s25 = sld [smem:[#allocation0]]
  $region153: #{tpu_custom_call.1} parent=0
    _
  %s27 = ssub.s32 1, %s25
  %s28 = scalar_select 0, %s27, %s25
  $region1: #{tpu_custom_call.1} parent=0
    #allocation2 [shape = 'u8[8192]{0}', space=vmem, size = 0x2000, scoped, tag = 'input window, operand 0']
    #allocation3 [shape = 's32[2]{0}', space=sflag, size = 0x8, scoped, tag = 'scoped memory for tpu_custom_call.1']
    #allocation4 [shape = 's32[2]{0}', space=sflag, size = 0x8, scoped, tag = 'scoped memory for tpu_custom_call.1']
    #allocation5 [shape = 'u8[8192]{0}', space=vmem, size = 0x2000, scoped, tag = 'input window, operand 1']
    #allocation6 [shape = 's32[2]{0}', space=sflag, size = 0x8, scoped, tag = 'scoped memory for tpu_custom_call.1']
    #allocation7 [shape = 'u8[16384]{0}', space=vmem, size = 0x4000, scoped, tag = 'input window, operand 9, single buffered']
    #allocation8 [shape = 'u8[16384]{0}', space=vmem, size = 0x4000, scoped, tag = 'input window, operand 10, single buffered']
    #allocation9 [shape = 's32[1]{0}', space=sflag, size = 0x4, scoped, tag = 'scoped memory for tpu_custom_call.1']
    #allocation10 [shape = 'u8[16384]{0}', space=vmem, size = 0x4000, scoped, tag = 'input window, operand 11, single buffered']
    #allocation11 [shape = 'u8[16384]{0}', space=vmem, size = 0x4000, scoped, tag = 'input window, operand 12, single buffered']
    #allocation12 [shape = 's32[1]{0}', space=sflag, size = 0x4, scoped, tag = 'scoped memory for tpu_custom_call.1']
    #allocation13 [shape = 'u8[8192]{0}', space=vmem, size = 0x2000, scoped, tag = 'output window, operand 0']
    %29 = vsyncpa [#allocation3], 0
    %s30 = scalar_lea.sflag [#allocation3], 1
    %31 = vsyncpa %s30, 0
    %32 = vsyncpa [#allocation6], 0
    %s33 = scalar_lea.sflag [#allocation6], 1
    %34 = vsyncpa %s33, 0
    %35 = vsyncpa [#allocation9], 0
    %36 = vsyncpa [#allocation12], 0
    %37 = vsyncpa [#allocation4], 0
    %s38 = scalar_lea.sflag [#allocation4], 1
    %39 = vsyncpa %s38, 0
    loop: start=0, step=1, limit=4
    $region2: #{tpu_custom_call.1} parent=1 // loop_pre_header
      _
    $region3: #{tpu_custom_call.1} parent=1 // loop_header
      %s41 = sphi 0, %s45
      %p42 = scmp.ge.s32.totalorder %s41, 4
      %s51 = sphi 0, %s53
      %s54 = sphi 0, %s51
      %s55 = sphi 0, %s54
      %s71 = sphi 0, %s55
      %s77 = sphi 0, %s79
      %s80 = sphi 0, %s77
      %s81 = sphi 0, %s80
      %s97 = sphi 0, %s81
      %s103 = sphi 0, %s105
      %s106 = sphi 0, %s103
      %s107 = sphi 0, %s106
      %s123 = sphi 0, %s107
      %s129 = sphi 0, %s131
      %s132 = sphi 0, %s129
      %s133 = sphi 0, %s132
      %s149 = sphi 0, %s133
      %s153 = sphi 0, %s153
      %s155 = sphi 0, %s153
      %s156 = sphi 0, %s155
      %s170 = sphi 0, %s156
      %s174 = sphi 0, %s174
      %s176 = sphi 0, %s174
      %s177 = sphi 0, %s176
      %s191 = sphi 0, %s177
      %s195 = sphi 0, %s195
      %s197 = sphi 0, %s195
      %s198 = sphi 0, %s197
      %s212 = sphi 0, %s198
      %s216 = sphi 0, %s216
      %s218 = sphi 0, %s216
      %s219 = sphi 0, %s218
      %s233 = sphi 0, %s219
      %s237 = sphi 0, %s237
      %s239 = sphi 0, %s237
      %s240 = sphi 0, %s239
      %s254 = sphi 0, %s240
      %s258 = sphi 0, %s258
      %s260 = sphi 0, %s258
      %s261 = sphi 0, %s260
      %s275 = sphi 0, %s261
      %s279 = sphi 0, %s279
      %s281 = sphi 0, %s279
      %s282 = sphi 0, %s281
      %s296 = sphi 0, %s282
      %s300 = sphi 0, %s300
      %s302 = sphi 0, %s300
      %s303 = sphi 0, %s302
      %s317 = sphi 0, %s303
      %s321 = sphi 0, %s321
      %s323 = sphi 0, %s321
      %s324 = sphi 0, %s323
      %s338 = sphi 0, %s324
      %s342 = sphi 0, %s342
      %s344 = sphi 0, %s342
      %s345 = sphi 0, %s344
      %s359 = sphi 0, %s345
      %s363 = sphi 0, %s363
      %s365 = sphi 0, %s363
      %s366 = sphi 0, %s365
      %s380 = sphi 0, %s366
      %s384 = sphi 0, %s384
      %s386 = sphi 0, %s384
      %s387 = sphi 0, %s386
      %s401 = sphi 0, %s387
      %s405 = sphi 0, %s405
      %s407 = sphi 0, %s405
      %s408 = sphi 0, %s407
      %s422 = sphi 0, %s408
      %s426 = sphi 0, %s426
      %s428 = sphi 0, %s426
      %s429 = sphi 0, %s428
      %s443 = sphi 0, %s429
      %s447 = sphi 0, %s447
      %s449 = sphi 0, %s447
      %s450 = sphi 0, %s449
      %s464 = sphi 0, %s450
      %s468 = sphi 0, %s468
      %s470 = sphi 0, %s468
      %s471 = sphi 0, %s470
      %s485 = sphi 0, %s471
      %s489 = sphi 0, %s489
      %s491 = sphi 0, %s489
      %s492 = sphi 0, %s491
      %s506 = sphi 0, %s492
      %s510 = sphi 0, %s510
      %s512 = sphi 0, %s510
      %s513 = sphi 0, %s512
      %s527 = sphi 0, %s513
      %s531 = sphi 0, %s531
      %s533 = sphi 0, %s531
      %s534 = sphi 0, %s533
      %s548 = sphi 0, %s534
      %s552 = sphi 0, %s552
      %s554 = sphi 0, %s552
      %s555 = sphi 0, %s554
      %s569 = sphi 0, %s555
      %s575 = sphi 0, %s577
      %s578 = sphi 0, %s575
      %s579 = sphi 0, %s578
      %s595 = sphi 0, %s579
    $region4: #{tpu_custom_call.1} parent=1 // loop_header_branch
      %44 = sbr.rel (%p42) target = $region8
    $region5: #{tpu_custom_call.1} parent=1 // loop_body
      %s46 = ssub.s32 %s41, 1
      %s47 = ssub.s32 %s41, 2
      %s48 = sadd.s32 %s41, 1
      %s49 = ssub.s32 %s41, %s48
      %p50 = scmp.eq.s32.totalorder %s49, 0
      %s52 = sadd.s32 %s51, 1
      %s53 = scalar_select %p50, %s51, %s52
      %p56 = pneg %p50
      %p57 = scmp.eq.s32.totalorder %s41, 1
      %p58 = por %p56, %p57
      %p59 = scmp.ne.s32.totalorder %s51, %s54
      %p60 = scmp.eq.s32.totalorder %s41, 0
      %p61 = por %p59, %p60
      %p62 = scmp.ne.s32.totalorder %s51, %s54
      %p63 = scmp.eq.s32.totalorder %s46, 1
      %p64 = por %p62, %p63
      %p65 = scmp.ne.s32.totalorder %s54, %s55
      %p66 = scmp.eq.s32.totalorder %s46, 0
      %p67 = por %p65, %p66
      %p68 = scmp.ne.s32.totalorder %s54, %s55
      %p69 = scmp.eq.s32.totalorder %s47, 1
      %p70 = por %p68, %p69
      %p72 = scmp.ne.s32.totalorder %s55, %s71
      %p73 = scmp.eq.s32.totalorder %s47, 0
      %p74 = por %p72, %p73
      %s75 = ssub.s32 %s41, %s48
      %p76 = scmp.eq.s32.totalorder %s75, 0
      %s78 = sadd.s32 %s77, 1
      %s79 = scalar_select %p76, %s77, %s78
      %p82 = pneg %p76
      %p83 = scmp.eq.s32.totalorder %s41, 1
      %p84 = por %p82, %p83
      %p85 = scmp.ne.s32.totalorder %s77, %s80
      %p86 = scmp.eq.s32.totalorder %s41, 0
      %p87 = por %p85, %p86
      %p88 = scmp.ne.s32.totalorder %s77, %s80
      %p89 = scmp.eq.s32.totalorder %s46, 1
      %p90 = por %p88, %p89
      %p91 = scmp.ne.s32.totalorder %s80, %s81
      %p92 = scmp.eq.s32.totalorder %s46, 0
      %p93 = por %p91, %p92
      %p94 = scmp.ne.s32.totalorder %s80, %s81
      %p95 = scmp.eq.s32.totalorder %s47, 1
      %p96 = por %p94, %p95
      %p98 = scmp.ne.s32.totalorder %s81, %s97
      %p99 = scmp.eq.s32.totalorder %s47, 0
      %p100 = por %p98, %p99
      %s101 = ssub.s32 %s41, %s48
      %p102 = scmp.eq.s32.totalorder %s101, 0
      %s104 = sadd.s32 %s103, 1
      %s105 = scalar_select %p102, %s103, %s104
      %p108 = pneg %p102
      %p109 = scmp.eq.s32.totalorder %s41, 1
      %p110 = por %p108, %p109
      %p111 = scmp.ne.s32.totalorder %s103, %s106
      %p112 = scmp.eq.s32.totalorder %s41, 0
      %p113 = por %p111, %p112
      %p114 = scmp.ne.s32.totalorder %s103, %s106
      %p115 = scmp.eq.s32.totalorder %s46, 1
      %p116 = por %p114, %p115
      %p117 = scmp.ne.s32.totalorder %s106, %s107
      %p118 = scmp.eq.s32.totalorder %s46, 0
      %p119 = por %p117, %p118
      %p120 = scmp.ne.s32.totalorder %s106, %s107
      %p121 = scmp.eq.s32.totalorder %s47, 1
      %p122 = por %p120, %p121
      %p124 = scmp.ne.s32.totalorder %s107, %s123
      %p125 = scmp.eq.s32.totalorder %s47, 0
      %p126 = por %p124, %p125
      %s127 = ssub.s32 %s41, %s48
      %p128 = scmp.eq.s32.totalorder %s127, 0
      %s130 = sadd.s32 %s129, 1
      %s131 = scalar_select %p128, %s129, %s130
      %p134 = pneg %p128
      %p135 = scmp.eq.s32.totalorder %s41, 1
      %p136 = por %p134, %p135
      %p137 = scmp.ne.s32.totalorder %s129, %s132
      %p138 = scmp.eq.s32.totalorder %s41, 0
      %p139 = por %p137, %p138
      %p140 = scmp.ne.s32.totalorder %s129, %s132
      %p141 = scmp.eq.s32.totalorder %s46, 1
      %p142 = por %p140, %p141
      %p143 = scmp.ne.s32.totalorder %s132, %s133
      %p144 = scmp.eq.s32.totalorder %s46, 0
      %p145 = por %p143, %p144
      %p146 = scmp.ne.s32.totalorder %s132, %s133
      %p147 = scmp.eq.s32.totalorder %s47, 1
      %p148 = por %p146, %p147
      %p150 = scmp.ne.s32.totalorder %s133, %s149
      %p151 = scmp.eq.s32.totalorder %s47, 0
      %p152 = por %p150, %p151
      %s154 = sadd.s32 %s153, 1
      %p157 = scmp.eq.s32.totalorder %s41, 1
      %p158 = scmp.ne.s32.totalorder %s153, %s155
      %p159 = scmp.eq.s32.totalorder %s41, 0
      %p160 = por %p158, %p159
      %p161 = scmp.ne.s32.totalorder %s153, %s155
      %p162 = scmp.eq.s32.totalorder %s46, 1
      %p163 = por %p161, %p162
      %p164 = scmp.ne.s32.totalorder %s155, %s156
      %p165 = scmp.eq.s32.totalorder %s46, 0
      %p166 = por %p164, %p165
      %p167 = scmp.ne.s32.totalorder %s155, %s156
      %p168 = scmp.eq.s32.totalorder %s47, 1
      %p169 = por %p167, %p168
      %p171 = scmp.ne.s32.totalorder %s156, %s170
      %p172 = scmp.eq.s32.totalorder %s47, 0
      %p173 = por %p171, %p172
      %s175 = sadd.s32 %s174, 1
      %p178 = scmp.eq.s32.totalorder %s41, 1
      %p179 = scmp.ne.s32.totalorder %s174, %s176
      %p180 = scmp.eq.s32.totalorder %s41, 0
      %p181 = por %p179, %p180
      %p182 = scmp.ne.s32.totalorder %s174, %s176
      %p183 = scmp.eq.s32.totalorder %s46, 1
      %p184 = por %p182, %p183
      %p185 = scmp.ne.s32.totalorder %s176, %s177
      %p186 = scmp.eq.s32.totalorder %s46, 0
      %p187 = por %p185, %p186
      %p188 = scmp.ne.s32.totalorder %s176, %s177
      %p189 = scmp.eq.s32.totalorder %s47, 1
      %p190 = por %p188, %p189
      %p192 = scmp.ne.s32.totalorder %s177, %s191
      %p193 = scmp.eq.s32.totalorder %s47, 0
      %p194 = por %p192, %p193
      %s196 = sadd.s32 %s195, 1
      %p199 = scmp.eq.s32.totalorder %s41, 1
      %p200 = scmp.ne.s32.totalorder %s195, %s197
      %p201 = scmp.eq.s32.totalorder %s41, 0
      %p202 = por %p200, %p201
      %p203 = scmp.ne.s32.totalorder %s195, %s197
      %p204 = scmp.eq.s32.totalorder %s46, 1
      %p205 = por %p203, %p204
      %p206 = scmp.ne.s32.totalorder %s197, %s198
      %p207 = scmp.eq.s32.totalorder %s46, 0
      %p208 = por %p206, %p207
      %p209 = scmp.ne.s32.totalorder %s197, %s198
      %p210 = scmp.eq.s32.totalorder %s47, 1
      %p211 = por %p209, %p210
      %p213 = scmp.ne.s32.totalorder %s198, %s212
      %p214 = scmp.eq.s32.totalorder %s47, 0
      %p215 = por %p213, %p214
      %s217 = sadd.s32 %s216, 1
      %p220 = scmp.eq.s32.totalorder %s41, 1
      %p221 = scmp.ne.s32.totalorder %s216, %s218
      %p222 = scmp.eq.s32.totalorder %s41, 0
      %p223 = por %p221, %p222
      %p224 = scmp.ne.s32.totalorder %s216, %s218
      %p225 = scmp.eq.s32.totalorder %s46, 1
      %p226 = por %p224, %p225
      %p227 = scmp.ne.s32.totalorder %s218, %s219
      %p228 = scmp.eq.s32.totalorder %s46, 0
      %p229 = por %p227, %p228
      %p230 = scmp.ne.s32.totalorder %s218, %s219
      %p231 = scmp.eq.s32.totalorder %s47, 1
      %p232 = por %p230, %p231
      %p234 = scmp.ne.s32.totalorder %s219, %s233
      %p235 = scmp.eq.s32.totalorder %s47, 0
      %p236 = por %p234, %p235
      %s238 = sadd.s32 %s237, 1
      %p241 = scmp.eq.s32.totalorder %s41, 1
      %p242 = scmp.ne.s32.totalorder %s237, %s239
      %p243 = scmp.eq.s32.totalorder %s41, 0
      %p244 = por %p242, %p243
      %p245 = scmp.ne.s32.totalorder %s237, %s239
      %p246 = scmp.eq.s32.totalorder %s46, 1
      %p247 = por %p245, %p246
      %p248 = scmp.ne.s32.totalorder %s239, %s240
      %p249 = scmp.eq.s32.totalorder %s46, 0
      %p250 = por %p248, %p249
      %p251 = scmp.ne.s32.totalorder %s239, %s240
      %p252 = scmp.eq.s32.totalorder %s47, 1
      %p253 = por %p251, %p252
      %p255 = scmp.ne.s32.totalorder %s240, %s254
      %p256 = scmp.eq.s32.totalorder %s47, 0
      %p257 = por %p255, %p256
      %s259 = sadd.s32 %s258, 1
      %p262 = scmp.eq.s32.totalorder %s41, 1
      %p263 = scmp.ne.s32.totalorder %s258, %s260
      %p264 = scmp.eq.s32.totalorder %s41, 0
      %p265 = por %p263, %p264
      %p266 = scmp.ne.s32.totalorder %s258, %s260
      %p267 = scmp.eq.s32.totalorder %s46, 1
      %p268 = por %p266, %p267
      %p269 = scmp.ne.s32.totalorder %s260, %s261
      %p270 = scmp.eq.s32.totalorder %s46, 0
      %p271 = por %p269, %p270
      %p272 = scmp.ne.s32.totalorder %s260, %s261
      %p273 = scmp.eq.s32.totalorder %s47, 1
      %p274 = por %p272, %p273
      %p276 = scmp.ne.s32.totalorder %s261, %s275
      %p277 = scmp.eq.s32.totalorder %s47, 0
      %p278 = por %p276, %p277
      %s280 = sadd.s32 %s279, 1
      %p283 = scmp.eq.s32.totalorder %s41, 1
      %p284 = scmp.ne.s32.totalorder %s279, %s281
      %p285 = scmp.eq.s32.totalorder %s41, 0
      %p286 = por %p284, %p285
      %p287 = scmp.ne.s32.totalorder %s279, %s281
      %p288 = scmp.eq.s32.totalorder %s46, 1
      %p289 = por %p287, %p288
      %p290 = scmp.ne.s32.totalorder %s281, %s282
      %p291 = scmp.eq.s32.totalorder %s46, 0
      %p292 = por %p290, %p291
      %p293 = scmp.ne.s32.totalorder %s281, %s282
      %p294 = scmp.eq.s32.totalorder %s47, 1
      %p295 = por %p293, %p294
      %p297 = scmp.ne.s32.totalorder %s282, %s296
      %p298 = scmp.eq.s32.totalorder %s47, 0
      %p299 = por %p297, %p298
      %s301 = sadd.s32 %s300, 1
      %p304 = scmp.eq.s32.totalorder %s41, 1
      %p305 = scmp.ne.s32.totalorder %s300, %s302
      %p306 = scmp.eq.s32.totalorder %s41, 0
      %p307 = por %p305, %p306
      %p308 = scmp.ne.s32.totalorder %s300, %s302
      %p309 = scmp.eq.s32.totalorder %s46, 1
      %p310 = por %p308, %p309
      %p311 = scmp.ne.s32.totalorder %s302, %s303
      %p312 = scmp.eq.s32.totalorder %s46, 0
      %p313 = por %p311, %p312
      %p314 = scmp.ne.s32.totalorder %s302, %s303
      %p315 = scmp.eq.s32.totalorder %s47, 1
      %p316 = por %p314, %p315
      %p318 = scmp.ne.s32.totalorder %s303, %s317
      %p319 = scmp.eq.s32.totalorder %s47, 0
      %p320 = por %p318, %p319
      %s322 = sadd.s32 %s321, 1
      %p325 = scmp.eq.s32.totalorder %s41, 1
      %p326 = scmp.ne.s32.totalorder %s321, %s323
      %p327 = scmp.eq.s32.totalorder %s41, 0
      %p328 = por %p326, %p327
      %p329 = scmp.ne.s32.totalorder %s321, %s323
      %p330 = scmp.eq.s32.totalorder %s46, 1
      %p331 = por %p329, %p330
      %p332 = scmp.ne.s32.totalorder %s323, %s324
      %p333 = scmp.eq.s32.totalorder %s46, 0
      %p334 = por %p332, %p333
      %p335 = scmp.ne.s32.totalorder %s323, %s324
      %p336 = scmp.eq.s32.totalorder %s47, 1
      %p337 = por %p335, %p336
      %p339 = scmp.ne.s32.totalorder %s324, %s338
      %p340 = scmp.eq.s32.totalorder %s47, 0
      %p341 = por %p339, %p340
      %s343 = sadd.s32 %s342, 1
      %p346 = scmp.eq.s32.totalorder %s41, 1
      %p347 = scmp.ne.s32.totalorder %s342, %s344
      %p348 = scmp.eq.s32.totalorder %s41, 0
      %p349 = por %p347, %p348
      %p350 = scmp.ne.s32.totalorder %s342, %s344
      %p351 = scmp.eq.s32.totalorder %s46, 1
      %p352 = por %p350, %p351
      %p353 = scmp.ne.s32.totalorder %s344, %s345
      %p354 = scmp.eq.s32.totalorder %s46, 0
      %p355 = por %p353, %p354
      %p356 = scmp.ne.s32.totalorder %s344, %s345
      %p357 = scmp.eq.s32.totalorder %s47, 1
      %p358 = por %p356, %p357
      %p360 = scmp.ne.s32.totalorder %s345, %s359
      %p361 = scmp.eq.s32.totalorder %s47, 0
      %p362 = por %p360, %p361
      %s364 = sadd.s32 %s363, 1
      %p367 = scmp.eq.s32.totalorder %s41, 1
      %p368 = scmp.ne.s32.totalorder %s363, %s365
      %p369 = scmp.eq.s32.totalorder %s41, 0
      %p370 = por %p368, %p369
      %p371 = scmp.ne.s32.totalorder %s363, %s365
      %p372 = scmp.eq.s32.totalorder %s46, 1
      %p373 = por %p371, %p372
      %p374 = scmp.ne.s32.totalorder %s365, %s366
      %p375 = scmp.eq.s32.totalorder %s46, 0
      %p376 = por %p374, %p375
      %p377 = scmp.ne.s32.totalorder %s365, %s366
      %p378 = scmp.eq.s32.totalorder %s47, 1
      %p379 = por %p377, %p378
      %p381 = scmp.ne.s32.totalorder %s366, %s380
      %p382 = scmp.eq.s32.totalorder %s47, 0
      %p383 = por %p381, %p382
      %s385 = sadd.s32 %s384, 1
      %p388 = scmp.eq.s32.totalorder %s41, 1
      %p389 = scmp.ne.s32.totalorder %s384, %s386
      %p390 = scmp.eq.s32.totalorder %s41, 0
      %p391 = por %p389, %p390
      %p392 = scmp.ne.s32.totalorder %s384, %s386
      %p393 = scmp.eq.s32.totalorder %s46, 1
      %p394 = por %p392, %p393
      %p395 = scmp.ne.s32.totalorder %s386, %s387
      %p396 = scmp.eq.s32.totalorder %s46, 0
      %p397 = por %p395, %p396
      %p398 = scmp.ne.s32.totalorder %s386, %s387
      %p399 = scmp.eq.s32.totalorder %s47, 1
      %p400 = por %p398, %p399
      %p402 = scmp.ne.s32.totalorder %s387, %s401
      %p403 = scmp.eq.s32.totalorder %s47, 0
      %p404 = por %p402, %p403
      %s406 = sadd.s32 %s405, 1
      %p409 = scmp.eq.s32.totalorder %s41, 1
      %p410 = scmp.ne.s32.totalorder %s405, %s407
      %p411 = scmp.eq.s32.totalorder %s41, 0
      %p412 = por %p410, %p411
      %p413 = scmp.ne.s32.totalorder %s405, %s407
      %p414 = scmp.eq.s32.totalorder %s46, 1
      %p415 = por %p413, %p414
      %p416 = scmp.ne.s32.totalorder %s407, %s408
      %p417 = scmp.eq.s32.totalorder %s46, 0
      %p418 = por %p416, %p417
      %p419 = scmp.ne.s32.totalorder %s407, %s408
      %p420 = scmp.eq.s32.totalorder %s47, 1
      %p421 = por %p419, %p420
      %p423 = scmp.ne.s32.totalorder %s408, %s422
      %p424 = scmp.eq.s32.totalorder %s47, 0
      %p425 = por %p423, %p424
      %s427 = sadd.s32 %s426, 1
      %p430 = scmp.eq.s32.totalorder %s41, 1
      %p431 = scmp.ne.s32.totalorder %s426, %s428
      %p432 = scmp.eq.s32.totalorder %s41, 0
      %p433 = por %p431, %p432
      %p434 = scmp.ne.s32.totalorder %s426, %s428
      %p435 = scmp.eq.s32.totalorder %s46, 1
      %p436 = por %p434, %p435
      %p437 = scmp.ne.s32.totalorder %s428, %s429
      %p438 = scmp.eq.s32.totalorder %s46, 0
      %p439 = por %p437, %p438
      %p440 = scmp.ne.s32.totalorder %s428, %s429
      %p441 = scmp.eq.s32.totalorder %s47, 1
      %p442 = por %p440, %p441
      %p444 = scmp.ne.s32.totalorder %s429, %s443
      %p445 = scmp.eq.s32.totalorder %s47, 0
      %p446 = por %p444, %p445
      %s448 = sadd.s32 %s447, 1
      %p451 = scmp.eq.s32.totalorder %s41, 1
      %p452 = scmp.ne.s32.totalorder %s447, %s449
      %p453 = scmp.eq.s32.totalorder %s41, 0
      %p454 = por %p452, %p453
      %p455 = scmp.ne.s32.totalorder %s447, %s449
      %p456 = scmp.eq.s32.totalorder %s46, 1
      %p457 = por %p455, %p456
      %p458 = scmp.ne.s32.totalorder %s449, %s450
      %p459 = scmp.eq.s32.totalorder %s46, 0
      %p460 = por %p458, %p459
      %p461 = scmp.ne.s32.totalorder %s449, %s450
      %p462 = scmp.eq.s32.totalorder %s47, 1
      %p463 = por %p461, %p462
      %p465 = scmp.ne.s32.totalorder %s450, %s464
      %p466 = scmp.eq.s32.totalorder %s47, 0
      %p467 = por %p465, %p466
      %s469 = sadd.s32 %s468, 1
      %p472 = scmp.eq.s32.totalorder %s41, 1
      %p473 = scmp.ne.s32.totalorder %s468, %s470
      %p474 = scmp.eq.s32.totalorder %s41, 0
      %p475 = por %p473, %p474
      %p476 = scmp.ne.s32.totalorder %s468, %s470
      %p477 = scmp.eq.s32.totalorder %s46, 1
      %p478 = por %p476, %p477
      %p479 = scmp.ne.s32.totalorder %s470, %s471
      %p480 = scmp.eq.s32.totalorder %s46, 0
      %p481 = por %p479, %p480
      %p482 = scmp.ne.s32.totalorder %s470, %s471
      %p483 = scmp.eq.s32.totalorder %s47, 1
      %p484 = por %p482, %p483
      %p486 = scmp.ne.s32.totalorder %s471, %s485
      %p487 = scmp.eq.s32.totalorder %s47, 0
      %p488 = por %p486, %p487
      %s490 = sadd.s32 %s489, 1
      %p493 = scmp.eq.s32.totalorder %s41, 1
      %p494 = scmp.ne.s32.totalorder %s489, %s491
      %p495 = scmp.eq.s32.totalorder %s41, 0
      %p496 = por %p494, %p495
      %p497 = scmp.ne.s32.totalorder %s489, %s491
      %p498 = scmp.eq.s32.totalorder %s46, 1
      %p499 = por %p497, %p498
      %p500 = scmp.ne.s32.totalorder %s491, %s492
      %p501 = scmp.eq.s32.totalorder %s46, 0
      %p502 = por %p500, %p501
      %p503 = scmp.ne.s32.totalorder %s491, %s492
      %p504 = scmp.eq.s32.totalorder %s47, 1
      %p505 = por %p503, %p504
      %p507 = scmp.ne.s32.totalorder %s492, %s506
      %p508 = scmp.eq.s32.totalorder %s47, 0
      %p509 = por %p507, %p508
      %s511 = sadd.s32 %s510, 1
      %p514 = scmp.eq.s32.totalorder %s41, 1
      %p515 = scmp.ne.s32.totalorder %s510, %s512
      %p516 = scmp.eq.s32.totalorder %s41, 0
      %p517 = por %p515, %p516
      %p518 = scmp.ne.s32.totalorder %s510, %s512
      %p519 = scmp.eq.s32.totalorder %s46, 1
      %p520 = por %p518, %p519
      %p521 = scmp.ne.s32.totalorder %s512, %s513
      %p522 = scmp.eq.s32.totalorder %s46, 0
      %p523 = por %p521, %p522
      %p524 = scmp.ne.s32.totalorder %s512, %s513
      %p525 = scmp.eq.s32.totalorder %s47, 1
      %p526 = por %p524, %p525
      %p528 = scmp.ne.s32.totalorder %s513, %s527
      %p529 = scmp.eq.s32.totalorder %s47, 0
      %p530 = por %p528, %p529
      %s532 = sadd.s32 %s531, 1
      %p535 = scmp.eq.s32.totalorder %s41, 1
      %p536 = scmp.ne.s32.totalorder %s531, %s533
      %p537 = scmp.eq.s32.totalorder %s41, 0
      %p538 = por %p536, %p537
      %p539 = scmp.ne.s32.totalorder %s531, %s533
      %p540 = scmp.eq.s32.totalorder %s46, 1
      %p541 = por %p539, %p540
      %p542 = scmp.ne.s32.totalorder %s533, %s534
      %p543 = scmp.eq.s32.totalorder %s46, 0
      %p544 = por %p542, %p543
      %p545 = scmp.ne.s32.totalorder %s533, %s534
      %p546 = scmp.eq.s32.totalorder %s47, 1
      %p547 = por %p545, %p546
      %p549 = scmp.ne.s32.totalorder %s534, %s548
      %p550 = scmp.eq.s32.totalorder %s47, 0
      %p551 = por %p549, %p550
      %s553 = sadd.s32 %s552, 1
      %p556 = scmp.eq.s32.totalorder %s41, 1
      %p557 = scmp.ne.s32.totalorder %s552, %s554
      %p558 = scmp.eq.s32.totalorder %s41, 0
      %p559 = por %p557, %p558
      %p560 = scmp.ne.s32.totalorder %s552, %s554
      %p561 = scmp.eq.s32.totalorder %s46, 1
      %p562 = por %p560, %p561
      %p563 = scmp.ne.s32.totalorder %s554, %s555
      %p564 = scmp.eq.s32.totalorder %s46, 0
      %p565 = por %p563, %p564
      %p566 = scmp.ne.s32.totalorder %s554, %s555
      %p567 = scmp.eq.s32.totalorder %s47, 1
      %p568 = por %p566, %p567
      %p570 = scmp.ne.s32.totalorder %s555, %s569
      %p571 = scmp.eq.s32.totalorder %s47, 0
      %p572 = por %p570, %p571
      %s573 = ssub.s32 %s41, %s48
      %p574 = scmp.eq.s32.totalorder %s573, 0
      %s576 = sadd.s32 %s575, 1
      %s577 = scalar_select %p574, %s575, %s576
      %p580 = pneg %p574
      %p581 = scmp.eq.s32.totalorder %s41, 1
      %p582 = por %p580, %p581
      %p583 = scmp.ne.s32.totalorder %s575, %s578
      %p584 = scmp.eq.s32.totalorder %s41, 0
      %p585 = por %p583, %p584
      %p586 = scmp.ne.s32.totalorder %s575, %s578
      %p587 = scmp.eq.s32.totalorder %s46, 1
      %p588 = por %p586, %p587
      %p589 = scmp.ne.s32.totalorder %s578, %s579
      %p590 = scmp.eq.s32.totalorder %s46, 0
      %p591 = por %p589, %p590
      %p592 = scmp.ne.s32.totalorder %s578, %s579
      %p593 = scmp.eq.s32.totalorder %s47, 1
      %p594 = por %p592, %p593
      %p596 = scmp.ne.s32.totalorder %s579, %s595
      %p597 = scmp.eq.s32.totalorder %s47, 0
      %p598 = por %p596, %p597
      %p599 = scmp.le.s32.totalorder 1, %s41
      %p600 = scmp.lt.s32.totalorder %s41, 3
      %p601 = pnand %p599, %p600
      %p602 = pneg %p601
      // Predicated region
      $region9: #{tpu_custom_call.1} parent=5 // pred_check
        _
      $region10: #{tpu_custom_call.1} parent=5 // pred_check_branch
        %604 = sbr.rel (%p601) target = $region12
      $region11: #{tpu_custom_call.1} parent=5 // pred_region
        %s605 = ssub.s32 %s41, 1
        // Predicated region
        $region13: #{tpu_custom_call.1} parent=11 // pred_check
          %p606 = pneg %p166
        $region14: #{tpu_custom_call.1} parent=11 // pred_check_branch
          %608 = sbr.rel (%p606) target = $region16
        $region15: #{tpu_custom_call.1} parent=11 // pred_region
          _
        $region16: #{tpu_custom_call.1} parent=11 // pred_fallthru
          _
        // Predicated region
        $region17: #{tpu_custom_call.1} parent=11 // pred_check
          %p609 = pneg %p187
        $region18: #{tpu_custom_call.1} parent=11 // pred_check_branch
          %611 = sbr.rel (%p609) target = $region20
        $region19: #{tpu_custom_call.1} parent=11 // pred_region
          _
        $region20: #{tpu_custom_call.1} parent=11 // pred_fallthru
          _
        // Predicated region
        $region21: #{tpu_custom_call.1} parent=11 // pred_check
          %p612 = pneg %p208
        $region22: #{tpu_custom_call.1} parent=11 // pred_check_branch
          %614 = sbr.rel (%p612) target = $region24
        $region23: #{tpu_custom_call.1} parent=11 // pred_region
          _
        $region24: #{tpu_custom_call.1} parent=11 // pred_fallthru
          _
        // Predicated region
        $region25: #{tpu_custom_call.1} parent=11 // pred_check
          %p615 = pneg %p229
        $region26: #{tpu_custom_call.1} parent=11 // pred_check_branch
          %617 = sbr.rel (%p615) target = $region28
        $region27: #{tpu_custom_call.1} parent=11 // pred_region
          _
        $region28: #{tpu_custom_call.1} parent=11 // pred_fallthru
          _
        // Predicated region
        $region29: #{tpu_custom_call.1} parent=11 // pred_check
          %p618 = pneg %p250
        $region30: #{tpu_custom_call.1} parent=11 // pred_check_branch
          %620 = sbr.rel (%p618) target = $region32
        $region31: #{tpu_custom_call.1} parent=11 // pred_region
          _
        $region32: #{tpu_custom_call.1} parent=11 // pred_fallthru
          _
        // Predicated region
        $region33: #{tpu_custom_call.1} parent=11 // pred_check
          %p621 = pneg %p271
        $region34: #{tpu_custom_call.1} parent=11 // pred_check_branch
          %623 = sbr.rel (%p621) target = $region36
        $region35: #{tpu_custom_call.1} parent=11 // pred_region
          %s625 = ssub.s32 512, 512
          %626 = vsyncadd [#allocation6], %s625
          %s627 = sshll.u32 [#allocation7], 4
          %s628 = int_to_ptr.vmem [resolvable:$true] %s627
          %633 = dma.hbm_to_vmem [thread:$0]  %s9, 512, %s628, [#allocation6], 64, 64, 4
        $region36: #{tpu_custom_call.1} parent=11 // pred_fallthru
          _
        // Predicated region
        $region37: #{tpu_custom_call.1} parent=11 // pred_check
          %p634 = pneg %p292
        $region38: #{tpu_custom_call.1} parent=11 // pred_check_branch
          %636 = sbr.rel (%p634) target = $region40
        $region39: #{tpu_custom_call.1} parent=11 // pred_region
          %s638 = ssub.s32 512, 512
          %639 = vsyncadd [#allocation9], %s638
          %s640 = sshll.u32 [#allocation8], 4
          %s641 = int_to_ptr.vmem [resolvable:$true] %s640
          %646 = dma.hbm_to_vmem [thread:$0]  %s10, 512, %s641, [#allocation9], 64, 64, 4
        $region40: #{tpu_custom_call.1} parent=11 // pred_fallthru
          _
        // Predicated region
        $region41: #{tpu_custom_call.1} parent=11 // pred_check
          %p647 = pneg %p313
        $region42: #{tpu_custom_call.1} parent=11 // pred_check_branch
          %649 = sbr.rel (%p647) target = $region44
        $region43: #{tpu_custom_call.1} parent=11 // pred_region
          %s651 = ssub.s32 512, 512
          %652 = vsyncadd [#allocation9], %s651
          %s653 = sshll.u32 [#allocation10], 4
          %s654 = int_to_ptr.vmem [resolvable:$true] %s653
          %659 = dma.hbm_to_vmem [thread:$0]  %s11, 512, %s654, [#allocation9], 64, 64, 4
        $region44: #{tpu_custom_call.1} parent=11 // pred_fallthru
          _
        // Predicated region
        $region45: #{tpu_custom_call.1} parent=11 // pred_check
          %p660 = pneg %p334
        $region46: #{tpu_custom_call.1} parent=11 // pred_check_branch
          %662 = sbr.rel (%p660) target = $region48
        $region47: #{tpu_custom_call.1} parent=11 // pred_region
          %s664 = ssub.s32 512, 512
          %665 = vsyncadd [#allocation12], %s664
          %s666 = sshll.u32 [#allocation11], 4
          %s667 = int_to_ptr.vmem [resolvable:$true] %s666
          %672 = dma.hbm_to_vmem [thread:$0]  %s12, 512, %s667, [#allocation12], 64, 64, 4
        $region48: #{tpu_custom_call.1} parent=11 // pred_fallthru
          _
        // Predicated region
        $region49: #{tpu_custom_call.1} parent=11 // pred_check
          %p673 = pneg %p355
        $region50: #{tpu_custom_call.1} parent=11 // pred_check_branch
          %675 = sbr.rel (%p673) target = $region52
        $region51: #{tpu_custom_call.1} parent=11 // pred_region
          _
        $region52: #{tpu_custom_call.1} parent=11 // pred_fallthru
          _
        // Predicated region
        $region53: #{tpu_custom_call.1} parent=11 // pred_check
          %p676 = pneg %p376
        $region54: #{tpu_custom_call.1} parent=11 // pred_check_branch
          %678 = sbr.rel (%p676) target = $region56
        $region55: #{tpu_custom_call.1} parent=11 // pred_region
          _
        $region56: #{tpu_custom_call.1} parent=11 // pred_fallthru
          _
        // Predicated region
        $region57: #{tpu_custom_call.1} parent=11 // pred_check
          %p679 = pneg %p397
        $region58: #{tpu_custom_call.1} parent=11 // pred_check_branch
          %681 = sbr.rel (%p679) target = $region60
        $region59: #{tpu_custom_call.1} parent=11 // pred_region
          _
        $region60: #{tpu_custom_call.1} parent=11 // pred_fallthru
          _
        // Predicated region
        $region61: #{tpu_custom_call.1} parent=11 // pred_check
          %p682 = pneg %p418
        $region62: #{tpu_custom_call.1} parent=11 // pred_check_branch
          %684 = sbr.rel (%p682) target = $region64
        $region63: #{tpu_custom_call.1} parent=11 // pred_region
          _
        $region64: #{tpu_custom_call.1} parent=11 // pred_fallthru
          _
        // Predicated region
        $region65: #{tpu_custom_call.1} parent=11 // pred_check
          %p685 = pneg %p439
        $region66: #{tpu_custom_call.1} parent=11 // pred_check_branch
          %687 = sbr.rel (%p685) target = $region68
        $region67: #{tpu_custom_call.1} parent=11 // pred_region
          _
        $region68: #{tpu_custom_call.1} parent=11 // pred_fallthru
          _
        // Predicated region
        $region69: #{tpu_custom_call.1} parent=11 // pred_check
          %p688 = pneg %p460
        $region70: #{tpu_custom_call.1} parent=11 // pred_check_branch
          %690 = sbr.rel (%p688) target = $region72
        $region71: #{tpu_custom_call.1} parent=11 // pred_region
          _
        $region72: #{tpu_custom_call.1} parent=11 // pred_fallthru
          _
        // Predicated region
        $region73: #{tpu_custom_call.1} parent=11 // pred_check
          %p691 = pneg %p481
        $region74: #{tpu_custom_call.1} parent=11 // pred_check_branch
          %693 = sbr.rel (%p691) target = $region76
        $region75: #{tpu_custom_call.1} parent=11 // pred_region
          _
        $region76: #{tpu_custom_call.1} parent=11 // pred_fallthru
          _
        // Predicated region
        $region77: #{tpu_custom_call.1} parent=11 // pred_check
          %p694 = pneg %p502
        $region78: #{tpu_custom_call.1} parent=11 // pred_check_branch
          %696 = sbr.rel (%p694) target = $region80
        $region79: #{tpu_custom_call.1} parent=11 // pred_region
          _
        $region80: #{tpu_custom_call.1} parent=11 // pred_fallthru
          _
        // Predicated region
        $region81: #{tpu_custom_call.1} parent=11 // pred_check
          %p697 = pneg %p523
        $region82: #{tpu_custom_call.1} parent=11 // pred_check_branch
          %699 = sbr.rel (%p697) target = $region84
        $region83: #{tpu_custom_call.1} parent=11 // pred_region
          _
        $region84: #{tpu_custom_call.1} parent=11 // pred_fallthru
          _
        // Predicated region
        $region85: #{tpu_custom_call.1} parent=11 // pred_check
          %p700 = pneg %p544
        $region86: #{tpu_custom_call.1} parent=11 // pred_check_branch
          %702 = sbr.rel (%p700) target = $region88
        $region87: #{tpu_custom_call.1} parent=11 // pred_region
          _
        $region88: #{tpu_custom_call.1} parent=11 // pred_fallthru
          _
        // Predicated region
        $region89: #{tpu_custom_call.1} parent=11 // pred_check
          %p703 = pneg %p565
        $region90: #{tpu_custom_call.1} parent=11 // pred_check_branch
          %705 = sbr.rel (%p703) target = $region92
        $region91: #{tpu_custom_call.1} parent=11 // pred_region
          _
        $region92: #{tpu_custom_call.1} parent=11 // pred_fallthru
          _
      $region12: #{tpu_custom_call.1} parent=5 // pred_fallthru
        _
      %p706 = scmp.lt.s32.totalorder %s41, 2
      // Predicated region
      $region93: #{tpu_custom_call.1} parent=5 // pred_check
        %p707 = pneg %p706
      $region94: #{tpu_custom_call.1} parent=5 // pred_check_branch
        %709 = sbr.rel (%p707) target = $region96
      $region95: #{tpu_custom_call.1} parent=5 // pred_region
        // Predicated region
        $region97: #{tpu_custom_call.1} parent=95 // pred_check
          %p710 = pneg %p61
        $region98: #{tpu_custom_call.1} parent=95 // pred_check_branch
          %712 = sbr.rel (%p710) target = $region100
        $region99: #{tpu_custom_call.1} parent=95 // pred_region
          %s713 = sand.u32 %s51, 1
          %s714 = scalar_lea.sflag [#allocation3], %s713
          %s715 = sand.u32 %s51, 1
          %s716 = smul.addr %s715, 8
          %s717 = scalar_lea.vmem [#allocation2], %s716
          %s719 = ssub.s32 128, 128
          %720 = vsyncadd %s714, %s719
          %s721 = smul.addr %s41, 128
          %s722 = scalar_lea.hbm %s0, %s721
          %s724 = sshll.u32 %s717, 4
          %s725 = int_to_ptr.vmem [resolvable:$true] %s724
          %727 = dma.hbm_to_vmem [thread:$0]  %s722, 128, %s725, %s714
        $region100: #{tpu_custom_call.1} parent=95 // pred_fallthru
          _
        // Predicated region
        $region101: #{tpu_custom_call.1} parent=95 // pred_check
          %p728 = pneg %p87
        $region102: #{tpu_custom_call.1} parent=95 // pred_check_branch
          %730 = sbr.rel (%p728) target = $region104
        $region103: #{tpu_custom_call.1} parent=95 // pred_region
          %s731 = sand.u32 %s41, 1
          %s732 = scalar_lea.sflag [#allocation6], %s731
          %s733 = sand.u32 %s77, 1
          %s734 = smul.addr %s733, 8
          %s735 = scalar_lea.vmem [#allocation5], %s734
          %s737 = ssub.s32 128, 128
          %738 = vsyncadd %s732, %s737
          %s739 = smul.addr %s41, 128
          %s740 = scalar_lea.hbm %s1, %s739
          %s742 = sshll.u32 %s735, 4
          %s743 = int_to_ptr.vmem [resolvable:$true] %s742
          %745 = dma.hbm_to_vmem [thread:$0]  %s740, 128, %s743, %s732
        $region104: #{tpu_custom_call.1} parent=95 // pred_fallthru
          _
        // Predicated region
        $region105: #{tpu_custom_call.1} parent=95 // pred_check
          %p746 = pneg %p113
        $region106: #{tpu_custom_call.1} parent=95 // pred_check_branch
          %748 = sbr.rel (%p746) target = $region108
        $region107: #{tpu_custom_call.1} parent=95 // pred_region
          %p749 = scmp.lt.s32.totalorder %s41, 1
          %s750 = scalar_select %p749, %s41, 1
          %s751 = smul.addr %s750, 8
          %s752 = scalar_lea.vmem %s2, %s751
        $region108: #{tpu_custom_call.1} parent=95 // pred_fallthru
          _
        // Predicated region
        $region109: #{tpu_custom_call.1} parent=95 // pred_check
          %p753 = pneg %p139
        $region110: #{tpu_custom_call.1} parent=95 // pred_check_branch
          %755 = sbr.rel (%p753) target = $region112
        $region111: #{tpu_custom_call.1} parent=95 // pred_region
          %p756 = scmp.lt.s32.totalorder %s41, 1
          %s757 = scalar_select %p756, %s41, 1
          %s758 = smul.addr %s757, 8
          %s759 = scalar_lea.vmem %s3, %s758
        $region112: #{tpu_custom_call.1} parent=95 // pred_fallthru
          _
      $region96: #{tpu_custom_call.1} parent=5 // pred_fallthru
        _
      %p760 = scmp.le.s32.totalorder 1, %s41
      %p761 = scmp.lt.s32.totalorder %s41, 3
      %p762 = pnand %p760, %p761
      %p763 = pneg %p762
      // Predicated region
      $region113: #{tpu_custom_call.1} parent=5 // pred_check
        _
      $region114: #{tpu_custom_call.1} parent=5 // pred_check_branch
        %765 = sbr.rel (%p762) target = $region116
      $region115: #{tpu_custom_call.1} parent=5 // pred_region
        %s766 = ssub.s32 %s41, 1
        %s767 = sand.u32 %s54, 1
        %s768 = scalar_lea.sflag [#allocation3], %s767
        %s769 = sand.u32 %s54, 1
        %s770 = smul.addr %s769, 8
        %s771 = scalar_lea.vmem [#allocation2], %s770
        // Predicated region
        $region117: #{tpu_custom_call.1} parent=115 // pred_check
          %p772 = pneg %p67
        $region118: #{tpu_custom_call.1} parent=115 // pred_check_branch
          %774 = sbr.rel (%p772) target = $region120
        $region119: #{tpu_custom_call.1} parent=115 // pred_region
          %775 = dma.done %s768, 128
        $region120: #{tpu_custom_call.1} parent=115 // pred_fallthru
          _
        %s776 = sand.u32 %s46, 1
        %s777 = scalar_lea.sflag [#allocation6], %s776
        %s778 = sand.u32 %s80, 1
        %s779 = smul.addr %s778, 8
        %s780 = scalar_lea.vmem [#allocation5], %s779
        // Predicated region
        $region121: #{tpu_custom_call.1} parent=115 // pred_check
          %p781 = pneg %p93
        $region122: #{tpu_custom_call.1} parent=115 // pred_check_branch
          %783 = sbr.rel (%p781) target = $region124
        $region123: #{tpu_custom_call.1} parent=115 // pred_region
          %784 = dma.done %s777, 128
        $region124: #{tpu_custom_call.1} parent=115 // pred_fallthru
          _
        // Predicated region
        $region125: #{tpu_custom_call.1} parent=115 // pred_check
          %p785 = pneg %p271
        $region126: #{tpu_custom_call.1} parent=115 // pred_check_branch
          %787 = sbr.rel (%p785) target = $region128
        $region127: #{tpu_custom_call.1} parent=115 // pred_region
          %788 = dma.done [#allocation6], 512
        $region128: #{tpu_custom_call.1} parent=115 // pred_fallthru
          _
        // Predicated region
        $region129: #{tpu_custom_call.1} parent=115 // pred_check
          %p789 = pneg %p292
        $region130: #{tpu_custom_call.1} parent=115 // pred_check_branch
          %791 = sbr.rel (%p789) target = $region132
        $region131: #{tpu_custom_call.1} parent=115 // pred_region
          %792 = dma.done [#allocation9], 512
        $region132: #{tpu_custom_call.1} parent=115 // pred_fallthru
          _
        // Predicated region
        $region133: #{tpu_custom_call.1} parent=115 // pred_check
          %p793 = pneg %p313
        $region134: #{tpu_custom_call.1} parent=115 // pred_check_branch
          %795 = sbr.rel (%p793) target = $region136
        $region135: #{tpu_custom_call.1} parent=115 // pred_region
          %796 = dma.done [#allocation9], 512
        $region136: #{tpu_custom_call.1} parent=115 // pred_fallthru
          _
        // Predicated region
        $region137: #{tpu_custom_call.1} parent=115 // pred_check
          %p797 = pneg %p334
        $region138: #{tpu_custom_call.1} parent=115 // pred_check_branch
          %799 = sbr.rel (%p797) target = $region140
        $region139: #{tpu_custom_call.1} parent=115 // pred_region
          %800 = dma.done [#allocation12], 512
        $region140: #{tpu_custom_call.1} parent=115 // pred_fallthru
          _
        %s801 = sand.u32 %s54, 1
        %s802 = scalar_lea.sflag [#allocation3], %s801
        %s803 = sand.u32 %s54, 1
        %s804 = smul.addr %s803, 8
        %s805 = scalar_lea.vmem [#allocation2], %s804
        %p806 = pneg %p67
        %p807 = pneg %p64
        %s808 = sand.u32 %s46, 1
        %s809 = scalar_lea.sflag [#allocation6], %s808
        %s810 = sand.u32 %s80, 1
        %s811 = smul.addr %s810, 8
        %s812 = scalar_lea.vmem [#allocation5], %s811
        %p813 = pneg %p93
        %p814 = pneg %p90
        %p815 = scmp.lt.s32.totalorder %s46, 1
        %s816 = scalar_select %p815, %s46, 1
        %s817 = smul.addr %s816, 8
        %s818 = scalar_lea.vmem %s2, %s817
        %p819 = pneg %p119
        %p820 = pneg %p116
        %p821 = scmp.lt.s32.totalorder %s46, 1
        %s822 = scalar_select %p821, %s46, 1
        %s823 = smul.addr %s822, 8
        %s824 = scalar_lea.vmem %s3, %s823
        %p825 = pneg %p145
        %p826 = pneg %p142
        %p827 = pneg %p166
        %p828 = pneg %p163
        %p829 = pneg %p187
        %p830 = pneg %p184
        %p831 = pneg %p208
        %p832 = pneg %p205
        %p833 = pneg %p229
        %p834 = pneg %p226
        %p835 = pneg %p250
        %p836 = pneg %p247
        %p837 = pneg %p271
        %p838 = pneg %p268
        %p839 = pneg %p292
        %p840 = pneg %p289
        %p841 = pneg %p313
        %p842 = pneg %p310
        %p843 = pneg %p334
        %p844 = pneg %p331
        %p845 = pneg %p355
        %p846 = pneg %p352
        %p847 = pneg %p376
        %p848 = pneg %p373
        %p849 = pneg %p397
        %p850 = pneg %p394
        %p851 = pneg %p418
        %p852 = pneg %p415
        %p853 = pneg %p439
        %p854 = pneg %p436
        %p855 = pneg %p460
        %p856 = pneg %p457
        %p857 = pneg %p481
        %p858 = pneg %p478
        %p859 = pneg %p502
        %p860 = pneg %p499
        %p861 = pneg %p523
        %p862 = pneg %p520
        %p863 = pneg %p544
        %p864 = pneg %p541
        %p865 = pneg %p565
        %p866 = pneg %p562
        %p867 = pneg %p591
        %p868 = pneg %p588
        %s869 = sand.u32 %s578, 1
        %s870 = scalar_lea.sflag [#allocation4], %s869
        %s871 = sand.u32 %s578, 1
        %s872 = smul.addr %s871, 8
        %s873 = scalar_lea.vmem [#allocation13], %s872
        %p874 = scmp.lt.s32.totalorder %s46, 1
        %s875 = scalar_select %p874, %s46, 1
        %s876 = smul.addr %s875, 8
        %s877 = scalar_lea.vmem %s2, %s876
        %p878 = scmp.lt.s32.totalorder %s46, 1
        %s879 = scalar_select %p878, %s46, 1
        %s880 = smul.addr %s879, 8
        %s881 = scalar_lea.vmem %s3, %s880
        %v883 = vld [vmem:[%s771] sm:$0xff]
        %v884 = vld [vmem:[%s780] sm:$0xff]
        %v885 = vpack.c.bf16 %v884, %v884
        %v886 = vld [vmem:[%s877] sm:$0xff]
        %vm887 = vcmp.ne.f32.partialorder %v886, 0.0
        %v888 = vld [vmem:[%s881] sm:$0xff]
        %vm889 = vcmp.ne.f32.partialorder %v888, 0.0
        %v890 = vpack.c.bf16 %v883, %v883
        %v891 = vld [vmem:[%s4] sm:$0xf]
        %v892 = vld [vmem:[%s4 + $0x4] sm:$0xf]
        %v893 = vld [vmem:[%s4 + $0x8] sm:$0xf]
        %v894 = vld [vmem:[%s4 + $0xc] sm:$0xf]
        %v895 = vld [vmem:[%s5] sm:$0xf]
        %v896 = vld [vmem:[%s5 + $0x4] sm:$0xf]
        %v897 = vld [vmem:[%s5 + $0x8] sm:$0xf]
        %v898 = vld [vmem:[%s5 + $0xc] sm:$0xf]
        %v899 = vld [vmem:[%s6] sm:$0xf]
        %v900 = vld [vmem:[%s6 + $0x4] sm:$0xf]
        %v901 = vld [vmem:[%s6 + $0x8] sm:$0xf]
        %v902 = vld [vmem:[%s6 + $0xc] sm:$0xf]
        %v903 = vld [vmem:[%s7] sm:$0xf]
        %v904 = vld [vmem:[%s7 + $0x4] sm:$0xf]
        %v905 = vld [vmem:[%s7 + $0x8] sm:$0xf]
        %v906 = vld [vmem:[%s7 + $0xc] sm:$0xf]
        %v911 = vunpack.c.l.b16 %v891
        %v912 = vunpack.c.l.b16 %v892
        %v913 = vunpack.c.l.b16 %v893
        %v914 = vunpack.c.l.b16 %v894
        %v915 = vpack.c.b16 %v912, %v911
        %v916 = vpack.c.b16 %v914, %v913
        %vm919 = vcmask 261120
        %v921 = vsel %vm919, %v890, 0
        %923 = vmatprep.subr.bf16.mxu0 0
        %924 = vmatpush1.bf16.msra.mxu0 %v915
        %925 = vmatprep.subr.bf16.mxu0 0
        %926 = vmatpush1.bf16.msra.mxu0 %v916
        %927 = vmatprep.subr.bf16.mxu0 0
        %928 = vmatpush1.bf16.msra.mxu0 0
        %929 = vmatprep.subr.bf16.mxu0 0
        %930 = vmatpush1.bf16.msra.mxu0 0
        %931 = vmatprep.subr.bf16.mxu0 0
        %932 = vmatpush1.bf16.msra.mxu0 0
        %933 = vmatprep.subr.bf16.mxu0 0
        %934 = vmatpush1.bf16.msra.mxu0 0
        %935 = vmatprep.subr.bf16.mxu0 0
        %936 = vmatpush1.bf16.msra.mxu0 0
        %937 = vmatprep.subr.bf16.mxu0 0
        %938 = vmatpush1.bf16.msra.mxu0 0
        %939 = vmatprep.subr.bf16.mxu0 0
        %940 = vmatpush1.bf16.msra.mxu0 0
        %941 = vmatprep.subr.bf16.mxu0 0
        %942 = vmatpush1.bf16.msra.mxu0 0
        %943 = vmatprep.subr.bf16.mxu0 0
        %944 = vmatpush1.bf16.msra.mxu0 0
        %945 = vmatprep.subr.bf16.mxu0 0
        %946 = vmatpush1.bf16.msra.mxu0 0
        %947 = vmatprep.subr.bf16.mxu0 0
        %948 = vmatpush1.bf16.msra.mxu0 0
        %949 = vmatprep.subr.bf16.mxu0 0
        %950 = vmatpush1.bf16.msra.mxu0 0
        %951 = vmatprep.subr.bf16.mxu0 0
        %952 = vmatpush1.bf16.msra.mxu0 0
        %953 = vmatprep.subr.bf16.mxu0 0
        %954 = vmatpush1.bf16.msra.mxu0 0
        %955 = vmatprep.mubr.bf16.mxu0 0
        %956 = vmatmul.mubr.bf16.gmra.mrb[0].mxu0 %v921
        %v957 = vpop.f32.mrb[0].mxu0
        %v958 = vadd.f32 0.0, %v957
        %v959 = vpop.f32.mrb[0].mxu0
        %v960 = vpop.f32.mrb[0].mxu0
        %v961 = vpop.f32.mrb[0].mxu0
        %962 = vdwg.mxu0
        %v967 = vunpack.c.l.b16 %v895
        %v968 = vunpack.c.l.b16 %v896
        %v969 = vunpack.c.l.b16 %v897
        %v970 = vunpack.c.l.b16 %v898
        %v971 = vpack.c.b16 %v968, %v967
        %v972 = vpack.c.b16 %v970, %v969
        %975 = vmatprep.subr.bf16.mxu0 0
        %976 = vmatpush1.bf16.msra.mxu0 %v971
        %977 = vmatprep.subr.bf16.mxu0 0
        %978 = vmatpush1.bf16.msra.mxu0 %v972
        %979 = vmatprep.subr.bf16.mxu0 0
        %980 = vmatpush1.bf16.msra.mxu0 0
        %981 = vmatprep.subr.bf16.mxu0 0
        %982 = vmatpush1.bf16.msra.mxu0 0
        %983 = vmatprep.subr.bf16.mxu0 0
        %984 = vmatpush1.bf16.msra.mxu0 0
        %985 = vmatprep.subr.bf16.mxu0 0
        %986 = vmatpush1.bf16.msra.mxu0 0
        %987 = vmatprep.subr.bf16.mxu0 0
        %988 = vmatpush1.bf16.msra.mxu0 0
        %989 = vmatprep.subr.bf16.mxu0 0
        %990 = vmatpush1.bf16.msra.mxu0 0
        %991 = vmatprep.subr.bf16.mxu0 0
        %992 = vmatpush1.bf16.msra.mxu0 0
        %993 = vmatprep.subr.bf16.mxu0 0
        %994 = vmatpush1.bf16.msra.mxu0 0
        %995 = vmatprep.subr.bf16.mxu0 0
        %996 = vmatpush1.bf16.msra.mxu0 0
        %997 = vmatprep.subr.bf16.mxu0 0
        %998 = vmatpush1.bf16.msra.mxu0 0
        %999 = vmatprep.subr.bf16.mxu0 0
        %1000 = vmatpush1.bf16.msra.mxu0 0
        %1001 = vmatprep.subr.bf16.mxu0 0
        %1002 = vmatpush1.bf16.msra.mxu0 0
        %1003 = vmatprep.subr.bf16.mxu0 0
        %1004 = vmatpush1.bf16.msra.mxu0 0
        %1005 = vmatprep.subr.bf16.mxu0 0
        %1006 = vmatpush1.bf16.msra.mxu0 0
        %1007 = vmatprep.mubr.bf16.mxu0 0
        %1008 = vmatmul.mubr.bf16.gmra.mrb[0].mxu0 %v921
        %v1009 = vpop.f32.mrb[0].mxu0
        %v1010 = vadd.f32 0.0, %v1009
        %v1011 = vpop.f32.mrb[0].mxu0
        %v1012 = vpop.f32.mrb[0].mxu0
        %v1013 = vpop.f32.mrb[0].mxu0
        %1014 = vdwg.mxu0
        %v1019 = vunpack.c.l.b16 %v899
        %v1020 = vunpack.c.l.b16 %v900
        %v1021 = vunpack.c.l.b16 %v901
        %v1022 = vunpack.c.l.b16 %v902
        %v1023 = vpack.c.b16 %v1020, %v1019
        %v1024 = vpack.c.b16 %v1022, %v1021
        %1027 = vmatprep.subr.bf16.mxu0 0
        %1028 = vmatpush1.bf16.msra.mxu0 %v1023
        %1029 = vmatprep.subr.bf16.mxu0 0
        %1030 = vmatpush1.bf16.msra.mxu0 %v1024
        %1031 = vmatprep.subr.bf16.mxu0 0
        %1032 = vmatpush1.bf16.msra.mxu0 0
        %1033 = vmatprep.subr.bf16.mxu0 0
        %1034 = vmatpush1.bf16.msra.mxu0 0
        %1035 = vmatprep.subr.bf16.mxu0 0
        %1036 = vmatpush1.bf16.msra.mxu0 0
        %1037 = vmatprep.subr.bf16.mxu0 0
        %1038 = vmatpush1.bf16.msra.mxu0 0
        %1039 = vmatprep.subr.bf16.mxu0 0
        %1040 = vmatpush1.bf16.msra.mxu0 0
        %1041 = vmatprep.subr.bf16.mxu0 0
        %1042 = vmatpush1.bf16.msra.mxu0 0
        %1043 = vmatprep.subr.bf16.mxu0 0
        %1044 = vmatpush1.bf16.msra.mxu0 0
        %1045 = vmatprep.subr.bf16.mxu0 0
        %1046 = vmatpush1.bf16.msra.mxu0 0
        %1047 = vmatprep.subr.bf16.mxu0 0
        %1048 = vmatpush1.bf16.msra.mxu0 0
        %1049 = vmatprep.subr.bf16.mxu0 0
        %1050 = vmatpush1.bf16.msra.mxu0 0
        %1051 = vmatprep.subr.bf16.mxu0 0
        %1052 = vmatpush1.bf16.msra.mxu0 0
        %1053 = vmatprep.subr.bf16.mxu0 0
        %1054 = vmatpush1.bf16.msra.mxu0 0
        %1055 = vmatprep.subr.bf16.mxu0 0
        %1056 = vmatpush1.bf16.msra.mxu0 0
        %1057 = vmatprep.subr.bf16.mxu0 0
        %1058 = vmatpush1.bf16.msra.mxu0 0
        %1059 = vmatprep.mubr.bf16.mxu0 0
        %1060 = vmatmul.mubr.bf16.gmra.mrb[0].mxu0 %v921
        %v1061 = vpop.f32.mrb[0].mxu0
        %v1062 = vadd.f32 0.0, %v1061
        %v1063 = vpop.f32.mrb[0].mxu0
        %v1064 = vpop.f32.mrb[0].mxu0
        %v1065 = vpop.f32.mrb[0].mxu0
        %1066 = vdwg.mxu0
        %1068 = vrot.lane.b32.xlu0 %v958, 120
        %v1069 = vpop.permute.xlu0 %1068
        %1071 = vrot.lane.b32.xlu0 %v958, 112
        %v1072 = vpop.permute.xlu0 %1071
        %1074 = vrot.lane.b32.xlu0 %v958, 104
        %v1075 = vpop.permute.xlu0 %1074
        %v1077 = vcombine.low %v958, %v1072
        %v1078 = vcombine.high %v958, %v1072
        %v1080 = vunpack.c.l.s4 1983009808
        %v1081 = vunpack.c.0.s8 %v1080
        %v1082 = vlaneseq
        %v1083 = vshrl.u32 %v1082, 7
        %v1084 = vsub.s32 %v1081, %v1083
        %v1085 = vrot.slane %v1077, %v1084
        %v1087 = vunpack.c.l.s4 1983009808
        %v1088 = vunpack.c.0.s8 %v1087
        %v1089 = vlaneseq
        %v1090 = vshrl.u32 %v1089, 7
        %v1091 = vsub.s32 %v1088, %v1090
        %v1092 = vrot.slane %v1078, %v1091
        %v1093 = vcombine.low %v1069, %v1075
        %v1094 = vcombine.high %v1069, %v1075
        %v1096 = vunpack.c.l.s4 1983009808
        %v1097 = vunpack.c.0.s8 %v1096
        %v1098 = vlaneseq
        %v1099 = vshrl.u32 %v1098, 7
        %v1100 = vsub.s32 %v1097, %v1099
        %v1101 = vrot.slane %v1093, %v1100
        %v1103 = vunpack.c.l.s4 1983009808
        %v1104 = vunpack.c.0.s8 %v1103
        %v1105 = vlaneseq
        %v1106 = vshrl.u32 %v1105, 7
        %v1107 = vsub.s32 %v1104, %v1106
        %v1108 = vrot.slane %v1094, %v1107
        %v1109 = vcombine.low %v1085, %v1101
        %v1110 = vcombine.high %v1085, %v1101
        %v1112 = vunpack.c.l.s4 1934713408
        %v1113 = vunpack.c.0.s8 %v1112
        %v1114 = vlaneseq
        %v1115 = vshrl.u32 %v1114, 7
        %v1116 = vsub.s32 %v1113, %v1115
        %v1117 = vrot.slane %v1109, %v1116
        %v1119 = vunpack.c.l.s4 1934713408
        %v1120 = vunpack.c.0.s8 %v1119
        %v1121 = vlaneseq
        %v1122 = vshrl.u32 %v1121, 7
        %v1123 = vsub.s32 %v1120, %v1122
        %v1124 = vrot.slane %v1110, %v1123
        %v1125 = vcombine.low %v1092, %v1108
        %v1126 = vcombine.high %v1092, %v1108
        %v1128 = vunpack.c.l.s4 1934713408
        %v1129 = vunpack.c.0.s8 %v1128
        %v1130 = vlaneseq
        %v1131 = vshrl.u32 %v1130, 7
        %v1132 = vsub.s32 %v1129, %v1131
        %v1133 = vrot.slane %v1125, %v1132
        %v1135 = vunpack.c.l.s4 1934713408
        %v1136 = vunpack.c.0.s8 %v1135
        %v1137 = vlaneseq
        %v1138 = vshrl.u32 %v1137, 7
        %v1139 = vsub.s32 %v1136, %v1138
        %v1140 = vrot.slane %v1126, %v1139
        %v1141 = vcombine.high %v1117, 0.0
        %v1142 = vcombine.high %v1124, 0.0
        %v1143 = vcombine.high %v1133, 0.0
        %v1144 = vcombine.high %v1140, 0.0
        %v1145 = vcombine.low %v1117, %v1124
        %v1147 = vunpack.c.l.s4 1983009808
        %v1148 = vunpack.c.0.s8 %v1147
        %v1149 = vlaneseq
        %v1150 = vshrl.u32 %v1149, 7
        %v1151 = vsub.s32 %v1148, %v1150
        %v1152 = vrot.slane %v1145, %v1151
        %v1153 = vcombine.low %v1141, %v1142
        %v1155 = vunpack.c.l.s4 1983009808
        %v1156 = vunpack.c.0.s8 %v1155
        %v1157 = vlaneseq
        %v1158 = vshrl.u32 %v1157, 7
        %v1159 = vsub.s32 %v1156, %v1158
        %v1160 = vrot.slane %v1153, %v1159
        %v1161 = vcombine.low %v1133, %v1140
        %v1163 = vunpack.c.l.s4 1983009808
        %v1164 = vunpack.c.0.s8 %v1163
        %v1165 = vlaneseq
        %v1166 = vshrl.u32 %v1165, 7
        %v1167 = vsub.s32 %v1164, %v1166
        %v1168 = vrot.slane %v1161, %v1167
        %v1169 = vcombine.low %v1143, %v1144
        %v1171 = vunpack.c.l.s4 1983009808
        %v1172 = vunpack.c.0.s8 %v1171
        %v1173 = vlaneseq
        %v1174 = vshrl.u32 %v1173, 7
        %v1175 = vsub.s32 %v1172, %v1174
        %v1176 = vrot.slane %v1169, %v1175
        %v1177 = vcombine.low %v1152, %v1160
        %v1178 = vcombine.high %v1152, %v1160
        %v1180 = vunpack.c.l.s4 1934713408
        %v1181 = vunpack.c.0.s8 %v1180
        %v1182 = vlaneseq
        %v1183 = vshrl.u32 %v1182, 7
        %v1184 = vsub.s32 %v1181, %v1183
        %v1185 = vrot.slane %v1177, %v1184
        %v1187 = vunpack.c.l.s4 1934713408
        %v1188 = vunpack.c.0.s8 %v1187
        %v1189 = vlaneseq
        %v1190 = vshrl.u32 %v1189, 7
        %v1191 = vsub.s32 %v1188, %v1190
        %v1192 = vrot.slane %v1178, %v1191
        %v1193 = vcombine.low %v1168, %v1176
        %v1194 = vcombine.high %v1168, %v1176
        %v1196 = vunpack.c.l.s4 1934713408
        %v1197 = vunpack.c.0.s8 %v1196
        %v1198 = vlaneseq
        %v1199 = vshrl.u32 %v1198, 7
        %v1200 = vsub.s32 %v1197, %v1199
        %v1201 = vrot.slane %v1193, %v1200
        %v1203 = vunpack.c.l.s4 1934713408
        %v1204 = vunpack.c.0.s8 %v1203
        %v1205 = vlaneseq
        %v1206 = vshrl.u32 %v1205, 7
        %v1207 = vsub.s32 %v1204, %v1206
        %v1208 = vrot.slane %v1194, %v1207
        %v1209 = vcombine.low %v1185, %v1201
        %v1210 = vcombine.high %v1185, %v1201
        %v1211 = vcombine.low %v1192, %v1208
        %v1212 = vcombine.high %v1192, %v1208
        %v1213 = vpack.c.bf16 %v1209, %v1209
        %v1214 = vpack.c.bf16 %v1210, %v1210
        %v1215 = vpack.c.bf16 %v1211, %v1211
        %v1216 = vpack.c.bf16 %v1212, %v1212
        %1218 = vrot.lane.b32.xlu0 %v1010, 120
        %v1219 = vpop.permute.xlu0 %1218
        %1221 = vrot.lane.b32.xlu0 %v1010, 112
        %v1222 = vpop.permute.xlu0 %1221
        %1224 = vrot.lane.b32.xlu0 %v1010, 104
        %v1225 = vpop.permute.xlu0 %1224
        %v1227 = vcombine.low %v1010, %v1222
        %v1228 = vcombine.high %v1010, %v1222
        %v1230 = vunpack.c.l.s4 1983009808
        %v1231 = vunpack.c.0.s8 %v1230
        %v1232 = vlaneseq
        %v1233 = vshrl.u32 %v1232, 7
        %v1234 = vsub.s32 %v1231, %v1233
        %v1235 = vrot.slane %v1227, %v1234
        %v1237 = vunpack.c.l.s4 1983009808
        %v1238 = vunpack.c.0.s8 %v1237
        %v1239 = vlaneseq
        %v1240 = vshrl.u32 %v1239, 7
        %v1241 = vsub.s32 %v1238, %v1240
        %v1242 = vrot.slane %v1228, %v1241
        %v1243 = vcombine.low %v1219, %v1225
        %v1244 = vcombine.high %v1219, %v1225
        %v1246 = vunpack.c.l.s4 1983009808
        %v1247 = vunpack.c.0.s8 %v1246
        %v1248 = vlaneseq
        %v1249 = vshrl.u32 %v1248, 7
        %v1250 = vsub.s32 %v1247, %v1249
        %v1251 = vrot.slane %v1243, %v1250
        %v1253 = vunpack.c.l.s4 1983009808
        %v1254 = vunpack.c.0.s8 %v1253
        %v1255 = vlaneseq
        %v1256 = vshrl.u32 %v1255, 7
        %v1257 = vsub.s32 %v1254, %v1256
        %v1258 = vrot.slane %v1244, %v1257
        %v1259 = vcombine.low %v1235, %v1251
        %v1260 = vcombine.high %v1235, %v1251
        %v1262 = vunpack.c.l.s4 1934713408
        %v1263 = vunpack.c.0.s8 %v1262
        %v1264 = vlaneseq
        %v1265 = vshrl.u32 %v1264, 7
        %v1266 = vsub.s32 %v1263, %v1265
        %v1267 = vrot.slane %v1259, %v1266
        %v1269 = vunpack.c.l.s4 1934713408
        %v1270 = vunpack.c.0.s8 %v1269
        %v1271 = vlaneseq
        %v1272 = vshrl.u32 %v1271, 7
        %v1273 = vsub.s32 %v1270, %v1272
        %v1274 = vrot.slane %v1260, %v1273
        %v1275 = vcombine.low %v1242, %v1258
        %v1276 = vcombine.high %v1242, %v1258
        %v1278 = vunpack.c.l.s4 1934713408
        %v1279 = vunpack.c.0.s8 %v1278
        %v1280 = vlaneseq
        %v1281 = vshrl.u32 %v1280, 7
        %v1282 = vsub.s32 %v1279, %v1281
        %v1283 = vrot.slane %v1275, %v1282
        %v1285 = vunpack.c.l.s4 1934713408
        %v1286 = vunpack.c.0.s8 %v1285
        %v1287 = vlaneseq
        %v1288 = vshrl.u32 %v1287, 7
        %v1289 = vsub.s32 %v1286, %v1288
        %v1290 = vrot.slane %v1276, %v1289
        %v1291 = vcombine.high %v1267, 0.0
        %v1292 = vcombine.high %v1274, 0.0
        %v1293 = vcombine.high %v1283, 0.0
        %v1294 = vcombine.high %v1290, 0.0
        %v1295 = vcombine.low %v1267, %v1274
        %v1297 = vunpack.c.l.s4 1983009808
        %v1298 = vunpack.c.0.s8 %v1297
        %v1299 = vlaneseq
        %v1300 = vshrl.u32 %v1299, 7
        %v1301 = vsub.s32 %v1298, %v1300
        %v1302 = vrot.slane %v1295, %v1301
        %v1303 = vcombine.low %v1291, %v1292
        %v1305 = vunpack.c.l.s4 1983009808
        %v1306 = vunpack.c.0.s8 %v1305
        %v1307 = vlaneseq
        %v1308 = vshrl.u32 %v1307, 7
        %v1309 = vsub.s32 %v1306, %v1308
        %v1310 = vrot.slane %v1303, %v1309
        %v1311 = vcombine.low %v1283, %v1290
        %v1313 = vunpack.c.l.s4 1983009808
        %v1314 = vunpack.c.0.s8 %v1313
        %v1315 = vlaneseq
        %v1316 = vshrl.u32 %v1315, 7
        %v1317 = vsub.s32 %v1314, %v1316
        %v1318 = vrot.slane %v1311, %v1317
        %v1319 = vcombine.low %v1293, %v1294
        %v1321 = vunpack.c.l.s4 1983009808
        %v1322 = vunpack.c.0.s8 %v1321
        %v1323 = vlaneseq
        %v1324 = vshrl.u32 %v1323, 7
        %v1325 = vsub.s32 %v1322, %v1324
        %v1326 = vrot.slane %v1319, %v1325
        %v1327 = vcombine.low %v1302, %v1310
        %v1328 = vcombine.high %v1302, %v1310
        %v1330 = vunpack.c.l.s4 1934713408
        %v1331 = vunpack.c.0.s8 %v1330
        %v1332 = vlaneseq
        %v1333 = vshrl.u32 %v1332, 7
        %v1334 = vsub.s32 %v1331, %v1333
        %v1335 = vrot.slane %v1327, %v1334
        %v1337 = vunpack.c.l.s4 1934713408
        %v1338 = vunpack.c.0.s8 %v1337
        %v1339 = vlaneseq
        %v1340 = vshrl.u32 %v1339, 7
        %v1341 = vsub.s32 %v1338, %v1340
        %v1342 = vrot.slane %v1328, %v1341
        %v1343 = vcombine.low %v1318, %v1326
        %v1344 = vcombine.high %v1318, %v1326
        %v1346 = vunpack.c.l.s4 1934713408
        %v1347 = vunpack.c.0.s8 %v1346
        %v1348 = vlaneseq
        %v1349 = vshrl.u32 %v1348, 7
        %v1350 = vsub.s32 %v1347, %v1349
        %v1351 = vrot.slane %v1343, %v1350
        %v1353 = vunpack.c.l.s4 1934713408
        %v1354 = vunpack.c.0.s8 %v1353
        %v1355 = vlaneseq
        %v1356 = vshrl.u32 %v1355, 7
        %v1357 = vsub.s32 %v1354, %v1356
        %v1358 = vrot.slane %v1344, %v1357
        %v1359 = vcombine.low %v1335, %v1351
        %v1360 = vcombine.high %v1335, %v1351
        %v1361 = vcombine.low %v1342, %v1358
        %v1362 = vcombine.high %v1342, %v1358
        %v1363 = vpack.c.bf16 %v1359, %v1359
        %v1364 = vpack.c.bf16 %v1360, %v1360
        %v1365 = vpack.c.bf16 %v1361, %v1361
        %v1366 = vpack.c.bf16 %v1362, %v1362
        %1368 = vrot.lane.b32.xlu0 %v1062, 120
        %v1369 = vpop.permute.xlu0 %1368
        %1371 = vrot.lane.b32.xlu0 %v1062, 112
        %v1372 = vpop.permute.xlu0 %1371
        %1374 = vrot.lane.b32.xlu0 %v1062, 104
        %v1375 = vpop.permute.xlu0 %1374
        %v1377 = vcombine.low %v1062, %v1372
        %v1378 = vcombine.high %v1062, %v1372
        %v1380 = vunpack.c.l.s4 1983009808
        %v1381 = vunpack.c.0.s8 %v1380
        %v1382 = vlaneseq
        %v1383 = vshrl.u32 %v1382, 7
        %v1384 = vsub.s32 %v1381, %v1383
        %v1385 = vrot.slane %v1377, %v1384
        %v1387 = vunpack.c.l.s4 1983009808
        %v1388 = vunpack.c.0.s8 %v1387
        %v1389 = vlaneseq
        %v1390 = vshrl.u32 %v1389, 7
        %v1391 = vsub.s32 %v1388, %v1390
        %v1392 = vrot.slane %v1378, %v1391
        %v1393 = vcombine.low %v1369, %v1375
        %v1394 = vcombine.high %v1369, %v1375
        %v1396 = vunpack.c.l.s4 1983009808
        %v1397 = vunpack.c.0.s8 %v1396
        %v1398 = vlaneseq
        %v1399 = vshrl.u32 %v1398, 7
        %v1400 = vsub.s32 %v1397, %v1399
        %v1401 = vrot.slane %v1393, %v1400
        %v1403 = vunpack.c.l.s4 1983009808
        %v1404 = vunpack.c.0.s8 %v1403
        %v1405 = vlaneseq
        %v1406 = vshrl.u32 %v1405, 7
        %v1407 = vsub.s32 %v1404, %v1406
        %v1408 = vrot.slane %v1394, %v1407
        %v1409 = vcombine.low %v1385, %v1401
        %v1410 = vcombine.high %v1385, %v1401
        %v1412 = vunpack.c.l.s4 1934713408
        %v1413 = vunpack.c.0.s8 %v1412
        %v1414 = vlaneseq
        %v1415 = vshrl.u32 %v1414, 7
        %v1416 = vsub.s32 %v1413, %v1415
        %v1417 = vrot.slane %v1409, %v1416
        %v1419 = vunpack.c.l.s4 1934713408
        %v1420 = vunpack.c.0.s8 %v1419
        %v1421 = vlaneseq
        %v1422 = vshrl.u32 %v1421, 7
        %v1423 = vsub.s32 %v1420, %v1422
        %v1424 = vrot.slane %v1410, %v1423
        %v1425 = vcombine.low %v1392, %v1408
        %v1426 = vcombine.high %v1392, %v1408
        %v1428 = vunpack.c.l.s4 1934713408
        %v1429 = vunpack.c.0.s8 %v1428
        %v1430 = vlaneseq
        %v1431 = vshrl.u32 %v1430, 7
        %v1432 = vsub.s32 %v1429, %v1431
        %v1433 = vrot.slane %v1425, %v1432
        %v1435 = vunpack.c.l.s4 1934713408
        %v1436 = vunpack.c.0.s8 %v1435
        %v1437 = vlaneseq
        %v1438 = vshrl.u32 %v1437, 7
        %v1439 = vsub.s32 %v1436, %v1438
        %v1440 = vrot.slane %v1426, %v1439
        %v1441 = vcombine.high %v1417, 0.0
        %v1442 = vcombine.high %v1424, 0.0
        %v1443 = vcombine.high %v1433, 0.0
        %v1444 = vcombine.high %v1440, 0.0
        %v1445 = vcombine.low %v1417, %v1424
        %v1447 = vunpack.c.l.s4 1983009808
        %v1448 = vunpack.c.0.s8 %v1447
        %v1449 = vlaneseq
        %v1450 = vshrl.u32 %v1449, 7
        %v1451 = vsub.s32 %v1448, %v1450
        %v1452 = vrot.slane %v1445, %v1451
        %v1453 = vcombine.low %v1441, %v1442
        %v1455 = vunpack.c.l.s4 1983009808
        %v1456 = vunpack.c.0.s8 %v1455
        %v1457 = vlaneseq
        %v1458 = vshrl.u32 %v1457, 7
        %v1459 = vsub.s32 %v1456, %v1458
        %v1460 = vrot.slane %v1453, %v1459
        %v1461 = vcombine.low %v1433, %v1440
        %v1463 = vunpack.c.l.s4 1983009808
        %v1464 = vunpack.c.0.s8 %v1463
        %v1465 = vlaneseq
        %v1466 = vshrl.u32 %v1465, 7
        %v1467 = vsub.s32 %v1464, %v1466
        %v1468 = vrot.slane %v1461, %v1467
        %v1469 = vcombine.low %v1443, %v1444
        %v1471 = vunpack.c.l.s4 1983009808
        %v1472 = vunpack.c.0.s8 %v1471
        %v1473 = vlaneseq
        %v1474 = vshrl.u32 %v1473, 7
        %v1475 = vsub.s32 %v1472, %v1474
        %v1476 = vrot.slane %v1469, %v1475
        %v1477 = vcombine.low %v1452, %v1460
        %v1478 = vcombine.high %v1452, %v1460
        %v1480 = vunpack.c.l.s4 1934713408
        %v1481 = vunpack.c.0.s8 %v1480
        %v1482 = vlaneseq
        %v1483 = vshrl.u32 %v1482, 7
        %v1484 = vsub.s32 %v1481, %v1483
        %v1485 = vrot.slane %v1477, %v1484
        %v1487 = vunpack.c.l.s4 1934713408
        %v1488 = vunpack.c.0.s8 %v1487
        %v1489 = vlaneseq
        %v1490 = vshrl.u32 %v1489, 7
        %v1491 = vsub.s32 %v1488, %v1490
        %v1492 = vrot.slane %v1478, %v1491
        %v1493 = vcombine.low %v1468, %v1476
        %v1494 = vcombine.high %v1468, %v1476
        %v1496 = vunpack.c.l.s4 1934713408
        %v1497 = vunpack.c.0.s8 %v1496
        %v1498 = vlaneseq
        %v1499 = vshrl.u32 %v1498, 7
        %v1500 = vsub.s32 %v1497, %v1499
        %v1501 = vrot.slane %v1493, %v1500
        %v1503 = vunpack.c.l.s4 1934713408
        %v1504 = vunpack.c.0.s8 %v1503
        %v1505 = vlaneseq
        %v1506 = vshrl.u32 %v1505, 7
        %v1507 = vsub.s32 %v1504, %v1506
        %v1508 = vrot.slane %v1494, %v1507
        %v1509 = vcombine.low %v1485, %v1501
        %v1510 = vcombine.high %v1485, %v1501
        %v1511 = vcombine.low %v1492, %v1508
        %v1512 = vcombine.high %v1492, %v1508
        %v1513 = vpack.c.bf16 %v1509, %v1509
        %v1514 = vpack.c.bf16 %v1510, %v1510
        %v1515 = vpack.c.bf16 %v1511, %v1511
        %v1516 = vpack.c.bf16 %v1512, %v1512
        %vm1517 = vcmask 64512
        %v1519 = vsel %vm1517, %v1213, 0
        %v1522 = vsel %vm1517, %v1363, 0
        %1524 = vmatprep.subr.bf16.mxu0 0
        %1525 = vmatpush1.bf16.xpose.msra.mxu0 %v1522
        %1526 = vmatprep.subr.bf16.mxu0 0
        %1527 = vmatpush1.bf16.xpose.msra.mxu0 0
        %1528 = vmatprep.subr.bf16.mxu0 0
        %1529 = vmatpush1.bf16.xpose.msra.mxu0 0
        %1530 = vmatprep.subr.bf16.mxu0 0
        %1531 = vmatpush1.bf16.xpose.msra.mxu0 0
        %1532 = vmatprep.subr.bf16.mxu0 0
        %1533 = vmatpush1.bf16.xpose.msra.mxu0 0
        %1534 = vmatprep.subr.bf16.mxu0 0
        %1535 = vmatpush1.bf16.xpose.msra.mxu0 0
        %1536 = vmatprep.subr.bf16.mxu0 0
        %1537 = vmatpush1.bf16.xpose.msra.mxu0 0
        %1538 = vmatprep.subr.bf16.mxu0 0
        %1539 = vmatpush1.bf16.xpose.msra.mxu0 0
        %1540 = vmatprep.subr.bf16.mxu0 0
        %1541 = vmatpush1.bf16.xpose.msra.mxu0 0
        %1542 = vmatprep.subr.bf16.mxu0 0
        %1543 = vmatpush1.bf16.xpose.msra.mxu0 0
        %1544 = vmatprep.subr.bf16.mxu0 0
        %1545 = vmatpush1.bf16.xpose.msra.mxu0 0
        %1546 = vmatprep.subr.bf16.mxu0 0
        %1547 = vmatpush1.bf16.xpose.msra.mxu0 0
        %1548 = vmatprep.subr.bf16.mxu0 0
        %1549 = vmatpush1.bf16.xpose.msra.mxu0 0
        %1550 = vmatprep.subr.bf16.mxu0 0
        %1551 = vmatpush1.bf16.xpose.msra.mxu0 0
        %1552 = vmatprep.subr.bf16.mxu0 0
        %1553 = vmatpush1.bf16.xpose.msra.mxu0 0
        %1554 = vmatprep.subr.bf16.mxu0 0
        %1555 = vmatpush1.bf16.xpose.msra.mxu0 0
        %1556 = vmatprep.mubr.bf16.mxu0 0
        %1557 = vmatmul.mubr.bf16.gmra.mrb[0].mxu0 %v1519
        %v1558 = vpop.f32.mrb[0].mxu0
        %v1559 = vadd.f32 0.0, %v1558
        %v1560 = vpop.f32.mrb[0].mxu0
        %v1561 = vpop.f32.mrb[0].mxu0
        %v1562 = vpop.f32.mrb[0].mxu0
        %1563 = vdwg.mxu0
        %v1565 = vsel %vm1517, %v1214, 0
        %v1568 = vsel %vm1517, %v1364, 0
        %1570 = vmatprep.subr.bf16.mxu0 0
        %1571 = vmatpush1.bf16.xpose.msra.mxu0 %v1568
        %1572 = vmatprep.subr.bf16.mxu0 0
        %1573 = vmatpush1.bf16.xpose.msra.mxu0 0
        %1574 = vmatprep.subr.bf16.mxu0 0
        %1575 = vmatpush1.bf16.xpose.msra.mxu0 0
        %1576 = vmatprep.subr.bf16.mxu0 0
        %1577 = vmatpush1.bf16.xpose.msra.mxu0 0
        %1578 = vmatprep.subr.bf16.mxu0 0
        %1579 = vmatpush1.bf16.xpose.msra.mxu0 0
        %1580 = vmatprep.subr.bf16.mxu0 0
        %1581 = vmatpush1.bf16.xpose.msra.mxu0 0
        %1582 = vmatprep.subr.bf16.mxu0 0
        %1583 = vmatpush1.bf16.xpose.msra.mxu0 0
        %1584 = vmatprep.subr.bf16.mxu0 0
        %1585 = vmatpush1.bf16.xpose.msra.mxu0 0
        %1586 = vmatprep.subr.bf16.mxu0 0
        %1587 = vmatpush1.bf16.xpose.msra.mxu0 0
        %1588 = vmatprep.subr.bf16.mxu0 0
        %1589 = vmatpush1.bf16.xpose.msra.mxu0 0
        %1590 = vmatprep.subr.bf16.mxu0 0
        %1591 = vmatpush1.bf16.xpose.msra.mxu0 0
        %1592 = vmatprep.subr.bf16.mxu0 0
        %1593 = vmatpush1.bf16.xpose.msra.mxu0 0
        %1594 = vmatprep.subr.bf16.mxu0 0
        %1595 = vmatpush1.bf16.xpose.msra.mxu0 0
        %1596 = vmatprep.subr.bf16.mxu0 0
        %1597 = vmatpush1.bf16.xpose.msra.mxu0 0
        %1598 = vmatprep.subr.bf16.mxu0 0
        %1599 = vmatpush1.bf16.xpose.msra.mxu0 0
        %1600 = vmatprep.subr.bf16.mxu0 0
        %1601 = vmatpush1.bf16.xpose.msra.mxu0 0
        %1602 = vmatprep.mubr.bf16.mxu0 0
        %1603 = vmatmul.mubr.bf16.gmra.mrb[0].mxu0 %v1565
        %v1604 = vpop.f32.mrb[0].mxu0
        %v1605 = vadd.f32 0.0, %v1604
        %v1606 = vpop.f32.mrb[0].mxu0
        %v1607 = vpop.f32.mrb[0].mxu0
        %v1608 = vpop.f32.mrb[0].mxu0
        %1609 = vdwg.mxu0
        %v1611 = vsel %vm1517, %v1215, 0
        %v1614 = vsel %vm1517, %v1365, 0
        %1616 = vmatprep.subr.bf16.mxu0 0
        %1617 = vmatpush1.bf16.xpose.msra.mxu0 %v1614
        %1618 = vmatprep.subr.bf16.mxu0 0
        %1619 = vmatpush1.bf16.xpose.msra.mxu0 0
        %1620 = vmatprep.subr.bf16.mxu0 0
        %1621 = vmatpush1.bf16.xpose.msra.mxu0 0
        %1622 = vmatprep.subr.bf16.mxu0 0
        %1623 = vmatpush1.bf16.xpose.msra.mxu0 0
        %1624 = vmatprep.subr.bf16.mxu0 0
        %1625 = vmatpush1.bf16.xpose.msra.mxu0 0
        %1626 = vmatprep.subr.bf16.mxu0 0
        %1627 = vmatpush1.bf16.xpose.msra.mxu0 0
        %1628 = vmatprep.subr.bf16.mxu0 0
        %1629 = vmatpush1.bf16.xpose.msra.mxu0 0
        %1630 = vmatprep.subr.bf16.mxu0 0
        %1631 = vmatpush1.bf16.xpose.msra.mxu0 0
        %1632 = vmatprep.subr.bf16.mxu0 0
        %1633 = vmatpush1.bf16.xpose.msra.mxu0 0
        %1634 = vmatprep.subr.bf16.mxu0 0
        %1635 = vmatpush1.bf16.xpose.msra.mxu0 0
        %1636 = vmatprep.subr.bf16.mxu0 0
        %1637 = vmatpush1.bf16.xpose.msra.mxu0 0
        %1638 = vmatprep.subr.bf16.mxu0 0
        %1639 = vmatpush1.bf16.xpose.msra.mxu0 0
        %1640 = vmatprep.subr.bf16.mxu0 0
        %1641 = vmatpush1.bf16.xpose.msra.mxu0 0
        %1642 = vmatprep.subr.bf16.mxu0 0
        %1643 = vmatpush1.bf16.xpose.msra.mxu0 0
        %1644 = vmatprep.subr.bf16.mxu0 0
        %1645 = vmatpush1.bf16.xpose.msra.mxu0 0
        %1646 = vmatprep.subr.bf16.mxu0 0
        %1647 = vmatpush1.bf16.xpose.msra.mxu0 0
        %1648 = vmatprep.mubr.bf16.mxu0 0
        %1649 = vmatmul.mubr.bf16.gmra.mrb[0].mxu0 %v1611
        %v1650 = vpop.f32.mrb[0].mxu0
        %v1651 = vadd.f32 0.0, %v1650
        %v1652 = vpop.f32.mrb[0].mxu0
        %v1653 = vpop.f32.mrb[0].mxu0
        %v1654 = vpop.f32.mrb[0].mxu0
        %1655 = vdwg.mxu0
        %v1657 = vsel %vm1517, %v1216, 0
        %v1660 = vsel %vm1517, %v1366, 0
        %1662 = vmatprep.subr.bf16.mxu0 0
        %1663 = vmatpush1.bf16.xpose.msra.mxu0 %v1660
        %1664 = vmatprep.subr.bf16.mxu0 0
        %1665 = vmatpush1.bf16.xpose.msra.mxu0 0
        %1666 = vmatprep.subr.bf16.mxu0 0
        %1667 = vmatpush1.bf16.xpose.msra.mxu0 0
        %1668 = vmatprep.subr.bf16.mxu0 0
        %1669 = vmatpush1.bf16.xpose.msra.mxu0 0
        %1670 = vmatprep.subr.bf16.mxu0 0
        %1671 = vmatpush1.bf16.xpose.msra.mxu0 0
        %1672 = vmatprep.subr.bf16.mxu0 0
        %1673 = vmatpush1.bf16.xpose.msra.mxu0 0
        %1674 = vmatprep.subr.bf16.mxu0 0
        %1675 = vmatpush1.bf16.xpose.msra.mxu0 0
        %1676 = vmatprep.subr.bf16.mxu0 0
        %1677 = vmatpush1.bf16.xpose.msra.mxu0 0
        %1678 = vmatprep.subr.bf16.mxu0 0
        %1679 = vmatpush1.bf16.xpose.msra.mxu0 0
        %1680 = vmatprep.subr.bf16.mxu0 0
        %1681 = vmatpush1.bf16.xpose.msra.mxu0 0
        %1682 = vmatprep.subr.bf16.mxu0 0
        %1683 = vmatpush1.bf16.xpose.msra.mxu0 0
        %1684 = vmatprep.subr.bf16.mxu0 0
        %1685 = vmatpush1.bf16.xpose.msra.mxu0 0
        %1686 = vmatprep.subr.bf16.mxu0 0
        %1687 = vmatpush1.bf16.xpose.msra.mxu0 0
        %1688 = vmatprep.subr.bf16.mxu0 0
        %1689 = vmatpush1.bf16.xpose.msra.mxu0 0
        %1690 = vmatprep.subr.bf16.mxu0 0
        %1691 = vmatpush1.bf16.xpose.msra.mxu0 0
        %1692 = vmatprep.subr.bf16.mxu0 0
        %1693 = vmatpush1.bf16.xpose.msra.mxu0 0
        %1694 = vmatprep.mubr.bf16.mxu0 0
        %1695 = vmatmul.mubr.bf16.gmra.mrb[0].mxu0 %v1657
        %v1696 = vpop.f32.mrb[0].mxu0
        %v1697 = vadd.f32 0.0, %v1696
        %v1698 = vpop.f32.mrb[0].mxu0
        %v1699 = vpop.f32.mrb[0].mxu0
        %v1700 = vpop.f32.mrb[0].mxu0
        %1701 = vdwg.mxu0
        %v1702 = vsel %vm887, 1, 0
        %1703 = vset.pattern.permute.xlu0 0
        %1704 = vperm.xlu0 %1703, %v1702
        %v1705 = vpop.permute.xlu0 %1704
        %vm1706 = vcmp.eq.s32.totalorder %v1705, 1
        %v1707 = vsel %vm1706, -1e+09, %v1559
        %v1708 = vsel %vm1706, -1e+09, %v1605
        %v1709 = vsel %vm1706, -1e+09, %v1651
        %v1710 = vsel %vm1706, -1e+09, %v1697
        %v1711 = vsel %vm1517, %v1707, -inf
        %1712 = vmax.xlane.f32.xlu0 %v1711
        %v1713 = vpop.xlane.xlu0 %1712
        %v1714 = vsel %vm1517, %v1708, -inf
        %1715 = vmax.xlane.f32.xlu0 %v1714
        %v1716 = vpop.xlane.xlu0 %1715
        %v1717 = vsel %vm1517, %v1709, -inf
        %1718 = vmax.xlane.f32.xlu0 %v1717
        %v1719 = vpop.xlane.xlu0 %1718
        %v1720 = vsel %vm1517, %v1710, -inf
        %1721 = vmax.xlane.f32.xlu0 %v1720
        %v1722 = vpop.xlane.xlu0 %1721
        %v1723 = vsub.f32 %v1707, %v1713
        %v1724 = vsub.f32 %v1708, %v1716
        %v1725 = vsub.f32 %v1709, %v1719
        %v1726 = vsub.f32 %v1710, %v1722
        %v1727 = vmul.f32 %v1723, 1.442695
        %v1728 = vpow.pop %v1727
        %v1729 = vmul.f32 %v1724, 1.442695
        %v1730 = vpow.pop %v1729
        %v1731 = vmul.f32 %v1725, 1.442695
        %v1732 = vpow.pop %v1731
        %v1733 = vmul.f32 %v1726, 1.442695
        %v1734 = vpow.pop %v1733
        %v1735 = vsel %vm1517, %v1728, 0.0
        %1736 = vadd.xlane.f32.xlu0 %v1735
        %v1737 = vpop.xlane.xlu0 %1736
        %v1738 = vsel %vm1517, %v1730, 0.0
        %1739 = vadd.xlane.f32.xlu0 %v1738
        %v1740 = vpop.xlane.xlu0 %1739
        %v1741 = vsel %vm1517, %v1732, 0.0
        %1742 = vadd.xlane.f32.xlu0 %v1741
        %v1743 = vpop.xlane.xlu0 %1742
        %v1744 = vsel %vm1517, %v1734, 0.0
        %1745 = vadd.xlane.f32.xlu0 %v1744
        %v1746 = vpop.xlane.xlu0 %1745
        %v1747 = vrcp.pop %v1737
        %v1748 = vrcp.pop %v1740
        %v1749 = vrcp.pop %v1743
        %v1750 = vrcp.pop %v1746
        %v1751 = vmul.f32 %v1728, %v1747
        %v1752 = vmul.f32 %v1730, %v1748
        %v1753 = vmul.f32 %v1732, %v1749
        %v1754 = vmul.f32 %v1734, %v1750
        %v1755 = vpack.c.bf16 %v1751, %v1751
        %v1756 = vpack.c.bf16 %v1752, %v1752
        %v1757 = vpack.c.bf16 %v1753, %v1753
        %v1758 = vpack.c.bf16 %v1754, %v1754
        %v1760 = vsel %vm1517, %v1755, 0
        %vm1762 = vcmask 1043456
        %v1764 = vsel %vm1762, %v1513, 0
        %1766 = vmatprep.subr.bf16.mxu0 0
        %1767 = vmatpush1.bf16.msra.mxu0 %v1764
        %1768 = vmatprep.subr.bf16.mxu0 0
        %1769 = vmatpush1.bf16.msra.mxu0 0
        %1770 = vmatprep.subr.bf16.mxu0 0
        %1771 = vmatpush1.bf16.msra.mxu0 0
        %1772 = vmatprep.subr.bf16.mxu0 0
        %1773 = vmatpush1.bf16.msra.mxu0 0
        %1774 = vmatprep.subr.bf16.mxu0 0
        %1775 = vmatpush1.bf16.msra.mxu0 0
        %1776 = vmatprep.subr.bf16.mxu0 0
        %1777 = vmatpush1.bf16.msra.mxu0 0
        %1778 = vmatprep.subr.bf16.mxu0 0
        %1779 = vmatpush1.bf16.msra.mxu0 0
        %1780 = vmatprep.subr.bf16.mxu0 0
        %1781 = vmatpush1.bf16.msra.mxu0 0
        %1782 = vmatprep.subr.bf16.mxu0 0
        %1783 = vmatpush1.bf16.msra.mxu0 0
        %1784 = vmatprep.subr.bf16.mxu0 0
        %1785 = vmatpush1.bf16.msra.mxu0 0
        %1786 = vmatprep.subr.bf16.mxu0 0
        %1787 = vmatpush1.bf16.msra.mxu0 0
        %1788 = vmatprep.subr.bf16.mxu0 0
        %1789 = vmatpush1.bf16.msra.mxu0 0
        %1790 = vmatprep.subr.bf16.mxu0 0
        %1791 = vmatpush1.bf16.msra.mxu0 0
        %1792 = vmatprep.subr.bf16.mxu0 0
        %1793 = vmatpush1.bf16.msra.mxu0 0
        %1794 = vmatprep.subr.bf16.mxu0 0
        %1795 = vmatpush1.bf16.msra.mxu0 0
        %1796 = vmatprep.subr.bf16.mxu0 0
        %1797 = vmatpush1.bf16.msra.mxu0 0
        %1798 = vmatprep.mubr.bf16.mxu0 0
        %1799 = vmatmul.mubr.bf16.gmra.mrb[0].mxu0 %v1760
        %v1800 = vpop.f32.mrb[0].mxu0
        %v1801 = vadd.f32 0.0, %v1800
        %v1802 = vpop.f32.mrb[0].mxu0
        %v1803 = vpop.f32.mrb[0].mxu0
        %v1804 = vpop.f32.mrb[0].mxu0
        %1805 = vdwg.mxu0
        %v1807 = vsel %vm1517, %v1756, 0
        %v1810 = vsel %vm1762, %v1514, 0
        %1812 = vmatprep.subr.bf16.mxu0 0
        %1813 = vmatpush1.bf16.msra.mxu0 %v1810
        %1814 = vmatprep.subr.bf16.mxu0 0
        %1815 = vmatpush1.bf16.msra.mxu0 0
        %1816 = vmatprep.subr.bf16.mxu0 0
        %1817 = vmatpush1.bf16.msra.mxu0 0
        %1818 = vmatprep.subr.bf16.mxu0 0
        %1819 = vmatpush1.bf16.msra.mxu0 0
        %1820 = vmatprep.subr.bf16.mxu0 0
        %1821 = vmatpush1.bf16.msra.mxu0 0
        %1822 = vmatprep.subr.bf16.mxu0 0
        %1823 = vmatpush1.bf16.msra.mxu0 0
        %1824 = vmatprep.subr.bf16.mxu0 0
        %1825 = vmatpush1.bf16.msra.mxu0 0
        %1826 = vmatprep.subr.bf16.mxu0 0
        %1827 = vmatpush1.bf16.msra.mxu0 0
        %1828 = vmatprep.subr.bf16.mxu0 0
        %1829 = vmatpush1.bf16.msra.mxu0 0
        %1830 = vmatprep.subr.bf16.mxu0 0
        %1831 = vmatpush1.bf16.msra.mxu0 0
        %1832 = vmatprep.subr.bf16.mxu0 0
        %1833 = vmatpush1.bf16.msra.mxu0 0
        %1834 = vmatprep.subr.bf16.mxu0 0
        %1835 = vmatpush1.bf16.msra.mxu0 0
        %1836 = vmatprep.subr.bf16.mxu0 0
        %1837 = vmatpush1.bf16.msra.mxu0 0
        %1838 = vmatprep.subr.bf16.mxu0 0
        %1839 = vmatpush1.bf16.msra.mxu0 0
        %1840 = vmatprep.subr.bf16.mxu0 0
        %1841 = vmatpush1.bf16.msra.mxu0 0
        %1842 = vmatprep.subr.bf16.mxu0 0
        %1843 = vmatpush1.bf16.msra.mxu0 0
        %1844 = vmatprep.mubr.bf16.mxu0 0
        %1845 = vmatmul.mubr.bf16.gmra.mrb[0].mxu0 %v1807
        %v1846 = vpop.f32.mrb[0].mxu0
        %v1847 = vadd.f32 0.0, %v1846
        %v1848 = vpop.f32.mrb[0].mxu0
        %v1849 = vpop.f32.mrb[0].mxu0
        %v1850 = vpop.f32.mrb[0].mxu0
        %1851 = vdwg.mxu0
        %v1853 = vsel %vm1517, %v1757, 0
        %v1856 = vsel %vm1762, %v1515, 0
        %1858 = vmatprep.subr.bf16.mxu0 0
        %1859 = vmatpush1.bf16.msra.mxu0 %v1856
        %1860 = vmatprep.subr.bf16.mxu0 0
        %1861 = vmatpush1.bf16.msra.mxu0 0
        %1862 = vmatprep.subr.bf16.mxu0 0
        %1863 = vmatpush1.bf16.msra.mxu0 0
        %1864 = vmatprep.subr.bf16.mxu0 0
        %1865 = vmatpush1.bf16.msra.mxu0 0
        %1866 = vmatprep.subr.bf16.mxu0 0
        %1867 = vmatpush1.bf16.msra.mxu0 0
        %1868 = vmatprep.subr.bf16.mxu0 0
        %1869 = vmatpush1.bf16.msra.mxu0 0
        %1870 = vmatprep.subr.bf16.mxu0 0
        %1871 = vmatpush1.bf16.msra.mxu0 0
        %1872 = vmatprep.subr.bf16.mxu0 0
        %1873 = vmatpush1.bf16.msra.mxu0 0
        %1874 = vmatprep.subr.bf16.mxu0 0
        %1875 = vmatpush1.bf16.msra.mxu0 0
        %1876 = vmatprep.subr.bf16.mxu0 0
        %1877 = vmatpush1.bf16.msra.mxu0 0
        %1878 = vmatprep.subr.bf16.mxu0 0
        %1879 = vmatpush1.bf16.msra.mxu0 0
        %1880 = vmatprep.subr.bf16.mxu0 0
        %1881 = vmatpush1.bf16.msra.mxu0 0
        %1882 = vmatprep.subr.bf16.mxu0 0
        %1883 = vmatpush1.bf16.msra.mxu0 0
        %1884 = vmatprep.subr.bf16.mxu0 0
        %1885 = vmatpush1.bf16.msra.mxu0 0
        %1886 = vmatprep.subr.bf16.mxu0 0
        %1887 = vmatpush1.bf16.msra.mxu0 0
        %1888 = vmatprep.subr.bf16.mxu0 0
        %1889 = vmatpush1.bf16.msra.mxu0 0
        %1890 = vmatprep.mubr.bf16.mxu0 0
        %1891 = vmatmul.mubr.bf16.gmra.mrb[0].mxu0 %v1853
        %v1892 = vpop.f32.mrb[0].mxu0
        %v1893 = vadd.f32 0.0, %v1892
        %v1894 = vpop.f32.mrb[0].mxu0
        %v1895 = vpop.f32.mrb[0].mxu0
        %v1896 = vpop.f32.mrb[0].mxu0
        %1897 = vdwg.mxu0
        %v1899 = vsel %vm1517, %v1758, 0
        %v1902 = vsel %vm1762, %v1516, 0
        %1904 = vmatprep.subr.bf16.mxu0 0
        %1905 = vmatpush1.bf16.msra.mxu0 %v1902
        %1906 = vmatprep.subr.bf16.mxu0 0
        %1907 = vmatpush1.bf16.msra.mxu0 0
        %1908 = vmatprep.subr.bf16.mxu0 0
        %1909 = vmatpush1.bf16.msra.mxu0 0
        %1910 = vmatprep.subr.bf16.mxu0 0
        %1911 = vmatpush1.bf16.msra.mxu0 0
        %1912 = vmatprep.subr.bf16.mxu0 0
        %1913 = vmatpush1.bf16.msra.mxu0 0
        %1914 = vmatprep.subr.bf16.mxu0 0
        %1915 = vmatpush1.bf16.msra.mxu0 0
        %1916 = vmatprep.subr.bf16.mxu0 0
        %1917 = vmatpush1.bf16.msra.mxu0 0
        %1918 = vmatprep.subr.bf16.mxu0 0
        %1919 = vmatpush1.bf16.msra.mxu0 0
        %1920 = vmatprep.subr.bf16.mxu0 0
        %1921 = vmatpush1.bf16.msra.mxu0 0
        %1922 = vmatprep.subr.bf16.mxu0 0
        %1923 = vmatpush1.bf16.msra.mxu0 0
        %1924 = vmatprep.subr.bf16.mxu0 0
        %1925 = vmatpush1.bf16.msra.mxu0 0
        %1926 = vmatprep.subr.bf16.mxu0 0
        %1927 = vmatpush1.bf16.msra.mxu0 0
        %1928 = vmatprep.subr.bf16.mxu0 0
        %1929 = vmatpush1.bf16.msra.mxu0 0
        %1930 = vmatprep.subr.bf16.mxu0 0
        %1931 = vmatpush1.bf16.msra.mxu0 0
        %1932 = vmatprep.subr.bf16.mxu0 0
        %1933 = vmatpush1.bf16.msra.mxu0 0
        %1934 = vmatprep.subr.bf16.mxu0 0
        %1935 = vmatpush1.bf16.msra.mxu0 0
        %1936 = vmatprep.mubr.bf16.mxu0 0
        %1937 = vmatmul.mubr.bf16.gmra.mrb[0].mxu0 %v1899
        %v1938 = vpop.f32.mrb[0].mxu0
        %v1939 = vadd.f32 0.0, %v1938
        %v1940 = vpop.f32.mrb[0].mxu0
        %v1941 = vpop.f32.mrb[0].mxu0
        %v1942 = vpop.f32.mrb[0].mxu0
        %1943 = vdwg.mxu0
        %v1944 = vcombine.low %v1801, %v1893
        %v1945 = vcombine.high %v1801, %v1893
        %v1947 = vunpack.c.l.s4 1983009808
        %v1948 = vunpack.c.0.s8 %v1947
        %v1949 = vlaneseq
        %v1950 = vshrl.u32 %v1949, 7
        %v1951 = vsub.s32 %v1948, %v1950
        %v1952 = vrot.slane %v1944, %v1951
        %v1954 = vunpack.c.l.s4 1983009808
        %v1955 = vunpack.c.0.s8 %v1954
        %v1956 = vlaneseq
        %v1957 = vshrl.u32 %v1956, 7
        %v1958 = vsub.s32 %v1955, %v1957
        %v1959 = vrot.slane %v1945, %v1958
        %v1960 = vcombine.low %v1847, %v1939
        %v1961 = vcombine.high %v1847, %v1939
        %v1963 = vunpack.c.l.s4 1983009808
        %v1964 = vunpack.c.0.s8 %v1963
        %v1965 = vlaneseq
        %v1966 = vshrl.u32 %v1965, 7
        %v1967 = vsub.s32 %v1964, %v1966
        %v1968 = vrot.slane %v1960, %v1967
        %v1970 = vunpack.c.l.s4 1983009808
        %v1971 = vunpack.c.0.s8 %v1970
        %v1972 = vlaneseq
        %v1973 = vshrl.u32 %v1972, 7
        %v1974 = vsub.s32 %v1971, %v1973
        %v1975 = vrot.slane %v1961, %v1974
        %v1976 = vcombine.low %v1952, %v1968
        %v1977 = vcombine.high %v1952, %v1968
        %v1979 = vunpack.c.l.s4 1934713408
        %v1980 = vunpack.c.0.s8 %v1979
        %v1981 = vlaneseq
        %v1982 = vshrl.u32 %v1981, 7
        %v1983 = vsub.s32 %v1980, %v1982
        %v1984 = vrot.slane %v1976, %v1983
        %v1986 = vunpack.c.l.s4 1934713408
        %v1987 = vunpack.c.0.s8 %v1986
        %v1988 = vlaneseq
        %v1989 = vshrl.u32 %v1988, 7
        %v1990 = vsub.s32 %v1987, %v1989
        %v1991 = vrot.slane %v1977, %v1990
        %v1992 = vcombine.low %v1959, %v1975
        %v1993 = vcombine.high %v1959, %v1975
        %v1995 = vunpack.c.l.s4 1934713408
        %v1996 = vunpack.c.0.s8 %v1995
        %v1997 = vlaneseq
        %v1998 = vshrl.u32 %v1997, 7
        %v1999 = vsub.s32 %v1996, %v1998
        %v2000 = vrot.slane %v1992, %v1999
        %v2002 = vunpack.c.l.s4 1934713408
        %v2003 = vunpack.c.0.s8 %v2002
        %v2004 = vlaneseq
        %v2005 = vshrl.u32 %v2004, 7
        %v2006 = vsub.s32 %v2003, %v2005
        %v2007 = vrot.slane %v1993, %v2006
        %v2008 = vcombine.high %v1984, 0.0
        %v2009 = vcombine.high %v1991, 0.0
        %v2010 = vcombine.high %v2000, 0.0
        %v2011 = vcombine.high %v2007, 0.0
        %v2012 = vcombine.low %v1984, %v1991
        %v2014 = vunpack.c.l.s4 1983009808
        %v2015 = vunpack.c.0.s8 %v2014
        %v2016 = vlaneseq
        %v2017 = vshrl.u32 %v2016, 7
        %v2018 = vsub.s32 %v2015, %v2017
        %v2019 = vrot.slane %v2012, %v2018
        %v2020 = vcombine.low %v2008, %v2009
        %v2022 = vunpack.c.l.s4 1983009808
        %v2023 = vunpack.c.0.s8 %v2022
        %v2024 = vlaneseq
        %v2025 = vshrl.u32 %v2024, 7
        %v2026 = vsub.s32 %v2023, %v2025
        %v2027 = vrot.slane %v2020, %v2026
        %v2028 = vcombine.low %v2000, %v2007
        %v2030 = vunpack.c.l.s4 1983009808
        %v2031 = vunpack.c.0.s8 %v2030
        %v2032 = vlaneseq
        %v2033 = vshrl.u32 %v2032, 7
        %v2034 = vsub.s32 %v2031, %v2033
        %v2035 = vrot.slane %v2028, %v2034
        %v2036 = vcombine.low %v2010, %v2011
        %v2038 = vunpack.c.l.s4 1983009808
        %v2039 = vunpack.c.0.s8 %v2038
        %v2040 = vlaneseq
        %v2041 = vshrl.u32 %v2040, 7
        %v2042 = vsub.s32 %v2039, %v2041
        %v2043 = vrot.slane %v2036, %v2042
        %v2044 = vcombine.low %v2019, %v2027
        %v2045 = vcombine.high %v2019, %v2027
        %v2047 = vunpack.c.l.s4 1934713408
        %v2048 = vunpack.c.0.s8 %v2047
        %v2049 = vlaneseq
        %v2050 = vshrl.u32 %v2049, 7
        %v2051 = vsub.s32 %v2048, %v2050
        %v2052 = vrot.slane %v2044, %v2051
        %v2054 = vunpack.c.l.s4 1934713408
        %v2055 = vunpack.c.0.s8 %v2054
        %v2056 = vlaneseq
        %v2057 = vshrl.u32 %v2056, 7
        %v2058 = vsub.s32 %v2055, %v2057
        %v2059 = vrot.slane %v2045, %v2058
        %v2060 = vcombine.low %v2035, %v2043
        %v2061 = vcombine.high %v2035, %v2043
        %v2063 = vunpack.c.l.s4 1934713408
        %v2064 = vunpack.c.0.s8 %v2063
        %v2065 = vlaneseq
        %v2066 = vshrl.u32 %v2065, 7
        %v2067 = vsub.s32 %v2064, %v2066
        %v2068 = vrot.slane %v2060, %v2067
        %v2070 = vunpack.c.l.s4 1934713408
        %v2071 = vunpack.c.0.s8 %v2070
        %v2072 = vlaneseq
        %v2073 = vshrl.u32 %v2072, 7
        %v2074 = vsub.s32 %v2071, %v2073
        %v2075 = vrot.slane %v2061, %v2074
        %v2076 = vcombine.low %v2052, %v2068
        %v2077 = vcombine.high %v2052, %v2068
        %v2078 = vcombine.low %v2059, %v2075
        %v2079 = vcombine.high %v2059, %v2075
        %2081 = vrot.lane.b32.xlu0 %v2077, 8
        %v2082 = vpop.permute.xlu0 %2081
        %2085 = vrot.lane.b32.xlu0 %v2078, 16
        %v2086 = vpop.permute.xlu0 %2085
        %2089 = vrot.lane.b32.xlu0 %v2079, 24
        %v2090 = vpop.permute.xlu0 %2089
        %v2092 = vsel %vm1517, %v2076, %v2082
        %vm2093 = vcmask 130048
        %v2094 = vsel %vm2093, %v2092, %v2086
        %vm2095 = vcmask 195584
        %v2096 = vsel %vm2095, %v2094, %v2090
        %v2097 = vpack.c.bf16 %v2096, %v2096
        %v2102 = vunpack.c.l.b16 %v903
        %v2103 = vunpack.c.l.b16 %v904
        %v2104 = vunpack.c.l.b16 %v905
        %v2105 = vunpack.c.l.b16 %v906
        %v2106 = vpack.c.b16 %v2103, %v2102
        %v2107 = vpack.c.b16 %v2105, %v2104
        %v2111 = vsel %vm919, %v2097, 0
        %2113 = vmatprep.subr.bf16.mxu0 0
        %2114 = vmatpush1.bf16.msra.mxu0 %v2106
        %2115 = vmatprep.subr.bf16.mxu0 0
        %2116 = vmatpush1.bf16.msra.mxu0 %v2107
        %2117 = vmatprep.subr.bf16.mxu0 0
        %2118 = vmatpush1.bf16.msra.mxu0 0
        %2119 = vmatprep.subr.bf16.mxu0 0
        %2120 = vmatpush1.bf16.msra.mxu0 0
        %2121 = vmatprep.subr.bf16.mxu0 0
        %2122 = vmatpush1.bf16.msra.mxu0 0
        %2123 = vmatprep.subr.bf16.mxu0 0
        %2124 = vmatpush1.bf16.msra.mxu0 0
        %2125 = vmatprep.subr.bf16.mxu0 0
        %2126 = vmatpush1.bf16.msra.mxu0 0
        %2127 = vmatprep.subr.bf16.mxu0 0
        %2128 = vmatpush1.bf16.msra.mxu0 0
        %2129 = vmatprep.subr.bf16.mxu0 0
        %2130 = vmatpush1.bf16.msra.mxu0 0
        %2131 = vmatprep.subr.bf16.mxu0 0
        %2132 = vmatpush1.bf16.msra.mxu0 0
        %2133 = vmatprep.subr.bf16.mxu0 0
        %2134 = vmatpush1.bf16.msra.mxu0 0
        %2135 = vmatprep.subr.bf16.mxu0 0
        %2136 = vmatpush1.bf16.msra.mxu0 0
        %2137 = vmatprep.subr.bf16.mxu0 0
        %2138 = vmatpush1.bf16.msra.mxu0 0
        %2139 = vmatprep.subr.bf16.mxu0 0
        %2140 = vmatpush1.bf16.msra.mxu0 0
        %2141 = vmatprep.subr.bf16.mxu0 0
        %2142 = vmatpush1.bf16.msra.mxu0 0
        %2143 = vmatprep.subr.bf16.mxu0 0
        %2144 = vmatpush1.bf16.msra.mxu0 0
        %2145 = vmatprep.mubr.bf16.mxu0 0
        %2146 = vmatmul.mubr.bf16.gmra.mrb[0].mxu0 %v2111
        %v2147 = vpop.f32.mrb[0].mxu0
        %v2148 = vadd.f32 0.0, %v2147
        %v2149 = vpop.f32.mrb[0].mxu0
        %v2150 = vpop.f32.mrb[0].mxu0
        %v2151 = vpop.f32.mrb[0].mxu0
        %2152 = vdwg.mxu0
        %v2153 = vadd.f32 %v883, %v2148
        %v2154 = vld [vmem:[%s16] sm:$0x1]
        %v2155 = vld [vmem:[%s17] sm:$0x1]
        %v2156 = vsel %vm919, %v2153, 0.0
        %2157 = vadd.xlane.f32.xlu0 %v2156
        %v2158 = vpop.xlane.xlu0 %2157
        %v2159 = vrcp.pop 32.0
        %v2160 = vmul.f32 %v2158, %v2159
        %v2161 = vsub.f32 %v2153, %v2160
        %v2162 = vmul.f32 %v2161, %v2161
        %v2163 = vsel %vm919, %v2162, 0.0
        %2164 = vadd.xlane.f32.xlu0 %v2163
        %v2165 = vpop.xlane.xlu0 %2164
        %v2166 = vmul.f32 %v2165, %v2159
        %v2167 = vadd.f32 %v2166, 1e-05
        %v2168 = vrsqrt.pop %v2167
        %v2169 = vmul.f32 %v2161, %v2168
        %v2171 = vlaneseq
        %v2172 = vshrl.u32 %v2171, 7
        %v2173 = vsub.s32 0, %v2172
        %v2174 = vrot.slane %v2154, %v2173
        %v2176 = vmul.f32 %v2169, %v2174
        %v2178 = vlaneseq
        %v2179 = vshrl.u32 %v2178, 7
        %v2180 = vsub.s32 0, %v2179
        %v2181 = vrot.slane %v2155, %v2180
        %v2183 = vadd.f32 %v2176, %v2181
        %v2184 = vpack.c.bf16 %v2183, %v2183
        %v2185 = vld [vmem:[%s8] sm:$0xf]
        %v2186 = vld [vmem:[%s8 + $0x4] sm:$0xf]
        %v2187 = vld [vmem:[%s8 + $0x8] sm:$0xf]
        %v2188 = vld [vmem:[%s8 + $0xc] sm:$0xf]
        %v2189 = vld [vmem:[#allocation7] sm:$0xf]
        %v2190 = vld [vmem:[#allocation7 + $0x4] sm:$0xf]
        %v2191 = vld [vmem:[#allocation7 + $0x8] sm:$0xf]
        %v2192 = vld [vmem:[#allocation7 + $0xc] sm:$0xf]
        %v2193 = vld [vmem:[#allocation8] sm:$0xf]
        %v2194 = vld [vmem:[#allocation8 + $0x4] sm:$0xf]
        %v2195 = vld [vmem:[#allocation8 + $0x8] sm:$0xf]
        %v2196 = vld [vmem:[#allocation8 + $0xc] sm:$0xf]
        %v2197 = vld [vmem:[#allocation10] sm:$0xf]
        %v2198 = vld [vmem:[#allocation10 + $0x4] sm:$0xf]
        %v2199 = vld [vmem:[#allocation10 + $0x8] sm:$0xf]
        %v2200 = vld [vmem:[#allocation10 + $0xc] sm:$0xf]
        %v2205 = vunpack.c.l.b16 %v2185
        %v2206 = vunpack.c.l.b16 %v2186
        %v2207 = vunpack.c.l.b16 %v2187
        %v2208 = vunpack.c.l.b16 %v2188
        %v2209 = vpack.c.b16 %v2206, %v2205
        %v2210 = vpack.c.b16 %v2208, %v2207
        %v2214 = vsel %vm919, %v2184, 0
        %2216 = vmatprep.subr.bf16.mxu0 0
        %2217 = vmatpush1.bf16.msra.mxu0 %v2209
        %2218 = vmatprep.subr.bf16.mxu0 0
        %2219 = vmatpush1.bf16.msra.mxu0 %v2210
        %2220 = vmatprep.subr.bf16.mxu0 0
        %2221 = vmatpush1.bf16.msra.mxu0 0
        %2222 = vmatprep.subr.bf16.mxu0 0
        %2223 = vmatpush1.bf16.msra.mxu0 0
        %2224 = vmatprep.subr.bf16.mxu0 0
        %2225 = vmatpush1.bf16.msra.mxu0 0
        %2226 = vmatprep.subr.bf16.mxu0 0
        %2227 = vmatpush1.bf16.msra.mxu0 0
        %2228 = vmatprep.subr.bf16.mxu0 0
        %2229 = vmatpush1.bf16.msra.mxu0 0
        %2230 = vmatprep.subr.bf16.mxu0 0
        %2231 = vmatpush1.bf16.msra.mxu0 0
        %2232 = vmatprep.subr.bf16.mxu0 0
        %2233 = vmatpush1.bf16.msra.mxu0 0
        %2234 = vmatprep.subr.bf16.mxu0 0
        %2235 = vmatpush1.bf16.msra.mxu0 0
        %2236 = vmatprep.subr.bf16.mxu0 0
        %2237 = vmatpush1.bf16.msra.mxu0 0
        %2238 = vmatprep.subr.bf16.mxu0 0
        %2239 = vmatpush1.bf16.msra.mxu0 0
        %2240 = vmatprep.subr.bf16.mxu0 0
        %2241 = vmatpush1.bf16.msra.mxu0 0
        %2242 = vmatprep.subr.bf16.mxu0 0
        %2243 = vmatpush1.bf16.msra.mxu0 0
        %2244 = vmatprep.subr.bf16.mxu0 0
        %2245 = vmatpush1.bf16.msra.mxu0 0
        %2246 = vmatprep.subr.bf16.mxu0 0
        %2247 = vmatpush1.bf16.msra.mxu0 0
        %2248 = vmatprep.mubr.bf16.mxu0 0
        %2249 = vmatmul.mubr.bf16.gmra.mrb[0].mxu0 %v2214
        %v2250 = vpop.f32.mrb[0].mxu0
        %v2251 = vadd.f32 0.0, %v2250
        %v2252 = vpop.f32.mrb[0].mxu0
        %v2253 = vpop.f32.mrb[0].mxu0
        %v2254 = vpop.f32.mrb[0].mxu0
        %2255 = vdwg.mxu0
        %v2260 = vunpack.c.l.b16 %v2189
        %v2261 = vunpack.c.l.b16 %v2190
        %v2262 = vunpack.c.l.b16 %v2191
        %v2263 = vunpack.c.l.b16 %v2192
        %v2264 = vpack.c.b16 %v2261, %v2260
        %v2265 = vpack.c.b16 %v2263, %v2262
        %v2269 = vsel %vm919, %v885, 0
        %2271 = vmatprep.subr.bf16.mxu0 0
        %2272 = vmatpush1.bf16.msra.mxu0 %v2264
        %2273 = vmatprep.subr.bf16.mxu0 0
        %2274 = vmatpush1.bf16.msra.mxu0 %v2265
        %2275 = vmatprep.subr.bf16.mxu0 0
        %2276 = vmatpush1.bf16.msra.mxu0 0
        %2277 = vmatprep.subr.bf16.mxu0 0
        %2278 = vmatpush1.bf16.msra.mxu0 0
        %2279 = vmatprep.subr.bf16.mxu0 0
        %2280 = vmatpush1.bf16.msra.mxu0 0
        %2281 = vmatprep.subr.bf16.mxu0 0
        %2282 = vmatpush1.bf16.msra.mxu0 0
        %2283 = vmatprep.subr.bf16.mxu0 0
        %2284 = vmatpush1.bf16.msra.mxu0 0
        %2285 = vmatprep.subr.bf16.mxu0 0
        %2286 = vmatpush1.bf16.msra.mxu0 0
        %2287 = vmatprep.subr.bf16.mxu0 0
        %2288 = vmatpush1.bf16.msra.mxu0 0
        %2289 = vmatprep.subr.bf16.mxu0 0
        %2290 = vmatpush1.bf16.msra.mxu0 0
        %2291 = vmatprep.subr.bf16.mxu0 0
        %2292 = vmatpush1.bf16.msra.mxu0 0
        %2293 = vmatprep.subr.bf16.mxu0 0
        %2294 = vmatpush1.bf16.msra.mxu0 0
        %2295 = vmatprep.subr.bf16.mxu0 0
        %2296 = vmatpush1.bf16.msra.mxu0 0
        %2297 = vmatprep.subr.bf16.mxu0 0
        %2298 = vmatpush1.bf16.msra.mxu0 0
        %2299 = vmatprep.subr.bf16.mxu0 0
        %2300 = vmatpush1.bf16.msra.mxu0 0
        %2301 = vmatprep.subr.bf16.mxu0 0
        %2302 = vmatpush1.bf16.msra.mxu0 0
        %2303 = vmatprep.mubr.bf16.mxu0 0
        %2304 = vmatmul.mubr.bf16.gmra.mrb[0].mxu0 %v2269
        %v2305 = vpop.f32.mrb[0].mxu0
        %v2306 = vadd.f32 0.0, %v2305
        %v2307 = vpop.f32.mrb[0].mxu0
        %v2308 = vpop.f32.mrb[0].mxu0
        %v2309 = vpop.f32.mrb[0].mxu0
        %2310 = vdwg.mxu0
        %v2315 = vunpack.c.l.b16 %v2193
        %v2316 = vunpack.c.l.b16 %v2194
        %v2317 = vunpack.c.l.b16 %v2195
        %v2318 = vunpack.c.l.b16 %v2196
        %v2319 = vpack.c.b16 %v2316, %v2315
        %v2320 = vpack.c.b16 %v2318, %v2317
        %2323 = vmatprep.subr.bf16.mxu0 0
        %2324 = vmatpush1.bf16.msra.mxu0 %v2319
        %2325 = vmatprep.subr.bf16.mxu0 0
        %2326 = vmatpush1.bf16.msra.mxu0 %v2320
        %2327 = vmatprep.subr.bf16.mxu0 0
        %2328 = vmatpush1.bf16.msra.mxu0 0
        %2329 = vmatprep.subr.bf16.mxu0 0
        %2330 = vmatpush1.bf16.msra.mxu0 0
        %2331 = vmatprep.subr.bf16.mxu0 0
        %2332 = vmatpush1.bf16.msra.mxu0 0
        %2333 = vmatprep.subr.bf16.mxu0 0
        %2334 = vmatpush1.bf16.msra.mxu0 0
        %2335 = vmatprep.subr.bf16.mxu0 0
        %2336 = vmatpush1.bf16.msra.mxu0 0
        %2337 = vmatprep.subr.bf16.mxu0 0
        %2338 = vmatpush1.bf16.msra.mxu0 0
        %2339 = vmatprep.subr.bf16.mxu0 0
        %2340 = vmatpush1.bf16.msra.mxu0 0
        %2341 = vmatprep.subr.bf16.mxu0 0
        %2342 = vmatpush1.bf16.msra.mxu0 0
        %2343 = vmatprep.subr.bf16.mxu0 0
        %2344 = vmatpush1.bf16.msra.mxu0 0
        %2345 = vmatprep.subr.bf16.mxu0 0
        %2346 = vmatpush1.bf16.msra.mxu0 0
        %2347 = vmatprep.subr.bf16.mxu0 0
        %2348 = vmatpush1.bf16.msra.mxu0 0
        %2349 = vmatprep.subr.bf16.mxu0 0
        %2350 = vmatpush1.bf16.msra.mxu0 0
        %2351 = vmatprep.subr.bf16.mxu0 0
        %2352 = vmatpush1.bf16.msra.mxu0 0
        %2353 = vmatprep.subr.bf16.mxu0 0
        %2354 = vmatpush1.bf16.msra.mxu0 0
        %2355 = vmatprep.mubr.bf16.mxu0 0
        %2356 = vmatmul.mubr.bf16.gmra.mrb[0].mxu0 %v2269
        %v2357 = vpop.f32.mrb[0].mxu0
        %v2358 = vadd.f32 0.0, %v2357
        %v2359 = vpop.f32.mrb[0].mxu0
        %v2360 = vpop.f32.mrb[0].mxu0
        %v2361 = vpop.f32.mrb[0].mxu0
        %2362 = vdwg.mxu0
        %2364 = vrot.lane.b32.xlu0 %v2251, 120
        %v2365 = vpop.permute.xlu0 %2364
        %2367 = vrot.lane.b32.xlu0 %v2251, 112
        %v2368 = vpop.permute.xlu0 %2367
        %2370 = vrot.lane.b32.xlu0 %v2251, 104
        %v2371 = vpop.permute.xlu0 %2370
        %v2373 = vcombine.low %v2251, %v2368
        %v2374 = vcombine.high %v2251, %v2368
        %v2376 = vunpack.c.l.s4 1983009808
        %v2377 = vunpack.c.0.s8 %v2376
        %v2378 = vlaneseq
        %v2379 = vshrl.u32 %v2378, 7
        %v2380 = vsub.s32 %v2377, %v2379
        %v2381 = vrot.slane %v2373, %v2380
        %v2383 = vunpack.c.l.s4 1983009808
        %v2384 = vunpack.c.0.s8 %v2383
        %v2385 = vlaneseq
        %v2386 = vshrl.u32 %v2385, 7
        %v2387 = vsub.s32 %v2384, %v2386
        %v2388 = vrot.slane %v2374, %v2387
        %v2389 = vcombine.low %v2365, %v2371
        %v2390 = vcombine.high %v2365, %v2371
        %v2392 = vunpack.c.l.s4 1983009808
        %v2393 = vunpack.c.0.s8 %v2392
        %v2394 = vlaneseq
        %v2395 = vshrl.u32 %v2394, 7
        %v2396 = vsub.s32 %v2393, %v2395
        %v2397 = vrot.slane %v2389, %v2396
        %v2399 = vunpack.c.l.s4 1983009808
        %v2400 = vunpack.c.0.s8 %v2399
        %v2401 = vlaneseq
        %v2402 = vshrl.u32 %v2401, 7
        %v2403 = vsub.s32 %v2400, %v2402
        %v2404 = vrot.slane %v2390, %v2403
        %v2405 = vcombine.low %v2381, %v2397
        %v2406 = vcombine.high %v2381, %v2397
        %v2408 = vunpack.c.l.s4 1934713408
        %v2409 = vunpack.c.0.s8 %v2408
        %v2410 = vlaneseq
        %v2411 = vshrl.u32 %v2410, 7
        %v2412 = vsub.s32 %v2409, %v2411
        %v2413 = vrot.slane %v2405, %v2412
        %v2415 = vunpack.c.l.s4 1934713408
        %v2416 = vunpack.c.0.s8 %v2415
        %v2417 = vlaneseq
        %v2418 = vshrl.u32 %v2417, 7
        %v2419 = vsub.s32 %v2416, %v2418
        %v2420 = vrot.slane %v2406, %v2419
        %v2421 = vcombine.low %v2388, %v2404
        %v2422 = vcombine.high %v2388, %v2404
        %v2424 = vunpack.c.l.s4 1934713408
        %v2425 = vunpack.c.0.s8 %v2424
        %v2426 = vlaneseq
        %v2427 = vshrl.u32 %v2426, 7
        %v2428 = vsub.s32 %v2425, %v2427
        %v2429 = vrot.slane %v2421, %v2428
        %v2431 = vunpack.c.l.s4 1934713408
        %v2432 = vunpack.c.0.s8 %v2431
        %v2433 = vlaneseq
        %v2434 = vshrl.u32 %v2433, 7
        %v2435 = vsub.s32 %v2432, %v2434
        %v2436 = vrot.slane %v2422, %v2435
        %v2437 = vcombine.high %v2413, 0.0
        %v2438 = vcombine.high %v2420, 0.0
        %v2439 = vcombine.high %v2429, 0.0
        %v2440 = vcombine.high %v2436, 0.0
        %v2441 = vcombine.low %v2413, %v2420
        %v2443 = vunpack.c.l.s4 1983009808
        %v2444 = vunpack.c.0.s8 %v2443
        %v2445 = vlaneseq
        %v2446 = vshrl.u32 %v2445, 7
        %v2447 = vsub.s32 %v2444, %v2446
        %v2448 = vrot.slane %v2441, %v2447
        %v2449 = vcombine.low %v2437, %v2438
        %v2451 = vunpack.c.l.s4 1983009808
        %v2452 = vunpack.c.0.s8 %v2451
        %v2453 = vlaneseq
        %v2454 = vshrl.u32 %v2453, 7
        %v2455 = vsub.s32 %v2452, %v2454
        %v2456 = vrot.slane %v2449, %v2455
        %v2457 = vcombine.low %v2429, %v2436
        %v2459 = vunpack.c.l.s4 1983009808
        %v2460 = vunpack.c.0.s8 %v2459
        %v2461 = vlaneseq
        %v2462 = vshrl.u32 %v2461, 7
        %v2463 = vsub.s32 %v2460, %v2462
        %v2464 = vrot.slane %v2457, %v2463
        %v2465 = vcombine.low %v2439, %v2440
        %v2467 = vunpack.c.l.s4 1983009808
        %v2468 = vunpack.c.0.s8 %v2467
        %v2469 = vlaneseq
        %v2470 = vshrl.u32 %v2469, 7
        %v2471 = vsub.s32 %v2468, %v2470
        %v2472 = vrot.slane %v2465, %v2471
        %v2473 = vcombine.low %v2448, %v2456
        %v2474 = vcombine.high %v2448, %v2456
        %v2476 = vunpack.c.l.s4 1934713408
        %v2477 = vunpack.c.0.s8 %v2476
        %v2478 = vlaneseq
        %v2479 = vshrl.u32 %v2478, 7
        %v2480 = vsub.s32 %v2477, %v2479
        %v2481 = vrot.slane %v2473, %v2480
        %v2483 = vunpack.c.l.s4 1934713408
        %v2484 = vunpack.c.0.s8 %v2483
        %v2485 = vlaneseq
        %v2486 = vshrl.u32 %v2485, 7
        %v2487 = vsub.s32 %v2484, %v2486
        %v2488 = vrot.slane %v2474, %v2487
        %v2489 = vcombine.low %v2464, %v2472
        %v2490 = vcombine.high %v2464, %v2472
        %v2492 = vunpack.c.l.s4 1934713408
        %v2493 = vunpack.c.0.s8 %v2492
        %v2494 = vlaneseq
        %v2495 = vshrl.u32 %v2494, 7
        %v2496 = vsub.s32 %v2493, %v2495
        %v2497 = vrot.slane %v2489, %v2496
        %v2499 = vunpack.c.l.s4 1934713408
        %v2500 = vunpack.c.0.s8 %v2499
        %v2501 = vlaneseq
        %v2502 = vshrl.u32 %v2501, 7
        %v2503 = vsub.s32 %v2500, %v2502
        %v2504 = vrot.slane %v2490, %v2503
        %v2505 = vcombine.low %v2481, %v2497
        %v2506 = vcombine.high %v2481, %v2497
        %v2507 = vcombine.low %v2488, %v2504
        %v2508 = vcombine.high %v2488, %v2504
        %v2509 = vpack.c.bf16 %v2505, %v2505
        %v2510 = vpack.c.bf16 %v2506, %v2506
        %v2511 = vpack.c.bf16 %v2507, %v2507
        %v2512 = vpack.c.bf16 %v2508, %v2508
        %2514 = vrot.lane.b32.xlu0 %v2306, 120
        %v2515 = vpop.permute.xlu0 %2514
        %2517 = vrot.lane.b32.xlu0 %v2306, 112
        %v2518 = vpop.permute.xlu0 %2517
        %2520 = vrot.lane.b32.xlu0 %v2306, 104
        %v2521 = vpop.permute.xlu0 %2520
        %v2523 = vcombine.low %v2306, %v2518
        %v2524 = vcombine.high %v2306, %v2518
        %v2526 = vunpack.c.l.s4 1983009808
        %v2527 = vunpack.c.0.s8 %v2526
        %v2528 = vlaneseq
        %v2529 = vshrl.u32 %v2528, 7
        %v2530 = vsub.s32 %v2527, %v2529
        %v2531 = vrot.slane %v2523, %v2530
        %v2533 = vunpack.c.l.s4 1983009808
        %v2534 = vunpack.c.0.s8 %v2533
        %v2535 = vlaneseq
        %v2536 = vshrl.u32 %v2535, 7
        %v2537 = vsub.s32 %v2534, %v2536
        %v2538 = vrot.slane %v2524, %v2537
        %v2539 = vcombine.low %v2515, %v2521
        %v2540 = vcombine.high %v2515, %v2521
        %v2542 = vunpack.c.l.s4 1983009808
        %v2543 = vunpack.c.0.s8 %v2542
        %v2544 = vlaneseq
        %v2545 = vshrl.u32 %v2544, 7
        %v2546 = vsub.s32 %v2543, %v2545
        %v2547 = vrot.slane %v2539, %v2546
        %v2549 = vunpack.c.l.s4 1983009808
        %v2550 = vunpack.c.0.s8 %v2549
        %v2551 = vlaneseq
        %v2552 = vshrl.u32 %v2551, 7
        %v2553 = vsub.s32 %v2550, %v2552
        %v2554 = vrot.slane %v2540, %v2553
        %v2555 = vcombine.low %v2531, %v2547
        %v2556 = vcombine.high %v2531, %v2547
        %v2558 = vunpack.c.l.s4 1934713408
        %v2559 = vunpack.c.0.s8 %v2558
        %v2560 = vlaneseq
        %v2561 = vshrl.u32 %v2560, 7
        %v2562 = vsub.s32 %v2559, %v2561
        %v2563 = vrot.slane %v2555, %v2562
        %v2565 = vunpack.c.l.s4 1934713408
        %v2566 = vunpack.c.0.s8 %v2565
        %v2567 = vlaneseq
        %v2568 = vshrl.u32 %v2567, 7
        %v2569 = vsub.s32 %v2566, %v2568
        %v2570 = vrot.slane %v2556, %v2569
        %v2571 = vcombine.low %v2538, %v2554
        %v2572 = vcombine.high %v2538, %v2554
        %v2574 = vunpack.c.l.s4 1934713408
        %v2575 = vunpack.c.0.s8 %v2574
        %v2576 = vlaneseq
        %v2577 = vshrl.u32 %v2576, 7
        %v2578 = vsub.s32 %v2575, %v2577
        %v2579 = vrot.slane %v2571, %v2578
        %v2581 = vunpack.c.l.s4 1934713408
        %v2582 = vunpack.c.0.s8 %v2581
        %v2583 = vlaneseq
        %v2584 = vshrl.u32 %v2583, 7
        %v2585 = vsub.s32 %v2582, %v2584
        %v2586 = vrot.slane %v2572, %v2585
        %v2587 = vcombine.high %v2563, 0.0
        %v2588 = vcombine.high %v2570, 0.0
        %v2589 = vcombine.high %v2579, 0.0
        %v2590 = vcombine.high %v2586, 0.0
        %v2591 = vcombine.low %v2563, %v2570
        %v2593 = vunpack.c.l.s4 1983009808
        %v2594 = vunpack.c.0.s8 %v2593
        %v2595 = vlaneseq
        %v2596 = vshrl.u32 %v2595, 7
        %v2597 = vsub.s32 %v2594, %v2596
        %v2598 = vrot.slane %v2591, %v2597
        %v2599 = vcombine.low %v2587, %v2588
        %v2601 = vunpack.c.l.s4 1983009808
        %v2602 = vunpack.c.0.s8 %v2601
        %v2603 = vlaneseq
        %v2604 = vshrl.u32 %v2603, 7
        %v2605 = vsub.s32 %v2602, %v2604
        %v2606 = vrot.slane %v2599, %v2605
        %v2607 = vcombine.low %v2579, %v2586
        %v2609 = vunpack.c.l.s4 1983009808
        %v2610 = vunpack.c.0.s8 %v2609
        %v2611 = vlaneseq
        %v2612 = vshrl.u32 %v2611, 7
        %v2613 = vsub.s32 %v2610, %v2612
        %v2614 = vrot.slane %v2607, %v2613
        %v2615 = vcombine.low %v2589, %v2590
        %v2617 = vunpack.c.l.s4 1983009808
        %v2618 = vunpack.c.0.s8 %v2617
        %v2619 = vlaneseq
        %v2620 = vshrl.u32 %v2619, 7
        %v2621 = vsub.s32 %v2618, %v2620
        %v2622 = vrot.slane %v2615, %v2621
        %v2623 = vcombine.low %v2598, %v2606
        %v2624 = vcombine.high %v2598, %v2606
        %v2626 = vunpack.c.l.s4 1934713408
        %v2627 = vunpack.c.0.s8 %v2626
        %v2628 = vlaneseq
        %v2629 = vshrl.u32 %v2628, 7
        %v2630 = vsub.s32 %v2627, %v2629
        %v2631 = vrot.slane %v2623, %v2630
        %v2633 = vunpack.c.l.s4 1934713408
        %v2634 = vunpack.c.0.s8 %v2633
        %v2635 = vlaneseq
        %v2636 = vshrl.u32 %v2635, 7
        %v2637 = vsub.s32 %v2634, %v2636
        %v2638 = vrot.slane %v2624, %v2637
        %v2639 = vcombine.low %v2614, %v2622
        %v2640 = vcombine.high %v2614, %v2622
        %v2642 = vunpack.c.l.s4 1934713408
        %v2643 = vunpack.c.0.s8 %v2642
        %v2644 = vlaneseq
        %v2645 = vshrl.u32 %v2644, 7
        %v2646 = vsub.s32 %v2643, %v2645
        %v2647 = vrot.slane %v2639, %v2646
        %v2649 = vunpack.c.l.s4 1934713408
        %v2650 = vunpack.c.0.s8 %v2649
        %v2651 = vlaneseq
        %v2652 = vshrl.u32 %v2651, 7
        %v2653 = vsub.s32 %v2650, %v2652
        %v2654 = vrot.slane %v2640, %v2653
        %v2655 = vcombine.low %v2631, %v2647
        %v2656 = vcombine.high %v2631, %v2647
        %v2657 = vcombine.low %v2638, %v2654
        %v2658 = vcombine.high %v2638, %v2654
        %v2659 = vpack.c.bf16 %v2655, %v2655
        %v2660 = vpack.c.bf16 %v2656, %v2656
        %v2661 = vpack.c.bf16 %v2657, %v2657
        %v2662 = vpack.c.bf16 %v2658, %v2658
        %2664 = vrot.lane.b32.xlu0 %v2358, 120
        %v2665 = vpop.permute.xlu0 %2664
        %2667 = vrot.lane.b32.xlu0 %v2358, 112
        %v2668 = vpop.permute.xlu0 %2667
        %2670 = vrot.lane.b32.xlu0 %v2358, 104
        %v2671 = vpop.permute.xlu0 %2670
        %v2673 = vcombine.low %v2358, %v2668
        %v2674 = vcombine.high %v2358, %v2668
        %v2676 = vunpack.c.l.s4 1983009808
        %v2677 = vunpack.c.0.s8 %v2676
        %v2678 = vlaneseq
        %v2679 = vshrl.u32 %v2678, 7
        %v2680 = vsub.s32 %v2677, %v2679
        %v2681 = vrot.slane %v2673, %v2680
        %v2683 = vunpack.c.l.s4 1983009808
        %v2684 = vunpack.c.0.s8 %v2683
        %v2685 = vlaneseq
        %v2686 = vshrl.u32 %v2685, 7
        %v2687 = vsub.s32 %v2684, %v2686
        %v2688 = vrot.slane %v2674, %v2687
        %v2689 = vcombine.low %v2665, %v2671
        %v2690 = vcombine.high %v2665, %v2671
        %v2692 = vunpack.c.l.s4 1983009808
        %v2693 = vunpack.c.0.s8 %v2692
        %v2694 = vlaneseq
        %v2695 = vshrl.u32 %v2694, 7
        %v2696 = vsub.s32 %v2693, %v2695
        %v2697 = vrot.slane %v2689, %v2696
        %v2699 = vunpack.c.l.s4 1983009808
        %v2700 = vunpack.c.0.s8 %v2699
        %v2701 = vlaneseq
        %v2702 = vshrl.u32 %v2701, 7
        %v2703 = vsub.s32 %v2700, %v2702
        %v2704 = vrot.slane %v2690, %v2703
        %v2705 = vcombine.low %v2681, %v2697
        %v2706 = vcombine.high %v2681, %v2697
        %v2708 = vunpack.c.l.s4 1934713408
        %v2709 = vunpack.c.0.s8 %v2708
        %v2710 = vlaneseq
        %v2711 = vshrl.u32 %v2710, 7
        %v2712 = vsub.s32 %v2709, %v2711
        %v2713 = vrot.slane %v2705, %v2712
        %v2715 = vunpack.c.l.s4 1934713408
        %v2716 = vunpack.c.0.s8 %v2715
        %v2717 = vlaneseq
        %v2718 = vshrl.u32 %v2717, 7
        %v2719 = vsub.s32 %v2716, %v2718
        %v2720 = vrot.slane %v2706, %v2719
        %v2721 = vcombine.low %v2688, %v2704
        %v2722 = vcombine.high %v2688, %v2704
        %v2724 = vunpack.c.l.s4 1934713408
        %v2725 = vunpack.c.0.s8 %v2724
        %v2726 = vlaneseq
        %v2727 = vshrl.u32 %v2726, 7
        %v2728 = vsub.s32 %v2725, %v2727
        %v2729 = vrot.slane %v2721, %v2728
        %v2731 = vunpack.c.l.s4 1934713408
        %v2732 = vunpack.c.0.s8 %v2731
        %v2733 = vlaneseq
        %v2734 = vshrl.u32 %v2733, 7
        %v2735 = vsub.s32 %v2732, %v2734
        %v2736 = vrot.slane %v2722, %v2735
        %v2737 = vcombine.high %v2713, 0.0
        %v2738 = vcombine.high %v2720, 0.0
        %v2739 = vcombine.high %v2729, 0.0
        %v2740 = vcombine.high %v2736, 0.0
        %v2741 = vcombine.low %v2713, %v2720
        %v2743 = vunpack.c.l.s4 1983009808
        %v2744 = vunpack.c.0.s8 %v2743
        %v2745 = vlaneseq
        %v2746 = vshrl.u32 %v2745, 7
        %v2747 = vsub.s32 %v2744, %v2746
        %v2748 = vrot.slane %v2741, %v2747
        %v2749 = vcombine.low %v2737, %v2738
        %v2751 = vunpack.c.l.s4 1983009808
        %v2752 = vunpack.c.0.s8 %v2751
        %v2753 = vlaneseq
        %v2754 = vshrl.u32 %v2753, 7
        %v2755 = vsub.s32 %v2752, %v2754
        %v2756 = vrot.slane %v2749, %v2755
        %v2757 = vcombine.low %v2729, %v2736
        %v2759 = vunpack.c.l.s4 1983009808
        %v2760 = vunpack.c.0.s8 %v2759
        %v2761 = vlaneseq
        %v2762 = vshrl.u32 %v2761, 7
        %v2763 = vsub.s32 %v2760, %v2762
        %v2764 = vrot.slane %v2757, %v2763
        %v2765 = vcombine.low %v2739, %v2740
        %v2767 = vunpack.c.l.s4 1983009808
        %v2768 = vunpack.c.0.s8 %v2767
        %v2769 = vlaneseq
        %v2770 = vshrl.u32 %v2769, 7
        %v2771 = vsub.s32 %v2768, %v2770
        %v2772 = vrot.slane %v2765, %v2771
        %v2773 = vcombine.low %v2748, %v2756
        %v2774 = vcombine.high %v2748, %v2756
        %v2776 = vunpack.c.l.s4 1934713408
        %v2777 = vunpack.c.0.s8 %v2776
        %v2778 = vlaneseq
        %v2779 = vshrl.u32 %v2778, 7
        %v2780 = vsub.s32 %v2777, %v2779
        %v2781 = vrot.slane %v2773, %v2780
        %v2783 = vunpack.c.l.s4 1934713408
        %v2784 = vunpack.c.0.s8 %v2783
        %v2785 = vlaneseq
        %v2786 = vshrl.u32 %v2785, 7
        %v2787 = vsub.s32 %v2784, %v2786
        %v2788 = vrot.slane %v2774, %v2787
        %v2789 = vcombine.low %v2764, %v2772
        %v2790 = vcombine.high %v2764, %v2772
        %v2792 = vunpack.c.l.s4 1934713408
        %v2793 = vunpack.c.0.s8 %v2792
        %v2794 = vlaneseq
        %v2795 = vshrl.u32 %v2794, 7
        %v2796 = vsub.s32 %v2793, %v2795
        %v2797 = vrot.slane %v2789, %v2796
        %v2799 = vunpack.c.l.s4 1934713408
        %v2800 = vunpack.c.0.s8 %v2799
        %v2801 = vlaneseq
        %v2802 = vshrl.u32 %v2801, 7
        %v2803 = vsub.s32 %v2800, %v2802
        %v2804 = vrot.slane %v2790, %v2803
        %v2805 = vcombine.low %v2781, %v2797
        %v2806 = vcombine.high %v2781, %v2797
        %v2807 = vcombine.low %v2788, %v2804
        %v2808 = vcombine.high %v2788, %v2804
        %v2809 = vpack.c.bf16 %v2805, %v2805
        %v2810 = vpack.c.bf16 %v2806, %v2806
        %v2811 = vpack.c.bf16 %v2807, %v2807
        %v2812 = vpack.c.bf16 %v2808, %v2808
        %v2814 = vsel %vm1517, %v2509, 0
        %v2817 = vsel %vm1517, %v2659, 0
        %2819 = vmatprep.subr.bf16.mxu0 0
        %2820 = vmatpush1.bf16.xpose.msra.mxu0 %v2817
        %2821 = vmatprep.subr.bf16.mxu0 0
        %2822 = vmatpush1.bf16.xpose.msra.mxu0 0
        %2823 = vmatprep.subr.bf16.mxu0 0
        %2824 = vmatpush1.bf16.xpose.msra.mxu0 0
        %2825 = vmatprep.subr.bf16.mxu0 0
        %2826 = vmatpush1.bf16.xpose.msra.mxu0 0
        %2827 = vmatprep.subr.bf16.mxu0 0
        %2828 = vmatpush1.bf16.xpose.msra.mxu0 0
        %2829 = vmatprep.subr.bf16.mxu0 0
        %2830 = vmatpush1.bf16.xpose.msra.mxu0 0
        %2831 = vmatprep.subr.bf16.mxu0 0
        %2832 = vmatpush1.bf16.xpose.msra.mxu0 0
        %2833 = vmatprep.subr.bf16.mxu0 0
        %2834 = vmatpush1.bf16.xpose.msra.mxu0 0
        %2835 = vmatprep.subr.bf16.mxu0 0
        %2836 = vmatpush1.bf16.xpose.msra.mxu0 0
        %2837 = vmatprep.subr.bf16.mxu0 0
        %2838 = vmatpush1.bf16.xpose.msra.mxu0 0
        %2839 = vmatprep.subr.bf16.mxu0 0
        %2840 = vmatpush1.bf16.xpose.msra.mxu0 0
        %2841 = vmatprep.subr.bf16.mxu0 0
        %2842 = vmatpush1.bf16.xpose.msra.mxu0 0
        %2843 = vmatprep.subr.bf16.mxu0 0
        %2844 = vmatpush1.bf16.xpose.msra.mxu0 0
        %2845 = vmatprep.subr.bf16.mxu0 0
        %2846 = vmatpush1.bf16.xpose.msra.mxu0 0
        %2847 = vmatprep.subr.bf16.mxu0 0
        %2848 = vmatpush1.bf16.xpose.msra.mxu0 0
        %2849 = vmatprep.subr.bf16.mxu0 0
        %2850 = vmatpush1.bf16.xpose.msra.mxu0 0
        %2851 = vmatprep.mubr.bf16.mxu0 0
        %2852 = vmatmul.mubr.bf16.gmra.mrb[0].mxu0 %v2814
        %v2853 = vpop.f32.mrb[0].mxu0
        %v2854 = vadd.f32 0.0, %v2853
        %v2855 = vpop.f32.mrb[0].mxu0
        %v2856 = vpop.f32.mrb[0].mxu0
        %v2857 = vpop.f32.mrb[0].mxu0
        %2858 = vdwg.mxu0
        %v2860 = vsel %vm1517, %v2510, 0
        %v2863 = vsel %vm1517, %v2660, 0
        %2865 = vmatprep.subr.bf16.mxu0 0
        %2866 = vmatpush1.bf16.xpose.msra.mxu0 %v2863
        %2867 = vmatprep.subr.bf16.mxu0 0
        %2868 = vmatpush1.bf16.xpose.msra.mxu0 0
        %2869 = vmatprep.subr.bf16.mxu0 0
        %2870 = vmatpush1.bf16.xpose.msra.mxu0 0
        %2871 = vmatprep.subr.bf16.mxu0 0
        %2872 = vmatpush1.bf16.xpose.msra.mxu0 0
        %2873 = vmatprep.subr.bf16.mxu0 0
        %2874 = vmatpush1.bf16.xpose.msra.mxu0 0
        %2875 = vmatprep.subr.bf16.mxu0 0
        %2876 = vmatpush1.bf16.xpose.msra.mxu0 0
        %2877 = vmatprep.subr.bf16.mxu0 0
        %2878 = vmatpush1.bf16.xpose.msra.mxu0 0
        %2879 = vmatprep.subr.bf16.mxu0 0
        %2880 = vmatpush1.bf16.xpose.msra.mxu0 0
        %2881 = vmatprep.subr.bf16.mxu0 0
        %2882 = vmatpush1.bf16.xpose.msra.mxu0 0
        %2883 = vmatprep.subr.bf16.mxu0 0
        %2884 = vmatpush1.bf16.xpose.msra.mxu0 0
        %2885 = vmatprep.subr.bf16.mxu0 0
        %2886 = vmatpush1.bf16.xpose.msra.mxu0 0
        %2887 = vmatprep.subr.bf16.mxu0 0
        %2888 = vmatpush1.bf16.xpose.msra.mxu0 0
        %2889 = vmatprep.subr.bf16.mxu0 0
        %2890 = vmatpush1.bf16.xpose.msra.mxu0 0
        %2891 = vmatprep.subr.bf16.mxu0 0
        %2892 = vmatpush1.bf16.xpose.msra.mxu0 0
        %2893 = vmatprep.subr.bf16.mxu0 0
        %2894 = vmatpush1.bf16.xpose.msra.mxu0 0
        %2895 = vmatprep.subr.bf16.mxu0 0
        %2896 = vmatpush1.bf16.xpose.msra.mxu0 0
        %2897 = vmatprep.mubr.bf16.mxu0 0
        %2898 = vmatmul.mubr.bf16.gmra.mrb[0].mxu0 %v2860
        %v2899 = vpop.f32.mrb[0].mxu0
        %v2900 = vadd.f32 0.0, %v2899
        %v2901 = vpop.f32.mrb[0].mxu0
        %v2902 = vpop.f32.mrb[0].mxu0
        %v2903 = vpop.f32.mrb[0].mxu0
        %2904 = vdwg.mxu0
        %v2906 = vsel %vm1517, %v2511, 0
        %v2909 = vsel %vm1517, %v2661, 0
        %2911 = vmatprep.subr.bf16.mxu0 0
        %2912 = vmatpush1.bf16.xpose.msra.mxu0 %v2909
        %2913 = vmatprep.subr.bf16.mxu0 0
        %2914 = vmatpush1.bf16.xpose.msra.mxu0 0
        %2915 = vmatprep.subr.bf16.mxu0 0
        %2916 = vmatpush1.bf16.xpose.msra.mxu0 0
        %2917 = vmatprep.subr.bf16.mxu0 0
        %2918 = vmatpush1.bf16.xpose.msra.mxu0 0
        %2919 = vmatprep.subr.bf16.mxu0 0
        %2920 = vmatpush1.bf16.xpose.msra.mxu0 0
        %2921 = vmatprep.subr.bf16.mxu0 0
        %2922 = vmatpush1.bf16.xpose.msra.mxu0 0
        %2923 = vmatprep.subr.bf16.mxu0 0
        %2924 = vmatpush1.bf16.xpose.msra.mxu0 0
        %2925 = vmatprep.subr.bf16.mxu0 0
        %2926 = vmatpush1.bf16.xpose.msra.mxu0 0
        %2927 = vmatprep.subr.bf16.mxu0 0
        %2928 = vmatpush1.bf16.xpose.msra.mxu0 0
        %2929 = vmatprep.subr.bf16.mxu0 0
        %2930 = vmatpush1.bf16.xpose.msra.mxu0 0
        %2931 = vmatprep.subr.bf16.mxu0 0
        %2932 = vmatpush1.bf16.xpose.msra.mxu0 0
        %2933 = vmatprep.subr.bf16.mxu0 0
        %2934 = vmatpush1.bf16.xpose.msra.mxu0 0
        %2935 = vmatprep.subr.bf16.mxu0 0
        %2936 = vmatpush1.bf16.xpose.msra.mxu0 0
        %2937 = vmatprep.subr.bf16.mxu0 0
        %2938 = vmatpush1.bf16.xpose.msra.mxu0 0
        %2939 = vmatprep.subr.bf16.mxu0 0
        %2940 = vmatpush1.bf16.xpose.msra.mxu0 0
        %2941 = vmatprep.subr.bf16.mxu0 0
        %2942 = vmatpush1.bf16.xpose.msra.mxu0 0
        %2943 = vmatprep.mubr.bf16.mxu0 0
        %2944 = vmatmul.mubr.bf16.gmra.mrb[0].mxu0 %v2906
        %v2945 = vpop.f32.mrb[0].mxu0
        %v2946 = vadd.f32 0.0, %v2945
        %v2947 = vpop.f32.mrb[0].mxu0
        %v2948 = vpop.f32.mrb[0].mxu0
        %v2949 = vpop.f32.mrb[0].mxu0
        %2950 = vdwg.mxu0
        %v2952 = vsel %vm1517, %v2512, 0
        %v2955 = vsel %vm1517, %v2662, 0
        %2957 = vmatprep.subr.bf16.mxu0 0
        %2958 = vmatpush1.bf16.xpose.msra.mxu0 %v2955
        %2959 = vmatprep.subr.bf16.mxu0 0
        %2960 = vmatpush1.bf16.xpose.msra.mxu0 0
        %2961 = vmatprep.subr.bf16.mxu0 0
        %2962 = vmatpush1.bf16.xpose.msra.mxu0 0
        %2963 = vmatprep.subr.bf16.mxu0 0
        %2964 = vmatpush1.bf16.xpose.msra.mxu0 0
        %2965 = vmatprep.subr.bf16.mxu0 0
        %2966 = vmatpush1.bf16.xpose.msra.mxu0 0
        %2967 = vmatprep.subr.bf16.mxu0 0
        %2968 = vmatpush1.bf16.xpose.msra.mxu0 0
        %2969 = vmatprep.subr.bf16.mxu0 0
        %2970 = vmatpush1.bf16.xpose.msra.mxu0 0
        %2971 = vmatprep.subr.bf16.mxu0 0
        %2972 = vmatpush1.bf16.xpose.msra.mxu0 0
        %2973 = vmatprep.subr.bf16.mxu0 0
        %2974 = vmatpush1.bf16.xpose.msra.mxu0 0
        %2975 = vmatprep.subr.bf16.mxu0 0
        %2976 = vmatpush1.bf16.xpose.msra.mxu0 0
        %2977 = vmatprep.subr.bf16.mxu0 0
        %2978 = vmatpush1.bf16.xpose.msra.mxu0 0
        %2979 = vmatprep.subr.bf16.mxu0 0
        %2980 = vmatpush1.bf16.xpose.msra.mxu0 0
        %2981 = vmatprep.subr.bf16.mxu0 0
        %2982 = vmatpush1.bf16.xpose.msra.mxu0 0
        %2983 = vmatprep.subr.bf16.mxu0 0
        %2984 = vmatpush1.bf16.xpose.msra.mxu0 0
        %2985 = vmatprep.subr.bf16.mxu0 0
        %2986 = vmatpush1.bf16.xpose.msra.mxu0 0
        %2987 = vmatprep.subr.bf16.mxu0 0
        %2988 = vmatpush1.bf16.xpose.msra.mxu0 0
        %2989 = vmatprep.mubr.bf16.mxu0 0
        %2990 = vmatmul.mubr.bf16.gmra.mrb[0].mxu0 %v2952
        %v2991 = vpop.f32.mrb[0].mxu0
        %v2992 = vadd.f32 0.0, %v2991
        %v2993 = vpop.f32.mrb[0].mxu0
        %v2994 = vpop.f32.mrb[0].mxu0
        %v2995 = vpop.f32.mrb[0].mxu0
        %2996 = vdwg.mxu0
        %v2997 = vsel %vm889, 1, 0
        %2998 = vset.pattern.permute.xlu0 0
        %2999 = vperm.xlu0 %2998, %v2997
        %v3000 = vpop.permute.xlu0 %2999
        %vm3001 = vcmp.eq.s32.totalorder %v3000, 1
        %v3002 = vsel %vm3001, -1e+09, %v2854
        %v3003 = vsel %vm3001, -1e+09, %v2900
        %v3004 = vsel %vm3001, -1e+09, %v2946
        %v3005 = vsel %vm3001, -1e+09, %v2992
        %v3006 = vsel %vm1517, %v3002, -inf
        %3007 = vmax.xlane.f32.xlu0 %v3006
        %v3008 = vpop.xlane.xlu0 %3007
        %v3009 = vsel %vm1517, %v3003, -inf
        %3010 = vmax.xlane.f32.xlu0 %v3009
        %v3011 = vpop.xlane.xlu0 %3010
        %v3012 = vsel %vm1517, %v3004, -inf
        %3013 = vmax.xlane.f32.xlu0 %v3012
        %v3014 = vpop.xlane.xlu0 %3013
        %v3015 = vsel %vm1517, %v3005, -inf
        %3016 = vmax.xlane.f32.xlu0 %v3015
        %v3017 = vpop.xlane.xlu0 %3016
        %v3018 = vsub.f32 %v3002, %v3008
        %v3019 = vsub.f32 %v3003, %v3011
        %v3020 = vsub.f32 %v3004, %v3014
        %v3021 = vsub.f32 %v3005, %v3017
        %v3022 = vmul.f32 %v3018, 1.442695
        %v3023 = vpow.pop %v3022
        %v3024 = vmul.f32 %v3019, 1.442695
        %v3025 = vpow.pop %v3024
        %v3026 = vmul.f32 %v3020, 1.442695
        %v3027 = vpow.pop %v3026
        %v3028 = vmul.f32 %v3021, 1.442695
        %v3029 = vpow.pop %v3028
        %v3030 = vsel %vm1517, %v3023, 0.0
        %3031 = vadd.xlane.f32.xlu0 %v3030
        %v3032 = vpop.xlane.xlu0 %3031
        %v3033 = vsel %vm1517, %v3025, 0.0
        %3034 = vadd.xlane.f32.xlu0 %v3033
        %v3035 = vpop.xlane.xlu0 %3034
        %v3036 = vsel %vm1517, %v3027, 0.0
        %3037 = vadd.xlane.f32.xlu0 %v3036
        %v3038 = vpop.xlane.xlu0 %3037
        %v3039 = vsel %vm1517, %v3029, 0.0
        %3040 = vadd.xlane.f32.xlu0 %v3039
        %v3041 = vpop.xlane.xlu0 %3040
        %v3042 = vrcp.pop %v3032
        %v3043 = vrcp.pop %v3035
        %v3044 = vrcp.pop %v3038
        %v3045 = vrcp.pop %v3041
        %v3046 = vmul.f32 %v3023, %v3042
        %v3047 = vmul.f32 %v3025, %v3043
        %v3048 = vmul.f32 %v3027, %v3044
        %v3049 = vmul.f32 %v3029, %v3045
        %v3050 = vpack.c.bf16 %v3046, %v3046
        %v3051 = vpack.c.bf16 %v3047, %v3047
        %v3052 = vpack.c.bf16 %v3048, %v3048
        %v3053 = vpack.c.bf16 %v3049, %v3049
        %v3055 = vsel %vm1517, %v3050, 0
        %v3058 = vsel %vm1762, %v2809, 0
        %3060 = vmatprep.subr.bf16.mxu0 0
        %3061 = vmatpush1.bf16.msra.mxu0 %v3058
        %3062 = vmatprep.subr.bf16.mxu0 0
        %3063 = vmatpush1.bf16.msra.mxu0 0
        %3064 = vmatprep.subr.bf16.mxu0 0
        %3065 = vmatpush1.bf16.msra.mxu0 0
        %3066 = vmatprep.subr.bf16.mxu0 0
        %3067 = vmatpush1.bf16.msra.mxu0 0
        %3068 = vmatprep.subr.bf16.mxu0 0
        %3069 = vmatpush1.bf16.msra.mxu0 0
        %3070 = vmatprep.subr.bf16.mxu0 0
        %3071 = vmatpush1.bf16.msra.mxu0 0
        %3072 = vmatprep.subr.bf16.mxu0 0
        %3073 = vmatpush1.bf16.msra.mxu0 0
        %3074 = vmatprep.subr.bf16.mxu0 0
        %3075 = vmatpush1.bf16.msra.mxu0 0
        %3076 = vmatprep.subr.bf16.mxu0 0
        %3077 = vmatpush1.bf16.msra.mxu0 0
        %3078 = vmatprep.subr.bf16.mxu0 0
        %3079 = vmatpush1.bf16.msra.mxu0 0
        %3080 = vmatprep.subr.bf16.mxu0 0
        %3081 = vmatpush1.bf16.msra.mxu0 0
        %3082 = vmatprep.subr.bf16.mxu0 0
        %3083 = vmatpush1.bf16.msra.mxu0 0
        %3084 = vmatprep.subr.bf16.mxu0 0
        %3085 = vmatpush1.bf16.msra.mxu0 0
        %3086 = vmatprep.subr.bf16.mxu0 0
        %3087 = vmatpush1.bf16.msra.mxu0 0
        %3088 = vmatprep.subr.bf16.mxu0 0
        %3089 = vmatpush1.bf16.msra.mxu0 0
        %3090 = vmatprep.subr.bf16.mxu0 0
        %3091 = vmatpush1.bf16.msra.mxu0 0
        %3092 = vmatprep.mubr.bf16.mxu0 0
        %3093 = vmatmul.mubr.bf16.gmra.mrb[0].mxu0 %v3055
        %v3094 = vpop.f32.mrb[0].mxu0
        %v3095 = vadd.f32 0.0, %v3094
        %v3096 = vpop.f32.mrb[0].mxu0
        %v3097 = vpop.f32.mrb[0].mxu0
        %v3098 = vpop.f32.mrb[0].mxu0
        %3099 = vdwg.mxu0
        %v3101 = vsel %vm1517, %v3051, 0
        %v3104 = vsel %vm1762, %v2810, 0
        %3106 = vmatprep.subr.bf16.mxu0 0
        %3107 = vmatpush1.bf16.msra.mxu0 %v3104
        %3108 = vmatprep.subr.bf16.mxu0 0
        %3109 = vmatpush1.bf16.msra.mxu0 0
        %3110 = vmatprep.subr.bf16.mxu0 0
        %3111 = vmatpush1.bf16.msra.mxu0 0
        %3112 = vmatprep.subr.bf16.mxu0 0
        %3113 = vmatpush1.bf16.msra.mxu0 0
        %3114 = vmatprep.subr.bf16.mxu0 0
        %3115 = vmatpush1.bf16.msra.mxu0 0
        %3116 = vmatprep.subr.bf16.mxu0 0
        %3117 = vmatpush1.bf16.msra.mxu0 0
        %3118 = vmatprep.subr.bf16.mxu0 0
        %3119 = vmatpush1.bf16.msra.mxu0 0
        %3120 = vmatprep.subr.bf16.mxu0 0
        %3121 = vmatpush1.bf16.msra.mxu0 0
        %3122 = vmatprep.subr.bf16.mxu0 0
        %3123 = vmatpush1.bf16.msra.mxu0 0
        %3124 = vmatprep.subr.bf16.mxu0 0
        %3125 = vmatpush1.bf16.msra.mxu0 0
        %3126 = vmatprep.subr.bf16.mxu0 0
        %3127 = vmatpush1.bf16.msra.mxu0 0
        %3128 = vmatprep.subr.bf16.mxu0 0
        %3129 = vmatpush1.bf16.msra.mxu0 0
        %3130 = vmatprep.subr.bf16.mxu0 0
        %3131 = vmatpush1.bf16.msra.mxu0 0
        %3132 = vmatprep.subr.bf16.mxu0 0
        %3133 = vmatpush1.bf16.msra.mxu0 0
        %3134 = vmatprep.subr.bf16.mxu0 0
        %3135 = vmatpush1.bf16.msra.mxu0 0
        %3136 = vmatprep.subr.bf16.mxu0 0
        %3137 = vmatpush1.bf16.msra.mxu0 0
        %3138 = vmatprep.mubr.bf16.mxu0 0
        %3139 = vmatmul.mubr.bf16.gmra.mrb[0].mxu0 %v3101
        %v3140 = vpop.f32.mrb[0].mxu0
        %v3141 = vadd.f32 0.0, %v3140
        %v3142 = vpop.f32.mrb[0].mxu0
        %v3143 = vpop.f32.mrb[0].mxu0
        %v3144 = vpop.f32.mrb[0].mxu0
        %3145 = vdwg.mxu0
        %v3147 = vsel %vm1517, %v3052, 0
        %v3150 = vsel %vm1762, %v2811, 0
        %3152 = vmatprep.subr.bf16.mxu0 0
        %3153 = vmatpush1.bf16.msra.mxu0 %v3150
        %3154 = vmatprep.subr.bf16.mxu0 0
        %3155 = vmatpush1.bf16.msra.mxu0 0
        %3156 = vmatprep.subr.bf16.mxu0 0
        %3157 = vmatpush1.bf16.msra.mxu0 0
        %3158 = vmatprep.subr.bf16.mxu0 0
        %3159 = vmatpush1.bf16.msra.mxu0 0
        %3160 = vmatprep.subr.bf16.mxu0 0
        %3161 = vmatpush1.bf16.msra.mxu0 0
        %3162 = vmatprep.subr.bf16.mxu0 0
        %3163 = vmatpush1.bf16.msra.mxu0 0
        %3164 = vmatprep.subr.bf16.mxu0 0
        %3165 = vmatpush1.bf16.msra.mxu0 0
        %3166 = vmatprep.subr.bf16.mxu0 0
        %3167 = vmatpush1.bf16.msra.mxu0 0
        %3168 = vmatprep.subr.bf16.mxu0 0
        %3169 = vmatpush1.bf16.msra.mxu0 0
        %3170 = vmatprep.subr.bf16.mxu0 0
        %3171 = vmatpush1.bf16.msra.mxu0 0
        %3172 = vmatprep.subr.bf16.mxu0 0
        %3173 = vmatpush1.bf16.msra.mxu0 0
        %3174 = vmatprep.subr.bf16.mxu0 0
        %3175 = vmatpush1.bf16.msra.mxu0 0
        %3176 = vmatprep.subr.bf16.mxu0 0
        %3177 = vmatpush1.bf16.msra.mxu0 0
        %3178 = vmatprep.subr.bf16.mxu0 0
        %3179 = vmatpush1.bf16.msra.mxu0 0
        %3180 = vmatprep.subr.bf16.mxu0 0
        %3181 = vmatpush1.bf16.msra.mxu0 0
        %3182 = vmatprep.subr.bf16.mxu0 0
        %3183 = vmatpush1.bf16.msra.mxu0 0
        %3184 = vmatprep.mubr.bf16.mxu0 0
        %3185 = vmatmul.mubr.bf16.gmra.mrb[0].mxu0 %v3147
        %v3186 = vpop.f32.mrb[0].mxu0
        %v3187 = vadd.f32 0.0, %v3186
        %v3188 = vpop.f32.mrb[0].mxu0
        %v3189 = vpop.f32.mrb[0].mxu0
        %v3190 = vpop.f32.mrb[0].mxu0
        %3191 = vdwg.mxu0
        %v3193 = vsel %vm1517, %v3053, 0
        %v3196 = vsel %vm1762, %v2812, 0
        %3198 = vmatprep.subr.bf16.mxu0 0
        %3199 = vmatpush1.bf16.msra.mxu0 %v3196
        %3200 = vmatprep.subr.bf16.mxu0 0
        %3201 = vmatpush1.bf16.msra.mxu0 0
        %3202 = vmatprep.subr.bf16.mxu0 0
        %3203 = vmatpush1.bf16.msra.mxu0 0
        %3204 = vmatprep.subr.bf16.mxu0 0
        %3205 = vmatpush1.bf16.msra.mxu0 0
        %3206 = vmatprep.subr.bf16.mxu0 0
        %3207 = vmatpush1.bf16.msra.mxu0 0
        %3208 = vmatprep.subr.bf16.mxu0 0
        %3209 = vmatpush1.bf16.msra.mxu0 0
        %3210 = vmatprep.subr.bf16.mxu0 0
        %3211 = vmatpush1.bf16.msra.mxu0 0
        %3212 = vmatprep.subr.bf16.mxu0 0
        %3213 = vmatpush1.bf16.msra.mxu0 0
        %3214 = vmatprep.subr.bf16.mxu0 0
        %3215 = vmatpush1.bf16.msra.mxu0 0
        %3216 = vmatprep.subr.bf16.mxu0 0
        %3217 = vmatpush1.bf16.msra.mxu0 0
        %3218 = vmatprep.subr.bf16.mxu0 0
        %3219 = vmatpush1.bf16.msra.mxu0 0
        %3220 = vmatprep.subr.bf16.mxu0 0
        %3221 = vmatpush1.bf16.msra.mxu0 0
        %3222 = vmatprep.subr.bf16.mxu0 0
        %3223 = vmatpush1.bf16.msra.mxu0 0
        %3224 = vmatprep.subr.bf16.mxu0 0
        %3225 = vmatpush1.bf16.msra.mxu0 0
        %3226 = vmatprep.subr.bf16.mxu0 0
        %3227 = vmatpush1.bf16.msra.mxu0 0
        %3228 = vmatprep.subr.bf16.mxu0 0
        %3229 = vmatpush1.bf16.msra.mxu0 0
        %3230 = vmatprep.mubr.bf16.mxu0 0
        %3231 = vmatmul.mubr.bf16.gmra.mrb[0].mxu0 %v3193
        %v3232 = vpop.f32.mrb[0].mxu0
        %v3233 = vadd.f32 0.0, %v3232
        %v3234 = vpop.f32.mrb[0].mxu0
        %v3235 = vpop.f32.mrb[0].mxu0
        %v3236 = vpop.f32.mrb[0].mxu0
        %3237 = vdwg.mxu0
        %v3238 = vcombine.low %v3095, %v3187
        %v3239 = vcombine.high %v3095, %v3187
        %v3241 = vunpack.c.l.s4 1983009808
        %v3242 = vunpack.c.0.s8 %v3241
        %v3243 = vlaneseq
        %v3244 = vshrl.u32 %v3243, 7
        %v3245 = vsub.s32 %v3242, %v3244
        %v3246 = vrot.slane %v3238, %v3245
        %v3248 = vunpack.c.l.s4 1983009808
        %v3249 = vunpack.c.0.s8 %v3248
        %v3250 = vlaneseq
        %v3251 = vshrl.u32 %v3250, 7
        %v3252 = vsub.s32 %v3249, %v3251
        %v3253 = vrot.slane %v3239, %v3252
        %v3254 = vcombine.low %v3141, %v3233
        %v3255 = vcombine.high %v3141, %v3233
        %v3257 = vunpack.c.l.s4 1983009808
        %v3258 = vunpack.c.0.s8 %v3257
        %v3259 = vlaneseq
        %v3260 = vshrl.u32 %v3259, 7
        %v3261 = vsub.s32 %v3258, %v3260
        %v3262 = vrot.slane %v3254, %v3261
        %v3264 = vunpack.c.l.s4 1983009808
        %v3265 = vunpack.c.0.s8 %v3264
        %v3266 = vlaneseq
        %v3267 = vshrl.u32 %v3266, 7
        %v3268 = vsub.s32 %v3265, %v3267
        %v3269 = vrot.slane %v3255, %v3268
        %v3270 = vcombine.low %v3246, %v3262
        %v3271 = vcombine.high %v3246, %v3262
        %v3273 = vunpack.c.l.s4 1934713408
        %v3274 = vunpack.c.0.s8 %v3273
        %v3275 = vlaneseq
        %v3276 = vshrl.u32 %v3275, 7
        %v3277 = vsub.s32 %v3274, %v3276
        %v3278 = vrot.slane %v3270, %v3277
        %v3280 = vunpack.c.l.s4 1934713408
        %v3281 = vunpack.c.0.s8 %v3280
        %v3282 = vlaneseq
        %v3283 = vshrl.u32 %v3282, 7
        %v3284 = vsub.s32 %v3281, %v3283
        %v3285 = vrot.slane %v3271, %v3284
        %v3286 = vcombine.low %v3253, %v3269
        %v3287 = vcombine.high %v3253, %v3269
        %v3289 = vunpack.c.l.s4 1934713408
        %v3290 = vunpack.c.0.s8 %v3289
        %v3291 = vlaneseq
        %v3292 = vshrl.u32 %v3291, 7
        %v3293 = vsub.s32 %v3290, %v3292
        %v3294 = vrot.slane %v3286, %v3293
        %v3296 = vunpack.c.l.s4 1934713408
        %v3297 = vunpack.c.0.s8 %v3296
        %v3298 = vlaneseq
        %v3299 = vshrl.u32 %v3298, 7
        %v3300 = vsub.s32 %v3297, %v3299
        %v3301 = vrot.slane %v3287, %v3300
        %v3302 = vcombine.high %v3278, 0.0
        %v3303 = vcombine.high %v3285, 0.0
        %v3304 = vcombine.high %v3294, 0.0
        %v3305 = vcombine.high %v3301, 0.0
        %v3306 = vcombine.low %v3278, %v3285
        %v3308 = vunpack.c.l.s4 1983009808
        %v3309 = vunpack.c.0.s8 %v3308
        %v3310 = vlaneseq
        %v3311 = vshrl.u32 %v3310, 7
        %v3312 = vsub.s32 %v3309, %v3311
        %v3313 = vrot.slane %v3306, %v3312
        %v3314 = vcombine.low %v3302, %v3303
        %v3316 = vunpack.c.l.s4 1983009808
        %v3317 = vunpack.c.0.s8 %v3316
        %v3318 = vlaneseq
        %v3319 = vshrl.u32 %v3318, 7
        %v3320 = vsub.s32 %v3317, %v3319
        %v3321 = vrot.slane %v3314, %v3320
        %v3322 = vcombine.low %v3294, %v3301
        %v3324 = vunpack.c.l.s4 1983009808
        %v3325 = vunpack.c.0.s8 %v3324
        %v3326 = vlaneseq
        %v3327 = vshrl.u32 %v3326, 7
        %v3328 = vsub.s32 %v3325, %v3327
        %v3329 = vrot.slane %v3322, %v3328
        %v3330 = vcombine.low %v3304, %v3305
        %v3332 = vunpack.c.l.s4 1983009808
        %v3333 = vunpack.c.0.s8 %v3332
        %v3334 = vlaneseq
        %v3335 = vshrl.u32 %v3334, 7
        %v3336 = vsub.s32 %v3333, %v3335
        %v3337 = vrot.slane %v3330, %v3336
        %v3338 = vcombine.low %v3313, %v3321
        %v3339 = vcombine.high %v3313, %v3321
        %v3341 = vunpack.c.l.s4 1934713408
        %v3342 = vunpack.c.0.s8 %v3341
        %v3343 = vlaneseq
        %v3344 = vshrl.u32 %v3343, 7
        %v3345 = vsub.s32 %v3342, %v3344
        %v3346 = vrot.slane %v3338, %v3345
        %v3348 = vunpack.c.l.s4 1934713408
        %v3349 = vunpack.c.0.s8 %v3348
        %v3350 = vlaneseq
        %v3351 = vshrl.u32 %v3350, 7
        %v3352 = vsub.s32 %v3349, %v3351
        %v3353 = vrot.slane %v3339, %v3352
        %v3354 = vcombine.low %v3329, %v3337
        %v3355 = vcombine.high %v3329, %v3337
        %v3357 = vunpack.c.l.s4 1934713408
        %v3358 = vunpack.c.0.s8 %v3357
        %v3359 = vlaneseq
        %v3360 = vshrl.u32 %v3359, 7
        %v3361 = vsub.s32 %v3358, %v3360
        %v3362 = vrot.slane %v3354, %v3361
        %v3364 = vunpack.c.l.s4 1934713408
        %v3365 = vunpack.c.0.s8 %v3364
        %v3366 = vlaneseq
        %v3367 = vshrl.u32 %v3366, 7
        %v3368 = vsub.s32 %v3365, %v3367
        %v3369 = vrot.slane %v3355, %v3368
        %v3370 = vcombine.low %v3346, %v3362
        %v3371 = vcombine.high %v3346, %v3362
        %v3372 = vcombine.low %v3353, %v3369
        %v3373 = vcombine.high %v3353, %v3369
        %3375 = vrot.lane.b32.xlu0 %v3371, 8
        %v3376 = vpop.permute.xlu0 %3375
        %3379 = vrot.lane.b32.xlu0 %v3372, 16
        %v3380 = vpop.permute.xlu0 %3379
        %3383 = vrot.lane.b32.xlu0 %v3373, 24
        %v3384 = vpop.permute.xlu0 %3383
        %v3386 = vsel %vm1517, %v3370, %v3376
        %v3387 = vsel %vm2093, %v3386, %v3380
        %v3388 = vsel %vm2095, %v3387, %v3384
        %v3389 = vpack.c.bf16 %v3388, %v3388
        %v3394 = vunpack.c.l.b16 %v2197
        %v3395 = vunpack.c.l.b16 %v2198
        %v3396 = vunpack.c.l.b16 %v2199
        %v3397 = vunpack.c.l.b16 %v2200
        %v3398 = vpack.c.b16 %v3395, %v3394
        %v3399 = vpack.c.b16 %v3397, %v3396
        %v3403 = vsel %vm919, %v3389, 0
        %3405 = vmatprep.subr.bf16.mxu0 0
        %3406 = vmatpush1.bf16.msra.mxu0 %v3398
        %3407 = vmatprep.subr.bf16.mxu0 0
        %3408 = vmatpush1.bf16.msra.mxu0 %v3399
        %3409 = vmatprep.subr.bf16.mxu0 0
        %3410 = vmatpush1.bf16.msra.mxu0 0
        %3411 = vmatprep.subr.bf16.mxu0 0
        %3412 = vmatpush1.bf16.msra.mxu0 0
        %3413 = vmatprep.subr.bf16.mxu0 0
        %3414 = vmatpush1.bf16.msra.mxu0 0
        %3415 = vmatprep.subr.bf16.mxu0 0
        %3416 = vmatpush1.bf16.msra.mxu0 0
        %3417 = vmatprep.subr.bf16.mxu0 0
        %3418 = vmatpush1.bf16.msra.mxu0 0
        %3419 = vmatprep.subr.bf16.mxu0 0
        %3420 = vmatpush1.bf16.msra.mxu0 0
        %3421 = vmatprep.subr.bf16.mxu0 0
        %3422 = vmatpush1.bf16.msra.mxu0 0
        %3423 = vmatprep.subr.bf16.mxu0 0
        %3424 = vmatpush1.bf16.msra.mxu0 0
        %3425 = vmatprep.subr.bf16.mxu0 0
        %3426 = vmatpush1.bf16.msra.mxu0 0
        %3427 = vmatprep.subr.bf16.mxu0 0
        %3428 = vmatpush1.bf16.msra.mxu0 0
        %3429 = vmatprep.subr.bf16.mxu0 0
        %3430 = vmatpush1.bf16.msra.mxu0 0
        %3431 = vmatprep.subr.bf16.mxu0 0
        %3432 = vmatpush1.bf16.msra.mxu0 0
        %3433 = vmatprep.subr.bf16.mxu0 0
        %3434 = vmatpush1.bf16.msra.mxu0 0
        %3435 = vmatprep.subr.bf16.mxu0 0
        %3436 = vmatpush1.bf16.msra.mxu0 0
        %3437 = vmatprep.mubr.bf16.mxu0 0
        %3438 = vmatmul.mubr.bf16.gmra.mrb[0].mxu0 %v3403
        %v3439 = vpop.f32.mrb[0].mxu0
        %v3440 = vadd.f32 0.0, %v3439
        %v3441 = vpop.f32.mrb[0].mxu0
        %v3442 = vpop.f32.mrb[0].mxu0
        %v3443 = vpop.f32.mrb[0].mxu0
        %3444 = vdwg.mxu0
        %v3445 = vadd.f32 %v2183, %v3440
        %v3446 = vld [vmem:[%s18] sm:$0x1]
        %v3447 = vld [vmem:[%s19] sm:$0x1]
        %v3448 = vsel %vm919, %v3445, 0.0
        %3449 = vadd.xlane.f32.xlu0 %v3448
        %v3450 = vpop.xlane.xlu0 %3449
        %v3451 = vmul.f32 %v3450, %v2159
        %v3452 = vsub.f32 %v3445, %v3451
        %v3453 = vmul.f32 %v3452, %v3452
        %v3454 = vsel %vm919, %v3453, 0.0
        %3455 = vadd.xlane.f32.xlu0 %v3454
        %v3456 = vpop.xlane.xlu0 %3455
        %v3457 = vmul.f32 %v3456, %v2159
        %v3458 = vadd.f32 %v3457, 1e-05
        %v3459 = vrsqrt.pop %v3458
        %v3460 = vmul.f32 %v3452, %v3459
        %v3462 = vlaneseq
        %v3463 = vshrl.u32 %v3462, 7
        %v3464 = vsub.s32 0, %v3463
        %v3465 = vrot.slane %v3446, %v3464
        %v3467 = vmul.f32 %v3460, %v3465
        %v3469 = vlaneseq
        %v3470 = vshrl.u32 %v3469, 7
        %v3471 = vsub.s32 0, %v3470
        %v3472 = vrot.slane %v3447, %v3471
        %v3474 = vadd.f32 %v3467, %v3472
        %v3475 = vpack.c.bf16 %v3474, %v3474
        %v3476 = vld [vmem:[#allocation11] sm:$0xf]
        %v3477 = vld [vmem:[#allocation11 + $0x4] sm:$0xf]
        %v3478 = vld [vmem:[#allocation11 + $0x8] sm:$0xf]
        %v3479 = vld [vmem:[#allocation11 + $0xc] sm:$0xf]
        %v3480 = vld [vmem:[%s13] sm:$0x1]
        %v3482 = vlaneseq
        %v3483 = vshrl.u32 %v3482, 7
        %v3484 = vsub.s32 0, %v3483
        %v3485 = vrot.slane %v3480, %v3484
        %v3491 = vunpack.c.l.b16 %v3476
        %v3492 = vunpack.c.l.b16 %v3477
        %v3493 = vunpack.c.l.b16 %v3478
        %v3494 = vunpack.c.l.b16 %v3479
        %v3495 = vpack.c.b16 %v3492, %v3491
        %v3496 = vpack.c.b16 %v3494, %v3493
        %v3500 = vsel %vm919, %v3475, 0
        %3502 = vmatprep.subr.bf16.mxu0 0
        %3503 = vmatpush1.bf16.msra.mxu0 %v3495
        %3504 = vmatprep.subr.bf16.mxu0 0
        %3505 = vmatpush1.bf16.msra.mxu0 %v3496
        %3506 = vmatprep.subr.bf16.mxu0 0
        %3507 = vmatpush1.bf16.msra.mxu0 0
        %3508 = vmatprep.subr.bf16.mxu0 0
        %3509 = vmatpush1.bf16.msra.mxu0 0
        %3510 = vmatprep.subr.bf16.mxu0 0
        %3511 = vmatpush1.bf16.msra.mxu0 0
        %3512 = vmatprep.subr.bf16.mxu0 0
        %3513 = vmatpush1.bf16.msra.mxu0 0
        %3514 = vmatprep.subr.bf16.mxu0 0
        %3515 = vmatpush1.bf16.msra.mxu0 0
        %3516 = vmatprep.subr.bf16.mxu0 0
        %3517 = vmatpush1.bf16.msra.mxu0 0
        %3518 = vmatprep.subr.bf16.mxu0 0
        %3519 = vmatpush1.bf16.msra.mxu0 0
        %3520 = vmatprep.subr.bf16.mxu0 0
        %3521 = vmatpush1.bf16.msra.mxu0 0
        %3522 = vmatprep.subr.bf16.mxu0 0
        %3523 = vmatpush1.bf16.msra.mxu0 0
        %3524 = vmatprep.subr.bf16.mxu0 0
        %3525 = vmatpush1.bf16.msra.mxu0 0
        %3526 = vmatprep.subr.bf16.mxu0 0
        %3527 = vmatpush1.bf16.msra.mxu0 0
        %3528 = vmatprep.subr.bf16.mxu0 0
        %3529 = vmatpush1.bf16.msra.mxu0 0
        %3530 = vmatprep.subr.bf16.mxu0 0
        %3531 = vmatpush1.bf16.msra.mxu0 0
        %3532 = vmatprep.subr.bf16.mxu0 0
        %3533 = vmatpush1.bf16.msra.mxu0 0
        %3534 = vmatprep.mubr.bf16.mxu0 0
        %3535 = vmatmul.mubr.bf16.gmra.mrb[0].mxu0 %v3500
        %v3536 = vpop.f32.mrb[0].mxu0
        %v3537 = vadd.f32 %v3485, %v3536
        %v3538 = vpop.f32.mrb[0].mxu0
        %v3539 = vpop.f32.mrb[0].mxu0
        %v3540 = vpop.f32.mrb[0].mxu0
        %3541 = vdwg.mxu0
        %v3542 = vmax.f32 %v3537, 0.0
        %v3543 = vpack.c.bf16 %v3542, %v3542
        %v3544 = vld [vmem:[%s14] sm:$0xf]
        %v3545 = vld [vmem:[%s14 + $0x4] sm:$0xf]
        %v3546 = vld [vmem:[%s14 + $0x8] sm:$0xf]
        %v3547 = vld [vmem:[%s14 + $0xc] sm:$0xf]
        %v3548 = vld [vmem:[%s14 + $0x10] sm:$0xf]
        %v3549 = vld [vmem:[%s14 + $0x14] sm:$0xf]
        %v3550 = vld [vmem:[%s14 + $0x18] sm:$0xf]
        %v3551 = vld [vmem:[%s14 + $0x1c] sm:$0xf]
        %v3552 = vld [vmem:[%s15] sm:$0x1]
        %v3554 = vlaneseq
        %v3555 = vshrl.u32 %v3554, 7
        %v3556 = vsub.s32 0, %v3555
        %v3557 = vrot.slane %v3552, %v3556
        %v3567 = vunpack.c.l.b16 %v3544
        %v3568 = vunpack.c.l.b16 %v3545
        %v3569 = vunpack.c.l.b16 %v3546
        %v3570 = vunpack.c.l.b16 %v3547
        %v3571 = vunpack.c.l.b16 %v3548
        %v3572 = vunpack.c.l.b16 %v3549
        %v3573 = vunpack.c.l.b16 %v3550
        %v3574 = vunpack.c.l.b16 %v3551
        %v3575 = vpack.c.b16 %v3568, %v3567
        %v3576 = vpack.c.b16 %v3570, %v3569
        %v3577 = vpack.c.b16 %v3572, %v3571
        %v3578 = vpack.c.b16 %v3574, %v3573
        %vm3583 = vcmask 523264
        %v3585 = vsel %vm3583, %v3543, 0
        %3587 = vmatprep.subr.bf16.mxu0 0
        %3588 = vmatpush1.bf16.msra.mxu0 %v3575
        %3589 = vmatprep.subr.bf16.mxu0 0
        %3590 = vmatpush1.bf16.msra.mxu0 %v3576
        %3591 = vmatprep.subr.bf16.mxu0 0
        %3592 = vmatpush1.bf16.msra.mxu0 %v3577
        %3593 = vmatprep.subr.bf16.mxu0 0
        %3594 = vmatpush1.bf16.msra.mxu0 %v3578
        %3595 = vmatprep.subr.bf16.mxu0 0
        %3596 = vmatpush1.bf16.msra.mxu0 0
        %3597 = vmatprep.subr.bf16.mxu0 0
        %3598 = vmatpush1.bf16.msra.mxu0 0
        %3599 = vmatprep.subr.bf16.mxu0 0
        %3600 = vmatpush1.bf16.msra.mxu0 0
        %3601 = vmatprep.subr.bf16.mxu0 0
        %3602 = vmatpush1.bf16.msra.mxu0 0
        %3603 = vmatprep.subr.bf16.mxu0 0
        %3604 = vmatpush1.bf16.msra.mxu0 0
        %3605 = vmatprep.subr.bf16.mxu0 0
        %3606 = vmatpush1.bf16.msra.mxu0 0
        %3607 = vmatprep.subr.bf16.mxu0 0
        %3608 = vmatpush1.bf16.msra.mxu0 0
        %3609 = vmatprep.subr.bf16.mxu0 0
        %3610 = vmatpush1.bf16.msra.mxu0 0
        %3611 = vmatprep.subr.bf16.mxu0 0
        %3612 = vmatpush1.bf16.msra.mxu0 0
        %3613 = vmatprep.subr.bf16.mxu0 0
        %3614 = vmatpush1.bf16.msra.mxu0 0
        %3615 = vmatprep.subr.bf16.mxu0 0
        %3616 = vmatpush1.bf16.msra.mxu0 0
        %3617 = vmatprep.subr.bf16.mxu0 0
        %3618 = vmatpush1.bf16.msra.mxu0 0
        %3619 = vmatprep.mubr.bf16.mxu0 0
        %3620 = vmatmul.mubr.bf16.gmra.mrb[0].mxu0 %v3585
        %v3621 = vpop.f32.mrb[0].mxu0
        %v3622 = vadd.f32 %v3557, %v3621
        %v3623 = vpop.f32.mrb[0].mxu0
        %v3624 = vpop.f32.mrb[0].mxu0
        %v3625 = vpop.f32.mrb[0].mxu0
        %3626 = vdwg.mxu0
        %v3627 = vadd.f32 %v3474, %v3622
        %v3628 = vld [vmem:[%s20] sm:$0x1]
        %v3629 = vld [vmem:[%s21] sm:$0x1]
        %v3630 = vsel %vm919, %v3627, 0.0
        %3631 = vadd.xlane.f32.xlu0 %v3630
        %v3632 = vpop.xlane.xlu0 %3631
        %v3633 = vmul.f32 %v3632, %v2159
        %v3634 = vsub.f32 %v3627, %v3633
        %v3635 = vmul.f32 %v3634, %v3634
        %v3636 = vsel %vm919, %v3635, 0.0
        %3637 = vadd.xlane.f32.xlu0 %v3636
        %v3638 = vpop.xlane.xlu0 %3637
        %v3639 = vmul.f32 %v3638, %v2159
        %v3640 = vadd.f32 %v3639, 1e-05
        %v3641 = vrsqrt.pop %v3640
        %v3642 = vmul.f32 %v3634, %v3641
        %v3644 = vlaneseq
        %v3645 = vshrl.u32 %v3644, 7
        %v3646 = vsub.s32 0, %v3645
        %v3647 = vrot.slane %v3628, %v3646
        %v3649 = vmul.f32 %v3642, %v3647
        %v3651 = vlaneseq
        %v3652 = vshrl.u32 %v3651, 7
        %v3653 = vsub.s32 0, %v3652
        %v3654 = vrot.slane %v3629, %v3653
        %v3656 = vadd.f32 %v3649, %v3654
        %v3657 = vpack.c.bf16 %v3656, %v3656
        %s3658 = scalar_lea.vmem %s4, 16
        %v3659 = vld [vmem:[%s3658] sm:$0xf]
        %v3660 = vld [vmem:[%s3658 + $0x4] sm:$0xf]
        %v3661 = vld [vmem:[%s3658 + $0x8] sm:$0xf]
        %v3662 = vld [vmem:[%s3658 + $0xc] sm:$0xf]
        %s3663 = scalar_lea.vmem %s5, 16
        %v3664 = vld [vmem:[%s3663] sm:$0xf]
        %v3665 = vld [vmem:[%s3663 + $0x4] sm:$0xf]
        %v3666 = vld [vmem:[%s3663 + $0x8] sm:$0xf]
        %v3667 = vld [vmem:[%s3663 + $0xc] sm:$0xf]
        %s3668 = scalar_lea.vmem %s6, 16
        %v3669 = vld [vmem:[%s3668] sm:$0xf]
        %v3670 = vld [vmem:[%s3668 + $0x4] sm:$0xf]
        %v3671 = vld [vmem:[%s3668 + $0x8] sm:$0xf]
        %v3672 = vld [vmem:[%s3668 + $0xc] sm:$0xf]
        %s3673 = scalar_lea.vmem %s7, 16
        %v3674 = vld [vmem:[%s3673] sm:$0xf]
        %v3675 = vld [vmem:[%s3673 + $0x4] sm:$0xf]
        %v3676 = vld [vmem:[%s3673 + $0x8] sm:$0xf]
        %v3677 = vld [vmem:[%s3673 + $0xc] sm:$0xf]
        %v3682 = vunpack.c.l.b16 %v3659
        %v3683 = vunpack.c.l.b16 %v3660
        %v3684 = vunpack.c.l.b16 %v3661
        %v3685 = vunpack.c.l.b16 %v3662
        %v3686 = vpack.c.b16 %v3683, %v3682
        %v3687 = vpack.c.b16 %v3685, %v3684
        %v3691 = vsel %vm919, %v3657, 0
        %3693 = vmatprep.subr.bf16.mxu0 0
        %3694 = vmatpush1.bf16.msra.mxu0 %v3686
        %3695 = vmatprep.subr.bf16.mxu0 0
        %3696 = vmatpush1.bf16.msra.mxu0 %v3687
        %3697 = vmatprep.subr.bf16.mxu0 0
        %3698 = vmatpush1.bf16.msra.mxu0 0
        %3699 = vmatprep.subr.bf16.mxu0 0
        %3700 = vmatpush1.bf16.msra.mxu0 0
        %3701 = vmatprep.subr.bf16.mxu0 0
        %3702 = vmatpush1.bf16.msra.mxu0 0
        %3703 = vmatprep.subr.bf16.mxu0 0
        %3704 = vmatpush1.bf16.msra.mxu0 0
        %3705 = vmatprep.subr.bf16.mxu0 0
        %3706 = vmatpush1.bf16.msra.mxu0 0
        %3707 = vmatprep.subr.bf16.mxu0 0
        %3708 = vmatpush1.bf16.msra.mxu0 0
        %3709 = vmatprep.subr.bf16.mxu0 0
        %3710 = vmatpush1.bf16.msra.mxu0 0
        %3711 = vmatprep.subr.bf16.mxu0 0
        %3712 = vmatpush1.bf16.msra.mxu0 0
        %3713 = vmatprep.subr.bf16.mxu0 0
        %3714 = vmatpush1.bf16.msra.mxu0 0
        %3715 = vmatprep.subr.bf16.mxu0 0
        %3716 = vmatpush1.bf16.msra.mxu0 0
        %3717 = vmatprep.subr.bf16.mxu0 0
        %3718 = vmatpush1.bf16.msra.mxu0 0
        %3719 = vmatprep.subr.bf16.mxu0 0
        %3720 = vmatpush1.bf16.msra.mxu0 0
        %3721 = vmatprep.subr.bf16.mxu0 0
        %3722 = vmatpush1.bf16.msra.mxu0 0
        %3723 = vmatprep.subr.bf16.mxu0 0
        %3724 = vmatpush1.bf16.msra.mxu0 0
        %3725 = vmatprep.mubr.bf16.mxu0 0
        %3726 = vmatmul.mubr.bf16.gmra.mrb[0].mxu0 %v3691
        %v3727 = vpop.f32.mrb[0].mxu0
        %v3728 = vadd.f32 0.0, %v3727
        %v3729 = vpop.f32.mrb[0].mxu0
        %v3730 = vpop.f32.mrb[0].mxu0
        %v3731 = vpop.f32.mrb[0].mxu0
        %3732 = vdwg.mxu0
        %v3737 = vunpack.c.l.b16 %v3664
        %v3738 = vunpack.c.l.b16 %v3665
        %v3739 = vunpack.c.l.b16 %v3666
        %v3740 = vunpack.c.l.b16 %v3667
        %v3741 = vpack.c.b16 %v3738, %v3737
        %v3742 = vpack.c.b16 %v3740, %v3739
        %3745 = vmatprep.subr.bf16.mxu0 0
        %3746 = vmatpush1.bf16.msra.mxu0 %v3741
        %3747 = vmatprep.subr.bf16.mxu0 0
        %3748 = vmatpush1.bf16.msra.mxu0 %v3742
        %3749 = vmatprep.subr.bf16.mxu0 0
        %3750 = vmatpush1.bf16.msra.mxu0 0
        %3751 = vmatprep.subr.bf16.mxu0 0
        %3752 = vmatpush1.bf16.msra.mxu0 0
        %3753 = vmatprep.subr.bf16.mxu0 0
        %3754 = vmatpush1.bf16.msra.mxu0 0
        %3755 = vmatprep.subr.bf16.mxu0 0
        %3756 = vmatpush1.bf16.msra.mxu0 0
        %3757 = vmatprep.subr.bf16.mxu0 0
        %3758 = vmatpush1.bf16.msra.mxu0 0
        %3759 = vmatprep.subr.bf16.mxu0 0
        %3760 = vmatpush1.bf16.msra.mxu0 0
        %3761 = vmatprep.subr.bf16.mxu0 0
        %3762 = vmatpush1.bf16.msra.mxu0 0
        %3763 = vmatprep.subr.bf16.mxu0 0
        %3764 = vmatpush1.bf16.msra.mxu0 0
        %3765 = vmatprep.subr.bf16.mxu0 0
        %3766 = vmatpush1.bf16.msra.mxu0 0
        %3767 = vmatprep.subr.bf16.mxu0 0
        %3768 = vmatpush1.bf16.msra.mxu0 0
        %3769 = vmatprep.subr.bf16.mxu0 0
        %3770 = vmatpush1.bf16.msra.mxu0 0
        %3771 = vmatprep.subr.bf16.mxu0 0
        %3772 = vmatpush1.bf16.msra.mxu0 0
        %3773 = vmatprep.subr.bf16.mxu0 0
        %3774 = vmatpush1.bf16.msra.mxu0 0
        %3775 = vmatprep.subr.bf16.mxu0 0
        %3776 = vmatpush1.bf16.msra.mxu0 0
        %3777 = vmatprep.mubr.bf16.mxu0 0
        %3778 = vmatmul.mubr.bf16.gmra.mrb[0].mxu0 %v3691
        %v3779 = vpop.f32.mrb[0].mxu0
        %v3780 = vadd.f32 0.0, %v3779
        %v3781 = vpop.f32.mrb[0].mxu0
        %v3782 = vpop.f32.mrb[0].mxu0
        %v3783 = vpop.f32.mrb[0].mxu0
        %3784 = vdwg.mxu0
        %v3789 = vunpack.c.l.b16 %v3669
        %v3790 = vunpack.c.l.b16 %v3670
        %v3791 = vunpack.c.l.b16 %v3671
        %v3792 = vunpack.c.l.b16 %v3672
        %v3793 = vpack.c.b16 %v3790, %v3789
        %v3794 = vpack.c.b16 %v3792, %v3791
        %3797 = vmatprep.subr.bf16.mxu0 0
        %3798 = vmatpush1.bf16.msra.mxu0 %v3793
        %3799 = vmatprep.subr.bf16.mxu0 0
        %3800 = vmatpush1.bf16.msra.mxu0 %v3794
        %3801 = vmatprep.subr.bf16.mxu0 0
        %3802 = vmatpush1.bf16.msra.mxu0 0
        %3803 = vmatprep.subr.bf16.mxu0 0
        %3804 = vmatpush1.bf16.msra.mxu0 0
        %3805 = vmatprep.subr.bf16.mxu0 0
        %3806 = vmatpush1.bf16.msra.mxu0 0
        %3807 = vmatprep.subr.bf16.mxu0 0
        %3808 = vmatpush1.bf16.msra.mxu0 0
        %3809 = vmatprep.subr.bf16.mxu0 0
        %3810 = vmatpush1.bf16.msra.mxu0 0
        %3811 = vmatprep.subr.bf16.mxu0 0
        %3812 = vmatpush1.bf16.msra.mxu0 0
        %3813 = vmatprep.subr.bf16.mxu0 0
        %3814 = vmatpush1.bf16.msra.mxu0 0
        %3815 = vmatprep.subr.bf16.mxu0 0
        %3816 = vmatpush1.bf16.msra.mxu0 0
        %3817 = vmatprep.subr.bf16.mxu0 0
        %3818 = vmatpush1.bf16.msra.mxu0 0
        %3819 = vmatprep.subr.bf16.mxu0 0
        %3820 = vmatpush1.bf16.msra.mxu0 0
        %3821 = vmatprep.subr.bf16.mxu0 0
        %3822 = vmatpush1.bf16.msra.mxu0 0
        %3823 = vmatprep.subr.bf16.mxu0 0
        %3824 = vmatpush1.bf16.msra.mxu0 0
        %3825 = vmatprep.subr.bf16.mxu0 0
        %3826 = vmatpush1.bf16.msra.mxu0 0
        %3827 = vmatprep.subr.bf16.mxu0 0
        %3828 = vmatpush1.bf16.msra.mxu0 0
        %3829 = vmatprep.mubr.bf16.mxu0 0
        %3830 = vmatmul.mubr.bf16.gmra.mrb[0].mxu0 %v3691
        %v3831 = vpop.f32.mrb[0].mxu0
        %v3832 = vadd.f32 0.0, %v3831
        %v3833 = vpop.f32.mrb[0].mxu0
        %v3834 = vpop.f32.mrb[0].mxu0
        %v3835 = vpop.f32.mrb[0].mxu0
        %3836 = vdwg.mxu0
        %3838 = vrot.lane.b32.xlu0 %v3728, 120
        %v3839 = vpop.permute.xlu0 %3838
        %3841 = vrot.lane.b32.xlu0 %v3728, 112
        %v3842 = vpop.permute.xlu0 %3841
        %3844 = vrot.lane.b32.xlu0 %v3728, 104
        %v3845 = vpop.permute.xlu0 %3844
        %v3847 = vcombine.low %v3728, %v3842
        %v3848 = vcombine.high %v3728, %v3842
        %v3850 = vunpack.c.l.s4 1983009808
        %v3851 = vunpack.c.0.s8 %v3850
        %v3852 = vlaneseq
        %v3853 = vshrl.u32 %v3852, 7
        %v3854 = vsub.s32 %v3851, %v3853
        %v3855 = vrot.slane %v3847, %v3854
        %v3857 = vunpack.c.l.s4 1983009808
        %v3858 = vunpack.c.0.s8 %v3857
        %v3859 = vlaneseq
        %v3860 = vshrl.u32 %v3859, 7
        %v3861 = vsub.s32 %v3858, %v3860
        %v3862 = vrot.slane %v3848, %v3861
        %v3863 = vcombine.low %v3839, %v3845
        %v3864 = vcombine.high %v3839, %v3845
        %v3866 = vunpack.c.l.s4 1983009808
        %v3867 = vunpack.c.0.s8 %v3866
        %v3868 = vlaneseq
        %v3869 = vshrl.u32 %v3868, 7
        %v3870 = vsub.s32 %v3867, %v3869
        %v3871 = vrot.slane %v3863, %v3870
        %v3873 = vunpack.c.l.s4 1983009808
        %v3874 = vunpack.c.0.s8 %v3873
        %v3875 = vlaneseq
        %v3876 = vshrl.u32 %v3875, 7
        %v3877 = vsub.s32 %v3874, %v3876
        %v3878 = vrot.slane %v3864, %v3877
        %v3879 = vcombine.low %v3855, %v3871
        %v3880 = vcombine.high %v3855, %v3871
        %v3882 = vunpack.c.l.s4 1934713408
        %v3883 = vunpack.c.0.s8 %v3882
        %v3884 = vlaneseq
        %v3885 = vshrl.u32 %v3884, 7
        %v3886 = vsub.s32 %v3883, %v3885
        %v3887 = vrot.slane %v3879, %v3886
        %v3889 = vunpack.c.l.s4 1934713408
        %v3890 = vunpack.c.0.s8 %v3889
        %v3891 = vlaneseq
        %v3892 = vshrl.u32 %v3891, 7
        %v3893 = vsub.s32 %v3890, %v3892
        %v3894 = vrot.slane %v3880, %v3893
        %v3895 = vcombine.low %v3862, %v3878
        %v3896 = vcombine.high %v3862, %v3878
        %v3898 = vunpack.c.l.s4 1934713408
        %v3899 = vunpack.c.0.s8 %v3898
        %v3900 = vlaneseq
        %v3901 = vshrl.u32 %v3900, 7
        %v3902 = vsub.s32 %v3899, %v3901
        %v3903 = vrot.slane %v3895, %v3902
        %v3905 = vunpack.c.l.s4 1934713408
        %v3906 = vunpack.c.0.s8 %v3905
        %v3907 = vlaneseq
        %v3908 = vshrl.u32 %v3907, 7
        %v3909 = vsub.s32 %v3906, %v3908
        %v3910 = vrot.slane %v3896, %v3909
        %v3911 = vcombine.high %v3887, 0.0
        %v3912 = vcombine.high %v3894, 0.0
        %v3913 = vcombine.high %v3903, 0.0
        %v3914 = vcombine.high %v3910, 0.0
        %v3915 = vcombine.low %v3887, %v3894
        %v3917 = vunpack.c.l.s4 1983009808
        %v3918 = vunpack.c.0.s8 %v3917
        %v3919 = vlaneseq
        %v3920 = vshrl.u32 %v3919, 7
        %v3921 = vsub.s32 %v3918, %v3920
        %v3922 = vrot.slane %v3915, %v3921
        %v3923 = vcombine.low %v3911, %v3912
        %v3925 = vunpack.c.l.s4 1983009808
        %v3926 = vunpack.c.0.s8 %v3925
        %v3927 = vlaneseq
        %v3928 = vshrl.u32 %v3927, 7
        %v3929 = vsub.s32 %v3926, %v3928
        %v3930 = vrot.slane %v3923, %v3929
        %v3931 = vcombine.low %v3903, %v3910
        %v3933 = vunpack.c.l.s4 1983009808
        %v3934 = vunpack.c.0.s8 %v3933
        %v3935 = vlaneseq
        %v3936 = vshrl.u32 %v3935, 7
        %v3937 = vsub.s32 %v3934, %v3936
        %v3938 = vrot.slane %v3931, %v3937
        %v3939 = vcombine.low %v3913, %v3914
        %v3941 = vunpack.c.l.s4 1983009808
        %v3942 = vunpack.c.0.s8 %v3941
        %v3943 = vlaneseq
        %v3944 = vshrl.u32 %v3943, 7
        %v3945 = vsub.s32 %v3942, %v3944
        %v3946 = vrot.slane %v3939, %v3945
        %v3947 = vcombine.low %v3922, %v3930
        %v3948 = vcombine.high %v3922, %v3930
        %v3950 = vunpack.c.l.s4 1934713408
        %v3951 = vunpack.c.0.s8 %v3950
        %v3952 = vlaneseq
        %v3953 = vshrl.u32 %v3952, 7
        %v3954 = vsub.s32 %v3951, %v3953
        %v3955 = vrot.slane %v3947, %v3954
        %v3957 = vunpack.c.l.s4 1934713408
        %v3958 = vunpack.c.0.s8 %v3957
        %v3959 = vlaneseq
        %v3960 = vshrl.u32 %v3959, 7
        %v3961 = vsub.s32 %v3958, %v3960
        %v3962 = vrot.slane %v3948, %v3961
        %v3963 = vcombine.low %v3938, %v3946
        %v3964 = vcombine.high %v3938, %v3946
        %v3966 = vunpack.c.l.s4 1934713408
        %v3967 = vunpack.c.0.s8 %v3966
        %v3968 = vlaneseq
        %v3969 = vshrl.u32 %v3968, 7
        %v3970 = vsub.s32 %v3967, %v3969
        %v3971 = vrot.slane %v3963, %v3970
        %v3973 = vunpack.c.l.s4 1934713408
        %v3974 = vunpack.c.0.s8 %v3973
        %v3975 = vlaneseq
        %v3976 = vshrl.u32 %v3975, 7
        %v3977 = vsub.s32 %v3974, %v3976
        %v3978 = vrot.slane %v3964, %v3977
        %v3979 = vcombine.low %v3955, %v3971
        %v3980 = vcombine.high %v3955, %v3971
        %v3981 = vcombine.low %v3962, %v3978
        %v3982 = vcombine.high %v3962, %v3978
        %v3983 = vpack.c.bf16 %v3979, %v3979
        %v3984 = vpack.c.bf16 %v3980, %v3980
        %v3985 = vpack.c.bf16 %v3981, %v3981
        %v3986 = vpack.c.bf16 %v3982, %v3982
        %3988 = vrot.lane.b32.xlu0 %v3780, 120
        %v3989 = vpop.permute.xlu0 %3988
        %3991 = vrot.lane.b32.xlu0 %v3780, 112
        %v3992 = vpop.permute.xlu0 %3991
        %3994 = vrot.lane.b32.xlu0 %v3780, 104
        %v3995 = vpop.permute.xlu0 %3994
        %v3997 = vcombine.low %v3780, %v3992
        %v3998 = vcombine.high %v3780, %v3992
        %v4000 = vunpack.c.l.s4 1983009808
        %v4001 = vunpack.c.0.s8 %v4000
        %v4002 = vlaneseq
        %v4003 = vshrl.u32 %v4002, 7
        %v4004 = vsub.s32 %v4001, %v4003
        %v4005 = vrot.slane %v3997, %v4004
        %v4007 = vunpack.c.l.s4 1983009808
        %v4008 = vunpack.c.0.s8 %v4007
        %v4009 = vlaneseq
        %v4010 = vshrl.u32 %v4009, 7
        %v4011 = vsub.s32 %v4008, %v4010
        %v4012 = vrot.slane %v3998, %v4011
        %v4013 = vcombine.low %v3989, %v3995
        %v4014 = vcombine.high %v3989, %v3995
        %v4016 = vunpack.c.l.s4 1983009808
        %v4017 = vunpack.c.0.s8 %v4016
        %v4018 = vlaneseq
        %v4019 = vshrl.u32 %v4018, 7
        %v4020 = vsub.s32 %v4017, %v4019
        %v4021 = vrot.slane %v4013, %v4020
        %v4023 = vunpack.c.l.s4 1983009808
        %v4024 = vunpack.c.0.s8 %v4023
        %v4025 = vlaneseq
        %v4026 = vshrl.u32 %v4025, 7
        %v4027 = vsub.s32 %v4024, %v4026
        %v4028 = vrot.slane %v4014, %v4027
        %v4029 = vcombine.low %v4005, %v4021
        %v4030 = vcombine.high %v4005, %v4021
        %v4032 = vunpack.c.l.s4 1934713408
        %v4033 = vunpack.c.0.s8 %v4032
        %v4034 = vlaneseq
        %v4035 = vshrl.u32 %v4034, 7
        %v4036 = vsub.s32 %v4033, %v4035
        %v4037 = vrot.slane %v4029, %v4036
        %v4039 = vunpack.c.l.s4 1934713408
        %v4040 = vunpack.c.0.s8 %v4039
        %v4041 = vlaneseq
        %v4042 = vshrl.u32 %v4041, 7
        %v4043 = vsub.s32 %v4040, %v4042
        %v4044 = vrot.slane %v4030, %v4043
        %v4045 = vcombine.low %v4012, %v4028
        %v4046 = vcombine.high %v4012, %v4028
        %v4048 = vunpack.c.l.s4 1934713408
        %v4049 = vunpack.c.0.s8 %v4048
        %v4050 = vlaneseq
        %v4051 = vshrl.u32 %v4050, 7
        %v4052 = vsub.s32 %v4049, %v4051
        %v4053 = vrot.slane %v4045, %v4052
        %v4055 = vunpack.c.l.s4 1934713408
        %v4056 = vunpack.c.0.s8 %v4055
        %v4057 = vlaneseq
        %v4058 = vshrl.u32 %v4057, 7
        %v4059 = vsub.s32 %v4056, %v4058
        %v4060 = vrot.slane %v4046, %v4059
        %v4061 = vcombine.high %v4037, 0.0
        %v4062 = vcombine.high %v4044, 0.0
        %v4063 = vcombine.high %v4053, 0.0
        %v4064 = vcombine.high %v4060, 0.0
        %v4065 = vcombine.low %v4037, %v4044
        %v4067 = vunpack.c.l.s4 1983009808
        %v4068 = vunpack.c.0.s8 %v4067
        %v4069 = vlaneseq
        %v4070 = vshrl.u32 %v4069, 7
        %v4071 = vsub.s32 %v4068, %v4070
        %v4072 = vrot.slane %v4065, %v4071
        %v4073 = vcombine.low %v4061, %v4062
        %v4075 = vunpack.c.l.s4 1983009808
        %v4076 = vunpack.c.0.s8 %v4075
        %v4077 = vlaneseq
        %v4078 = vshrl.u32 %v4077, 7
        %v4079 = vsub.s32 %v4076, %v4078
        %v4080 = vrot.slane %v4073, %v4079
        %v4081 = vcombine.low %v4053, %v4060
        %v4083 = vunpack.c.l.s4 1983009808
        %v4084 = vunpack.c.0.s8 %v4083
        %v4085 = vlaneseq
        %v4086 = vshrl.u32 %v4085, 7
        %v4087 = vsub.s32 %v4084, %v4086
        %v4088 = vrot.slane %v4081, %v4087
        %v4089 = vcombine.low %v4063, %v4064
        %v4091 = vunpack.c.l.s4 1983009808
        %v4092 = vunpack.c.0.s8 %v4091
        %v4093 = vlaneseq
        %v4094 = vshrl.u32 %v4093, 7
        %v4095 = vsub.s32 %v4092, %v4094
        %v4096 = vrot.slane %v4089, %v4095
        %v4097 = vcombine.low %v4072, %v4080
        %v4098 = vcombine.high %v4072, %v4080
        %v4100 = vunpack.c.l.s4 1934713408
        %v4101 = vunpack.c.0.s8 %v4100
        %v4102 = vlaneseq
        %v4103 = vshrl.u32 %v4102, 7
        %v4104 = vsub.s32 %v4101, %v4103
        %v4105 = vrot.slane %v4097, %v4104
        %v4107 = vunpack.c.l.s4 1934713408
        %v4108 = vunpack.c.0.s8 %v4107
        %v4109 = vlaneseq
        %v4110 = vshrl.u32 %v4109, 7
        %v4111 = vsub.s32 %v4108, %v4110
        %v4112 = vrot.slane %v4098, %v4111
        %v4113 = vcombine.low %v4088, %v4096
        %v4114 = vcombine.high %v4088, %v4096
        %v4116 = vunpack.c.l.s4 1934713408
        %v4117 = vunpack.c.0.s8 %v4116
        %v4118 = vlaneseq
        %v4119 = vshrl.u32 %v4118, 7
        %v4120 = vsub.s32 %v4117, %v4119
        %v4121 = vrot.slane %v4113, %v4120
        %v4123 = vunpack.c.l.s4 1934713408
        %v4124 = vunpack.c.0.s8 %v4123
        %v4125 = vlaneseq
        %v4126 = vshrl.u32 %v4125, 7
        %v4127 = vsub.s32 %v4124, %v4126
        %v4128 = vrot.slane %v4114, %v4127
        %v4129 = vcombine.low %v4105, %v4121
        %v4130 = vcombine.high %v4105, %v4121
        %v4131 = vcombine.low %v4112, %v4128
        %v4132 = vcombine.high %v4112, %v4128
        %v4133 = vpack.c.bf16 %v4129, %v4129
        %v4134 = vpack.c.bf16 %v4130, %v4130
        %v4135 = vpack.c.bf16 %v4131, %v4131
        %v4136 = vpack.c.bf16 %v4132, %v4132
        %4138 = vrot.lane.b32.xlu0 %v3832, 120
        %v4139 = vpop.permute.xlu0 %4138
        %4141 = vrot.lane.b32.xlu0 %v3832, 112
        %v4142 = vpop.permute.xlu0 %4141
        %4144 = vrot.lane.b32.xlu0 %v3832, 104
        %v4145 = vpop.permute.xlu0 %4144
        %v4147 = vcombine.low %v3832, %v4142
        %v4148 = vcombine.high %v3832, %v4142
        %v4150 = vunpack.c.l.s4 1983009808
        %v4151 = vunpack.c.0.s8 %v4150
        %v4152 = vlaneseq
        %v4153 = vshrl.u32 %v4152, 7
        %v4154 = vsub.s32 %v4151, %v4153
        %v4155 = vrot.slane %v4147, %v4154
        %v4157 = vunpack.c.l.s4 1983009808
        %v4158 = vunpack.c.0.s8 %v4157
        %v4159 = vlaneseq
        %v4160 = vshrl.u32 %v4159, 7
        %v4161 = vsub.s32 %v4158, %v4160
        %v4162 = vrot.slane %v4148, %v4161
        %v4163 = vcombine.low %v4139, %v4145
        %v4164 = vcombine.high %v4139, %v4145
        %v4166 = vunpack.c.l.s4 1983009808
        %v4167 = vunpack.c.0.s8 %v4166
        %v4168 = vlaneseq
        %v4169 = vshrl.u32 %v4168, 7
        %v4170 = vsub.s32 %v4167, %v4169
        %v4171 = vrot.slane %v4163, %v4170
        %v4173 = vunpack.c.l.s4 1983009808
        %v4174 = vunpack.c.0.s8 %v4173
        %v4175 = vlaneseq
        %v4176 = vshrl.u32 %v4175, 7
        %v4177 = vsub.s32 %v4174, %v4176
        %v4178 = vrot.slane %v4164, %v4177
        %v4179 = vcombine.low %v4155, %v4171
        %v4180 = vcombine.high %v4155, %v4171
        %v4182 = vunpack.c.l.s4 1934713408
        %v4183 = vunpack.c.0.s8 %v4182
        %v4184 = vlaneseq
        %v4185 = vshrl.u32 %v4184, 7
        %v4186 = vsub.s32 %v4183, %v4185
        %v4187 = vrot.slane %v4179, %v4186
        %v4189 = vunpack.c.l.s4 1934713408
        %v4190 = vunpack.c.0.s8 %v4189
        %v4191 = vlaneseq
        %v4192 = vshrl.u32 %v4191, 7
        %v4193 = vsub.s32 %v4190, %v4192
        %v4194 = vrot.slane %v4180, %v4193
        %v4195 = vcombine.low %v4162, %v4178
        %v4196 = vcombine.high %v4162, %v4178
        %v4198 = vunpack.c.l.s4 1934713408
        %v4199 = vunpack.c.0.s8 %v4198
        %v4200 = vlaneseq
        %v4201 = vshrl.u32 %v4200, 7
        %v4202 = vsub.s32 %v4199, %v4201
        %v4203 = vrot.slane %v4195, %v4202
        %v4205 = vunpack.c.l.s4 1934713408
        %v4206 = vunpack.c.0.s8 %v4205
        %v4207 = vlaneseq
        %v4208 = vshrl.u32 %v4207, 7
        %v4209 = vsub.s32 %v4206, %v4208
        %v4210 = vrot.slane %v4196, %v4209
        %v4211 = vcombine.high %v4187, 0.0
        %v4212 = vcombine.high %v4194, 0.0
        %v4213 = vcombine.high %v4203, 0.0
        %v4214 = vcombine.high %v4210, 0.0
        %v4215 = vcombine.low %v4187, %v4194
        %v4217 = vunpack.c.l.s4 1983009808
        %v4218 = vunpack.c.0.s8 %v4217
        %v4219 = vlaneseq
        %v4220 = vshrl.u32 %v4219, 7
        %v4221 = vsub.s32 %v4218, %v4220
        %v4222 = vrot.slane %v4215, %v4221
        %v4223 = vcombine.low %v4211, %v4212
        %v4225 = vunpack.c.l.s4 1983009808
        %v4226 = vunpack.c.0.s8 %v4225
        %v4227 = vlaneseq
        %v4228 = vshrl.u32 %v4227, 7
        %v4229 = vsub.s32 %v4226, %v4228
        %v4230 = vrot.slane %v4223, %v4229
        %v4231 = vcombine.low %v4203, %v4210
        %v4233 = vunpack.c.l.s4 1983009808
        %v4234 = vunpack.c.0.s8 %v4233
        %v4235 = vlaneseq
        %v4236 = vshrl.u32 %v4235, 7
        %v4237 = vsub.s32 %v4234, %v4236
        %v4238 = vrot.slane %v4231, %v4237
        %v4239 = vcombine.low %v4213, %v4214
        %v4241 = vunpack.c.l.s4 1983009808
        %v4242 = vunpack.c.0.s8 %v4241
        %v4243 = vlaneseq
        %v4244 = vshrl.u32 %v4243, 7
        %v4245 = vsub.s32 %v4242, %v4244
        %v4246 = vrot.slane %v4239, %v4245
        %v4247 = vcombine.low %v4222, %v4230
        %v4248 = vcombine.high %v4222, %v4230
        %v4250 = vunpack.c.l.s4 1934713408
        %v4251 = vunpack.c.0.s8 %v4250
        %v4252 = vlaneseq
        %v4253 = vshrl.u32 %v4252, 7
        %v4254 = vsub.s32 %v4251, %v4253
        %v4255 = vrot.slane %v4247, %v4254
        %v4257 = vunpack.c.l.s4 1934713408
        %v4258 = vunpack.c.0.s8 %v4257
        %v4259 = vlaneseq
        %v4260 = vshrl.u32 %v4259, 7
        %v4261 = vsub.s32 %v4258, %v4260
        %v4262 = vrot.slane %v4248, %v4261
        %v4263 = vcombine.low %v4238, %v4246
        %v4264 = vcombine.high %v4238, %v4246
        %v4266 = vunpack.c.l.s4 1934713408
        %v4267 = vunpack.c.0.s8 %v4266
        %v4268 = vlaneseq
        %v4269 = vshrl.u32 %v4268, 7
        %v4270 = vsub.s32 %v4267, %v4269
        %v4271 = vrot.slane %v4263, %v4270
        %v4273 = vunpack.c.l.s4 1934713408
        %v4274 = vunpack.c.0.s8 %v4273
        %v4275 = vlaneseq
        %v4276 = vshrl.u32 %v4275, 7
        %v4277 = vsub.s32 %v4274, %v4276
        %v4278 = vrot.slane %v4264, %v4277
        %v4279 = vcombine.low %v4255, %v4271
        %v4280 = vcombine.high %v4255, %v4271
        %v4281 = vcombine.low %v4262, %v4278
        %v4282 = vcombine.high %v4262, %v4278
        %v4283 = vpack.c.bf16 %v4279, %v4279
        %v4284 = vpack.c.bf16 %v4280, %v4280
        %v4285 = vpack.c.bf16 %v4281, %v4281
        %v4286 = vpack.c.bf16 %v4282, %v4282
        %v4288 = vsel %vm1517, %v3983, 0
        %v4291 = vsel %vm1517, %v4133, 0
        %4293 = vmatprep.subr.bf16.mxu0 0
        %4294 = vmatpush1.bf16.xpose.msra.mxu0 %v4291
        %4295 = vmatprep.subr.bf16.mxu0 0
        %4296 = vmatpush1.bf16.xpose.msra.mxu0 0
        %4297 = vmatprep.subr.bf16.mxu0 0
        %4298 = vmatpush1.bf16.xpose.msra.mxu0 0
        %4299 = vmatprep.subr.bf16.mxu0 0
        %4300 = vmatpush1.bf16.xpose.msra.mxu0 0
        %4301 = vmatprep.subr.bf16.mxu0 0
        %4302 = vmatpush1.bf16.xpose.msra.mxu0 0
        %4303 = vmatprep.subr.bf16.mxu0 0
        %4304 = vmatpush1.bf16.xpose.msra.mxu0 0
        %4305 = vmatprep.subr.bf16.mxu0 0
        %4306 = vmatpush1.bf16.xpose.msra.mxu0 0
        %4307 = vmatprep.subr.bf16.mxu0 0
        %4308 = vmatpush1.bf16.xpose.msra.mxu0 0
        %4309 = vmatprep.subr.bf16.mxu0 0
        %4310 = vmatpush1.bf16.xpose.msra.mxu0 0
        %4311 = vmatprep.subr.bf16.mxu0 0
        %4312 = vmatpush1.bf16.xpose.msra.mxu0 0
        %4313 = vmatprep.subr.bf16.mxu0 0
        %4314 = vmatpush1.bf16.xpose.msra.mxu0 0
        %4315 = vmatprep.subr.bf16.mxu0 0
        %4316 = vmatpush1.bf16.xpose.msra.mxu0 0
        %4317 = vmatprep.subr.bf16.mxu0 0
        %4318 = vmatpush1.bf16.xpose.msra.mxu0 0
        %4319 = vmatprep.subr.bf16.mxu0 0
        %4320 = vmatpush1.bf16.xpose.msra.mxu0 0
        %4321 = vmatprep.subr.bf16.mxu0 0
        %4322 = vmatpush1.bf16.xpose.msra.mxu0 0
        %4323 = vmatprep.subr.bf16.mxu0 0
        %4324 = vmatpush1.bf16.xpose.msra.mxu0 0
        %4325 = vmatprep.mubr.bf16.mxu0 0
        %4326 = vmatmul.mubr.bf16.gmra.mrb[0].mxu0 %v4288
        %v4327 = vpop.f32.mrb[0].mxu0
        %v4328 = vadd.f32 0.0, %v4327
        %v4329 = vpop.f32.mrb[0].mxu0
        %v4330 = vpop.f32.mrb[0].mxu0
        %v4331 = vpop.f32.mrb[0].mxu0
        %4332 = vdwg.mxu0
        %v4334 = vsel %vm1517, %v3984, 0
        %v4337 = vsel %vm1517, %v4134, 0
        %4339 = vmatprep.subr.bf16.mxu0 0
        %4340 = vmatpush1.bf16.xpose.msra.mxu0 %v4337
        %4341 = vmatprep.subr.bf16.mxu0 0
        %4342 = vmatpush1.bf16.xpose.msra.mxu0 0
        %4343 = vmatprep.subr.bf16.mxu0 0
        %4344 = vmatpush1.bf16.xpose.msra.mxu0 0
        %4345 = vmatprep.subr.bf16.mxu0 0
        %4346 = vmatpush1.bf16.xpose.msra.mxu0 0
        %4347 = vmatprep.subr.bf16.mxu0 0
        %4348 = vmatpush1.bf16.xpose.msra.mxu0 0
        %4349 = vmatprep.subr.bf16.mxu0 0
        %4350 = vmatpush1.bf16.xpose.msra.mxu0 0
        %4351 = vmatprep.subr.bf16.mxu0 0
        %4352 = vmatpush1.bf16.xpose.msra.mxu0 0
        %4353 = vmatprep.subr.bf16.mxu0 0
        %4354 = vmatpush1.bf16.xpose.msra.mxu0 0
        %4355 = vmatprep.subr.bf16.mxu0 0
        %4356 = vmatpush1.bf16.xpose.msra.mxu0 0
        %4357 = vmatprep.subr.bf16.mxu0 0
        %4358 = vmatpush1.bf16.xpose.msra.mxu0 0
        %4359 = vmatprep.subr.bf16.mxu0 0
        %4360 = vmatpush1.bf16.xpose.msra.mxu0 0
        %4361 = vmatprep.subr.bf16.mxu0 0
        %4362 = vmatpush1.bf16.xpose.msra.mxu0 0
        %4363 = vmatprep.subr.bf16.mxu0 0
        %4364 = vmatpush1.bf16.xpose.msra.mxu0 0
        %4365 = vmatprep.subr.bf16.mxu0 0
        %4366 = vmatpush1.bf16.xpose.msra.mxu0 0
        %4367 = vmatprep.subr.bf16.mxu0 0
        %4368 = vmatpush1.bf16.xpose.msra.mxu0 0
        %4369 = vmatprep.subr.bf16.mxu0 0
        %4370 = vmatpush1.bf16.xpose.msra.mxu0 0
        %4371 = vmatprep.mubr.bf16.mxu0 0
        %4372 = vmatmul.mubr.bf16.gmra.mrb[0].mxu0 %v4334
        %v4373 = vpop.f32.mrb[0].mxu0
        %v4374 = vadd.f32 0.0, %v4373
        %v4375 = vpop.f32.mrb[0].mxu0
        %v4376 = vpop.f32.mrb[0].mxu0
        %v4377 = vpop.f32.mrb[0].mxu0
        %4378 = vdwg.mxu0
        %v4380 = vsel %vm1517, %v3985, 0
        %v4383 = vsel %vm1517, %v4135, 0
        %4385 = vmatprep.subr.bf16.mxu0 0
        %4386 = vmatpush1.bf16.xpose.msra.mxu0 %v4383
        %4387 = vmatprep.subr.bf16.mxu0 0
        %4388 = vmatpush1.bf16.xpose.msra.mxu0 0
        %4389 = vmatprep.subr.bf16.mxu0 0
        %4390 = vmatpush1.bf16.xpose.msra.mxu0 0
        %4391 = vmatprep.subr.bf16.mxu0 0
        %4392 = vmatpush1.bf16.xpose.msra.mxu0 0
        %4393 = vmatprep.subr.bf16.mxu0 0
        %4394 = vmatpush1.bf16.xpose.msra.mxu0 0
        %4395 = vmatprep.subr.bf16.mxu0 0
        %4396 = vmatpush1.bf16.xpose.msra.mxu0 0
        %4397 = vmatprep.subr.bf16.mxu0 0
        %4398 = vmatpush1.bf16.xpose.msra.mxu0 0
        %4399 = vmatprep.subr.bf16.mxu0 0
        %4400 = vmatpush1.bf16.xpose.msra.mxu0 0
        %4401 = vmatprep.subr.bf16.mxu0 0
        %4402 = vmatpush1.bf16.xpose.msra.mxu0 0
        %4403 = vmatprep.subr.bf16.mxu0 0
        %4404 = vmatpush1.bf16.xpose.msra.mxu0 0
        %4405 = vmatprep.subr.bf16.mxu0 0
        %4406 = vmatpush1.bf16.xpose.msra.mxu0 0
        %4407 = vmatprep.subr.bf16.mxu0 0
        %4408 = vmatpush1.bf16.xpose.msra.mxu0 0
        %4409 = vmatprep.subr.bf16.mxu0 0
        %4410 = vmatpush1.bf16.xpose.msra.mxu0 0
        %4411 = vmatprep.subr.bf16.mxu0 0
        %4412 = vmatpush1.bf16.xpose.msra.mxu0 0
        %4413 = vmatprep.subr.bf16.mxu0 0
        %4414 = vmatpush1.bf16.xpose.msra.mxu0 0
        %4415 = vmatprep.subr.bf16.mxu0 0
        %4416 = vmatpush1.bf16.xpose.msra.mxu0 0
        %4417 = vmatprep.mubr.bf16.mxu0 0
        %4418 = vmatmul.mubr.bf16.gmra.mrb[0].mxu0 %v4380
        %v4419 = vpop.f32.mrb[0].mxu0
        %v4420 = vadd.f32 0.0, %v4419
        %v4421 = vpop.f32.mrb[0].mxu0
        %v4422 = vpop.f32.mrb[0].mxu0
        %v4423 = vpop.f32.mrb[0].mxu0
        %4424 = vdwg.mxu0
        %v4426 = vsel %vm1517, %v3986, 0
        %v4429 = vsel %vm1517, %v4136, 0
        %4431 = vmatprep.subr.bf16.mxu0 0
        %4432 = vmatpush1.bf16.xpose.msra.mxu0 %v4429
        %4433 = vmatprep.subr.bf16.mxu0 0
        %4434 = vmatpush1.bf16.xpose.msra.mxu0 0
        %4435 = vmatprep.subr.bf16.mxu0 0
        %4436 = vmatpush1.bf16.xpose.msra.mxu0 0
        %4437 = vmatprep.subr.bf16.mxu0 0
        %4438 = vmatpush1.bf16.xpose.msra.mxu0 0
        %4439 = vmatprep.subr.bf16.mxu0 0
        %4440 = vmatpush1.bf16.xpose.msra.mxu0 0
        %4441 = vmatprep.subr.bf16.mxu0 0
        %4442 = vmatpush1.bf16.xpose.msra.mxu0 0
        %4443 = vmatprep.subr.bf16.mxu0 0
        %4444 = vmatpush1.bf16.xpose.msra.mxu0 0
        %4445 = vmatprep.subr.bf16.mxu0 0
        %4446 = vmatpush1.bf16.xpose.msra.mxu0 0
        %4447 = vmatprep.subr.bf16.mxu0 0
        %4448 = vmatpush1.bf16.xpose.msra.mxu0 0
        %4449 = vmatprep.subr.bf16.mxu0 0
        %4450 = vmatpush1.bf16.xpose.msra.mxu0 0
        %4451 = vmatprep.subr.bf16.mxu0 0
        %4452 = vmatpush1.bf16.xpose.msra.mxu0 0
        %4453 = vmatprep.subr.bf16.mxu0 0
        %4454 = vmatpush1.bf16.xpose.msra.mxu0 0
        %4455 = vmatprep.subr.bf16.mxu0 0
        %4456 = vmatpush1.bf16.xpose.msra.mxu0 0
        %4457 = vmatprep.subr.bf16.mxu0 0
        %4458 = vmatpush1.bf16.xpose.msra.mxu0 0
        %4459 = vmatprep.subr.bf16.mxu0 0
        %4460 = vmatpush1.bf16.xpose.msra.mxu0 0
        %4461 = vmatprep.subr.bf16.mxu0 0
        %4462 = vmatpush1.bf16.xpose.msra.mxu0 0
        %4463 = vmatprep.mubr.bf16.mxu0 0
        %4464 = vmatmul.mubr.bf16.gmra.mrb[0].mxu0 %v4426
        %v4465 = vpop.f32.mrb[0].mxu0
        %v4466 = vadd.f32 0.0, %v4465
        %v4467 = vpop.f32.mrb[0].mxu0
        %v4468 = vpop.f32.mrb[0].mxu0
        %v4469 = vpop.f32.mrb[0].mxu0
        %4470 = vdwg.mxu0
        %v4471 = vsel %vm1706, -1e+09, %v4328
        %v4472 = vsel %vm1706, -1e+09, %v4374
        %v4473 = vsel %vm1706, -1e+09, %v4420
        %v4474 = vsel %vm1706, -1e+09, %v4466
        %v4475 = vsel %vm1517, %v4471, -inf
        %4476 = vmax.xlane.f32.xlu0 %v4475
        %v4477 = vpop.xlane.xlu0 %4476
        %v4478 = vsel %vm1517, %v4472, -inf
        %4479 = vmax.xlane.f32.xlu0 %v4478
        %v4480 = vpop.xlane.xlu0 %4479
        %v4481 = vsel %vm1517, %v4473, -inf
        %4482 = vmax.xlane.f32.xlu0 %v4481
        %v4483 = vpop.xlane.xlu0 %4482
        %v4484 = vsel %vm1517, %v4474, -inf
        %4485 = vmax.xlane.f32.xlu0 %v4484
        %v4486 = vpop.xlane.xlu0 %4485
        %v4487 = vsub.f32 %v4471, %v4477
        %v4488 = vsub.f32 %v4472, %v4480
        %v4489 = vsub.f32 %v4473, %v4483
        %v4490 = vsub.f32 %v4474, %v4486
        %v4491 = vmul.f32 %v4487, 1.442695
        %v4492 = vpow.pop %v4491
        %v4493 = vmul.f32 %v4488, 1.442695
        %v4494 = vpow.pop %v4493
        %v4495 = vmul.f32 %v4489, 1.442695
        %v4496 = vpow.pop %v4495
        %v4497 = vmul.f32 %v4490, 1.442695
        %v4498 = vpow.pop %v4497
        %v4499 = vsel %vm1517, %v4492, 0.0
        %4500 = vadd.xlane.f32.xlu0 %v4499
        %v4501 = vpop.xlane.xlu0 %4500
        %v4502 = vsel %vm1517, %v4494, 0.0
        %4503 = vadd.xlane.f32.xlu0 %v4502
        %v4504 = vpop.xlane.xlu0 %4503
        %v4505 = vsel %vm1517, %v4496, 0.0
        %4506 = vadd.xlane.f32.xlu0 %v4505
        %v4507 = vpop.xlane.xlu0 %4506
        %v4508 = vsel %vm1517, %v4498, 0.0
        %4509 = vadd.xlane.f32.xlu0 %v4508
        %v4510 = vpop.xlane.xlu0 %4509
        %v4511 = vrcp.pop %v4501
        %v4512 = vrcp.pop %v4504
        %v4513 = vrcp.pop %v4507
        %v4514 = vrcp.pop %v4510
        %v4515 = vmul.f32 %v4492, %v4511
        %v4516 = vmul.f32 %v4494, %v4512
        %v4517 = vmul.f32 %v4496, %v4513
        %v4518 = vmul.f32 %v4498, %v4514
        %v4519 = vpack.c.bf16 %v4515, %v4515
        %v4520 = vpack.c.bf16 %v4516, %v4516
        %v4521 = vpack.c.bf16 %v4517, %v4517
        %v4522 = vpack.c.bf16 %v4518, %v4518
        %v4524 = vsel %vm1517, %v4519, 0
        %v4527 = vsel %vm1762, %v4283, 0
        %4529 = vmatprep.subr.bf16.mxu0 0
        %4530 = vmatpush1.bf16.msra.mxu0 %v4527
        %4531 = vmatprep.subr.bf16.mxu0 0
        %4532 = vmatpush1.bf16.msra.mxu0 0
        %4533 = vmatprep.subr.bf16.mxu0 0
        %4534 = vmatpush1.bf16.msra.mxu0 0
        %4535 = vmatprep.subr.bf16.mxu0 0
        %4536 = vmatpush1.bf16.msra.mxu0 0
        %4537 = vmatprep.subr.bf16.mxu0 0
        %4538 = vmatpush1.bf16.msra.mxu0 0
        %4539 = vmatprep.subr.bf16.mxu0 0
        %4540 = vmatpush1.bf16.msra.mxu0 0
        %4541 = vmatprep.subr.bf16.mxu0 0
        %4542 = vmatpush1.bf16.msra.mxu0 0
        %4543 = vmatprep.subr.bf16.mxu0 0
        %4544 = vmatpush1.bf16.msra.mxu0 0
        %4545 = vmatprep.subr.bf16.mxu0 0
        %4546 = vmatpush1.bf16.msra.mxu0 0
        %4547 = vmatprep.subr.bf16.mxu0 0
        %4548 = vmatpush1.bf16.msra.mxu0 0
        %4549 = vmatprep.subr.bf16.mxu0 0
        %4550 = vmatpush1.bf16.msra.mxu0 0
        %4551 = vmatprep.subr.bf16.mxu0 0
        %4552 = vmatpush1.bf16.msra.mxu0 0
        %4553 = vmatprep.subr.bf16.mxu0 0
        %4554 = vmatpush1.bf16.msra.mxu0 0
        %4555 = vmatprep.subr.bf16.mxu0 0
        %4556 = vmatpush1.bf16.msra.mxu0 0
        %4557 = vmatprep.subr.bf16.mxu0 0
        %4558 = vmatpush1.bf16.msra.mxu0 0
        %4559 = vmatprep.subr.bf16.mxu0 0
        %4560 = vmatpush1.bf16.msra.mxu0 0
        %4561 = vmatprep.mubr.bf16.mxu0 0
        %4562 = vmatmul.mubr.bf16.gmra.mrb[0].mxu0 %v4524
        %v4563 = vpop.f32.mrb[0].mxu0
        %v4564 = vadd.f32 0.0, %v4563
        %v4565 = vpop.f32.mrb[0].mxu0
        %v4566 = vpop.f32.mrb[0].mxu0
        %v4567 = vpop.f32.mrb[0].mxu0
        %4568 = vdwg.mxu0
        %v4570 = vsel %vm1517, %v4520, 0
        %v4573 = vsel %vm1762, %v4284, 0
        %4575 = vmatprep.subr.bf16.mxu0 0
        %4576 = vmatpush1.bf16.msra.mxu0 %v4573
        %4577 = vmatprep.subr.bf16.mxu0 0
        %4578 = vmatpush1.bf16.msra.mxu0 0
        %4579 = vmatprep.subr.bf16.mxu0 0
        %4580 = vmatpush1.bf16.msra.mxu0 0
        %4581 = vmatprep.subr.bf16.mxu0 0
        %4582 = vmatpush1.bf16.msra.mxu0 0
        %4583 = vmatprep.subr.bf16.mxu0 0
        %4584 = vmatpush1.bf16.msra.mxu0 0
        %4585 = vmatprep.subr.bf16.mxu0 0
        %4586 = vmatpush1.bf16.msra.mxu0 0
        %4587 = vmatprep.subr.bf16.mxu0 0
        %4588 = vmatpush1.bf16.msra.mxu0 0
        %4589 = vmatprep.subr.bf16.mxu0 0
        %4590 = vmatpush1.bf16.msra.mxu0 0
        %4591 = vmatprep.subr.bf16.mxu0 0
        %4592 = vmatpush1.bf16.msra.mxu0 0
        %4593 = vmatprep.subr.bf16.mxu0 0
        %4594 = vmatpush1.bf16.msra.mxu0 0
        %4595 = vmatprep.subr.bf16.mxu0 0
        %4596 = vmatpush1.bf16.msra.mxu0 0
        %4597 = vmatprep.subr.bf16.mxu0 0
        %4598 = vmatpush1.bf16.msra.mxu0 0
        %4599 = vmatprep.subr.bf16.mxu0 0
        %4600 = vmatpush1.bf16.msra.mxu0 0
        %4601 = vmatprep.subr.bf16.mxu0 0
        %4602 = vmatpush1.bf16.msra.mxu0 0
        %4603 = vmatprep.subr.bf16.mxu0 0
        %4604 = vmatpush1.bf16.msra.mxu0 0
        %4605 = vmatprep.subr.bf16.mxu0 0
        %4606 = vmatpush1.bf16.msra.mxu0 0
        %4607 = vmatprep.mubr.bf16.mxu0 0
        %4608 = vmatmul.mubr.bf16.gmra.mrb[0].mxu0 %v4570
        %v4609 = vpop.f32.mrb[0].mxu0
        %v4610 = vadd.f32 0.0, %v4609
        %v4611 = vpop.f32.mrb[0].mxu0
        %v4612 = vpop.f32.mrb[0].mxu0
        %v4613 = vpop.f32.mrb[0].mxu0
        %4614 = vdwg.mxu0
        %v4616 = vsel %vm1517, %v4521, 0
        %v4619 = vsel %vm1762, %v4285, 0
        %4621 = vmatprep.subr.bf16.mxu0 0
        %4622 = vmatpush1.bf16.msra.mxu0 %v4619
        %4623 = vmatprep.subr.bf16.mxu0 0
        %4624 = vmatpush1.bf16.msra.mxu0 0
        %4625 = vmatprep.subr.bf16.mxu0 0
        %4626 = vmatpush1.bf16.msra.mxu0 0
        %4627 = vmatprep.subr.bf16.mxu0 0
        %4628 = vmatpush1.bf16.msra.mxu0 0
        %4629 = vmatprep.subr.bf16.mxu0 0
        %4630 = vmatpush1.bf16.msra.mxu0 0
        %4631 = vmatprep.subr.bf16.mxu0 0
        %4632 = vmatpush1.bf16.msra.mxu0 0
        %4633 = vmatprep.subr.bf16.mxu0 0
        %4634 = vmatpush1.bf16.msra.mxu0 0
        %4635 = vmatprep.subr.bf16.mxu0 0
        %4636 = vmatpush1.bf16.msra.mxu0 0
        %4637 = vmatprep.subr.bf16.mxu0 0
        %4638 = vmatpush1.bf16.msra.mxu0 0
        %4639 = vmatprep.subr.bf16.mxu0 0
        %4640 = vmatpush1.bf16.msra.mxu0 0
        %4641 = vmatprep.subr.bf16.mxu0 0
        %4642 = vmatpush1.bf16.msra.mxu0 0
        %4643 = vmatprep.subr.bf16.mxu0 0
        %4644 = vmatpush1.bf16.msra.mxu0 0
        %4645 = vmatprep.subr.bf16.mxu0 0
        %4646 = vmatpush1.bf16.msra.mxu0 0
        %4647 = vmatprep.subr.bf16.mxu0 0
        %4648 = vmatpush1.bf16.msra.mxu0 0
        %4649 = vmatprep.subr.bf16.mxu0 0
        %4650 = vmatpush1.bf16.msra.mxu0 0
        %4651 = vmatprep.subr.bf16.mxu0 0
        %4652 = vmatpush1.bf16.msra.mxu0 0
        %4653 = vmatprep.mubr.bf16.mxu0 0
        %4654 = vmatmul.mubr.bf16.gmra.mrb[0].mxu0 %v4616
        %v4655 = vpop.f32.mrb[0].mxu0
        %v4656 = vadd.f32 0.0, %v4655
        %v4657 = vpop.f32.mrb[0].mxu0
        %v4658 = vpop.f32.mrb[0].mxu0
        %v4659 = vpop.f32.mrb[0].mxu0
        %4660 = vdwg.mxu0
        %v4662 = vsel %vm1517, %v4522, 0
        %v4665 = vsel %vm1762, %v4286, 0
        %4667 = vmatprep.subr.bf16.mxu0 0
        %4668 = vmatpush1.bf16.msra.mxu0 %v4665
        %4669 = vmatprep.subr.bf16.mxu0 0
        %4670 = vmatpush1.bf16.msra.mxu0 0
        %4671 = vmatprep.subr.bf16.mxu0 0
        %4672 = vmatpush1.bf16.msra.mxu0 0
        %4673 = vmatprep.subr.bf16.mxu0 0
        %4674 = vmatpush1.bf16.msra.mxu0 0
        %4675 = vmatprep.subr.bf16.mxu0 0
        %4676 = vmatpush1.bf16.msra.mxu0 0
        %4677 = vmatprep.subr.bf16.mxu0 0
        %4678 = vmatpush1.bf16.msra.mxu0 0
        %4679 = vmatprep.subr.bf16.mxu0 0
        %4680 = vmatpush1.bf16.msra.mxu0 0
        %4681 = vmatprep.subr.bf16.mxu0 0
        %4682 = vmatpush1.bf16.msra.mxu0 0
        %4683 = vmatprep.subr.bf16.mxu0 0
        %4684 = vmatpush1.bf16.msra.mxu0 0
        %4685 = vmatprep.subr.bf16.mxu0 0
        %4686 = vmatpush1.bf16.msra.mxu0 0
        %4687 = vmatprep.subr.bf16.mxu0 0
        %4688 = vmatpush1.bf16.msra.mxu0 0
        %4689 = vmatprep.subr.bf16.mxu0 0
        %4690 = vmatpush1.bf16.msra.mxu0 0
        %4691 = vmatprep.subr.bf16.mxu0 0
        %4692 = vmatpush1.bf16.msra.mxu0 0
        %4693 = vmatprep.subr.bf16.mxu0 0
        %4694 = vmatpush1.bf16.msra.mxu0 0
        %4695 = vmatprep.subr.bf16.mxu0 0
        %4696 = vmatpush1.bf16.msra.mxu0 0
        %4697 = vmatprep.subr.bf16.mxu0 0
        %4698 = vmatpush1.bf16.msra.mxu0 0
        %4699 = vmatprep.mubr.bf16.mxu0 0
        %4700 = vmatmul.mubr.bf16.gmra.mrb[0].mxu0 %v4662
        %v4701 = vpop.f32.mrb[0].mxu0
        %v4702 = vadd.f32 0.0, %v4701
        %v4703 = vpop.f32.mrb[0].mxu0
        %v4704 = vpop.f32.mrb[0].mxu0
        %v4705 = vpop.f32.mrb[0].mxu0
        %4706 = vdwg.mxu0
        %v4707 = vcombine.low %v4564, %v4656
        %v4708 = vcombine.high %v4564, %v4656
        %v4710 = vunpack.c.l.s4 1983009808
        %v4711 = vunpack.c.0.s8 %v4710
        %v4712 = vlaneseq
        %v4713 = vshrl.u32 %v4712, 7
        %v4714 = vsub.s32 %v4711, %v4713
        %v4715 = vrot.slane %v4707, %v4714
        %v4717 = vunpack.c.l.s4 1983009808
        %v4718 = vunpack.c.0.s8 %v4717
        %v4719 = vlaneseq
        %v4720 = vshrl.u32 %v4719, 7
        %v4721 = vsub.s32 %v4718, %v4720
        %v4722 = vrot.slane %v4708, %v4721
        %v4723 = vcombine.low %v4610, %v4702
        %v4724 = vcombine.high %v4610, %v4702
        %v4726 = vunpack.c.l.s4 1983009808
        %v4727 = vunpack.c.0.s8 %v4726
        %v4728 = vlaneseq
        %v4729 = vshrl.u32 %v4728, 7
        %v4730 = vsub.s32 %v4727, %v4729
        %v4731 = vrot.slane %v4723, %v4730
        %v4733 = vunpack.c.l.s4 1983009808
        %v4734 = vunpack.c.0.s8 %v4733
        %v4735 = vlaneseq
        %v4736 = vshrl.u32 %v4735, 7
        %v4737 = vsub.s32 %v4734, %v4736
        %v4738 = vrot.slane %v4724, %v4737
        %v4739 = vcombine.low %v4715, %v4731
        %v4740 = vcombine.high %v4715, %v4731
        %v4742 = vunpack.c.l.s4 1934713408
        %v4743 = vunpack.c.0.s8 %v4742
        %v4744 = vlaneseq
        %v4745 = vshrl.u32 %v4744, 7
        %v4746 = vsub.s32 %v4743, %v4745
        %v4747 = vrot.slane %v4739, %v4746
        %v4749 = vunpack.c.l.s4 1934713408
        %v4750 = vunpack.c.0.s8 %v4749
        %v4751 = vlaneseq
        %v4752 = vshrl.u32 %v4751, 7
        %v4753 = vsub.s32 %v4750, %v4752
        %v4754 = vrot.slane %v4740, %v4753
        %v4755 = vcombine.low %v4722, %v4738
        %v4756 = vcombine.high %v4722, %v4738
        %v4758 = vunpack.c.l.s4 1934713408
        %v4759 = vunpack.c.0.s8 %v4758
        %v4760 = vlaneseq
        %v4761 = vshrl.u32 %v4760, 7
        %v4762 = vsub.s32 %v4759, %v4761
        %v4763 = vrot.slane %v4755, %v4762
        %v4765 = vunpack.c.l.s4 1934713408
        %v4766 = vunpack.c.0.s8 %v4765
        %v4767 = vlaneseq
        %v4768 = vshrl.u32 %v4767, 7
        %v4769 = vsub.s32 %v4766, %v4768
        %v4770 = vrot.slane %v4756, %v4769
        %v4771 = vcombine.high %v4747, 0.0
        %v4772 = vcombine.high %v4754, 0.0
        %v4773 = vcombine.high %v4763, 0.0
        %v4774 = vcombine.high %v4770, 0.0
        %v4775 = vcombine.low %v4747, %v4754
        %v4777 = vunpack.c.l.s4 1983009808
        %v4778 = vunpack.c.0.s8 %v4777
        %v4779 = vlaneseq
        %v4780 = vshrl.u32 %v4779, 7
        %v4781 = vsub.s32 %v4778, %v4780
        %v4782 = vrot.slane %v4775, %v4781
        %v4783 = vcombine.low %v4771, %v4772
        %v4785 = vunpack.c.l.s4 1983009808
        %v4786 = vunpack.c.0.s8 %v4785
        %v4787 = vlaneseq
        %v4788 = vshrl.u32 %v4787, 7
        %v4789 = vsub.s32 %v4786, %v4788
        %v4790 = vrot.slane %v4783, %v4789
        %v4791 = vcombine.low %v4763, %v4770
        %v4793 = vunpack.c.l.s4 1983009808
        %v4794 = vunpack.c.0.s8 %v4793
        %v4795 = vlaneseq
        %v4796 = vshrl.u32 %v4795, 7
        %v4797 = vsub.s32 %v4794, %v4796
        %v4798 = vrot.slane %v4791, %v4797
        %v4799 = vcombine.low %v4773, %v4774
        %v4801 = vunpack.c.l.s4 1983009808
        %v4802 = vunpack.c.0.s8 %v4801
        %v4803 = vlaneseq
        %v4804 = vshrl.u32 %v4803, 7
        %v4805 = vsub.s32 %v4802, %v4804
        %v4806 = vrot.slane %v4799, %v4805
        %v4807 = vcombine.low %v4782, %v4790
        %v4808 = vcombine.high %v4782, %v4790
        %v4810 = vunpack.c.l.s4 1934713408
        %v4811 = vunpack.c.0.s8 %v4810
        %v4812 = vlaneseq
        %v4813 = vshrl.u32 %v4812, 7
        %v4814 = vsub.s32 %v4811, %v4813
        %v4815 = vrot.slane %v4807, %v4814
        %v4817 = vunpack.c.l.s4 1934713408
        %v4818 = vunpack.c.0.s8 %v4817
        %v4819 = vlaneseq
        %v4820 = vshrl.u32 %v4819, 7
        %v4821 = vsub.s32 %v4818, %v4820
        %v4822 = vrot.slane %v4808, %v4821
        %v4823 = vcombine.low %v4798, %v4806
        %v4824 = vcombine.high %v4798, %v4806
        %v4826 = vunpack.c.l.s4 1934713408
        %v4827 = vunpack.c.0.s8 %v4826
        %v4828 = vlaneseq
        %v4829 = vshrl.u32 %v4828, 7
        %v4830 = vsub.s32 %v4827, %v4829
        %v4831 = vrot.slane %v4823, %v4830
        %v4833 = vunpack.c.l.s4 1934713408
        %v4834 = vunpack.c.0.s8 %v4833
        %v4835 = vlaneseq
        %v4836 = vshrl.u32 %v4835, 7
        %v4837 = vsub.s32 %v4834, %v4836
        %v4838 = vrot.slane %v4824, %v4837
        %v4839 = vcombine.low %v4815, %v4831
        %v4840 = vcombine.high %v4815, %v4831
        %v4841 = vcombine.low %v4822, %v4838
        %v4842 = vcombine.high %v4822, %v4838
        %4844 = vrot.lane.b32.xlu0 %v4840, 8
        %v4845 = vpop.permute.xlu0 %4844
        %4848 = vrot.lane.b32.xlu0 %v4841, 16
        %v4849 = vpop.permute.xlu0 %4848
        %4852 = vrot.lane.b32.xlu0 %v4842, 24
        %v4853 = vpop.permute.xlu0 %4852
        %v4855 = vsel %vm1517, %v4839, %v4845
        %v4856 = vsel %vm2093, %v4855, %v4849
        %v4857 = vsel %vm2095, %v4856, %v4853
        %v4858 = vpack.c.bf16 %v4857, %v4857
        %v4863 = vunpack.c.l.b16 %v3674
        %v4864 = vunpack.c.l.b16 %v3675
        %v4865 = vunpack.c.l.b16 %v3676
        %v4866 = vunpack.c.l.b16 %v3677
        %v4867 = vpack.c.b16 %v4864, %v4863
        %v4868 = vpack.c.b16 %v4866, %v4865
        %v4872 = vsel %vm919, %v4858, 0
        %4874 = vmatprep.subr.bf16.mxu0 0
        %4875 = vmatpush1.bf16.msra.mxu0 %v4867
        %4876 = vmatprep.subr.bf16.mxu0 0
        %4877 = vmatpush1.bf16.msra.mxu0 %v4868
        %4878 = vmatprep.subr.bf16.mxu0 0
        %4879 = vmatpush1.bf16.msra.mxu0 0
        %4880 = vmatprep.subr.bf16.mxu0 0
        %4881 = vmatpush1.bf16.msra.mxu0 0
        %4882 = vmatprep.subr.bf16.mxu0 0
        %4883 = vmatpush1.bf16.msra.mxu0 0
        %4884 = vmatprep.subr.bf16.mxu0 0
        %4885 = vmatpush1.bf16.msra.mxu0 0
        %4886 = vmatprep.subr.bf16.mxu0 0
        %4887 = vmatpush1.bf16.msra.mxu0 0
        %4888 = vmatprep.subr.bf16.mxu0 0
        %4889 = vmatpush1.bf16.msra.mxu0 0
        %4890 = vmatprep.subr.bf16.mxu0 0
        %4891 = vmatpush1.bf16.msra.mxu0 0
        %4892 = vmatprep.subr.bf16.mxu0 0
        %4893 = vmatpush1.bf16.msra.mxu0 0
        %4894 = vmatprep.subr.bf16.mxu0 0
        %4895 = vmatpush1.bf16.msra.mxu0 0
        %4896 = vmatprep.subr.bf16.mxu0 0
        %4897 = vmatpush1.bf16.msra.mxu0 0
        %4898 = vmatprep.subr.bf16.mxu0 0
        %4899 = vmatpush1.bf16.msra.mxu0 0
        %4900 = vmatprep.subr.bf16.mxu0 0
        %4901 = vmatpush1.bf16.msra.mxu0 0
        %4902 = vmatprep.subr.bf16.mxu0 0
        %4903 = vmatpush1.bf16.msra.mxu0 0
        %4904 = vmatprep.subr.bf16.mxu0 0
        %4905 = vmatpush1.bf16.msra.mxu0 0
        %4906 = vmatprep.mubr.bf16.mxu0 0
        %4907 = vmatmul.mubr.bf16.gmra.mrb[0].mxu0 %v4872
        %v4908 = vpop.f32.mrb[0].mxu0
        %v4909 = vadd.f32 0.0, %v4908
        %v4910 = vpop.f32.mrb[0].mxu0
        %v4911 = vpop.f32.mrb[0].mxu0
        %v4912 = vpop.f32.mrb[0].mxu0
        %4913 = vdwg.mxu0
        %v4914 = vadd.f32 %v3656, %v4909
        %s4915 = scalar_lea.vmem %s16, 1
        %v4916 = vld [vmem:[%s4915] sm:$0x1]
        %s4917 = scalar_lea.vmem %s17, 1
        %v4918 = vld [vmem:[%s4917] sm:$0x1]
        %v4919 = vsel %vm919, %v4914, 0.0
        %4920 = vadd.xlane.f32.xlu0 %v4919
        %v4921 = vpop.xlane.xlu0 %4920
        %v4922 = vmul.f32 %v4921, %v2159
        %v4923 = vsub.f32 %v4914, %v4922
        %v4924 = vmul.f32 %v4923, %v4923
        %v4925 = vsel %vm919, %v4924, 0.0
        %4926 = vadd.xlane.f32.xlu0 %v4925
        %v4927 = vpop.xlane.xlu0 %4926
        %v4928 = vmul.f32 %v4927, %v2159
        %v4929 = vadd.f32 %v4928, 1e-05
        %v4930 = vrsqrt.pop %v4929
        %v4931 = vmul.f32 %v4923, %v4930
        %v4933 = vlaneseq
        %v4934 = vshrl.u32 %v4933, 7
        %v4935 = vsub.s32 0, %v4934
        %v4936 = vrot.slane %v4916, %v4935
        %v4938 = vmul.f32 %v4931, %v4936
        %v4940 = vlaneseq
        %v4941 = vshrl.u32 %v4940, 7
        %v4942 = vsub.s32 0, %v4941
        %v4943 = vrot.slane %v4918, %v4942
        %v4945 = vadd.f32 %v4938, %v4943
        %v4946 = vpack.c.bf16 %v4945, %v4945
        %s4947 = scalar_lea.vmem %s8, 16
        %v4948 = vld [vmem:[%s4947] sm:$0xf]
        %v4949 = vld [vmem:[%s4947 + $0x4] sm:$0xf]
        %v4950 = vld [vmem:[%s4947 + $0x8] sm:$0xf]
        %v4951 = vld [vmem:[%s4947 + $0xc] sm:$0xf]
        %s4952 = scalar_lea.vmem [#allocation7], 16
        %v4953 = vld [vmem:[%s4952] sm:$0xf]
        %v4954 = vld [vmem:[%s4952 + $0x4] sm:$0xf]
        %v4955 = vld [vmem:[%s4952 + $0x8] sm:$0xf]
        %v4956 = vld [vmem:[%s4952 + $0xc] sm:$0xf]
        %s4957 = scalar_lea.vmem [#allocation8], 16
        %v4958 = vld [vmem:[%s4957] sm:$0xf]
        %v4959 = vld [vmem:[%s4957 + $0x4] sm:$0xf]
        %v4960 = vld [vmem:[%s4957 + $0x8] sm:$0xf]
        %v4961 = vld [vmem:[%s4957 + $0xc] sm:$0xf]
        %s4962 = scalar_lea.vmem [#allocation10], 16
        %v4963 = vld [vmem:[%s4962] sm:$0xf]
        %v4964 = vld [vmem:[%s4962 + $0x4] sm:$0xf]
        %v4965 = vld [vmem:[%s4962 + $0x8] sm:$0xf]
        %v4966 = vld [vmem:[%s4962 + $0xc] sm:$0xf]
        %v4971 = vunpack.c.l.b16 %v4948
        %v4972 = vunpack.c.l.b16 %v4949
        %v4973 = vunpack.c.l.b16 %v4950
        %v4974 = vunpack.c.l.b16 %v4951
        %v4975 = vpack.c.b16 %v4972, %v4971
        %v4976 = vpack.c.b16 %v4974, %v4973
        %v4980 = vsel %vm919, %v4946, 0
        %4982 = vmatprep.subr.bf16.mxu0 0
        %4983 = vmatpush1.bf16.msra.mxu0 %v4975
        %4984 = vmatprep.subr.bf16.mxu0 0
        %4985 = vmatpush1.bf16.msra.mxu0 %v4976
        %4986 = vmatprep.subr.bf16.mxu0 0
        %4987 = vmatpush1.bf16.msra.mxu0 0
        %4988 = vmatprep.subr.bf16.mxu0 0
        %4989 = vmatpush1.bf16.msra.mxu0 0
        %4990 = vmatprep.subr.bf16.mxu0 0
        %4991 = vmatpush1.bf16.msra.mxu0 0
        %4992 = vmatprep.subr.bf16.mxu0 0
        %4993 = vmatpush1.bf16.msra.mxu0 0
        %4994 = vmatprep.subr.bf16.mxu0 0
        %4995 = vmatpush1.bf16.msra.mxu0 0
        %4996 = vmatprep.subr.bf16.mxu0 0
        %4997 = vmatpush1.bf16.msra.mxu0 0
        %4998 = vmatprep.subr.bf16.mxu0 0
        %4999 = vmatpush1.bf16.msra.mxu0 0
        %5000 = vmatprep.subr.bf16.mxu0 0
        %5001 = vmatpush1.bf16.msra.mxu0 0
        %5002 = vmatprep.subr.bf16.mxu0 0
        %5003 = vmatpush1.bf16.msra.mxu0 0
        %5004 = vmatprep.subr.bf16.mxu0 0
        %5005 = vmatpush1.bf16.msra.mxu0 0
        %5006 = vmatprep.subr.bf16.mxu0 0
        %5007 = vmatpush1.bf16.msra.mxu0 0
        %5008 = vmatprep.subr.bf16.mxu0 0
        %5009 = vmatpush1.bf16.msra.mxu0 0
        %5010 = vmatprep.subr.bf16.mxu0 0
        %5011 = vmatpush1.bf16.msra.mxu0 0
        %5012 = vmatprep.subr.bf16.mxu0 0
        %5013 = vmatpush1.bf16.msra.mxu0 0
        %5014 = vmatprep.mubr.bf16.mxu0 0
        %5015 = vmatmul.mubr.bf16.gmra.mrb[0].mxu0 %v4980
        %v5016 = vpop.f32.mrb[0].mxu0
        %v5017 = vadd.f32 0.0, %v5016
        %v5018 = vpop.f32.mrb[0].mxu0
        %v5019 = vpop.f32.mrb[0].mxu0
        %v5020 = vpop.f32.mrb[0].mxu0
        %5021 = vdwg.mxu0
        %v5026 = vunpack.c.l.b16 %v4953
        %v5027 = vunpack.c.l.b16 %v4954
        %v5028 = vunpack.c.l.b16 %v4955
        %v5029 = vunpack.c.l.b16 %v4956
        %v5030 = vpack.c.b16 %v5027, %v5026
        %v5031 = vpack.c.b16 %v5029, %v5028
        %5034 = vmatprep.subr.bf16.mxu0 0
        %5035 = vmatpush1.bf16.msra.mxu0 %v5030
        %5036 = vmatprep.subr.bf16.mxu0 0
        %5037 = vmatpush1.bf16.msra.mxu0 %v5031
        %5038 = vmatprep.subr.bf16.mxu0 0
        %5039 = vmatpush1.bf16.msra.mxu0 0
        %5040 = vmatprep.subr.bf16.mxu0 0
        %5041 = vmatpush1.bf16.msra.mxu0 0
        %5042 = vmatprep.subr.bf16.mxu0 0
        %5043 = vmatpush1.bf16.msra.mxu0 0
        %5044 = vmatprep.subr.bf16.mxu0 0
        %5045 = vmatpush1.bf16.msra.mxu0 0
        %5046 = vmatprep.subr.bf16.mxu0 0
        %5047 = vmatpush1.bf16.msra.mxu0 0
        %5048 = vmatprep.subr.bf16.mxu0 0
        %5049 = vmatpush1.bf16.msra.mxu0 0
        %5050 = vmatprep.subr.bf16.mxu0 0
        %5051 = vmatpush1.bf16.msra.mxu0 0
        %5052 = vmatprep.subr.bf16.mxu0 0
        %5053 = vmatpush1.bf16.msra.mxu0 0
        %5054 = vmatprep.subr.bf16.mxu0 0
        %5055 = vmatpush1.bf16.msra.mxu0 0
        %5056 = vmatprep.subr.bf16.mxu0 0
        %5057 = vmatpush1.bf16.msra.mxu0 0
        %5058 = vmatprep.subr.bf16.mxu0 0
        %5059 = vmatpush1.bf16.msra.mxu0 0
        %5060 = vmatprep.subr.bf16.mxu0 0
        %5061 = vmatpush1.bf16.msra.mxu0 0
        %5062 = vmatprep.subr.bf16.mxu0 0
        %5063 = vmatpush1.bf16.msra.mxu0 0
        %5064 = vmatprep.subr.bf16.mxu0 0
        %5065 = vmatpush1.bf16.msra.mxu0 0
        %5066 = vmatprep.mubr.bf16.mxu0 0
        %5067 = vmatmul.mubr.bf16.gmra.mrb[0].mxu0 %v2269
        %v5068 = vpop.f32.mrb[0].mxu0
        %v5069 = vadd.f32 0.0, %v5068
        %v5070 = vpop.f32.mrb[0].mxu0
        %v5071 = vpop.f32.mrb[0].mxu0
        %v5072 = vpop.f32.mrb[0].mxu0
        %5073 = vdwg.mxu0
        %v5078 = vunpack.c.l.b16 %v4958
        %v5079 = vunpack.c.l.b16 %v4959
        %v5080 = vunpack.c.l.b16 %v4960
        %v5081 = vunpack.c.l.b16 %v4961
        %v5082 = vpack.c.b16 %v5079, %v5078
        %v5083 = vpack.c.b16 %v5081, %v5080
        %5086 = vmatprep.subr.bf16.mxu0 0
        %5087 = vmatpush1.bf16.msra.mxu0 %v5082
        %5088 = vmatprep.subr.bf16.mxu0 0
        %5089 = vmatpush1.bf16.msra.mxu0 %v5083
        %5090 = vmatprep.subr.bf16.mxu0 0
        %5091 = vmatpush1.bf16.msra.mxu0 0
        %5092 = vmatprep.subr.bf16.mxu0 0
        %5093 = vmatpush1.bf16.msra.mxu0 0
        %5094 = vmatprep.subr.bf16.mxu0 0
        %5095 = vmatpush1.bf16.msra.mxu0 0
        %5096 = vmatprep.subr.bf16.mxu0 0
        %5097 = vmatpush1.bf16.msra.mxu0 0
        %5098 = vmatprep.subr.bf16.mxu0 0
        %5099 = vmatpush1.bf16.msra.mxu0 0
        %5100 = vmatprep.subr.bf16.mxu0 0
        %5101 = vmatpush1.bf16.msra.mxu0 0
        %5102 = vmatprep.subr.bf16.mxu0 0
        %5103 = vmatpush1.bf16.msra.mxu0 0
        %5104 = vmatprep.subr.bf16.mxu0 0
        %5105 = vmatpush1.bf16.msra.mxu0 0
        %5106 = vmatprep.subr.bf16.mxu0 0
        %5107 = vmatpush1.bf16.msra.mxu0 0
        %5108 = vmatprep.subr.bf16.mxu0 0
        %5109 = vmatpush1.bf16.msra.mxu0 0
        %5110 = vmatprep.subr.bf16.mxu0 0
        %5111 = vmatpush1.bf16.msra.mxu0 0
        %5112 = vmatprep.subr.bf16.mxu0 0
        %5113 = vmatpush1.bf16.msra.mxu0 0
        %5114 = vmatprep.subr.bf16.mxu0 0
        %5115 = vmatpush1.bf16.msra.mxu0 0
        %5116 = vmatprep.subr.bf16.mxu0 0
        %5117 = vmatpush1.bf16.msra.mxu0 0
        %5118 = vmatprep.mubr.bf16.mxu0 0
        %5119 = vmatmul.mubr.bf16.gmra.mrb[0].mxu0 %v2269
        %v5120 = vpop.f32.mrb[0].mxu0
        %v5121 = vadd.f32 0.0, %v5120
        %v5122 = vpop.f32.mrb[0].mxu0
        %v5123 = vpop.f32.mrb[0].mxu0
        %v5124 = vpop.f32.mrb[0].mxu0
        %5125 = vdwg.mxu0
        %5127 = vrot.lane.b32.xlu0 %v5017, 120
        %v5128 = vpop.permute.xlu0 %5127
        %5130 = vrot.lane.b32.xlu0 %v5017, 112
        %v5131 = vpop.permute.xlu0 %5130
        %5133 = vrot.lane.b32.xlu0 %v5017, 104
        %v5134 = vpop.permute.xlu0 %5133
        %v5136 = vcombine.low %v5017, %v5131
        %v5137 = vcombine.high %v5017, %v5131
        %v5139 = vunpack.c.l.s4 1983009808
        %v5140 = vunpack.c.0.s8 %v5139
        %v5141 = vlaneseq
        %v5142 = vshrl.u32 %v5141, 7
        %v5143 = vsub.s32 %v5140, %v5142
        %v5144 = vrot.slane %v5136, %v5143
        %v5146 = vunpack.c.l.s4 1983009808
        %v5147 = vunpack.c.0.s8 %v5146
        %v5148 = vlaneseq
        %v5149 = vshrl.u32 %v5148, 7
        %v5150 = vsub.s32 %v5147, %v5149
        %v5151 = vrot.slane %v5137, %v5150
        %v5152 = vcombine.low %v5128, %v5134
        %v5153 = vcombine.high %v5128, %v5134
        %v5155 = vunpack.c.l.s4 1983009808
        %v5156 = vunpack.c.0.s8 %v5155
        %v5157 = vlaneseq
        %v5158 = vshrl.u32 %v5157, 7
        %v5159 = vsub.s32 %v5156, %v5158
        %v5160 = vrot.slane %v5152, %v5159
        %v5162 = vunpack.c.l.s4 1983009808
        %v5163 = vunpack.c.0.s8 %v5162
        %v5164 = vlaneseq
        %v5165 = vshrl.u32 %v5164, 7
        %v5166 = vsub.s32 %v5163, %v5165
        %v5167 = vrot.slane %v5153, %v5166
        %v5168 = vcombine.low %v5144, %v5160
        %v5169 = vcombine.high %v5144, %v5160
        %v5171 = vunpack.c.l.s4 1934713408
        %v5172 = vunpack.c.0.s8 %v5171
        %v5173 = vlaneseq
        %v5174 = vshrl.u32 %v5173, 7
        %v5175 = vsub.s32 %v5172, %v5174
        %v5176 = vrot.slane %v5168, %v5175
        %v5178 = vunpack.c.l.s4 1934713408
        %v5179 = vunpack.c.0.s8 %v5178
        %v5180 = vlaneseq
        %v5181 = vshrl.u32 %v5180, 7
        %v5182 = vsub.s32 %v5179, %v5181
        %v5183 = vrot.slane %v5169, %v5182
        %v5184 = vcombine.low %v5151, %v5167
        %v5185 = vcombine.high %v5151, %v5167
        %v5187 = vunpack.c.l.s4 1934713408
        %v5188 = vunpack.c.0.s8 %v5187
        %v5189 = vlaneseq
        %v5190 = vshrl.u32 %v5189, 7
        %v5191 = vsub.s32 %v5188, %v5190
        %v5192 = vrot.slane %v5184, %v5191
        %v5194 = vunpack.c.l.s4 1934713408
        %v5195 = vunpack.c.0.s8 %v5194
        %v5196 = vlaneseq
        %v5197 = vshrl.u32 %v5196, 7
        %v5198 = vsub.s32 %v5195, %v5197
        %v5199 = vrot.slane %v5185, %v5198
        %v5200 = vcombine.high %v5176, 0.0
        %v5201 = vcombine.high %v5183, 0.0
        %v5202 = vcombine.high %v5192, 0.0
        %v5203 = vcombine.high %v5199, 0.0
        %v5204 = vcombine.low %v5176, %v5183
        %v5206 = vunpack.c.l.s4 1983009808
        %v5207 = vunpack.c.0.s8 %v5206
        %v5208 = vlaneseq
        %v5209 = vshrl.u32 %v5208, 7
        %v5210 = vsub.s32 %v5207, %v5209
        %v5211 = vrot.slane %v5204, %v5210
        %v5212 = vcombine.low %v5200, %v5201
        %v5214 = vunpack.c.l.s4 1983009808
        %v5215 = vunpack.c.0.s8 %v5214
        %v5216 = vlaneseq
        %v5217 = vshrl.u32 %v5216, 7
        %v5218 = vsub.s32 %v5215, %v5217
        %v5219 = vrot.slane %v5212, %v5218
        %v5220 = vcombine.low %v5192, %v5199
        %v5222 = vunpack.c.l.s4 1983009808
        %v5223 = vunpack.c.0.s8 %v5222
        %v5224 = vlaneseq
        %v5225 = vshrl.u32 %v5224, 7
        %v5226 = vsub.s32 %v5223, %v5225
        %v5227 = vrot.slane %v5220, %v5226
        %v5228 = vcombine.low %v5202, %v5203
        %v5230 = vunpack.c.l.s4 1983009808
        %v5231 = vunpack.c.0.s8 %v5230
        %v5232 = vlaneseq
        %v5233 = vshrl.u32 %v5232, 7
        %v5234 = vsub.s32 %v5231, %v5233
        %v5235 = vrot.slane %v5228, %v5234
        %v5236 = vcombine.low %v5211, %v5219
        %v5237 = vcombine.high %v5211, %v5219
        %v5239 = vunpack.c.l.s4 1934713408
        %v5240 = vunpack.c.0.s8 %v5239
        %v5241 = vlaneseq
        %v5242 = vshrl.u32 %v5241, 7
        %v5243 = vsub.s32 %v5240, %v5242
        %v5244 = vrot.slane %v5236, %v5243
        %v5246 = vunpack.c.l.s4 1934713408
        %v5247 = vunpack.c.0.s8 %v5246
        %v5248 = vlaneseq
        %v5249 = vshrl.u32 %v5248, 7
        %v5250 = vsub.s32 %v5247, %v5249
        %v5251 = vrot.slane %v5237, %v5250
        %v5252 = vcombine.low %v5227, %v5235
        %v5253 = vcombine.high %v5227, %v5235
        %v5255 = vunpack.c.l.s4 1934713408
        %v5256 = vunpack.c.0.s8 %v5255
        %v5257 = vlaneseq
        %v5258 = vshrl.u32 %v5257, 7
        %v5259 = vsub.s32 %v5256, %v5258
        %v5260 = vrot.slane %v5252, %v5259
        %v5262 = vunpack.c.l.s4 1934713408
        %v5263 = vunpack.c.0.s8 %v5262
        %v5264 = vlaneseq
        %v5265 = vshrl.u32 %v5264, 7
        %v5266 = vsub.s32 %v5263, %v5265
        %v5267 = vrot.slane %v5253, %v5266
        %v5268 = vcombine.low %v5244, %v5260
        %v5269 = vcombine.high %v5244, %v5260
        %v5270 = vcombine.low %v5251, %v5267
        %v5271 = vcombine.high %v5251, %v5267
        %v5272 = vpack.c.bf16 %v5268, %v5268
        %v5273 = vpack.c.bf16 %v5269, %v5269
        %v5274 = vpack.c.bf16 %v5270, %v5270
        %v5275 = vpack.c.bf16 %v5271, %v5271
        %5277 = vrot.lane.b32.xlu0 %v5069, 120
        %v5278 = vpop.permute.xlu0 %5277
        %5280 = vrot.lane.b32.xlu0 %v5069, 112
        %v5281 = vpop.permute.xlu0 %5280
        %5283 = vrot.lane.b32.xlu0 %v5069, 104
        %v5284 = vpop.permute.xlu0 %5283
        %v5286 = vcombine.low %v5069, %v5281
        %v5287 = vcombine.high %v5069, %v5281
        %v5289 = vunpack.c.l.s4 1983009808
        %v5290 = vunpack.c.0.s8 %v5289
        %v5291 = vlaneseq
        %v5292 = vshrl.u32 %v5291, 7
        %v5293 = vsub.s32 %v5290, %v5292
        %v5294 = vrot.slane %v5286, %v5293
        %v5296 = vunpack.c.l.s4 1983009808
        %v5297 = vunpack.c.0.s8 %v5296
        %v5298 = vlaneseq
        %v5299 = vshrl.u32 %v5298, 7
        %v5300 = vsub.s32 %v5297, %v5299
        %v5301 = vrot.slane %v5287, %v5300
        %v5302 = vcombine.low %v5278, %v5284
        %v5303 = vcombine.high %v5278, %v5284
        %v5305 = vunpack.c.l.s4 1983009808
        %v5306 = vunpack.c.0.s8 %v5305
        %v5307 = vlaneseq
        %v5308 = vshrl.u32 %v5307, 7
        %v5309 = vsub.s32 %v5306, %v5308
        %v5310 = vrot.slane %v5302, %v5309
        %v5312 = vunpack.c.l.s4 1983009808
        %v5313 = vunpack.c.0.s8 %v5312
        %v5314 = vlaneseq
        %v5315 = vshrl.u32 %v5314, 7
        %v5316 = vsub.s32 %v5313, %v5315
        %v5317 = vrot.slane %v5303, %v5316
        %v5318 = vcombine.low %v5294, %v5310
        %v5319 = vcombine.high %v5294, %v5310
        %v5321 = vunpack.c.l.s4 1934713408
        %v5322 = vunpack.c.0.s8 %v5321
        %v5323 = vlaneseq
        %v5324 = vshrl.u32 %v5323, 7
        %v5325 = vsub.s32 %v5322, %v5324
        %v5326 = vrot.slane %v5318, %v5325
        %v5328 = vunpack.c.l.s4 1934713408
        %v5329 = vunpack.c.0.s8 %v5328
        %v5330 = vlaneseq
        %v5331 = vshrl.u32 %v5330, 7
        %v5332 = vsub.s32 %v5329, %v5331
        %v5333 = vrot.slane %v5319, %v5332
        %v5334 = vcombine.low %v5301, %v5317
        %v5335 = vcombine.high %v5301, %v5317
        %v5337 = vunpack.c.l.s4 1934713408
        %v5338 = vunpack.c.0.s8 %v5337
        %v5339 = vlaneseq
        %v5340 = vshrl.u32 %v5339, 7
        %v5341 = vsub.s32 %v5338, %v5340
        %v5342 = vrot.slane %v5334, %v5341
        %v5344 = vunpack.c.l.s4 1934713408
        %v5345 = vunpack.c.0.s8 %v5344
        %v5346 = vlaneseq
        %v5347 = vshrl.u32 %v5346, 7
        %v5348 = vsub.s32 %v5345, %v5347
        %v5349 = vrot.slane %v5335, %v5348
        %v5350 = vcombine.high %v5326, 0.0
        %v5351 = vcombine.high %v5333, 0.0
        %v5352 = vcombine.high %v5342, 0.0
        %v5353 = vcombine.high %v5349, 0.0
        %v5354 = vcombine.low %v5326, %v5333
        %v5356 = vunpack.c.l.s4 1983009808
        %v5357 = vunpack.c.0.s8 %v5356
        %v5358 = vlaneseq
        %v5359 = vshrl.u32 %v5358, 7
        %v5360 = vsub.s32 %v5357, %v5359
        %v5361 = vrot.slane %v5354, %v5360
        %v5362 = vcombine.low %v5350, %v5351
        %v5364 = vunpack.c.l.s4 1983009808
        %v5365 = vunpack.c.0.s8 %v5364
        %v5366 = vlaneseq
        %v5367 = vshrl.u32 %v5366, 7
        %v5368 = vsub.s32 %v5365, %v5367
        %v5369 = vrot.slane %v5362, %v5368
        %v5370 = vcombine.low %v5342, %v5349
        %v5372 = vunpack.c.l.s4 1983009808
        %v5373 = vunpack.c.0.s8 %v5372
        %v5374 = vlaneseq
        %v5375 = vshrl.u32 %v5374, 7
        %v5376 = vsub.s32 %v5373, %v5375
        %v5377 = vrot.slane %v5370, %v5376
        %v5378 = vcombine.low %v5352, %v5353
        %v5380 = vunpack.c.l.s4 1983009808
        %v5381 = vunpack.c.0.s8 %v5380
        %v5382 = vlaneseq
        %v5383 = vshrl.u32 %v5382, 7
        %v5384 = vsub.s32 %v5381, %v5383
        %v5385 = vrot.slane %v5378, %v5384
        %v5386 = vcombine.low %v5361, %v5369
        %v5387 = vcombine.high %v5361, %v5369
        %v5389 = vunpack.c.l.s4 1934713408
        %v5390 = vunpack.c.0.s8 %v5389
        %v5391 = vlaneseq
        %v5392 = vshrl.u32 %v5391, 7
        %v5393 = vsub.s32 %v5390, %v5392
        %v5394 = vrot.slane %v5386, %v5393
        %v5396 = vunpack.c.l.s4 1934713408
        %v5397 = vunpack.c.0.s8 %v5396
        %v5398 = vlaneseq
        %v5399 = vshrl.u32 %v5398, 7
        %v5400 = vsub.s32 %v5397, %v5399
        %v5401 = vrot.slane %v5387, %v5400
        %v5402 = vcombine.low %v5377, %v5385
        %v5403 = vcombine.high %v5377, %v5385
        %v5405 = vunpack.c.l.s4 1934713408
        %v5406 = vunpack.c.0.s8 %v5405
        %v5407 = vlaneseq
        %v5408 = vshrl.u32 %v5407, 7
        %v5409 = vsub.s32 %v5406, %v5408
        %v5410 = vrot.slane %v5402, %v5409
        %v5412 = vunpack.c.l.s4 1934713408
        %v5413 = vunpack.c.0.s8 %v5412
        %v5414 = vlaneseq
        %v5415 = vshrl.u32 %v5414, 7
        %v5416 = vsub.s32 %v5413, %v5415
        %v5417 = vrot.slane %v5403, %v5416
        %v5418 = vcombine.low %v5394, %v5410
        %v5419 = vcombine.high %v5394, %v5410
        %v5420 = vcombine.low %v5401, %v5417
        %v5421 = vcombine.high %v5401, %v5417
        %v5422 = vpack.c.bf16 %v5418, %v5418
        %v5423 = vpack.c.bf16 %v5419, %v5419
        %v5424 = vpack.c.bf16 %v5420, %v5420
        %v5425 = vpack.c.bf16 %v5421, %v5421
        %5427 = vrot.lane.b32.xlu0 %v5121, 120
        %v5428 = vpop.permute.xlu0 %5427
        %5430 = vrot.lane.b32.xlu0 %v5121, 112
        %v5431 = vpop.permute.xlu0 %5430
        %5433 = vrot.lane.b32.xlu0 %v5121, 104
        %v5434 = vpop.permute.xlu0 %5433
        %v5436 = vcombine.low %v5121, %v5431
        %v5437 = vcombine.high %v5121, %v5431
        %v5439 = vunpack.c.l.s4 1983009808
        %v5440 = vunpack.c.0.s8 %v5439
        %v5441 = vlaneseq
        %v5442 = vshrl.u32 %v5441, 7
        %v5443 = vsub.s32 %v5440, %v5442
        %v5444 = vrot.slane %v5436, %v5443
        %v5446 = vunpack.c.l.s4 1983009808
        %v5447 = vunpack.c.0.s8 %v5446
        %v5448 = vlaneseq
        %v5449 = vshrl.u32 %v5448, 7
        %v5450 = vsub.s32 %v5447, %v5449
        %v5451 = vrot.slane %v5437, %v5450
        %v5452 = vcombine.low %v5428, %v5434
        %v5453 = vcombine.high %v5428, %v5434
        %v5455 = vunpack.c.l.s4 1983009808
        %v5456 = vunpack.c.0.s8 %v5455
        %v5457 = vlaneseq
        %v5458 = vshrl.u32 %v5457, 7
        %v5459 = vsub.s32 %v5456, %v5458
        %v5460 = vrot.slane %v5452, %v5459
        %v5462 = vunpack.c.l.s4 1983009808
        %v5463 = vunpack.c.0.s8 %v5462
        %v5464 = vlaneseq
        %v5465 = vshrl.u32 %v5464, 7
        %v5466 = vsub.s32 %v5463, %v5465
        %v5467 = vrot.slane %v5453, %v5466
        %v5468 = vcombine.low %v5444, %v5460
        %v5469 = vcombine.high %v5444, %v5460
        %v5471 = vunpack.c.l.s4 1934713408
        %v5472 = vunpack.c.0.s8 %v5471
        %v5473 = vlaneseq
        %v5474 = vshrl.u32 %v5473, 7
        %v5475 = vsub.s32 %v5472, %v5474
        %v5476 = vrot.slane %v5468, %v5475
        %v5478 = vunpack.c.l.s4 1934713408
        %v5479 = vunpack.c.0.s8 %v5478
        %v5480 = vlaneseq
        %v5481 = vshrl.u32 %v5480, 7
        %v5482 = vsub.s32 %v5479, %v5481
        %v5483 = vrot.slane %v5469, %v5482
        %v5484 = vcombine.low %v5451, %v5467
        %v5485 = vcombine.high %v5451, %v5467
        %v5487 = vunpack.c.l.s4 1934713408
        %v5488 = vunpack.c.0.s8 %v5487
        %v5489 = vlaneseq
        %v5490 = vshrl.u32 %v5489, 7
        %v5491 = vsub.s32 %v5488, %v5490
        %v5492 = vrot.slane %v5484, %v5491
        %v5494 = vunpack.c.l.s4 1934713408
        %v5495 = vunpack.c.0.s8 %v5494
        %v5496 = vlaneseq
        %v5497 = vshrl.u32 %v5496, 7
        %v5498 = vsub.s32 %v5495, %v5497
        %v5499 = vrot.slane %v5485, %v5498
        %v5500 = vcombine.high %v5476, 0.0
        %v5501 = vcombine.high %v5483, 0.0
        %v5502 = vcombine.high %v5492, 0.0
        %v5503 = vcombine.high %v5499, 0.0
        %v5504 = vcombine.low %v5476, %v5483
        %v5506 = vunpack.c.l.s4 1983009808
        %v5507 = vunpack.c.0.s8 %v5506
        %v5508 = vlaneseq
        %v5509 = vshrl.u32 %v5508, 7
        %v5510 = vsub.s32 %v5507, %v5509
        %v5511 = vrot.slane %v5504, %v5510
        %v5512 = vcombine.low %v5500, %v5501
        %v5514 = vunpack.c.l.s4 1983009808
        %v5515 = vunpack.c.0.s8 %v5514
        %v5516 = vlaneseq
        %v5517 = vshrl.u32 %v5516, 7
        %v5518 = vsub.s32 %v5515, %v5517
        %v5519 = vrot.slane %v5512, %v5518
        %v5520 = vcombine.low %v5492, %v5499
        %v5522 = vunpack.c.l.s4 1983009808
        %v5523 = vunpack.c.0.s8 %v5522
        %v5524 = vlaneseq
        %v5525 = vshrl.u32 %v5524, 7
        %v5526 = vsub.s32 %v5523, %v5525
        %v5527 = vrot.slane %v5520, %v5526
        %v5528 = vcombine.low %v5502, %v5503
        %v5530 = vunpack.c.l.s4 1983009808
        %v5531 = vunpack.c.0.s8 %v5530
        %v5532 = vlaneseq
        %v5533 = vshrl.u32 %v5532, 7
        %v5534 = vsub.s32 %v5531, %v5533
        %v5535 = vrot.slane %v5528, %v5534
        %v5536 = vcombine.low %v5511, %v5519
        %v5537 = vcombine.high %v5511, %v5519
        %v5539 = vunpack.c.l.s4 1934713408
        %v5540 = vunpack.c.0.s8 %v5539
        %v5541 = vlaneseq
        %v5542 = vshrl.u32 %v5541, 7
        %v5543 = vsub.s32 %v5540, %v5542
        %v5544 = vrot.slane %v5536, %v5543
        %v5546 = vunpack.c.l.s4 1934713408
        %v5547 = vunpack.c.0.s8 %v5546
        %v5548 = vlaneseq
        %v5549 = vshrl.u32 %v5548, 7
        %v5550 = vsub.s32 %v5547, %v5549
        %v5551 = vrot.slane %v5537, %v5550
        %v5552 = vcombine.low %v5527, %v5535
        %v5553 = vcombine.high %v5527, %v5535
        %v5555 = vunpack.c.l.s4 1934713408
        %v5556 = vunpack.c.0.s8 %v5555
        %v5557 = vlaneseq
        %v5558 = vshrl.u32 %v5557, 7
        %v5559 = vsub.s32 %v5556, %v5558
        %v5560 = vrot.slane %v5552, %v5559
        %v5562 = vunpack.c.l.s4 1934713408
        %v5563 = vunpack.c.0.s8 %v5562
        %v5564 = vlaneseq
        %v5565 = vshrl.u32 %v5564, 7
        %v5566 = vsub.s32 %v5563, %v5565
        %v5567 = vrot.slane %v5553, %v5566
        %v5568 = vcombine.low %v5544, %v5560
        %v5569 = vcombine.high %v5544, %v5560
        %v5570 = vcombine.low %v5551, %v5567
        %v5571 = vcombine.high %v5551, %v5567
        %v5572 = vpack.c.bf16 %v5568, %v5568
        %v5573 = vpack.c.bf16 %v5569, %v5569
        %v5574 = vpack.c.bf16 %v5570, %v5570
        %v5575 = vpack.c.bf16 %v5571, %v5571
        %v5577 = vsel %vm1517, %v5272, 0
        %v5580 = vsel %vm1517, %v5422, 0
        %5582 = vmatprep.subr.bf16.mxu0 0
        %5583 = vmatpush1.bf16.xpose.msra.mxu0 %v5580
        %5584 = vmatprep.subr.bf16.mxu0 0
        %5585 = vmatpush1.bf16.xpose.msra.mxu0 0
        %5586 = vmatprep.subr.bf16.mxu0 0
        %5587 = vmatpush1.bf16.xpose.msra.mxu0 0
        %5588 = vmatprep.subr.bf16.mxu0 0
        %5589 = vmatpush1.bf16.xpose.msra.mxu0 0
        %5590 = vmatprep.subr.bf16.mxu0 0
        %5591 = vmatpush1.bf16.xpose.msra.mxu0 0
        %5592 = vmatprep.subr.bf16.mxu0 0
        %5593 = vmatpush1.bf16.xpose.msra.mxu0 0
        %5594 = vmatprep.subr.bf16.mxu0 0
        %5595 = vmatpush1.bf16.xpose.msra.mxu0 0
        %5596 = vmatprep.subr.bf16.mxu0 0
        %5597 = vmatpush1.bf16.xpose.msra.mxu0 0
        %5598 = vmatprep.subr.bf16.mxu0 0
        %5599 = vmatpush1.bf16.xpose.msra.mxu0 0
        %5600 = vmatprep.subr.bf16.mxu0 0
        %5601 = vmatpush1.bf16.xpose.msra.mxu0 0
        %5602 = vmatprep.subr.bf16.mxu0 0
        %5603 = vmatpush1.bf16.xpose.msra.mxu0 0
        %5604 = vmatprep.subr.bf16.mxu0 0
        %5605 = vmatpush1.bf16.xpose.msra.mxu0 0
        %5606 = vmatprep.subr.bf16.mxu0 0
        %5607 = vmatpush1.bf16.xpose.msra.mxu0 0
        %5608 = vmatprep.subr.bf16.mxu0 0
        %5609 = vmatpush1.bf16.xpose.msra.mxu0 0
        %5610 = vmatprep.subr.bf16.mxu0 0
        %5611 = vmatpush1.bf16.xpose.msra.mxu0 0
        %5612 = vmatprep.subr.bf16.mxu0 0
        %5613 = vmatpush1.bf16.xpose.msra.mxu0 0
        %5614 = vmatprep.mubr.bf16.mxu0 0
        %5615 = vmatmul.mubr.bf16.gmra.mrb[0].mxu0 %v5577
        %v5616 = vpop.f32.mrb[0].mxu0
        %v5617 = vadd.f32 0.0, %v5616
        %v5618 = vpop.f32.mrb[0].mxu0
        %v5619 = vpop.f32.mrb[0].mxu0
        %v5620 = vpop.f32.mrb[0].mxu0
        %5621 = vdwg.mxu0
        %v5623 = vsel %vm1517, %v5273, 0
        %v5626 = vsel %vm1517, %v5423, 0
        %5628 = vmatprep.subr.bf16.mxu0 0
        %5629 = vmatpush1.bf16.xpose.msra.mxu0 %v5626
        %5630 = vmatprep.subr.bf16.mxu0 0
        %5631 = vmatpush1.bf16.xpose.msra.mxu0 0
        %5632 = vmatprep.subr.bf16.mxu0 0
        %5633 = vmatpush1.bf16.xpose.msra.mxu0 0
        %5634 = vmatprep.subr.bf16.mxu0 0
        %5635 = vmatpush1.bf16.xpose.msra.mxu0 0
        %5636 = vmatprep.subr.bf16.mxu0 0
        %5637 = vmatpush1.bf16.xpose.msra.mxu0 0
        %5638 = vmatprep.subr.bf16.mxu0 0
        %5639 = vmatpush1.bf16.xpose.msra.mxu0 0
        %5640 = vmatprep.subr.bf16.mxu0 0
        %5641 = vmatpush1.bf16.xpose.msra.mxu0 0
        %5642 = vmatprep.subr.bf16.mxu0 0
        %5643 = vmatpush1.bf16.xpose.msra.mxu0 0
        %5644 = vmatprep.subr.bf16.mxu0 0
        %5645 = vmatpush1.bf16.xpose.msra.mxu0 0
        %5646 = vmatprep.subr.bf16.mxu0 0
        %5647 = vmatpush1.bf16.xpose.msra.mxu0 0
        %5648 = vmatprep.subr.bf16.mxu0 0
        %5649 = vmatpush1.bf16.xpose.msra.mxu0 0
        %5650 = vmatprep.subr.bf16.mxu0 0
        %5651 = vmatpush1.bf16.xpose.msra.mxu0 0
        %5652 = vmatprep.subr.bf16.mxu0 0
        %5653 = vmatpush1.bf16.xpose.msra.mxu0 0
        %5654 = vmatprep.subr.bf16.mxu0 0
        %5655 = vmatpush1.bf16.xpose.msra.mxu0 0
        %5656 = vmatprep.subr.bf16.mxu0 0
        %5657 = vmatpush1.bf16.xpose.msra.mxu0 0
        %5658 = vmatprep.subr.bf16.mxu0 0
        %5659 = vmatpush1.bf16.xpose.msra.mxu0 0
        %5660 = vmatprep.mubr.bf16.mxu0 0
        %5661 = vmatmul.mubr.bf16.gmra.mrb[0].mxu0 %v5623
        %v5662 = vpop.f32.mrb[0].mxu0
        %v5663 = vadd.f32 0.0, %v5662
        %v5664 = vpop.f32.mrb[0].mxu0
        %v5665 = vpop.f32.mrb[0].mxu0
        %v5666 = vpop.f32.mrb[0].mxu0
        %5667 = vdwg.mxu0
        %v5669 = vsel %vm1517, %v5274, 0
        %v5672 = vsel %vm1517, %v5424, 0
        %5674 = vmatprep.subr.bf16.mxu0 0
        %5675 = vmatpush1.bf16.xpose.msra.mxu0 %v5672
        %5676 = vmatprep.subr.bf16.mxu0 0
        %5677 = vmatpush1.bf16.xpose.msra.mxu0 0
        %5678 = vmatprep.subr.bf16.mxu0 0
        %5679 = vmatpush1.bf16.xpose.msra.mxu0 0
        %5680 = vmatprep.subr.bf16.mxu0 0
        %5681 = vmatpush1.bf16.xpose.msra.mxu0 0
        %5682 = vmatprep.subr.bf16.mxu0 0
        %5683 = vmatpush1.bf16.xpose.msra.mxu0 0
        %5684 = vmatprep.subr.bf16.mxu0 0
        %5685 = vmatpush1.bf16.xpose.msra.mxu0 0
        %5686 = vmatprep.subr.bf16.mxu0 0
        %5687 = vmatpush1.bf16.xpose.msra.mxu0 0
        %5688 = vmatprep.subr.bf16.mxu0 0
        %5689 = vmatpush1.bf16.xpose.msra.mxu0 0
        %5690 = vmatprep.subr.bf16.mxu0 0
        %5691 = vmatpush1.bf16.xpose.msra.mxu0 0
        %5692 = vmatprep.subr.bf16.mxu0 0
        %5693 = vmatpush1.bf16.xpose.msra.mxu0 0
        %5694 = vmatprep.subr.bf16.mxu0 0
        %5695 = vmatpush1.bf16.xpose.msra.mxu0 0
        %5696 = vmatprep.subr.bf16.mxu0 0
        %5697 = vmatpush1.bf16.xpose.msra.mxu0 0
        %5698 = vmatprep.subr.bf16.mxu0 0
        %5699 = vmatpush1.bf16.xpose.msra.mxu0 0
        %5700 = vmatprep.subr.bf16.mxu0 0
        %5701 = vmatpush1.bf16.xpose.msra.mxu0 0
        %5702 = vmatprep.subr.bf16.mxu0 0
        %5703 = vmatpush1.bf16.xpose.msra.mxu0 0
        %5704 = vmatprep.subr.bf16.mxu0 0
        %5705 = vmatpush1.bf16.xpose.msra.mxu0 0
        %5706 = vmatprep.mubr.bf16.mxu0 0
        %5707 = vmatmul.mubr.bf16.gmra.mrb[0].mxu0 %v5669
        %v5708 = vpop.f32.mrb[0].mxu0
        %v5709 = vadd.f32 0.0, %v5708
        %v5710 = vpop.f32.mrb[0].mxu0
        %v5711 = vpop.f32.mrb[0].mxu0
        %v5712 = vpop.f32.mrb[0].mxu0
        %5713 = vdwg.mxu0
        %v5715 = vsel %vm1517, %v5275, 0
        %v5718 = vsel %vm1517, %v5425, 0
        %5720 = vmatprep.subr.bf16.mxu0 0
        %5721 = vmatpush1.bf16.xpose.msra.mxu0 %v5718
        %5722 = vmatprep.subr.bf16.mxu0 0
        %5723 = vmatpush1.bf16.xpose.msra.mxu0 0
        %5724 = vmatprep.subr.bf16.mxu0 0
        %5725 = vmatpush1.bf16.xpose.msra.mxu0 0
        %5726 = vmatprep.subr.bf16.mxu0 0
        %5727 = vmatpush1.bf16.xpose.msra.mxu0 0
        %5728 = vmatprep.subr.bf16.mxu0 0
        %5729 = vmatpush1.bf16.xpose.msra.mxu0 0
        %5730 = vmatprep.subr.bf16.mxu0 0
        %5731 = vmatpush1.bf16.xpose.msra.mxu0 0
        %5732 = vmatprep.subr.bf16.mxu0 0
        %5733 = vmatpush1.bf16.xpose.msra.mxu0 0
        %5734 = vmatprep.subr.bf16.mxu0 0
        %5735 = vmatpush1.bf16.xpose.msra.mxu0 0
        %5736 = vmatprep.subr.bf16.mxu0 0
        %5737 = vmatpush1.bf16.xpose.msra.mxu0 0
        %5738 = vmatprep.subr.bf16.mxu0 0
        %5739 = vmatpush1.bf16.xpose.msra.mxu0 0
        %5740 = vmatprep.subr.bf16.mxu0 0
        %5741 = vmatpush1.bf16.xpose.msra.mxu0 0
        %5742 = vmatprep.subr.bf16.mxu0 0
        %5743 = vmatpush1.bf16.xpose.msra.mxu0 0
        %5744 = vmatprep.subr.bf16.mxu0 0
        %5745 = vmatpush1.bf16.xpose.msra.mxu0 0
        %5746 = vmatprep.subr.bf16.mxu0 0
        %5747 = vmatpush1.bf16.xpose.msra.mxu0 0
        %5748 = vmatprep.subr.bf16.mxu0 0
        %5749 = vmatpush1.bf16.xpose.msra.mxu0 0
        %5750 = vmatprep.subr.bf16.mxu0 0
        %5751 = vmatpush1.bf16.xpose.msra.mxu0 0
        %5752 = vmatprep.mubr.bf16.mxu0 0
        %5753 = vmatmul.mubr.bf16.gmra.mrb[0].mxu0 %v5715
        %v5754 = vpop.f32.mrb[0].mxu0
        %v5755 = vadd.f32 0.0, %v5754
        %v5756 = vpop.f32.mrb[0].mxu0
        %v5757 = vpop.f32.mrb[0].mxu0
        %v5758 = vpop.f32.mrb[0].mxu0
        %5759 = vdwg.mxu0
        %v5760 = vsel %vm3001, -1e+09, %v5617
        %v5761 = vsel %vm3001, -1e+09, %v5663
        %v5762 = vsel %vm3001, -1e+09, %v5709
        %v5763 = vsel %vm3001, -1e+09, %v5755
        %v5764 = vsel %vm1517, %v5760, -inf
        %5765 = vmax.xlane.f32.xlu0 %v5764
        %v5766 = vpop.xlane.xlu0 %5765
        %v5767 = vsel %vm1517, %v5761, -inf
        %5768 = vmax.xlane.f32.xlu0 %v5767
        %v5769 = vpop.xlane.xlu0 %5768
        %v5770 = vsel %vm1517, %v5762, -inf
        %5771 = vmax.xlane.f32.xlu0 %v5770
        %v5772 = vpop.xlane.xlu0 %5771
        %v5773 = vsel %vm1517, %v5763, -inf
        %5774 = vmax.xlane.f32.xlu0 %v5773
        %v5775 = vpop.xlane.xlu0 %5774
        %v5776 = vsub.f32 %v5760, %v5766
        %v5777 = vsub.f32 %v5761, %v5769
        %v5778 = vsub.f32 %v5762, %v5772
        %v5779 = vsub.f32 %v5763, %v5775
        %v5780 = vmul.f32 %v5776, 1.442695
        %v5781 = vpow.pop %v5780
        %v5782 = vmul.f32 %v5777, 1.442695
        %v5783 = vpow.pop %v5782
        %v5784 = vmul.f32 %v5778, 1.442695
        %v5785 = vpow.pop %v5784
        %v5786 = vmul.f32 %v5779, 1.442695
        %v5787 = vpow.pop %v5786
        %v5788 = vsel %vm1517, %v5781, 0.0
        %5789 = vadd.xlane.f32.xlu0 %v5788
        %v5790 = vpop.xlane.xlu0 %5789
        %v5791 = vsel %vm1517, %v5783, 0.0
        %5792 = vadd.xlane.f32.xlu0 %v5791
        %v5793 = vpop.xlane.xlu0 %5792
        %v5794 = vsel %vm1517, %v5785, 0.0
        %5795 = vadd.xlane.f32.xlu0 %v5794
        %v5796 = vpop.xlane.xlu0 %5795
        %v5797 = vsel %vm1517, %v5787, 0.0
        %5798 = vadd.xlane.f32.xlu0 %v5797
        %v5799 = vpop.xlane.xlu0 %5798
        %v5800 = vrcp.pop %v5790
        %v5801 = vrcp.pop %v5793
        %v5802 = vrcp.pop %v5796
        %v5803 = vrcp.pop %v5799
        %v5804 = vmul.f32 %v5781, %v5800
        %v5805 = vmul.f32 %v5783, %v5801
        %v5806 = vmul.f32 %v5785, %v5802
        %v5807 = vmul.f32 %v5787, %v5803
        %v5808 = vpack.c.bf16 %v5804, %v5804
        %v5809 = vpack.c.bf16 %v5805, %v5805
        %v5810 = vpack.c.bf16 %v5806, %v5806
        %v5811 = vpack.c.bf16 %v5807, %v5807
        %v5813 = vsel %vm1517, %v5808, 0
        %v5816 = vsel %vm1762, %v5572, 0
        %5818 = vmatprep.subr.bf16.mxu0 0
        %5819 = vmatpush1.bf16.msra.mxu0 %v5816
        %5820 = vmatprep.subr.bf16.mxu0 0
        %5821 = vmatpush1.bf16.msra.mxu0 0
        %5822 = vmatprep.subr.bf16.mxu0 0
        %5823 = vmatpush1.bf16.msra.mxu0 0
        %5824 = vmatprep.subr.bf16.mxu0 0
        %5825 = vmatpush1.bf16.msra.mxu0 0
        %5826 = vmatprep.subr.bf16.mxu0 0
        %5827 = vmatpush1.bf16.msra.mxu0 0
        %5828 = vmatprep.subr.bf16.mxu0 0
        %5829 = vmatpush1.bf16.msra.mxu0 0
        %5830 = vmatprep.subr.bf16.mxu0 0
        %5831 = vmatpush1.bf16.msra.mxu0 0
        %5832 = vmatprep.subr.bf16.mxu0 0
        %5833 = vmatpush1.bf16.msra.mxu0 0
        %5834 = vmatprep.subr.bf16.mxu0 0
        %5835 = vmatpush1.bf16.msra.mxu0 0
        %5836 = vmatprep.subr.bf16.mxu0 0
        %5837 = vmatpush1.bf16.msra.mxu0 0
        %5838 = vmatprep.subr.bf16.mxu0 0
        %5839 = vmatpush1.bf16.msra.mxu0 0
        %5840 = vmatprep.subr.bf16.mxu0 0
        %5841 = vmatpush1.bf16.msra.mxu0 0
        %5842 = vmatprep.subr.bf16.mxu0 0
        %5843 = vmatpush1.bf16.msra.mxu0 0
        %5844 = vmatprep.subr.bf16.mxu0 0
        %5845 = vmatpush1.bf16.msra.mxu0 0
        %5846 = vmatprep.subr.bf16.mxu0 0
        %5847 = vmatpush1.bf16.msra.mxu0 0
        %5848 = vmatprep.subr.bf16.mxu0 0
        %5849 = vmatpush1.bf16.msra.mxu0 0
        %5850 = vmatprep.mubr.bf16.mxu0 0
        %5851 = vmatmul.mubr.bf16.gmra.mrb[0].mxu0 %v5813
        %v5852 = vpop.f32.mrb[0].mxu0
        %v5853 = vadd.f32 0.0, %v5852
        %v5854 = vpop.f32.mrb[0].mxu0
        %v5855 = vpop.f32.mrb[0].mxu0
        %v5856 = vpop.f32.mrb[0].mxu0
        %5857 = vdwg.mxu0
        %v5859 = vsel %vm1517, %v5809, 0
        %v5862 = vsel %vm1762, %v5573, 0
        %5864 = vmatprep.subr.bf16.mxu0 0
        %5865 = vmatpush1.bf16.msra.mxu0 %v5862
        %5866 = vmatprep.subr.bf16.mxu0 0
        %5867 = vmatpush1.bf16.msra.mxu0 0
        %5868 = vmatprep.subr.bf16.mxu0 0
        %5869 = vmatpush1.bf16.msra.mxu0 0
        %5870 = vmatprep.subr.bf16.mxu0 0
        %5871 = vmatpush1.bf16.msra.mxu0 0
        %5872 = vmatprep.subr.bf16.mxu0 0
        %5873 = vmatpush1.bf16.msra.mxu0 0
        %5874 = vmatprep.subr.bf16.mxu0 0
        %5875 = vmatpush1.bf16.msra.mxu0 0
        %5876 = vmatprep.subr.bf16.mxu0 0
        %5877 = vmatpush1.bf16.msra.mxu0 0
        %5878 = vmatprep.subr.bf16.mxu0 0
        %5879 = vmatpush1.bf16.msra.mxu0 0
        %5880 = vmatprep.subr.bf16.mxu0 0
        %5881 = vmatpush1.bf16.msra.mxu0 0
        %5882 = vmatprep.subr.bf16.mxu0 0
        %5883 = vmatpush1.bf16.msra.mxu0 0
        %5884 = vmatprep.subr.bf16.mxu0 0
        %5885 = vmatpush1.bf16.msra.mxu0 0
        %5886 = vmatprep.subr.bf16.mxu0 0
        %5887 = vmatpush1.bf16.msra.mxu0 0
        %5888 = vmatprep.subr.bf16.mxu0 0
        %5889 = vmatpush1.bf16.msra.mxu0 0
        %5890 = vmatprep.subr.bf16.mxu0 0
        %5891 = vmatpush1.bf16.msra.mxu0 0
        %5892 = vmatprep.subr.bf16.mxu0 0
        %5893 = vmatpush1.bf16.msra.mxu0 0
        %5894 = vmatprep.subr.bf16.mxu0 0
        %5895 = vmatpush1.bf16.msra.mxu0 0
        %5896 = vmatprep.mubr.bf16.mxu0 0
        %5897 = vmatmul.mubr.bf16.gmra.mrb[0].mxu0 %v5859
        %v5898 = vpop.f32.mrb[0].mxu0
        %v5899 = vadd.f32 0.0, %v5898
        %v5900 = vpop.f32.mrb[0].mxu0
        %v5901 = vpop.f32.mrb[0].mxu0
        %v5902 = vpop.f32.mrb[0].mxu0
        %5903 = vdwg.mxu0
        %v5905 = vsel %vm1517, %v5810, 0
        %v5908 = vsel %vm1762, %v5574, 0
        %5910 = vmatprep.subr.bf16.mxu0 0
        %5911 = vmatpush1.bf16.msra.mxu0 %v5908
        %5912 = vmatprep.subr.bf16.mxu0 0
        %5913 = vmatpush1.bf16.msra.mxu0 0
        %5914 = vmatprep.subr.bf16.mxu0 0
        %5915 = vmatpush1.bf16.msra.mxu0 0
        %5916 = vmatprep.subr.bf16.mxu0 0
        %5917 = vmatpush1.bf16.msra.mxu0 0
        %5918 = vmatprep.subr.bf16.mxu0 0
        %5919 = vmatpush1.bf16.msra.mxu0 0
        %5920 = vmatprep.subr.bf16.mxu0 0
        %5921 = vmatpush1.bf16.msra.mxu0 0
        %5922 = vmatprep.subr.bf16.mxu0 0
        %5923 = vmatpush1.bf16.msra.mxu0 0
        %5924 = vmatprep.subr.bf16.mxu0 0
        %5925 = vmatpush1.bf16.msra.mxu0 0
        %5926 = vmatprep.subr.bf16.mxu0 0
        %5927 = vmatpush1.bf16.msra.mxu0 0
        %5928 = vmatprep.subr.bf16.mxu0 0
        %5929 = vmatpush1.bf16.msra.mxu0 0
        %5930 = vmatprep.subr.bf16.mxu0 0
        %5931 = vmatpush1.bf16.msra.mxu0 0
        %5932 = vmatprep.subr.bf16.mxu0 0
        %5933 = vmatpush1.bf16.msra.mxu0 0
        %5934 = vmatprep.subr.bf16.mxu0 0
        %5935 = vmatpush1.bf16.msra.mxu0 0
        %5936 = vmatprep.subr.bf16.mxu0 0
        %5937 = vmatpush1.bf16.msra.mxu0 0
        %5938 = vmatprep.subr.bf16.mxu0 0
        %5939 = vmatpush1.bf16.msra.mxu0 0
        %5940 = vmatprep.subr.bf16.mxu0 0
        %5941 = vmatpush1.bf16.msra.mxu0 0
        %5942 = vmatprep.mubr.bf16.mxu0 0
        %5943 = vmatmul.mubr.bf16.gmra.mrb[0].mxu0 %v5905
        %v5944 = vpop.f32.mrb[0].mxu0
        %v5945 = vadd.f32 0.0, %v5944
        %v5946 = vpop.f32.mrb[0].mxu0
        %v5947 = vpop.f32.mrb[0].mxu0
        %v5948 = vpop.f32.mrb[0].mxu0
        %5949 = vdwg.mxu0
        %v5951 = vsel %vm1517, %v5811, 0
        %v5954 = vsel %vm1762, %v5575, 0
        %5956 = vmatprep.subr.bf16.mxu0 0
        %5957 = vmatpush1.bf16.msra.mxu0 %v5954
        %5958 = vmatprep.subr.bf16.mxu0 0
        %5959 = vmatpush1.bf16.msra.mxu0 0
        %5960 = vmatprep.subr.bf16.mxu0 0
        %5961 = vmatpush1.bf16.msra.mxu0 0
        %5962 = vmatprep.subr.bf16.mxu0 0
        %5963 = vmatpush1.bf16.msra.mxu0 0
        %5964 = vmatprep.subr.bf16.mxu0 0
        %5965 = vmatpush1.bf16.msra.mxu0 0
        %5966 = vmatprep.subr.bf16.mxu0 0
        %5967 = vmatpush1.bf16.msra.mxu0 0
        %5968 = vmatprep.subr.bf16.mxu0 0
        %5969 = vmatpush1.bf16.msra.mxu0 0
        %5970 = vmatprep.subr.bf16.mxu0 0
        %5971 = vmatpush1.bf16.msra.mxu0 0
        %5972 = vmatprep.subr.bf16.mxu0 0
        %5973 = vmatpush1.bf16.msra.mxu0 0
        %5974 = vmatprep.subr.bf16.mxu0 0
        %5975 = vmatpush1.bf16.msra.mxu0 0
        %5976 = vmatprep.subr.bf16.mxu0 0
        %5977 = vmatpush1.bf16.msra.mxu0 0
        %5978 = vmatprep.subr.bf16.mxu0 0
        %5979 = vmatpush1.bf16.msra.mxu0 0
        %5980 = vmatprep.subr.bf16.mxu0 0
        %5981 = vmatpush1.bf16.msra.mxu0 0
        %5982 = vmatprep.subr.bf16.mxu0 0
        %5983 = vmatpush1.bf16.msra.mxu0 0
        %5984 = vmatprep.subr.bf16.mxu0 0
        %5985 = vmatpush1.bf16.msra.mxu0 0
        %5986 = vmatprep.subr.bf16.mxu0 0
        %5987 = vmatpush1.bf16.msra.mxu0 0
        %5988 = vmatprep.mubr.bf16.mxu0 0
        %5989 = vmatmul.mubr.bf16.gmra.mrb[0].mxu0 %v5951
        %v5990 = vpop.f32.mrb[0].mxu0
        %v5991 = vadd.f32 0.0, %v5990
        %v5992 = vpop.f32.mrb[0].mxu0
        %v5993 = vpop.f32.mrb[0].mxu0
        %v5994 = vpop.f32.mrb[0].mxu0
        %5995 = vdwg.mxu0
        %v5996 = vcombine.low %v5853, %v5945
        %v5997 = vcombine.high %v5853, %v5945
        %v5999 = vunpack.c.l.s4 1983009808
        %v6000 = vunpack.c.0.s8 %v5999
        %v6001 = vlaneseq
        %v6002 = vshrl.u32 %v6001, 7
        %v6003 = vsub.s32 %v6000, %v6002
        %v6004 = vrot.slane %v5996, %v6003
        %v6006 = vunpack.c.l.s4 1983009808
        %v6007 = vunpack.c.0.s8 %v6006
        %v6008 = vlaneseq
        %v6009 = vshrl.u32 %v6008, 7
        %v6010 = vsub.s32 %v6007, %v6009
        %v6011 = vrot.slane %v5997, %v6010
        %v6012 = vcombine.low %v5899, %v5991
        %v6013 = vcombine.high %v5899, %v5991
        %v6015 = vunpack.c.l.s4 1983009808
        %v6016 = vunpack.c.0.s8 %v6015
        %v6017 = vlaneseq
        %v6018 = vshrl.u32 %v6017, 7
        %v6019 = vsub.s32 %v6016, %v6018
        %v6020 = vrot.slane %v6012, %v6019
        %v6022 = vunpack.c.l.s4 1983009808
        %v6023 = vunpack.c.0.s8 %v6022
        %v6024 = vlaneseq
        %v6025 = vshrl.u32 %v6024, 7
        %v6026 = vsub.s32 %v6023, %v6025
        %v6027 = vrot.slane %v6013, %v6026
        %v6028 = vcombine.low %v6004, %v6020
        %v6029 = vcombine.high %v6004, %v6020
        %v6031 = vunpack.c.l.s4 1934713408
        %v6032 = vunpack.c.0.s8 %v6031
        %v6033 = vlaneseq
        %v6034 = vshrl.u32 %v6033, 7
        %v6035 = vsub.s32 %v6032, %v6034
        %v6036 = vrot.slane %v6028, %v6035
        %v6038 = vunpack.c.l.s4 1934713408
        %v6039 = vunpack.c.0.s8 %v6038
        %v6040 = vlaneseq
        %v6041 = vshrl.u32 %v6040, 7
        %v6042 = vsub.s32 %v6039, %v6041
        %v6043 = vrot.slane %v6029, %v6042
        %v6044 = vcombine.low %v6011, %v6027
        %v6045 = vcombine.high %v6011, %v6027
        %v6047 = vunpack.c.l.s4 1934713408
        %v6048 = vunpack.c.0.s8 %v6047
        %v6049 = vlaneseq
        %v6050 = vshrl.u32 %v6049, 7
        %v6051 = vsub.s32 %v6048, %v6050
        %v6052 = vrot.slane %v6044, %v6051
        %v6054 = vunpack.c.l.s4 1934713408
        %v6055 = vunpack.c.0.s8 %v6054
        %v6056 = vlaneseq
        %v6057 = vshrl.u32 %v6056, 7
        %v6058 = vsub.s32 %v6055, %v6057
        %v6059 = vrot.slane %v6045, %v6058
        %v6060 = vcombine.high %v6036, 0.0
        %v6061 = vcombine.high %v6043, 0.0
        %v6062 = vcombine.high %v6052, 0.0
        %v6063 = vcombine.high %v6059, 0.0
        %v6064 = vcombine.low %v6036, %v6043
        %v6066 = vunpack.c.l.s4 1983009808
        %v6067 = vunpack.c.0.s8 %v6066
        %v6068 = vlaneseq
        %v6069 = vshrl.u32 %v6068, 7
        %v6070 = vsub.s32 %v6067, %v6069
        %v6071 = vrot.slane %v6064, %v6070
        %v6072 = vcombine.low %v6060, %v6061
        %v6074 = vunpack.c.l.s4 1983009808
        %v6075 = vunpack.c.0.s8 %v6074
        %v6076 = vlaneseq
        %v6077 = vshrl.u32 %v6076, 7
        %v6078 = vsub.s32 %v6075, %v6077
        %v6079 = vrot.slane %v6072, %v6078
        %v6080 = vcombine.low %v6052, %v6059
        %v6082 = vunpack.c.l.s4 1983009808
        %v6083 = vunpack.c.0.s8 %v6082
        %v6084 = vlaneseq
        %v6085 = vshrl.u32 %v6084, 7
        %v6086 = vsub.s32 %v6083, %v6085
        %v6087 = vrot.slane %v6080, %v6086
        %v6088 = vcombine.low %v6062, %v6063
        %v6090 = vunpack.c.l.s4 1983009808
        %v6091 = vunpack.c.0.s8 %v6090
        %v6092 = vlaneseq
        %v6093 = vshrl.u32 %v6092, 7
        %v6094 = vsub.s32 %v6091, %v6093
        %v6095 = vrot.slane %v6088, %v6094
        %v6096 = vcombine.low %v6071, %v6079
        %v6097 = vcombine.high %v6071, %v6079
        %v6099 = vunpack.c.l.s4 1934713408
        %v6100 = vunpack.c.0.s8 %v6099
        %v6101 = vlaneseq
        %v6102 = vshrl.u32 %v6101, 7
        %v6103 = vsub.s32 %v6100, %v6102
        %v6104 = vrot.slane %v6096, %v6103
        %v6106 = vunpack.c.l.s4 1934713408
        %v6107 = vunpack.c.0.s8 %v6106
        %v6108 = vlaneseq
        %v6109 = vshrl.u32 %v6108, 7
        %v6110 = vsub.s32 %v6107, %v6109
        %v6111 = vrot.slane %v6097, %v6110
        %v6112 = vcombine.low %v6087, %v6095
        %v6113 = vcombine.high %v6087, %v6095
        %v6115 = vunpack.c.l.s4 1934713408
        %v6116 = vunpack.c.0.s8 %v6115
        %v6117 = vlaneseq
        %v6118 = vshrl.u32 %v6117, 7
        %v6119 = vsub.s32 %v6116, %v6118
        %v6120 = vrot.slane %v6112, %v6119
        %v6122 = vunpack.c.l.s4 1934713408
        %v6123 = vunpack.c.0.s8 %v6122
        %v6124 = vlaneseq
        %v6125 = vshrl.u32 %v6124, 7
        %v6126 = vsub.s32 %v6123, %v6125
        %v6127 = vrot.slane %v6113, %v6126
        %v6128 = vcombine.low %v6104, %v6120
        %v6129 = vcombine.high %v6104, %v6120
        %v6130 = vcombine.low %v6111, %v6127
        %v6131 = vcombine.high %v6111, %v6127
        %6133 = vrot.lane.b32.xlu0 %v6129, 8
        %v6134 = vpop.permute.xlu0 %6133
        %6137 = vrot.lane.b32.xlu0 %v6130, 16
        %v6138 = vpop.permute.xlu0 %6137
        %6141 = vrot.lane.b32.xlu0 %v6131, 24
        %v6142 = vpop.permute.xlu0 %6141
        %v6144 = vsel %vm1517, %v6128, %v6134
        %v6145 = vsel %vm2093, %v6144, %v6138
        %v6146 = vsel %vm2095, %v6145, %v6142
        %v6147 = vpack.c.bf16 %v6146, %v6146
        %v6152 = vunpack.c.l.b16 %v4963
        %v6153 = vunpack.c.l.b16 %v4964
        %v6154 = vunpack.c.l.b16 %v4965
        %v6155 = vunpack.c.l.b16 %v4966
        %v6156 = vpack.c.b16 %v6153, %v6152
        %v6157 = vpack.c.b16 %v6155, %v6154
        %v6161 = vsel %vm919, %v6147, 0
        %6163 = vmatprep.subr.bf16.mxu0 0
        %6164 = vmatpush1.bf16.msra.mxu0 %v6156
        %6165 = vmatprep.subr.bf16.mxu0 0
        %6166 = vmatpush1.bf16.msra.mxu0 %v6157
        %6167 = vmatprep.subr.bf16.mxu0 0
        %6168 = vmatpush1.bf16.msra.mxu0 0
        %6169 = vmatprep.subr.bf16.mxu0 0
        %6170 = vmatpush1.bf16.msra.mxu0 0
        %6171 = vmatprep.subr.bf16.mxu0 0
        %6172 = vmatpush1.bf16.msra.mxu0 0
        %6173 = vmatprep.subr.bf16.mxu0 0
        %6174 = vmatpush1.bf16.msra.mxu0 0
        %6175 = vmatprep.subr.bf16.mxu0 0
        %6176 = vmatpush1.bf16.msra.mxu0 0
        %6177 = vmatprep.subr.bf16.mxu0 0
        %6178 = vmatpush1.bf16.msra.mxu0 0
        %6179 = vmatprep.subr.bf16.mxu0 0
        %6180 = vmatpush1.bf16.msra.mxu0 0
        %6181 = vmatprep.subr.bf16.mxu0 0
        %6182 = vmatpush1.bf16.msra.mxu0 0
        %6183 = vmatprep.subr.bf16.mxu0 0
        %6184 = vmatpush1.bf16.msra.mxu0 0
        %6185 = vmatprep.subr.bf16.mxu0 0
        %6186 = vmatpush1.bf16.msra.mxu0 0
        %6187 = vmatprep.subr.bf16.mxu0 0
        %6188 = vmatpush1.bf16.msra.mxu0 0
        %6189 = vmatprep.subr.bf16.mxu0 0
        %6190 = vmatpush1.bf16.msra.mxu0 0
        %6191 = vmatprep.subr.bf16.mxu0 0
        %6192 = vmatpush1.bf16.msra.mxu0 0
        %6193 = vmatprep.subr.bf16.mxu0 0
        %6194 = vmatpush1.bf16.msra.mxu0 0
        %6195 = vmatprep.mubr.bf16.mxu0 0
        %6196 = vmatmul.mubr.bf16.gmra.mrb[0].mxu0 %v6161
        %v6197 = vpop.f32.mrb[0].mxu0
        %v6198 = vadd.f32 0.0, %v6197
        %v6199 = vpop.f32.mrb[0].mxu0
        %v6200 = vpop.f32.mrb[0].mxu0
        %v6201 = vpop.f32.mrb[0].mxu0
        %6202 = vdwg.mxu0
        %v6203 = vadd.f32 %v4945, %v6198
        %s6204 = scalar_lea.vmem %s18, 1
        %v6205 = vld [vmem:[%s6204] sm:$0x1]
        %s6206 = scalar_lea.vmem %s19, 1
        %v6207 = vld [vmem:[%s6206] sm:$0x1]
        %v6208 = vsel %vm919, %v6203, 0.0
        %6209 = vadd.xlane.f32.xlu0 %v6208
        %v6210 = vpop.xlane.xlu0 %6209
        %v6211 = vmul.f32 %v6210, %v2159
        %v6212 = vsub.f32 %v6203, %v6211
        %v6213 = vmul.f32 %v6212, %v6212
        %v6214 = vsel %vm919, %v6213, 0.0
        %6215 = vadd.xlane.f32.xlu0 %v6214
        %v6216 = vpop.xlane.xlu0 %6215
        %v6217 = vmul.f32 %v6216, %v2159
        %v6218 = vadd.f32 %v6217, 1e-05
        %v6219 = vrsqrt.pop %v6218
        %v6220 = vmul.f32 %v6212, %v6219
        %v6222 = vlaneseq
        %v6223 = vshrl.u32 %v6222, 7
        %v6224 = vsub.s32 0, %v6223
        %v6225 = vrot.slane %v6205, %v6224
        %v6227 = vmul.f32 %v6220, %v6225
        %v6229 = vlaneseq
        %v6230 = vshrl.u32 %v6229, 7
        %v6231 = vsub.s32 0, %v6230
        %v6232 = vrot.slane %v6207, %v6231
        %v6234 = vadd.f32 %v6227, %v6232
        %v6235 = vpack.c.bf16 %v6234, %v6234
        %s6236 = scalar_lea.vmem [#allocation11], 16
        %v6237 = vld [vmem:[%s6236] sm:$0xf]
        %v6238 = vld [vmem:[%s6236 + $0x4] sm:$0xf]
        %v6239 = vld [vmem:[%s6236 + $0x8] sm:$0xf]
        %v6240 = vld [vmem:[%s6236 + $0xc] sm:$0xf]
        %s6241 = scalar_lea.vmem %s13, 1
        %v6242 = vld [vmem:[%s6241] sm:$0x1]
        %v6244 = vlaneseq
        %v6245 = vshrl.u32 %v6244, 7
        %v6246 = vsub.s32 0, %v6245
        %v6247 = vrot.slane %v6242, %v6246
        %v6253 = vunpack.c.l.b16 %v6237
        %v6254 = vunpack.c.l.b16 %v6238
        %v6255 = vunpack.c.l.b16 %v6239
        %v6256 = vunpack.c.l.b16 %v6240
        %v6257 = vpack.c.b16 %v6254, %v6253
        %v6258 = vpack.c.b16 %v6256, %v6255
        %v6262 = vsel %vm919, %v6235, 0
        %6264 = vmatprep.subr.bf16.mxu0 0
        %6265 = vmatpush1.bf16.msra.mxu0 %v6257
        %6266 = vmatprep.subr.bf16.mxu0 0
        %6267 = vmatpush1.bf16.msra.mxu0 %v6258
        %6268 = vmatprep.subr.bf16.mxu0 0
        %6269 = vmatpush1.bf16.msra.mxu0 0
        %6270 = vmatprep.subr.bf16.mxu0 0
        %6271 = vmatpush1.bf16.msra.mxu0 0
        %6272 = vmatprep.subr.bf16.mxu0 0
        %6273 = vmatpush1.bf16.msra.mxu0 0
        %6274 = vmatprep.subr.bf16.mxu0 0
        %6275 = vmatpush1.bf16.msra.mxu0 0
        %6276 = vmatprep.subr.bf16.mxu0 0
        %6277 = vmatpush1.bf16.msra.mxu0 0
        %6278 = vmatprep.subr.bf16.mxu0 0
        %6279 = vmatpush1.bf16.msra.mxu0 0
        %6280 = vmatprep.subr.bf16.mxu0 0
        %6281 = vmatpush1.bf16.msra.mxu0 0
        %6282 = vmatprep.subr.bf16.mxu0 0
        %6283 = vmatpush1.bf16.msra.mxu0 0
        %6284 = vmatprep.subr.bf16.mxu0 0
        %6285 = vmatpush1.bf16.msra.mxu0 0
        %6286 = vmatprep.subr.bf16.mxu0 0
        %6287 = vmatpush1.bf16.msra.mxu0 0
        %6288 = vmatprep.subr.bf16.mxu0 0
        %6289 = vmatpush1.bf16.msra.mxu0 0
        %6290 = vmatprep.subr.bf16.mxu0 0
        %6291 = vmatpush1.bf16.msra.mxu0 0
        %6292 = vmatprep.subr.bf16.mxu0 0
        %6293 = vmatpush1.bf16.msra.mxu0 0
        %6294 = vmatprep.subr.bf16.mxu0 0
        %6295 = vmatpush1.bf16.msra.mxu0 0
        %6296 = vmatprep.mubr.bf16.mxu0 0
        %6297 = vmatmul.mubr.bf16.gmra.mrb[0].mxu0 %v6262
        %v6298 = vpop.f32.mrb[0].mxu0
        %v6299 = vadd.f32 %v6247, %v6298
        %v6300 = vpop.f32.mrb[0].mxu0
        %v6301 = vpop.f32.mrb[0].mxu0
        %v6302 = vpop.f32.mrb[0].mxu0
        %6303 = vdwg.mxu0
        %v6304 = vmax.f32 %v6299, 0.0
        %v6305 = vpack.c.bf16 %v6304, %v6304
        %s6306 = scalar_lea.vmem %s14, 32
        %v6307 = vld [vmem:[%s6306] sm:$0xf]
        %v6308 = vld [vmem:[%s6306 + $0x4] sm:$0xf]
        %v6309 = vld [vmem:[%s6306 + $0x8] sm:$0xf]
        %v6310 = vld [vmem:[%s6306 + $0xc] sm:$0xf]
        %v6311 = vld [vmem:[%s6306 + $0x10] sm:$0xf]
        %v6312 = vld [vmem:[%s6306 + $0x14] sm:$0xf]
        %v6313 = vld [vmem:[%s6306 + $0x18] sm:$0xf]
        %v6314 = vld [vmem:[%s6306 + $0x1c] sm:$0xf]
        %s6315 = scalar_lea.vmem %s15, 1
        %v6316 = vld [vmem:[%s6315] sm:$0x1]
        %v6318 = vlaneseq
        %v6319 = vshrl.u32 %v6318, 7
        %v6320 = vsub.s32 0, %v6319
        %v6321 = vrot.slane %v6316, %v6320
        %v6331 = vunpack.c.l.b16 %v6307
        %v6332 = vunpack.c.l.b16 %v6308
        %v6333 = vunpack.c.l.b16 %v6309
        %v6334 = vunpack.c.l.b16 %v6310
        %v6335 = vunpack.c.l.b16 %v6311
        %v6336 = vunpack.c.l.b16 %v6312
        %v6337 = vunpack.c.l.b16 %v6313
        %v6338 = vunpack.c.l.b16 %v6314
        %v6339 = vpack.c.b16 %v6332, %v6331
        %v6340 = vpack.c.b16 %v6334, %v6333
        %v6341 = vpack.c.b16 %v6336, %v6335
        %v6342 = vpack.c.b16 %v6338, %v6337
        %v6348 = vsel %vm3583, %v6305, 0
        %6350 = vmatprep.subr.bf16.mxu0 0
        %6351 = vmatpush1.bf16.msra.mxu0 %v6339
        %6352 = vmatprep.subr.bf16.mxu0 0
        %6353 = vmatpush1.bf16.msra.mxu0 %v6340
        %6354 = vmatprep.subr.bf16.mxu0 0
        %6355 = vmatpush1.bf16.msra.mxu0 %v6341
        %6356 = vmatprep.subr.bf16.mxu0 0
        %6357 = vmatpush1.bf16.msra.mxu0 %v6342
        %6358 = vmatprep.subr.bf16.mxu0 0
        %6359 = vmatpush1.bf16.msra.mxu0 0
        %6360 = vmatprep.subr.bf16.mxu0 0
        %6361 = vmatpush1.bf16.msra.mxu0 0
        %6362 = vmatprep.subr.bf16.mxu0 0
        %6363 = vmatpush1.bf16.msra.mxu0 0
        %6364 = vmatprep.subr.bf16.mxu0 0
        %6365 = vmatpush1.bf16.msra.mxu0 0
        %6366 = vmatprep.subr.bf16.mxu0 0
        %6367 = vmatpush1.bf16.msra.mxu0 0
        %6368 = vmatprep.subr.bf16.mxu0 0
        %6369 = vmatpush1.bf16.msra.mxu0 0
        %6370 = vmatprep.subr.bf16.mxu0 0
        %6371 = vmatpush1.bf16.msra.mxu0 0
        %6372 = vmatprep.subr.bf16.mxu0 0
        %6373 = vmatpush1.bf16.msra.mxu0 0
        %6374 = vmatprep.subr.bf16.mxu0 0
        %6375 = vmatpush1.bf16.msra.mxu0 0
        %6376 = vmatprep.subr.bf16.mxu0 0
        %6377 = vmatpush1.bf16.msra.mxu0 0
        %6378 = vmatprep.subr.bf16.mxu0 0
        %6379 = vmatpush1.bf16.msra.mxu0 0
        %6380 = vmatprep.subr.bf16.mxu0 0
        %6381 = vmatpush1.bf16.msra.mxu0 0
        %6382 = vmatprep.mubr.bf16.mxu0 0
        %6383 = vmatmul.mubr.bf16.gmra.mrb[0].mxu0 %v6348
        %v6384 = vpop.f32.mrb[0].mxu0
        %v6385 = vadd.f32 %v6321, %v6384
        %v6386 = vpop.f32.mrb[0].mxu0
        %v6387 = vpop.f32.mrb[0].mxu0
        %v6388 = vpop.f32.mrb[0].mxu0
        %6389 = vdwg.mxu0
        %v6390 = vadd.f32 %v6234, %v6385
        %s6391 = scalar_lea.vmem %s20, 1
        %v6392 = vld [vmem:[%s6391] sm:$0x1]
        %s6393 = scalar_lea.vmem %s21, 1
        %v6394 = vld [vmem:[%s6393] sm:$0x1]
        %v6395 = vsel %vm919, %v6390, 0.0
        %6396 = vadd.xlane.f32.xlu0 %v6395
        %v6397 = vpop.xlane.xlu0 %6396
        %v6398 = vmul.f32 %v6397, %v2159
        %v6399 = vsub.f32 %v6390, %v6398
        %v6400 = vmul.f32 %v6399, %v6399
        %v6401 = vsel %vm919, %v6400, 0.0
        %6402 = vadd.xlane.f32.xlu0 %v6401
        %v6403 = vpop.xlane.xlu0 %6402
        %v6404 = vmul.f32 %v6403, %v2159
        %v6405 = vadd.f32 %v6404, 1e-05
        %v6406 = vrsqrt.pop %v6405
        %v6407 = vmul.f32 %v6399, %v6406
        %v6409 = vlaneseq
        %v6410 = vshrl.u32 %v6409, 7
        %v6411 = vsub.s32 0, %v6410
        %v6412 = vrot.slane %v6392, %v6411
        %v6414 = vmul.f32 %v6407, %v6412
        %v6416 = vlaneseq
        %v6417 = vshrl.u32 %v6416, 7
        %v6418 = vsub.s32 0, %v6417
        %v6419 = vrot.slane %v6394, %v6418
        %v6421 = vadd.f32 %v6414, %v6419
        %v6422 = vld [vmem:[%s22] sm:$0x1]
        %v6423 = vld [vmem:[%s23] sm:$0x1]
        %v6424 = vsel %vm919, %v6421, 0.0
        %6425 = vadd.xlane.f32.xlu0 %v6424
        %v6426 = vpop.xlane.xlu0 %6425
        %v6427 = vmul.f32 %v6426, %v2159
        %v6428 = vsub.f32 %v6421, %v6427
        %v6429 = vmul.f32 %v6428, %v6428
        %v6430 = vsel %vm919, %v6429, 0.0
        %6431 = vadd.xlane.f32.xlu0 %v6430
        %v6432 = vpop.xlane.xlu0 %6431
        %v6433 = vmul.f32 %v6432, %v2159
        %v6434 = vadd.f32 %v6433, 1e-05
        %v6435 = vrsqrt.pop %v6434
        %v6436 = vmul.f32 %v6428, %v6435
        %v6438 = vlaneseq
        %v6439 = vshrl.u32 %v6438, 7
        %v6440 = vsub.s32 0, %v6439
        %v6441 = vrot.slane %v6422, %v6440
        %v6443 = vmul.f32 %v6436, %v6441
        %v6445 = vlaneseq
        %v6446 = vshrl.u32 %v6445, 7
        %v6447 = vsub.s32 0, %v6446
        %v6448 = vrot.slane %v6423, %v6447
        %v6450 = vadd.f32 %v6443, %v6448
        %6451 = vst.msk [vmem:[%s873] sm:$0xff] %vm919, %v6450
        %s6452 = sand.u32 %s578, 1
        %s6453 = scalar_lea.sflag [#allocation4], %s6452
        %s6454 = sand.u32 %s578, 1
        %s6455 = smul.addr %s6454, 8
        %s6456 = scalar_lea.vmem [#allocation13], %s6455
        // Predicated region
        $region141: #{tpu_custom_call.1} parent=115 // pred_check
          %p6457 = pneg %p588
        $region142: #{tpu_custom_call.1} parent=115 // pred_check_branch
          %6459 = sbr.rel (%p6457) target = $region144
        $region143: #{tpu_custom_call.1} parent=115 // pred_region
          %s6461 = ssub.s32 128, 128
          %6462 = vsyncadd %s6453, %s6461
          %s6463 = smul.addr %s46, 128
          %s6464 = scalar_lea.hbm %s24, %s6463
          %s6466 = sshll.u32 %s6456, 4
          %s6467 = int_to_ptr.vmem [resolvable:$true] %s6466
          %6469 = dma.vmem_to_hbm [thread:$0]  %s6467, 128, %s6464, %s6453
        $region144: #{tpu_custom_call.1} parent=115 // pred_fallthru
          _
      $region116: #{tpu_custom_call.1} parent=5 // pred_fallthru
        _
      %p6470 = scmp.le.s32.totalorder 2, %s41
      // Predicated region
      $region145: #{tpu_custom_call.1} parent=5 // pred_check
        %p6471 = pneg %p6470
      $region146: #{tpu_custom_call.1} parent=5 // pred_check_branch
        %6473 = sbr.rel (%p6471) target = $region148
      $region147: #{tpu_custom_call.1} parent=5 // pred_region
        %s6474 = ssub.s32 %s41, 2
        // Predicated region
        $region149: #{tpu_custom_call.1} parent=147 // pred_check
          %p6475 = pneg %p594
        $region150: #{tpu_custom_call.1} parent=147 // pred_check_branch
          %6477 = sbr.rel (%p6475) target = $region152
        $region151: #{tpu_custom_call.1} parent=147 // pred_region
          %s6478 = sand.u32 %s579, 1
          %s6479 = scalar_lea.sflag [#allocation4], %s6478
          %s6480 = sand.u32 %s579, 1
          %s6481 = smul.addr %s6480, 8
          %s6482 = scalar_lea.vmem [#allocation13], %s6481
          %6483 = dma.done %s6479, 128
        $region152: #{tpu_custom_call.1} parent=147 // pred_fallthru
          _
      $region148: #{tpu_custom_call.1} parent=5 // pred_fallthru
        _
    $region6: #{tpu_custom_call.1} parent=1 // loop_footer
      %s45 = sadd.s32 1, %s41
    $region7: #{tpu_custom_call.1} parent=1 // loop_footer_branch
      %40 = sbr.rel target = $region3
    $region8: #{tpu_custom_call.1} parent=1 // loop_exit
      _
    %6484 = vsyncpa [#allocation3], 1
    %s6485 = scalar_lea.sflag [#allocation3], 1
    %6486 = vsyncpa %s6485, 1
    %6487 = vsyncpa [#allocation6], 1
    %s6488 = scalar_lea.sflag [#allocation6], 1
    %6489 = vsyncpa %s6488, 1
    %6490 = vsyncpa [#allocation9], 1
    %6491 = vsyncpa [#allocation12], 1
    %6492 = vsyncpa [#allocation4], 1
    %s6493 = scalar_lea.sflag [#allocation4], 1
    %6494 = vsyncpa %s6493, 1

</llo_original>
